<compile_context>
chip_gen: v7x
topology: tpu7x:2x2x1
jax: 0.10.0
libtpu: 0.0.40
codegen_flags: <defaults>
</compile_context>

<pallas_src>
import jax
import jax.numpy as jnp
from jax import lax
from jax.experimental import pallas as pl
from jax.experimental.pallas import tpu as pltpu

BN_EPS = 1e-5  # PyTorch BatchNorm2d default


def _conv_block_kernel(x_ref, w1_ref, s1_ref, b1_ref, w2_ref, s2_ref, b2_ref,
                       out_ref, mid_ref):
    """One batch image per grid step.

    x_ref:   (1, H+2, W+2, Cin)  zero-padded input image (NHWC)
    w1_ref:  (3, 3, Cin, Cmid)   conv1 weights (HWIO)
    s1_ref:  (1, Cmid)           folded BN1 scale
    b1_ref:  (1, Cmid)           folded BN1 shift (conv1 bias folded in)
    w2_ref:  (3, 3, Cmid, Cout)  conv2 weights (HWIO)
    s2_ref:  (1, Cout)           folded BN2 scale
    b2_ref:  (1, Cout)           folded BN2 shift (conv2 bias folded in)
    out_ref: (1, H, W, Cout)
    mid_ref: (H+2, W+2, Cmid)    VMEM scratch: padded conv1 activation
    """
    _, H, W, Cout = out_ref.shape
    Cin = x_ref.shape[-1]
    Cmid = mid_ref.shape[-1]

    # ---- conv1 (3x3, pad=1) as 9 shifted matmuls on the MXU ----
    acc1 = jnp.zeros((H * W, Cmid), jnp.float32)
    for kh in range(3):
        for kw in range(3):
            patch = x_ref[0, kh:kh + H, kw:kw + W, :].reshape(H * W, Cin)
            acc1 = acc1 + jnp.dot(patch, w1_ref[kh, kw],
                                  preferred_element_type=jnp.float32)

    # ---- BN1 (folded, eval mode) + ReLU ----
    y1 = jnp.maximum(acc1 * s1_ref[...] + b1_ref[...], 0.0)   # (H*W, Cmid)

    # ---- stash padded intermediate in VMEM scratch (no HBM round trip) ----
    mid_ref[...] = jnp.zeros_like(mid_ref)
    mid_ref[pl.ds(1, H), pl.ds(1, W), :] = y1.reshape(H, W, Cmid)

    # ---- conv2 (3x3, pad=1) ----
    acc2 = jnp.zeros((H * W, Cout), jnp.float32)
    for kh in range(3):
        for kw in range(3):
            patch = mid_ref[kh:kh + H, kw:kw + W, :].reshape(H * W, Cmid)
            acc2 = acc2 + jnp.dot(patch, w2_ref[kh, kw],
                                  preferred_element_type=jnp.float32)

    # ---- BN2 (folded, eval mode) + ReLU ----
    y2 = jnp.maximum(acc2 * s2_ref[...] + b2_ref[...], 0.0)
    out_ref[0] = y2.reshape(H, W, Cout).astype(out_ref.dtype)


def _fold_bn(conv_bias, gamma, beta, running_mean, running_var, eps=BN_EPS):
    """Fold conv bias + eval-mode BatchNorm into per-channel scale/shift."""
    scale = gamma / jnp.sqrt(running_var + eps)
    shift = (conv_bias - running_mean) * scale + beta
    return scale, shift


@jax.jit
def conv_block_forward(x_nchw, w1, b1, g1, be1, m1, v1,
                       w2, b2, g2, be2, m2, v2):
    """ConvBlock.forward.  x_nchw: (N, Cin, H, W); conv weights in HWIO."""
    N, Cin, H, W = x_nchw.shape
    Cmid = w1.shape[-1]
    Cout = w2.shape[-1]

    # wrapper-side layout plumbing: NCHW -> NHWC, zero-pad spatial dims by 1
    x = jnp.transpose(x_nchw, (0, 2, 3, 1)).astype(jnp.float32)
    x_pad = jnp.pad(x, ((0, 0), (1, 1), (1, 1), (0, 0)))

    s1, sh1 = _fold_bn(b1, g1, be1, m1, v1)
    s2, sh2 = _fold_bn(b2, g2, be2, m2, v2)
    s1 = s1.reshape(1, Cmid).astype(jnp.float32)
    sh1 = sh1.reshape(1, Cmid).astype(jnp.float32)
    s2 = s2.reshape(1, Cout).astype(jnp.float32)
    sh2 = sh2.reshape(1, Cout).astype(jnp.float32)

    out_nhwc = pl.pallas_call(
        _conv_block_kernel,
        out_shape=jax.ShapeDtypeStruct((N, H, W, Cout), jnp.float32),
        grid_spec=pltpu.PrefetchScalarGridSpec(
            num_scalar_prefetch=0,
            grid=(N,),
            in_specs=[
                pl.BlockSpec((1, H + 2, W + 2, Cin), lambda n: (n, 0, 0, 0)),
                pl.BlockSpec((3, 3, Cin, Cmid), lambda n: (0, 0, 0, 0)),
                pl.BlockSpec((1, Cmid), lambda n: (0, 0)),
                pl.BlockSpec((1, Cmid), lambda n: (0, 0)),
                pl.BlockSpec((3, 3, Cmid, Cout), lambda n: (0, 0, 0, 0)),
                pl.BlockSpec((1, Cout), lambda n: (0, 0)),
                pl.BlockSpec((1, Cout), lambda n: (0, 0)),
            ],
            out_specs=pl.BlockSpec((1, H, W, Cout), lambda n: (n, 0, 0, 0)),
            scratch_shapes=[pltpu.VMEM((H + 2, W + 2, Cmid), jnp.float32)],
        ),
        compiler_params=pltpu.CompilerParams(
            dimension_semantics=("parallel",)),
    )(x_pad, w1, s1, sh1, w2, s2, sh2)

    return jnp.transpose(out_nhwc, (0, 3, 1, 2))  # back to NCHW


if __name__ == "__main__":
    key = jax.random.PRNGKey(0)
    keys = jax.random.split(key, 13)

    # ConvBlock(in_c=4, out_c=8) on a (2, 4, 16, 16) input
    N, Cin, Cmid, H, W = 2, 4, 8, 16, 16
    Cout = Cmid

    x = jax.random.normal(keys[0], (N, Cin, H, W), dtype=jnp.float32)

    # conv weights in HWIO layout; per-output-channel biases
    w1 = 0.2 * jax.random.normal(keys[1], (3, 3, Cin, Cmid), jnp.float32)
    b1 = 0.1 * jax.random.normal(keys[2], (Cmid,), jnp.float32)
    w2 = 0.2 * jax.random.normal(keys[3], (3, 3, Cmid, Cout), jnp.float32)
    b2 = 0.1 * jax.random.normal(keys[4], (Cout,), jnp.float32)

    # BatchNorm (eval mode) parameters and running statistics
    g1 = 1.0 + 0.1 * jax.random.normal(keys[5], (Cmid,), jnp.float32)
    be1 = 0.1 * jax.random.normal(keys[6], (Cmid,), jnp.float32)
    m1 = 0.1 * jax.random.normal(keys[7], (Cmid,), jnp.float32)
    v1 = 1.0 + 0.5 * jax.random.uniform(keys[8], (Cmid,), jnp.float32)
    g2 = 1.0 + 0.1 * jax.random.normal(keys[9], (Cout,), jnp.float32)
    be2 = 0.1 * jax.random.normal(keys[10], (Cout,), jnp.float32)
    m2 = 0.1 * jax.random.normal(keys[11], (Cout,), jnp.float32)
    v2 = 1.0 + 0.5 * jax.random.uniform(keys[12], (Cout,), jnp.float32)

    out = conv_block_forward(x, w1, b1, g1, be1, m1, v1,
                             w2, b2, g2, be2, m2, v2)
    out = jax.block_until_ready(out)

    # pure-JAX reference of the same eval-mode forward pass
    def ref_forward(x_nchw):
        xh = jnp.transpose(x_nchw, (0, 2, 3, 1))
        dn = ("NHWC", "HWIO", "NHWC")
        y = lax.conv_general_dilated(xh, w1, (1, 1), "SAME",
                                     dimension_numbers=dn,
                                     precision=lax.Precision.HIGHEST) + b1
        y = g1 * (y - m1) / jnp.sqrt(v1 + BN_EPS) + be1
        y = jnp.maximum(y, 0.0)
        y = lax.conv_general_dilated(y, w2, (1, 1), "SAME",
                                     dimension_numbers=dn,
                                     precision=lax.Precision.HIGHEST) + b2
        y = g2 * (y - m2) / jnp.sqrt(v2 + BN_EPS) + be2
        y = jnp.maximum(y, 0.0)
        return jnp.transpose(y, (0, 3, 1, 2))

    ref = ref_forward(x)
    assert out.shape == (N, Cout, H, W), out.shape
    assert jnp.allclose(out, ref, rtol=1e-3, atol=1e-3), (
        float(jnp.max(jnp.abs(out - ref))))

    print("KERNEL_OK")
</pallas_src>

<mosaic_0001>
module attributes {stable_mosaic.version = 11 : i64} {
  func.func @_conv_block_kernel(%arg0: i32, %arg1: memref<1x18x18x4xf32, #tpu.memory_space<vmem>>, %arg2: memref<3x3x4x8xf32, #tpu.memory_space<vmem>>, %arg3: memref<1x8xf32, #tpu.memory_space<vmem>>, %arg4: memref<1x8xf32, #tpu.memory_space<vmem>>, %arg5: memref<3x3x8x8xf32, #tpu.memory_space<vmem>>, %arg6: memref<1x8xf32, #tpu.memory_space<vmem>>, %arg7: memref<1x8xf32, #tpu.memory_space<vmem>>, %arg8: memref<1x16x16x8xf32, #tpu.memory_space<vmem>>, %arg9: memref<18x18x8xf32, #tpu.memory_space<vmem>>) attributes {dimension_semantics = [#tpu.dimension_semantics<parallel>], iteration_bounds = array<i64: 2>, scalar_prefetch = 0 : i64, scratch_operands = 1 : i64, tpu.core_type = #tpu.core_type<tc>, window_params = [{transform_indices = @transform_0, window_bounds = array<i64: 1, 18, 18, 4>}, {pipeline_mode = #tpu.pipeline_mode<synchronous>, transform_indices = @transform_1, window_bounds = array<i64: 3, 3, 4, 8>}, {pipeline_mode = #tpu.pipeline_mode<synchronous>, transform_indices = @transform_2, window_bounds = array<i64: 1, 8>}, {pipeline_mode = #tpu.pipeline_mode<synchronous>, transform_indices = @transform_3, window_bounds = array<i64: 1, 8>}, {pipeline_mode = #tpu.pipeline_mode<synchronous>, transform_indices = @transform_4, window_bounds = array<i64: 3, 3, 8, 8>}, {pipeline_mode = #tpu.pipeline_mode<synchronous>, transform_indices = @transform_5, window_bounds = array<i64: 1, 8>}, {pipeline_mode = #tpu.pipeline_mode<synchronous>, transform_indices = @transform_6, window_bounds = array<i64: 1, 8>}, {transform_indices = @transform_7, window_bounds = array<i64: 1, 16, 16, 8>}]} {
    %cst = arith.constant 0.000000e+00 : f32
    %0 = vector.broadcast %cst : f32 to vector<256x8xf32>
    %c0 = arith.constant 0 : index
    %c0_0 = arith.constant 0 : index
    %c0_1 = arith.constant 0 : index
    %c0_2 = arith.constant 0 : index
    %1 = vector.load %arg1[%c0, %c0_0, %c0_1, %c0_2] : memref<1x18x18x4xf32, #tpu.memory_space<vmem>>, vector<1x16x16x4xf32>
    %2 = vector.shape_cast %1 : vector<1x16x16x4xf32> to vector<16x16x4xf32>
    %3 = vector.shape_cast %2 : vector<16x16x4xf32> to vector<256x4xf32>
    %c0_3 = arith.constant 0 : index
    %c0_4 = arith.constant 0 : index
    %c0_5 = arith.constant 0 : index
    %c0_6 = arith.constant 0 : index
    %4 = vector.load %arg2[%c0_3, %c0_4, %c0_5, %c0_6] : memref<3x3x4x8xf32, #tpu.memory_space<vmem>>, vector<1x1x4x8xf32>
    %5 = vector.shape_cast %4 : vector<1x1x4x8xf32> to vector<4x8xf32>
    %cst_7 = arith.constant dense<0.000000e+00> : vector<256x8xf32>
    %6 = tpu.matmul %3, %5, %cst_7 {dimension_numbers = #tpu.dot_dimension_numbers<[1], [0], [0], [1], [0, 0, 1, 1], [], []>} : vector<256x4xf32>, vector<4x8xf32>, vector<256x8xf32> -> vector<256x8xf32>
    %7 = arith.addf %0, %6 : vector<256x8xf32>
    %c0_8 = arith.constant 0 : index
    %c0_9 = arith.constant 0 : index
    %c1 = arith.constant 1 : index
    %c0_10 = arith.constant 0 : index
    %8 = vector.load %arg1[%c0_8, %c0_9, %c1, %c0_10] : memref<1x18x18x4xf32, #tpu.memory_space<vmem>>, vector<1x16x16x4xf32>
    %9 = vector.shape_cast %8 : vector<1x16x16x4xf32> to vector<16x16x4xf32>
    %10 = vector.shape_cast %9 : vector<16x16x4xf32> to vector<256x4xf32>
    %c0_11 = arith.constant 0 : index
    %c1_12 = arith.constant 1 : index
    %c0_13 = arith.constant 0 : index
    %c0_14 = arith.constant 0 : index
    %11 = vector.load %arg2[%c0_11, %c1_12, %c0_13, %c0_14] : memref<3x3x4x8xf32, #tpu.memory_space<vmem>>, vector<1x1x4x8xf32>
    %12 = vector.shape_cast %11 : vector<1x1x4x8xf32> to vector<4x8xf32>
    %cst_15 = arith.constant dense<0.000000e+00> : vector<256x8xf32>
    %13 = tpu.matmul %10, %12, %cst_15 {dimension_numbers = #tpu.dot_dimension_numbers<[1], [0], [0], [1], [0, 0, 1, 1], [], []>} : vector<256x4xf32>, vector<4x8xf32>, vector<256x8xf32> -> vector<256x8xf32>
    %14 = arith.addf %7, %13 : vector<256x8xf32>
    %c0_16 = arith.constant 0 : index
    %c0_17 = arith.constant 0 : index
    %c2 = arith.constant 2 : index
    %c0_18 = arith.constant 0 : index
    %15 = vector.load %arg1[%c0_16, %c0_17, %c2, %c0_18] : memref<1x18x18x4xf32, #tpu.memory_space<vmem>>, vector<1x16x16x4xf32>
    %16 = vector.shape_cast %15 : vector<1x16x16x4xf32> to vector<16x16x4xf32>
    %17 = vector.shape_cast %16 : vector<16x16x4xf32> to vector<256x4xf32>
    %c0_19 = arith.constant 0 : index
    %c2_20 = arith.constant 2 : index
    %c0_21 = arith.constant 0 : index
    %c0_22 = arith.constant 0 : index
    %18 = vector.load %arg2[%c0_19, %c2_20, %c0_21, %c0_22] : memref<3x3x4x8xf32, #tpu.memory_space<vmem>>, vector<1x1x4x8xf32>
    %19 = vector.shape_cast %18 : vector<1x1x4x8xf32> to vector<4x8xf32>
    %cst_23 = arith.constant dense<0.000000e+00> : vector<256x8xf32>
    %20 = tpu.matmul %17, %19, %cst_23 {dimension_numbers = #tpu.dot_dimension_numbers<[1], [0], [0], [1], [0, 0, 1, 1], [], []>} : vector<256x4xf32>, vector<4x8xf32>, vector<256x8xf32> -> vector<256x8xf32>
    %21 = arith.addf %14, %20 : vector<256x8xf32>
    %c0_24 = arith.constant 0 : index
    %c1_25 = arith.constant 1 : index
    %c0_26 = arith.constant 0 : index
    %c0_27 = arith.constant 0 : index
    %22 = vector.load %arg1[%c0_24, %c1_25, %c0_26, %c0_27] : memref<1x18x18x4xf32, #tpu.memory_space<vmem>>, vector<1x16x16x4xf32>
    %23 = vector.shape_cast %22 : vector<1x16x16x4xf32> to vector<16x16x4xf32>
    %24 = vector.shape_cast %23 : vector<16x16x4xf32> to vector<256x4xf32>
    %c1_28 = arith.constant 1 : index
    %c0_29 = arith.constant 0 : index
    %c0_30 = arith.constant 0 : index
    %c0_31 = arith.constant 0 : index
    %25 = vector.load %arg2[%c1_28, %c0_29, %c0_30, %c0_31] : memref<3x3x4x8xf32, #tpu.memory_space<vmem>>, vector<1x1x4x8xf32>
    %26 = vector.shape_cast %25 : vector<1x1x4x8xf32> to vector<4x8xf32>
    %cst_32 = arith.constant dense<0.000000e+00> : vector<256x8xf32>
    %27 = tpu.matmul %24, %26, %cst_32 {dimension_numbers = #tpu.dot_dimension_numbers<[1], [0], [0], [1], [0, 0, 1, 1], [], []>} : vector<256x4xf32>, vector<4x8xf32>, vector<256x8xf32> -> vector<256x8xf32>
    %28 = arith.addf %21, %27 : vector<256x8xf32>
    %c0_33 = arith.constant 0 : index
    %c1_34 = arith.constant 1 : index
    %c1_35 = arith.constant 1 : index
    %c0_36 = arith.constant 0 : index
    %29 = vector.load %arg1[%c0_33, %c1_34, %c1_35, %c0_36] : memref<1x18x18x4xf32, #tpu.memory_space<vmem>>, vector<1x16x16x4xf32>
    %30 = vector.shape_cast %29 : vector<1x16x16x4xf32> to vector<16x16x4xf32>
    %31 = vector.shape_cast %30 : vector<16x16x4xf32> to vector<256x4xf32>
    %c1_37 = arith.constant 1 : index
    %c1_38 = arith.constant 1 : index
    %c0_39 = arith.constant 0 : index
    %c0_40 = arith.constant 0 : index
    %32 = vector.load %arg2[%c1_37, %c1_38, %c0_39, %c0_40] : memref<3x3x4x8xf32, #tpu.memory_space<vmem>>, vector<1x1x4x8xf32>
    %33 = vector.shape_cast %32 : vector<1x1x4x8xf32> to vector<4x8xf32>
    %cst_41 = arith.constant dense<0.000000e+00> : vector<256x8xf32>
    %34 = tpu.matmul %31, %33, %cst_41 {dimension_numbers = #tpu.dot_dimension_numbers<[1], [0], [0], [1], [0, 0, 1, 1], [], []>} : vector<256x4xf32>, vector<4x8xf32>, vector<256x8xf32> -> vector<256x8xf32>
    %35 = arith.addf %28, %34 : vector<256x8xf32>
    %c0_42 = arith.constant 0 : index
    %c1_43 = arith.constant 1 : index
    %c2_44 = arith.constant 2 : index
    %c0_45 = arith.constant 0 : index
    %36 = vector.load %arg1[%c0_42, %c1_43, %c2_44, %c0_45] : memref<1x18x18x4xf32, #tpu.memory_space<vmem>>, vector<1x16x16x4xf32>
    %37 = vector.shape_cast %36 : vector<1x16x16x4xf32> to vector<16x16x4xf32>
    %38 = vector.shape_cast %37 : vector<16x16x4xf32> to vector<256x4xf32>
    %c1_46 = arith.constant 1 : index
    %c2_47 = arith.constant 2 : index
    %c0_48 = arith.constant 0 : index
    %c0_49 = arith.constant 0 : index
    %39 = vector.load %arg2[%c1_46, %c2_47, %c0_48, %c0_49] : memref<3x3x4x8xf32, #tpu.memory_space<vmem>>, vector<1x1x4x8xf32>
    %40 = vector.shape_cast %39 : vector<1x1x4x8xf32> to vector<4x8xf32>
    %cst_50 = arith.constant dense<0.000000e+00> : vector<256x8xf32>
    %41 = tpu.matmul %38, %40, %cst_50 {dimension_numbers = #tpu.dot_dimension_numbers<[1], [0], [0], [1], [0, 0, 1, 1], [], []>} : vector<256x4xf32>, vector<4x8xf32>, vector<256x8xf32> -> vector<256x8xf32>
    %42 = arith.addf %35, %41 : vector<256x8xf32>
    %c0_51 = arith.constant 0 : index
    %c2_52 = arith.constant 2 : index
    %c0_53 = arith.constant 0 : index
    %c0_54 = arith.constant 0 : index
    %43 = vector.load %arg1[%c0_51, %c2_52, %c0_53, %c0_54] : memref<1x18x18x4xf32, #tpu.memory_space<vmem>>, vector<1x16x16x4xf32>
    %44 = vector.shape_cast %43 : vector<1x16x16x4xf32> to vector<16x16x4xf32>
    %45 = vector.shape_cast %44 : vector<16x16x4xf32> to vector<256x4xf32>
    %c2_55 = arith.constant 2 : index
    %c0_56 = arith.constant 0 : index
    %c0_57 = arith.constant 0 : index
    %c0_58 = arith.constant 0 : index
    %46 = vector.load %arg2[%c2_55, %c0_56, %c0_57, %c0_58] : memref<3x3x4x8xf32, #tpu.memory_space<vmem>>, vector<1x1x4x8xf32>
    %47 = vector.shape_cast %46 : vector<1x1x4x8xf32> to vector<4x8xf32>
    %cst_59 = arith.constant dense<0.000000e+00> : vector<256x8xf32>
    %48 = tpu.matmul %45, %47, %cst_59 {dimension_numbers = #tpu.dot_dimension_numbers<[1], [0], [0], [1], [0, 0, 1, 1], [], []>} : vector<256x4xf32>, vector<4x8xf32>, vector<256x8xf32> -> vector<256x8xf32>
    %49 = arith.addf %42, %48 : vector<256x8xf32>
    %c0_60 = arith.constant 0 : index
    %c2_61 = arith.constant 2 : index
    %c1_62 = arith.constant 1 : index
    %c0_63 = arith.constant 0 : index
    %50 = vector.load %arg1[%c0_60, %c2_61, %c1_62, %c0_63] : memref<1x18x18x4xf32, #tpu.memory_space<vmem>>, vector<1x16x16x4xf32>
    %51 = vector.shape_cast %50 : vector<1x16x16x4xf32> to vector<16x16x4xf32>
    %52 = vector.shape_cast %51 : vector<16x16x4xf32> to vector<256x4xf32>
    %c2_64 = arith.constant 2 : index
    %c1_65 = arith.constant 1 : index
    %c0_66 = arith.constant 0 : index
    %c0_67 = arith.constant 0 : index
    %53 = vector.load %arg2[%c2_64, %c1_65, %c0_66, %c0_67] : memref<3x3x4x8xf32, #tpu.memory_space<vmem>>, vector<1x1x4x8xf32>
    %54 = vector.shape_cast %53 : vector<1x1x4x8xf32> to vector<4x8xf32>
    %cst_68 = arith.constant dense<0.000000e+00> : vector<256x8xf32>
    %55 = tpu.matmul %52, %54, %cst_68 {dimension_numbers = #tpu.dot_dimension_numbers<[1], [0], [0], [1], [0, 0, 1, 1], [], []>} : vector<256x4xf32>, vector<4x8xf32>, vector<256x8xf32> -> vector<256x8xf32>
    %56 = arith.addf %49, %55 : vector<256x8xf32>
    %c0_69 = arith.constant 0 : index
    %c2_70 = arith.constant 2 : index
    %c2_71 = arith.constant 2 : index
    %c0_72 = arith.constant 0 : index
    %57 = vector.load %arg1[%c0_69, %c2_70, %c2_71, %c0_72] : memref<1x18x18x4xf32, #tpu.memory_space<vmem>>, vector<1x16x16x4xf32>
    %58 = vector.shape_cast %57 : vector<1x16x16x4xf32> to vector<16x16x4xf32>
    %59 = vector.shape_cast %58 : vector<16x16x4xf32> to vector<256x4xf32>
    %c2_73 = arith.constant 2 : index
    %c2_74 = arith.constant 2 : index
    %c0_75 = arith.constant 0 : index
    %c0_76 = arith.constant 0 : index
    %60 = vector.load %arg2[%c2_73, %c2_74, %c0_75, %c0_76] : memref<3x3x4x8xf32, #tpu.memory_space<vmem>>, vector<1x1x4x8xf32>
    %61 = vector.shape_cast %60 : vector<1x1x4x8xf32> to vector<4x8xf32>
    %cst_77 = arith.constant dense<0.000000e+00> : vector<256x8xf32>
    %62 = tpu.matmul %59, %61, %cst_77 {dimension_numbers = #tpu.dot_dimension_numbers<[1], [0], [0], [1], [0, 0, 1, 1], [], []>} : vector<256x4xf32>, vector<4x8xf32>, vector<256x8xf32> -> vector<256x8xf32>
    %63 = arith.addf %56, %62 : vector<256x8xf32>
    %c0_78 = arith.constant 0 : index
    %c0_79 = arith.constant 0 : index
    %64 = vector.load %arg3[%c0_78, %c0_79] : memref<1x8xf32, #tpu.memory_space<vmem>>, vector<1x8xf32>
    %65 = vector.broadcast %64 : vector<1x8xf32> to vector<256x8xf32>
    %66 = arith.mulf %63, %65 : vector<256x8xf32>
    %c0_80 = arith.constant 0 : index
    %c0_81 = arith.constant 0 : index
    %67 = vector.load %arg4[%c0_80, %c0_81] : memref<1x8xf32, #tpu.memory_space<vmem>>, vector<1x8xf32>
    %68 = vector.broadcast %67 : vector<1x8xf32> to vector<256x8xf32>
    %69 = arith.addf %66, %68 : vector<256x8xf32>
    %cst_82 = arith.constant 0.000000e+00 : f32
    %70 = vector.broadcast %cst_82 : f32 to vector<256x8xf32>
    %71 = arith.maximumf %69, %70 : vector<256x8xf32>
    %cst_83 = arith.constant 0.000000e+00 : f32
    %72 = vector.broadcast %cst_83 : f32 to vector<18x18x8xf32>
    %c0_84 = arith.constant 0 : index
    %c0_85 = arith.constant 0 : index
    %c0_86 = arith.constant 0 : index
    %73 = vector.load %arg9[%c0_84, %c0_85, %c0_86] : memref<18x18x8xf32, #tpu.memory_space<vmem>>, vector<18x18x8xf32>
    tpu.vector_store %arg9[%c0_84, %c0_85, %c0_86], %72 {strides = array<i32>} : memref<18x18x8xf32, #tpu.memory_space<vmem>>, vector<18x18x8xf32>,
    %74 = vector.shape_cast %71 : vector<256x8xf32> to vector<16x16x8xf32>
    %c1_87 = arith.constant 1 : index
    %c1_88 = arith.constant 1 : index
    %c0_89 = arith.constant 0 : index
    %75 = vector.load %arg9[%c1_87, %c1_88, %c0_89] : memref<18x18x8xf32, #tpu.memory_space<vmem>>, vector<16x16x8xf32>
    tpu.vector_store %arg9[%c1_87, %c1_88, %c0_89], %74 {strides = array<i32>} : memref<18x18x8xf32, #tpu.memory_space<vmem>>, vector<16x16x8xf32>,
    %cst_90 = arith.constant 0.000000e+00 : f32
    %76 = vector.broadcast %cst_90 : f32 to vector<256x8xf32>
    %c0_91 = arith.constant 0 : index
    %c0_92 = arith.constant 0 : index
    %c0_93 = arith.constant 0 : index
    %77 = vector.load %arg9[%c0_91, %c0_92, %c0_93] : memref<18x18x8xf32, #tpu.memory_space<vmem>>, vector<16x16x8xf32>
    %78 = vector.shape_cast %77 : vector<16x16x8xf32> to vector<256x8xf32>
    %c0_94 = arith.constant 0 : index
    %c0_95 = arith.constant 0 : index
    %c0_96 = arith.constant 0 : index
    %c0_97 = arith.constant 0 : index
    %79 = vector.load %arg5[%c0_94, %c0_95, %c0_96, %c0_97] : memref<3x3x8x8xf32, #tpu.memory_space<vmem>>, vector<1x1x8x8xf32>
    %80 = vector.shape_cast %79 : vector<1x1x8x8xf32> to vector<8x8xf32>
    %cst_98 = arith.constant dense<0.000000e+00> : vector<256x8xf32>
    %81 = tpu.matmul %78, %80, %cst_98 {dimension_numbers = #tpu.dot_dimension_numbers<[1], [0], [0], [1], [0, 0, 1, 1], [], []>} : vector<256x8xf32>, vector<8x8xf32>, vector<256x8xf32> -> vector<256x8xf32>
    %82 = arith.addf %76, %81 : vector<256x8xf32>
    %c0_99 = arith.constant 0 : index
    %c1_100 = arith.constant 1 : index
    %c0_101 = arith.constant 0 : index
    %83 = vector.load %arg9[%c0_99, %c1_100, %c0_101] : memref<18x18x8xf32, #tpu.memory_space<vmem>>, vector<16x16x8xf32>
    %84 = vector.shape_cast %83 : vector<16x16x8xf32> to vector<256x8xf32>
    %c0_102 = arith.constant 0 : index
    %c1_103 = arith.constant 1 : index
    %c0_104 = arith.constant 0 : index
    %c0_105 = arith.constant 0 : index
    %85 = vector.load %arg5[%c0_102, %c1_103, %c0_104, %c0_105] : memref<3x3x8x8xf32, #tpu.memory_space<vmem>>, vector<1x1x8x8xf32>
    %86 = vector.shape_cast %85 : vector<1x1x8x8xf32> to vector<8x8xf32>
    %cst_106 = arith.constant dense<0.000000e+00> : vector<256x8xf32>
    %87 = tpu.matmul %84, %86, %cst_106 {dimension_numbers = #tpu.dot_dimension_numbers<[1], [0], [0], [1], [0, 0, 1, 1], [], []>} : vector<256x8xf32>, vector<8x8xf32>, vector<256x8xf32> -> vector<256x8xf32>
    %88 = arith.addf %82, %87 : vector<256x8xf32>
    %c0_107 = arith.constant 0 : index
    %c2_108 = arith.constant 2 : index
    %c0_109 = arith.constant 0 : index
    %89 = vector.load %arg9[%c0_107, %c2_108, %c0_109] : memref<18x18x8xf32, #tpu.memory_space<vmem>>, vector<16x16x8xf32>
    %90 = vector.shape_cast %89 : vector<16x16x8xf32> to vector<256x8xf32>
    %c0_110 = arith.constant 0 : index
    %c2_111 = arith.constant 2 : index
    %c0_112 = arith.constant 0 : index
    %c0_113 = arith.constant 0 : index
    %91 = vector.load %arg5[%c0_110, %c2_111, %c0_112, %c0_113] : memref<3x3x8x8xf32, #tpu.memory_space<vmem>>, vector<1x1x8x8xf32>
    %92 = vector.shape_cast %91 : vector<1x1x8x8xf32> to vector<8x8xf32>
    %cst_114 = arith.constant dense<0.000000e+00> : vector<256x8xf32>
    %93 = tpu.matmul %90, %92, %cst_114 {dimension_numbers = #tpu.dot_dimension_numbers<[1], [0], [0], [1], [0, 0, 1, 1], [], []>} : vector<256x8xf32>, vector<8x8xf32>, vector<256x8xf32> -> vector<256x8xf32>
    %94 = arith.addf %88, %93 : vector<256x8xf32>
    %c1_115 = arith.constant 1 : index
    %c0_116 = arith.constant 0 : index
    %c0_117 = arith.constant 0 : index
    %95 = vector.load %arg9[%c1_115, %c0_116, %c0_117] : memref<18x18x8xf32, #tpu.memory_space<vmem>>, vector<16x16x8xf32>
    %96 = vector.shape_cast %95 : vector<16x16x8xf32> to vector<256x8xf32>
    %c1_118 = arith.constant 1 : index
    %c0_119 = arith.constant 0 : index
    %c0_120 = arith.constant 0 : index
    %c0_121 = arith.constant 0 : index
    %97 = vector.load %arg5[%c1_118, %c0_119, %c0_120, %c0_121] : memref<3x3x8x8xf32, #tpu.memory_space<vmem>>, vector<1x1x8x8xf32>
    %98 = vector.shape_cast %97 : vector<1x1x8x8xf32> to vector<8x8xf32>
    %cst_122 = arith.constant dense<0.000000e+00> : vector<256x8xf32>
    %99 = tpu.matmul %96, %98, %cst_122 {dimension_numbers = #tpu.dot_dimension_numbers<[1], [0], [0], [1], [0, 0, 1, 1], [], []>} : vector<256x8xf32>, vector<8x8xf32>, vector<256x8xf32> -> vector<256x8xf32>
    %100 = arith.addf %94, %99 : vector<256x8xf32>
    %c1_123 = arith.constant 1 : index
    %c1_124 = arith.constant 1 : index
    %c0_125 = arith.constant 0 : index
    %101 = vector.load %arg9[%c1_123, %c1_124, %c0_125] : memref<18x18x8xf32, #tpu.memory_space<vmem>>, vector<16x16x8xf32>
    %102 = vector.shape_cast %101 : vector<16x16x8xf32> to vector<256x8xf32>
    %c1_126 = arith.constant 1 : index
    %c1_127 = arith.constant 1 : index
    %c0_128 = arith.constant 0 : index
    %c0_129 = arith.constant 0 : index
    %103 = vector.load %arg5[%c1_126, %c1_127, %c0_128, %c0_129] : memref<3x3x8x8xf32, #tpu.memory_space<vmem>>, vector<1x1x8x8xf32>
    %104 = vector.shape_cast %103 : vector<1x1x8x8xf32> to vector<8x8xf32>
    %cst_130 = arith.constant dense<0.000000e+00> : vector<256x8xf32>
    %105 = tpu.matmul %102, %104, %cst_130 {dimension_numbers = #tpu.dot_dimension_numbers<[1], [0], [0], [1], [0, 0, 1, 1], [], []>} : vector<256x8xf32>, vector<8x8xf32>, vector<256x8xf32> -> vector<256x8xf32>
    %106 = arith.addf %100, %105 : vector<256x8xf32>
    %c1_131 = arith.constant 1 : index
    %c2_132 = arith.constant 2 : index
    %c0_133 = arith.constant 0 : index
    %107 = vector.load %arg9[%c1_131, %c2_132, %c0_133] : memref<18x18x8xf32, #tpu.memory_space<vmem>>, vector<16x16x8xf32>
    %108 = vector.shape_cast %107 : vector<16x16x8xf32> to vector<256x8xf32>
    %c1_134 = arith.constant 1 : index
    %c2_135 = arith.constant 2 : index
    %c0_136 = arith.constant 0 : index
    %c0_137 = arith.constant 0 : index
    %109 = vector.load %arg5[%c1_134, %c2_135, %c0_136, %c0_137] : memref<3x3x8x8xf32, #tpu.memory_space<vmem>>, vector<1x1x8x8xf32>
    %110 = vector.shape_cast %109 : vector<1x1x8x8xf32> to vector<8x8xf32>
    %cst_138 = arith.constant dense<0.000000e+00> : vector<256x8xf32>
    %111 = tpu.matmul %108, %110, %cst_138 {dimension_numbers = #tpu.dot_dimension_numbers<[1], [0], [0], [1], [0, 0, 1, 1], [], []>} : vector<256x8xf32>, vector<8x8xf32>, vector<256x8xf32> -> vector<256x8xf32>
    %112 = arith.addf %106, %111 : vector<256x8xf32>
    %c2_139 = arith.constant 2 : index
    %c0_140 = arith.constant 0 : index
    %c0_141 = arith.constant 0 : index
    %113 = vector.load %arg9[%c2_139, %c0_140, %c0_141] : memref<18x18x8xf32, #tpu.memory_space<vmem>>, vector<16x16x8xf32>
    %114 = vector.shape_cast %113 : vector<16x16x8xf32> to vector<256x8xf32>
    %c2_142 = arith.constant 2 : index
    %c0_143 = arith.constant 0 : index
    %c0_144 = arith.constant 0 : index
    %c0_145 = arith.constant 0 : index
    %115 = vector.load %arg5[%c2_142, %c0_143, %c0_144, %c0_145] : memref<3x3x8x8xf32, #tpu.memory_space<vmem>>, vector<1x1x8x8xf32>
    %116 = vector.shape_cast %115 : vector<1x1x8x8xf32> to vector<8x8xf32>
    %cst_146 = arith.constant dense<0.000000e+00> : vector<256x8xf32>
    %117 = tpu.matmul %114, %116, %cst_146 {dimension_numbers = #tpu.dot_dimension_numbers<[1], [0], [0], [1], [0, 0, 1, 1], [], []>} : vector<256x8xf32>, vector<8x8xf32>, vector<256x8xf32> -> vector<256x8xf32>
    %118 = arith.addf %112, %117 : vector<256x8xf32>
    %c2_147 = arith.constant 2 : index
    %c1_148 = arith.constant 1 : index
    %c0_149 = arith.constant 0 : index
    %119 = vector.load %arg9[%c2_147, %c1_148, %c0_149] : memref<18x18x8xf32, #tpu.memory_space<vmem>>, vector<16x16x8xf32>
    %120 = vector.shape_cast %119 : vector<16x16x8xf32> to vector<256x8xf32>
    %c2_150 = arith.constant 2 : index
    %c1_151 = arith.constant 1 : index
    %c0_152 = arith.constant 0 : index
    %c0_153 = arith.constant 0 : index
    %121 = vector.load %arg5[%c2_150, %c1_151, %c0_152, %c0_153] : memref<3x3x8x8xf32, #tpu.memory_space<vmem>>, vector<1x1x8x8xf32>
    %122 = vector.shape_cast %121 : vector<1x1x8x8xf32> to vector<8x8xf32>
    %cst_154 = arith.constant dense<0.000000e+00> : vector<256x8xf32>
    %123 = tpu.matmul %120, %122, %cst_154 {dimension_numbers = #tpu.dot_dimension_numbers<[1], [0], [0], [1], [0, 0, 1, 1], [], []>} : vector<256x8xf32>, vector<8x8xf32>, vector<256x8xf32> -> vector<256x8xf32>
    %124 = arith.addf %118, %123 : vector<256x8xf32>
    %c2_155 = arith.constant 2 : index
    %c2_156 = arith.constant 2 : index
    %c0_157 = arith.constant 0 : index
    %125 = vector.load %arg9[%c2_155, %c2_156, %c0_157] : memref<18x18x8xf32, #tpu.memory_space<vmem>>, vector<16x16x8xf32>
    %126 = vector.shape_cast %125 : vector<16x16x8xf32> to vector<256x8xf32>
    %c2_158 = arith.constant 2 : index
    %c2_159 = arith.constant 2 : index
    %c0_160 = arith.constant 0 : index
    %c0_161 = arith.constant 0 : index
    %127 = vector.load %arg5[%c2_158, %c2_159, %c0_160, %c0_161] : memref<3x3x8x8xf32, #tpu.memory_space<vmem>>, vector<1x1x8x8xf32>
    %128 = vector.shape_cast %127 : vector<1x1x8x8xf32> to vector<8x8xf32>
    %cst_162 = arith.constant dense<0.000000e+00> : vector<256x8xf32>
    %129 = tpu.matmul %126, %128, %cst_162 {dimension_numbers = #tpu.dot_dimension_numbers<[1], [0], [0], [1], [0, 0, 1, 1], [], []>} : vector<256x8xf32>, vector<8x8xf32>, vector<256x8xf32> -> vector<256x8xf32>
    %130 = arith.addf %124, %129 : vector<256x8xf32>
    %c0_163 = arith.constant 0 : index
    %c0_164 = arith.constant 0 : index
    %131 = vector.load %arg6[%c0_163, %c0_164] : memref<1x8xf32, #tpu.memory_space<vmem>>, vector<1x8xf32>
    %132 = vector.broadcast %131 : vector<1x8xf32> to vector<256x8xf32>
    %133 = arith.mulf %130, %132 : vector<256x8xf32>
    %c0_165 = arith.constant 0 : index
    %c0_166 = arith.constant 0 : index
    %134 = vector.load %arg7[%c0_165, %c0_166] : memref<1x8xf32, #tpu.memory_space<vmem>>, vector<1x8xf32>
    %135 = vector.broadcast %134 : vector<1x8xf32> to vector<256x8xf32>
    %136 = arith.addf %133, %135 : vector<256x8xf32>
    %cst_167 = arith.constant 0.000000e+00 : f32
    %137 = vector.broadcast %cst_167 : f32 to vector<256x8xf32>
    %138 = arith.maximumf %136, %137 : vector<256x8xf32>
    %139 = vector.shape_cast %138 : vector<256x8xf32> to vector<16x16x8xf32>
    %c0_168 = arith.constant 0 : index
    %c0_169 = arith.constant 0 : index
    %c0_170 = arith.constant 0 : index
    %c0_171 = arith.constant 0 : index
    %140 = vector.load %arg8[%c0_168, %c0_169, %c0_170, %c0_171] : memref<1x16x16x8xf32, #tpu.memory_space<vmem>>, vector<1x16x16x8xf32>
    %141 = vector.shape_cast %140 : vector<1x16x16x8xf32> to vector<16x16x8xf32>
    %142 = vector.shape_cast %139 : vector<16x16x8xf32> to vector<1x16x16x8xf32>
    tpu.vector_store %arg8[%c0_168, %c0_169, %c0_170, %c0_171], %142 {strides = array<i32>} : memref<1x16x16x8xf32, #tpu.memory_space<vmem>>, vector<1x16x16x8xf32>,
    return
  }
  func.func @transform_0(%arg0: i32) -> (i32, i32, i32, i32) {
    %c0_i32 = arith.constant 0 : i32
    %c0_i32_0 = arith.constant 0 : i32
    %c0_i32_1 = arith.constant 0 : i32
    %c0_i32_2 = arith.constant 0 : i32
    return %arg0, %c0_i32, %c0_i32_0, %c0_i32_1 : i32, i32, i32, i32
  }
  func.func @transform_1(%arg0: i32) -> (i32, i32, i32, i32) {
    %c0_i32 = arith.constant 0 : i32
    %c0_i32_0 = arith.constant 0 : i32
    %c0_i32_1 = arith.constant 0 : i32
    %c0_i32_2 = arith.constant 0 : i32
    %c0_i32_3 = arith.constant 0 : i32
    return %c0_i32, %c0_i32_0, %c0_i32_1, %c0_i32_2 : i32, i32, i32, i32
  }
  func.func @transform_2(%arg0: i32) -> (i32, i32) {
    %c0_i32 = arith.constant 0 : i32
    %c0_i32_0 = arith.constant 0 : i32
    %c0_i32_1 = arith.constant 0 : i32
    return %c0_i32, %c0_i32_0 : i32, i32
  }
  func.func @transform_3(%arg0: i32) -> (i32, i32) {
    %c0_i32 = arith.constant 0 : i32
    %c0_i32_0 = arith.constant 0 : i32
    %c0_i32_1 = arith.constant 0 : i32
    return %c0_i32, %c0_i32_0 : i32, i32
  }
  func.func @transform_4(%arg0: i32) -> (i32, i32, i32, i32) {
    %c0_i32 = arith.constant 0 : i32
    %c0_i32_0 = arith.constant 0 : i32
    %c0_i32_1 = arith.constant 0 : i32
    %c0_i32_2 = arith.constant 0 : i32
    %c0_i32_3 = arith.constant 0 : i32
    return %c0_i32, %c0_i32_0, %c0_i32_1, %c0_i32_2 : i32, i32, i32, i32
  }
  func.func @transform_5(%arg0: i32) -> (i32, i32) {
    %c0_i32 = arith.constant 0 : i32
    %c0_i32_0 = arith.constant 0 : i32
    %c0_i32_1 = arith.constant 0 : i32
    return %c0_i32, %c0_i32_0 : i32, i32
  }
  func.func @transform_6(%arg0: i32) -> (i32, i32) {
    %c0_i32 = arith.constant 0 : i32
    %c0_i32_0 = arith.constant 0 : i32
    %c0_i32_1 = arith.constant 0 : i32
    return %c0_i32, %c0_i32_0 : i32, i32
  }
  func.func @transform_7(%arg0: i32) -> (i32, i32, i32, i32) {
    %c0_i32 = arith.constant 0 : i32
    %c0_i32_0 = arith.constant 0 : i32
    %c0_i32_1 = arith.constant 0 : i32
    %c0_i32_2 = arith.constant 0 : i32
    return %arg0, %c0_i32, %c0_i32_0, %c0_i32_1 : i32, i32, i32, i32
  }
}

</mosaic_0001>

<llo_original>
// kernel: conv_block_forward.1
$region0: #{conv_block_forward.1}
  #allocation0 [shape = 'u32[]', space=smem, size = 0x4, offset = 0x4, fixed_abs, tag = 'smem constant byte address 0x4 - core index']
  #allocation1 [shape = 'u32[144,128]{1,0:T(1,128)}', space=vmem, size = 0x12000, scoped, tag = 'internal scratch']
  #allocation2 [shape = 'f32[18,18,8]{2,1,0:T(8,128)}', space=vmem, size = 0x36000, scoped, tag = 'scratch operand']
  %s0 = inlined_call_operand.vmem [shape: f32[2,18,18,4], index: 0, kind: input, shape index: {}]
  %s1 = inlined_call_operand.vmem [shape: f32[3,3,4,8], index: 1, kind: input, shape index: {}]
  %s2 = inlined_call_operand.vmem [shape: f32[1,8], index: 2, kind: input, shape index: {}]
  %s3 = inlined_call_operand.vmem [shape: f32[1,8], index: 3, kind: input, shape index: {}]
  %s4 = inlined_call_operand.vmem [shape: f32[3,3,8,8], index: 4, kind: input, shape index: {}]
  %s5 = inlined_call_operand.vmem [shape: f32[1,8], index: 5, kind: input, shape index: {}]
  %s6 = inlined_call_operand.vmem [shape: f32[1,8], index: 6, kind: input, shape index: {}]
  %s7 = inlined_call_operand.vmem [shape: f32[2,16,16,8], index: 7, kind: output, shape index: {}]
  %s8 = sld [smem:[#allocation0]]
  $region61: #{conv_block_forward.1} parent=0
    _
  %s10 = ssub.s32 1, %s8
  %s11 = scalar_select 0, %s10, %s8
  loop: start=0, step=1, limit=4
  $region2: #{conv_block_forward.1} parent=0 // loop_pre_header
    _
  $region3: #{conv_block_forward.1} parent=0 // loop_header
    %s13 = sphi 0, %s17
    %p14 = scmp.ge.s32.totalorder %s13, 4
    %s23 = sphi 0, %s25
    %s26 = sphi 0, %s23
    %s27 = sphi 0, %s26
    %s43 = sphi 0, %s27
    %s47 = sphi 0, %s47
    %s49 = sphi 0, %s47
    %s50 = sphi 0, %s49
    %s64 = sphi 0, %s50
    %s68 = sphi 0, %s68
    %s70 = sphi 0, %s68
    %s71 = sphi 0, %s70
    %s85 = sphi 0, %s71
    %s89 = sphi 0, %s89
    %s91 = sphi 0, %s89
    %s92 = sphi 0, %s91
    %s106 = sphi 0, %s92
    %s110 = sphi 0, %s110
    %s112 = sphi 0, %s110
    %s113 = sphi 0, %s112
    %s127 = sphi 0, %s113
    %s131 = sphi 0, %s131
    %s133 = sphi 0, %s131
    %s134 = sphi 0, %s133
    %s148 = sphi 0, %s134
    %s152 = sphi 0, %s152
    %s154 = sphi 0, %s152
    %s155 = sphi 0, %s154
    %s169 = sphi 0, %s155
    %s175 = sphi 0, %s177
    %s178 = sphi 0, %s175
    %s179 = sphi 0, %s178
    %s195 = sphi 0, %s179
  $region4: #{conv_block_forward.1} parent=0 // loop_header_branch
    %16 = sbr.rel (%p14) target = $region8
  $region5: #{conv_block_forward.1} parent=0 // loop_body
    %s18 = ssub.s32 %s13, 1
    %s19 = ssub.s32 %s13, 2
    %s20 = sadd.s32 %s13, 1
    %s21 = ssub.s32 %s13, %s20
    %p22 = scmp.eq.s32.totalorder %s21, 0
    %s24 = sadd.s32 %s23, 1
    %s25 = scalar_select %p22, %s23, %s24
    %p28 = pneg %p22
    %p29 = scmp.eq.s32.totalorder %s13, 1
    %p30 = por %p28, %p29
    %p31 = scmp.ne.s32.totalorder %s23, %s26
    %p32 = scmp.eq.s32.totalorder %s13, 0
    %p33 = por %p31, %p32
    %p34 = scmp.ne.s32.totalorder %s23, %s26
    %p35 = scmp.eq.s32.totalorder %s18, 1
    %p36 = por %p34, %p35
    %p37 = scmp.ne.s32.totalorder %s26, %s27
    %p38 = scmp.eq.s32.totalorder %s18, 0
    %p39 = por %p37, %p38
    %p40 = scmp.ne.s32.totalorder %s26, %s27
    %p41 = scmp.eq.s32.totalorder %s19, 1
    %p42 = por %p40, %p41
    %p44 = scmp.ne.s32.totalorder %s27, %s43
    %p45 = scmp.eq.s32.totalorder %s19, 0
    %p46 = por %p44, %p45
    %s48 = sadd.s32 %s47, 1
    %p51 = scmp.eq.s32.totalorder %s13, 1
    %p52 = scmp.ne.s32.totalorder %s47, %s49
    %p53 = scmp.eq.s32.totalorder %s13, 0
    %p54 = por %p52, %p53
    %p55 = scmp.ne.s32.totalorder %s47, %s49
    %p56 = scmp.eq.s32.totalorder %s18, 1
    %p57 = por %p55, %p56
    %p58 = scmp.ne.s32.totalorder %s49, %s50
    %p59 = scmp.eq.s32.totalorder %s18, 0
    %p60 = por %p58, %p59
    %p61 = scmp.ne.s32.totalorder %s49, %s50
    %p62 = scmp.eq.s32.totalorder %s19, 1
    %p63 = por %p61, %p62
    %p65 = scmp.ne.s32.totalorder %s50, %s64
    %p66 = scmp.eq.s32.totalorder %s19, 0
    %p67 = por %p65, %p66
    %s69 = sadd.s32 %s68, 1
    %p72 = scmp.eq.s32.totalorder %s13, 1
    %p73 = scmp.ne.s32.totalorder %s68, %s70
    %p74 = scmp.eq.s32.totalorder %s13, 0
    %p75 = por %p73, %p74
    %p76 = scmp.ne.s32.totalorder %s68, %s70
    %p77 = scmp.eq.s32.totalorder %s18, 1
    %p78 = por %p76, %p77
    %p79 = scmp.ne.s32.totalorder %s70, %s71
    %p80 = scmp.eq.s32.totalorder %s18, 0
    %p81 = por %p79, %p80
    %p82 = scmp.ne.s32.totalorder %s70, %s71
    %p83 = scmp.eq.s32.totalorder %s19, 1
    %p84 = por %p82, %p83
    %p86 = scmp.ne.s32.totalorder %s71, %s85
    %p87 = scmp.eq.s32.totalorder %s19, 0
    %p88 = por %p86, %p87
    %s90 = sadd.s32 %s89, 1
    %p93 = scmp.eq.s32.totalorder %s13, 1
    %p94 = scmp.ne.s32.totalorder %s89, %s91
    %p95 = scmp.eq.s32.totalorder %s13, 0
    %p96 = por %p94, %p95
    %p97 = scmp.ne.s32.totalorder %s89, %s91
    %p98 = scmp.eq.s32.totalorder %s18, 1
    %p99 = por %p97, %p98
    %p100 = scmp.ne.s32.totalorder %s91, %s92
    %p101 = scmp.eq.s32.totalorder %s18, 0
    %p102 = por %p100, %p101
    %p103 = scmp.ne.s32.totalorder %s91, %s92
    %p104 = scmp.eq.s32.totalorder %s19, 1
    %p105 = por %p103, %p104
    %p107 = scmp.ne.s32.totalorder %s92, %s106
    %p108 = scmp.eq.s32.totalorder %s19, 0
    %p109 = por %p107, %p108
    %s111 = sadd.s32 %s110, 1
    %p114 = scmp.eq.s32.totalorder %s13, 1
    %p115 = scmp.ne.s32.totalorder %s110, %s112
    %p116 = scmp.eq.s32.totalorder %s13, 0
    %p117 = por %p115, %p116
    %p118 = scmp.ne.s32.totalorder %s110, %s112
    %p119 = scmp.eq.s32.totalorder %s18, 1
    %p120 = por %p118, %p119
    %p121 = scmp.ne.s32.totalorder %s112, %s113
    %p122 = scmp.eq.s32.totalorder %s18, 0
    %p123 = por %p121, %p122
    %p124 = scmp.ne.s32.totalorder %s112, %s113
    %p125 = scmp.eq.s32.totalorder %s19, 1
    %p126 = por %p124, %p125
    %p128 = scmp.ne.s32.totalorder %s113, %s127
    %p129 = scmp.eq.s32.totalorder %s19, 0
    %p130 = por %p128, %p129
    %s132 = sadd.s32 %s131, 1
    %p135 = scmp.eq.s32.totalorder %s13, 1
    %p136 = scmp.ne.s32.totalorder %s131, %s133
    %p137 = scmp.eq.s32.totalorder %s13, 0
    %p138 = por %p136, %p137
    %p139 = scmp.ne.s32.totalorder %s131, %s133
    %p140 = scmp.eq.s32.totalorder %s18, 1
    %p141 = por %p139, %p140
    %p142 = scmp.ne.s32.totalorder %s133, %s134
    %p143 = scmp.eq.s32.totalorder %s18, 0
    %p144 = por %p142, %p143
    %p145 = scmp.ne.s32.totalorder %s133, %s134
    %p146 = scmp.eq.s32.totalorder %s19, 1
    %p147 = por %p145, %p146
    %p149 = scmp.ne.s32.totalorder %s134, %s148
    %p150 = scmp.eq.s32.totalorder %s19, 0
    %p151 = por %p149, %p150
    %s153 = sadd.s32 %s152, 1
    %p156 = scmp.eq.s32.totalorder %s13, 1
    %p157 = scmp.ne.s32.totalorder %s152, %s154
    %p158 = scmp.eq.s32.totalorder %s13, 0
    %p159 = por %p157, %p158
    %p160 = scmp.ne.s32.totalorder %s152, %s154
    %p161 = scmp.eq.s32.totalorder %s18, 1
    %p162 = por %p160, %p161
    %p163 = scmp.ne.s32.totalorder %s154, %s155
    %p164 = scmp.eq.s32.totalorder %s18, 0
    %p165 = por %p163, %p164
    %p166 = scmp.ne.s32.totalorder %s154, %s155
    %p167 = scmp.eq.s32.totalorder %s19, 1
    %p168 = por %p166, %p167
    %p170 = scmp.ne.s32.totalorder %s155, %s169
    %p171 = scmp.eq.s32.totalorder %s19, 0
    %p172 = por %p170, %p171
    %s173 = ssub.s32 %s13, %s20
    %p174 = scmp.eq.s32.totalorder %s173, 0
    %s176 = sadd.s32 %s175, 1
    %s177 = scalar_select %p174, %s175, %s176
    %p180 = pneg %p174
    %p181 = scmp.eq.s32.totalorder %s13, 1
    %p182 = por %p180, %p181
    %p183 = scmp.ne.s32.totalorder %s175, %s178
    %p184 = scmp.eq.s32.totalorder %s13, 0
    %p185 = por %p183, %p184
    %p186 = scmp.ne.s32.totalorder %s175, %s178
    %p187 = scmp.eq.s32.totalorder %s18, 1
    %p188 = por %p186, %p187
    %p189 = scmp.ne.s32.totalorder %s178, %s179
    %p190 = scmp.eq.s32.totalorder %s18, 0
    %p191 = por %p189, %p190
    %p192 = scmp.ne.s32.totalorder %s178, %s179
    %p193 = scmp.eq.s32.totalorder %s19, 1
    %p194 = por %p192, %p193
    %p196 = scmp.ne.s32.totalorder %s179, %s195
    %p197 = scmp.eq.s32.totalorder %s19, 0
    %p198 = por %p196, %p197
    %p199 = scmp.le.s32.totalorder 1, %s13
    %p200 = scmp.lt.s32.totalorder %s13, 3
    %p201 = pnand %p199, %p200
    %p202 = pneg %p201
    // Predicated region
    $region9: #{conv_block_forward.1} parent=5 // pred_check
      _
    $region10: #{conv_block_forward.1} parent=5 // pred_check_branch
      %204 = sbr.rel (%p201) target = $region12
    $region11: #{conv_block_forward.1} parent=5 // pred_region
      %s205 = ssub.s32 %s13, 1
      // Predicated region
      $region13: #{conv_block_forward.1} parent=11 // pred_check
        %p206 = pneg %p60
      $region14: #{conv_block_forward.1} parent=11 // pred_check_branch
        %208 = sbr.rel (%p206) target = $region16
      $region15: #{conv_block_forward.1} parent=11 // pred_region
        _
      $region16: #{conv_block_forward.1} parent=11 // pred_fallthru
        _
      // Predicated region
      $region17: #{conv_block_forward.1} parent=11 // pred_check
        %p209 = pneg %p81
      $region18: #{conv_block_forward.1} parent=11 // pred_check_branch
        %211 = sbr.rel (%p209) target = $region20
      $region19: #{conv_block_forward.1} parent=11 // pred_region
        _
      $region20: #{conv_block_forward.1} parent=11 // pred_fallthru
        _
      // Predicated region
      $region21: #{conv_block_forward.1} parent=11 // pred_check
        %p212 = pneg %p102
      $region22: #{conv_block_forward.1} parent=11 // pred_check_branch
        %214 = sbr.rel (%p212) target = $region24
      $region23: #{conv_block_forward.1} parent=11 // pred_region
        _
      $region24: #{conv_block_forward.1} parent=11 // pred_fallthru
        _
      // Predicated region
      $region25: #{conv_block_forward.1} parent=11 // pred_check
        %p215 = pneg %p123
      $region26: #{conv_block_forward.1} parent=11 // pred_check_branch
        %217 = sbr.rel (%p215) target = $region28
      $region27: #{conv_block_forward.1} parent=11 // pred_region
        _
      $region28: #{conv_block_forward.1} parent=11 // pred_fallthru
        _
      // Predicated region
      $region29: #{conv_block_forward.1} parent=11 // pred_check
        %p218 = pneg %p144
      $region30: #{conv_block_forward.1} parent=11 // pred_check_branch
        %220 = sbr.rel (%p218) target = $region32
      $region31: #{conv_block_forward.1} parent=11 // pred_region
        _
      $region32: #{conv_block_forward.1} parent=11 // pred_fallthru
        _
      // Predicated region
      $region33: #{conv_block_forward.1} parent=11 // pred_check
        %p221 = pneg %p165
      $region34: #{conv_block_forward.1} parent=11 // pred_check_branch
        %223 = sbr.rel (%p221) target = $region36
      $region35: #{conv_block_forward.1} parent=11 // pred_region
        _
      $region36: #{conv_block_forward.1} parent=11 // pred_fallthru
        _
    $region12: #{conv_block_forward.1} parent=5 // pred_fallthru
      _
    %p224 = scmp.lt.s32.totalorder %s13, 2
    // Predicated region
    $region37: #{conv_block_forward.1} parent=5 // pred_check
      %p225 = pneg %p224
    $region38: #{conv_block_forward.1} parent=5 // pred_check_branch
      %227 = sbr.rel (%p225) target = $region40
    $region39: #{conv_block_forward.1} parent=5 // pred_region
      // Predicated region
      $region41: #{conv_block_forward.1} parent=39 // pred_check
        %p228 = pneg %p33
      $region42: #{conv_block_forward.1} parent=39 // pred_check_branch
        %230 = sbr.rel (%p228) target = $region44
      $region43: #{conv_block_forward.1} parent=39 // pred_region
        %p231 = scmp.lt.s32.totalorder %s13, 1
        %s232 = scalar_select %p231, %s13, 1
        %s233 = smul.addr %s232, 54
        %s234 = smul.addr %s233, 8
        %s235 = scalar_lea.vmem %s0, %s234
      $region44: #{conv_block_forward.1} parent=39 // pred_fallthru
        _
    $region40: #{conv_block_forward.1} parent=5 // pred_fallthru
      _
    %p236 = scmp.le.s32.totalorder 1, %s13
    %p237 = scmp.lt.s32.totalorder %s13, 3
    %p238 = pnand %p236, %p237
    %p239 = pneg %p238
    // Predicated region
    $region45: #{conv_block_forward.1} parent=5 // pred_check
      _
    $region46: #{conv_block_forward.1} parent=5 // pred_check_branch
      %241 = sbr.rel (%p238) target = $region48
    $region47: #{conv_block_forward.1} parent=5 // pred_region
      %s242 = ssub.s32 %s13, 1
      %p243 = scmp.lt.s32.totalorder %s18, 1
      %s244 = scalar_select %p243, %s18, 1
      %s245 = smul.addr %s244, 54
      %s246 = smul.addr %s245, 8
      %s247 = scalar_lea.vmem %s0, %s246
      %p248 = pneg %p39
      %p249 = pneg %p36
      %p250 = pneg %p60
      %p251 = pneg %p57
      %p252 = pneg %p81
      %p253 = pneg %p78
      %p254 = pneg %p102
      %p255 = pneg %p99
      %p256 = pneg %p123
      %p257 = pneg %p120
      %p258 = pneg %p144
      %p259 = pneg %p141
      %p260 = pneg %p165
      %p261 = pneg %p162
      %p262 = pneg %p191
      %p263 = pneg %p188
      %p264 = scmp.lt.s32.totalorder %s18, 1
      %s265 = scalar_select %p264, %s18, 1
      %s266 = smul.addr %s265, 32
      %s267 = smul.addr %s266, 8
      %s268 = scalar_lea.vmem %s7, %s267
      %p269 = scmp.lt.s32.totalorder %s18, 1
      %s270 = scalar_select %p269, %s18, 1
      %s271 = smul.addr %s270, 54
      %s272 = smul.addr %s271, 8
      %s273 = scalar_lea.vmem %s0, %s272
      %p274 = scmp.lt.s32.totalorder %s18, 1
      %s275 = scalar_select %p274, %s18, 1
      %s276 = smul.addr %s275, 32
      %s277 = smul.addr %s276, 8
      %s278 = scalar_lea.vmem %s7, %s277
      %v279 = vld [vmem:[%s273] sm:$0xff]
      %v280 = vld [vmem:[%s273 + $0x8] sm:$0xff]
      %v281 = vld [vmem:[%s273 + $0x18] sm:$0xff]
      %v282 = vld [vmem:[%s273 + $0x20] sm:$0xff]
      %v283 = vld [vmem:[%s273 + $0x30] sm:$0xff]
      %v284 = vld [vmem:[%s273 + $0x38] sm:$0xff]
      %v285 = vld [vmem:[%s273 + $0x48] sm:$0xff]
      %v286 = vld [vmem:[%s273 + $0x50] sm:$0xff]
      %v287 = vld [vmem:[%s273 + $0x60] sm:$0xff]
      %v288 = vld [vmem:[%s273 + $0x68] sm:$0xff]
      %v289 = vld [vmem:[%s273 + $0x78] sm:$0xff]
      %v290 = vld [vmem:[%s273 + $0x80] sm:$0xff]
      %v291 = vld [vmem:[%s273 + $0x90] sm:$0xff]
      %v292 = vld [vmem:[%s273 + $0x98] sm:$0xff]
      %v293 = vld [vmem:[%s273 + $0xa8] sm:$0xff]
      %v294 = vld [vmem:[%s273 + $0xb0] sm:$0xff]
      %v295 = vld [vmem:[%s273 + $0xc0] sm:$0xff]
      %v296 = vld [vmem:[%s273 + $0xc8] sm:$0xff]
      %v297 = vld [vmem:[%s273 + $0xd8] sm:$0xff]
      %v298 = vld [vmem:[%s273 + $0xe0] sm:$0xff]
      %v299 = vld [vmem:[%s273 + $0xf0] sm:$0xff]
      %v300 = vld [vmem:[%s273 + $0xf8] sm:$0xff]
      %v301 = vld [vmem:[%s273 + $0x108] sm:$0xff]
      %v302 = vld [vmem:[%s273 + $0x110] sm:$0xff]
      %v303 = vld [vmem:[%s273 + $0x120] sm:$0xff]
      %v304 = vld [vmem:[%s273 + $0x128] sm:$0xff]
      %v305 = vld [vmem:[%s273 + $0x138] sm:$0xff]
      %v306 = vld [vmem:[%s273 + $0x140] sm:$0xff]
      %v307 = vld [vmem:[%s273 + $0x150] sm:$0xff]
      %v308 = vld [vmem:[%s273 + $0x158] sm:$0xff]
      %v309 = vld [vmem:[%s273 + $0x168] sm:$0xff]
      %v310 = vld [vmem:[%s273 + $0x170] sm:$0xff]
      %v311 = vld [vmem:[%s1] sm:$0xf]
      %v312 = vld [vmem:[%s273 + $0x1] sm:$0xff]
      %v313 = vld [vmem:[%s273 + $0x9] sm:$0xff]
      %v314 = vld [vmem:[%s273 + $0x19] sm:$0xff]
      %v315 = vld [vmem:[%s273 + $0x21] sm:$0xff]
      %v316 = vld [vmem:[%s273 + $0x31] sm:$0xff]
      %v317 = vld [vmem:[%s273 + $0x39] sm:$0xff]
      %v318 = vld [vmem:[%s273 + $0x49] sm:$0xff]
      %v319 = vld [vmem:[%s273 + $0x51] sm:$0xff]
      %v320 = vld [vmem:[%s273 + $0x61] sm:$0xff]
      %v321 = vld [vmem:[%s273 + $0x69] sm:$0xff]
      %v322 = vld [vmem:[%s273 + $0x79] sm:$0xff]
      %v323 = vld [vmem:[%s273 + $0x81] sm:$0xff]
      %v324 = vld [vmem:[%s273 + $0x91] sm:$0xff]
      %v325 = vld [vmem:[%s273 + $0x99] sm:$0xff]
      %v326 = vld [vmem:[%s273 + $0xa9] sm:$0xff]
      %v327 = vld [vmem:[%s273 + $0xb1] sm:$0xff]
      %v328 = vld [vmem:[%s273 + $0xc1] sm:$0xff]
      %v329 = vld [vmem:[%s273 + $0xc9] sm:$0xff]
      %v330 = vld [vmem:[%s273 + $0xd9] sm:$0xff]
      %v331 = vld [vmem:[%s273 + $0xe1] sm:$0xff]
      %v332 = vld [vmem:[%s273 + $0xf1] sm:$0xff]
      %v333 = vld [vmem:[%s273 + $0xf9] sm:$0xff]
      %v334 = vld [vmem:[%s273 + $0x109] sm:$0xff]
      %v335 = vld [vmem:[%s273 + $0x111] sm:$0xff]
      %v336 = vld [vmem:[%s273 + $0x121] sm:$0xff]
      %v337 = vld [vmem:[%s273 + $0x129] sm:$0xff]
      %v338 = vld [vmem:[%s273 + $0x139] sm:$0xff]
      %v339 = vld [vmem:[%s273 + $0x141] sm:$0xff]
      %v340 = vld [vmem:[%s273 + $0x151] sm:$0xff]
      %v341 = vld [vmem:[%s273 + $0x159] sm:$0xff]
      %v342 = vld [vmem:[%s273 + $0x169] sm:$0xff]
      %v343 = vld [vmem:[%s273 + $0x171] sm:$0xff]
      %s344 = scalar_lea.vmem %s1, 4
      %v345 = vld [vmem:[%s344] sm:$0xf]
      %vm346 = vcmask 31744
      %v348 = vsel %vm346, %v312, 0
      %v351 = vsel %vm346, %v313, 0
      %v354 = vsel %vm346, %v314, 0
      %v357 = vsel %vm346, %v315, 0
      %v360 = vsel %vm346, %v316, 0
      %v363 = vsel %vm346, %v317, 0
      %v366 = vsel %vm346, %v318, 0
      %v369 = vsel %vm346, %v319, 0
      %v372 = vsel %vm346, %v320, 0
      %v375 = vsel %vm346, %v321, 0
      %v378 = vsel %vm346, %v322, 0
      %v381 = vsel %vm346, %v323, 0
      %v384 = vsel %vm346, %v324, 0
      %v387 = vsel %vm346, %v325, 0
      %v390 = vsel %vm346, %v326, 0
      %v393 = vsel %vm346, %v327, 0
      %v396 = vsel %vm346, %v328, 0
      %v399 = vsel %vm346, %v329, 0
      %v402 = vsel %vm346, %v330, 0
      %v405 = vsel %vm346, %v331, 0
      %v408 = vsel %vm346, %v332, 0
      %v411 = vsel %vm346, %v333, 0
      %v414 = vsel %vm346, %v334, 0
      %v417 = vsel %vm346, %v335, 0
      %v420 = vsel %vm346, %v336, 0
      %v423 = vsel %vm346, %v337, 0
      %v426 = vsel %vm346, %v338, 0
      %v429 = vsel %vm346, %v339, 0
      %v432 = vsel %vm346, %v340, 0
      %v435 = vsel %vm346, %v341, 0
      %v438 = vsel %vm346, %v342, 0
      %v441 = vsel %vm346, %v343, 0
      %vm443 = vcmask 1043456
      %v445 = vsel %vm443, %v345, 0
      %447 = vmatprep.subr.mxu0 0.0
      %448 = vmatpush1.msra.mxu0 %v445
      %449 = vmatprep.subr.mxu0 0.0
      %450 = vmatpush1.msra.mxu0 0.0
      %451 = vmatprep.subr.mxu0 0.0
      %452 = vmatpush1.msra.mxu0 0.0
      %453 = vmatprep.subr.mxu0 0.0
      %454 = vmatpush1.msra.mxu0 0.0
      %455 = vmatprep.subr.mxu0 0.0
      %456 = vmatpush1.msra.mxu0 0.0
      %457 = vmatprep.subr.mxu0 0.0
      %458 = vmatpush1.msra.mxu0 0.0
      %459 = vmatprep.subr.mxu0 0.0
      %460 = vmatpush1.msra.mxu0 0.0
      %461 = vmatprep.subr.mxu0 0.0
      %462 = vmatpush1.msra.mxu0 0.0
      %463 = vmatprep.subr.mxu0 0.0
      %464 = vmatpush1.msra.mxu0 0.0
      %465 = vmatprep.subr.mxu0 0.0
      %466 = vmatpush1.msra.mxu0 0.0
      %467 = vmatprep.subr.mxu0 0.0
      %468 = vmatpush1.msra.mxu0 0.0
      %469 = vmatprep.subr.mxu0 0.0
      %470 = vmatpush1.msra.mxu0 0.0
      %471 = vmatprep.subr.mxu0 0.0
      %472 = vmatpush1.msra.mxu0 0.0
      %473 = vmatprep.subr.mxu0 0.0
      %474 = vmatpush1.msra.mxu0 0.0
      %475 = vmatprep.subr.mxu0 0.0
      %476 = vmatpush1.msra.mxu0 0.0
      %477 = vmatprep.subr.mxu0 0.0
      %478 = vmatpush1.msra.mxu0 0.0
      %479 = vmatprep.subr.mxu0 0.0
      %480 = vmatpush1.msra.mxu0 0.0
      %481 = vmatprep.subr.mxu0 0.0
      %482 = vmatpush1.msra.mxu0 0.0
      %483 = vmatprep.subr.mxu0 0.0
      %484 = vmatpush1.msra.mxu0 0.0
      %485 = vmatprep.subr.mxu0 0.0
      %486 = vmatpush1.msra.mxu0 0.0
      %487 = vmatprep.subr.mxu0 0.0
      %488 = vmatpush1.msra.mxu0 0.0
      %489 = vmatprep.subr.mxu0 0.0
      %490 = vmatpush1.msra.mxu0 0.0
      %491 = vmatprep.subr.mxu0 0.0
      %492 = vmatpush1.msra.mxu0 0.0
      %493 = vmatprep.subr.mxu0 0.0
      %494 = vmatpush1.msra.mxu0 0.0
      %495 = vmatprep.subr.mxu0 0.0
      %496 = vmatpush1.msra.mxu0 0.0
      %497 = vmatprep.subr.mxu0 0.0
      %498 = vmatpush1.msra.mxu0 0.0
      %499 = vmatprep.subr.mxu0 0.0
      %500 = vmatpush1.msra.mxu0 0.0
      %501 = vmatprep.subr.mxu0 0.0
      %502 = vmatpush1.msra.mxu0 0.0
      %503 = vmatprep.subr.mxu0 0.0
      %504 = vmatpush1.msra.mxu0 0.0
      %505 = vmatprep.subr.mxu0 0.0
      %506 = vmatpush1.msra.mxu0 0.0
      %507 = vmatprep.subr.mxu0 0.0
      %508 = vmatpush1.msra.mxu0 0.0
      %509 = vmatprep.subr.mxu0 0.0
      %510 = vmatpush1.msra.mxu0 0.0
      %511 = vmatprep.mubr.f32.mxu0 0.0
      %512 = vmatmul.mubr.f32.gmra.mrb[0].mxu0 %v348
      %v513 = vpop.f32.mrb[0].mxu0
      %v514 = vadd.f32 0.0, %v513
      %v515 = vpop.f32.mrb[0].mxu0
      %516 = vmatprep.mubr.f32.mxu0 0.0
      %517 = vmatmul.mubr.f32.gmra.mrb[0].mxu0 %v351
      %v518 = vpop.f32.mrb[0].mxu0
      %v519 = vadd.f32 0.0, %v518
      %v520 = vpop.f32.mrb[0].mxu0
      %521 = vmatprep.mubr.f32.mxu0 0.0
      %522 = vmatmul.mubr.f32.gmra.mrb[0].mxu0 %v354
      %v523 = vpop.f32.mrb[0].mxu0
      %v524 = vadd.f32 0.0, %v523
      %v525 = vpop.f32.mrb[0].mxu0
      %526 = vmatprep.mubr.f32.mxu0 0.0
      %527 = vmatmul.mubr.f32.gmra.mrb[0].mxu0 %v357
      %v528 = vpop.f32.mrb[0].mxu0
      %v529 = vadd.f32 0.0, %v528
      %v530 = vpop.f32.mrb[0].mxu0
      %531 = vmatprep.mubr.f32.mxu0 0.0
      %532 = vmatmul.mubr.f32.gmra.mrb[0].mxu0 %v360
      %v533 = vpop.f32.mrb[0].mxu0
      %v534 = vadd.f32 0.0, %v533
      %v535 = vpop.f32.mrb[0].mxu0
      %536 = vmatprep.mubr.f32.mxu0 0.0
      %537 = vmatmul.mubr.f32.gmra.mrb[0].mxu0 %v363
      %v538 = vpop.f32.mrb[0].mxu0
      %v539 = vadd.f32 0.0, %v538
      %v540 = vpop.f32.mrb[0].mxu0
      %541 = vmatprep.mubr.f32.mxu0 0.0
      %542 = vmatmul.mubr.f32.gmra.mrb[0].mxu0 %v366
      %v543 = vpop.f32.mrb[0].mxu0
      %v544 = vadd.f32 0.0, %v543
      %v545 = vpop.f32.mrb[0].mxu0
      %546 = vmatprep.mubr.f32.mxu0 0.0
      %547 = vmatmul.mubr.f32.gmra.mrb[0].mxu0 %v369
      %v548 = vpop.f32.mrb[0].mxu0
      %v549 = vadd.f32 0.0, %v548
      %v550 = vpop.f32.mrb[0].mxu0
      %551 = vmatprep.mubr.f32.mxu0 0.0
      %552 = vmatmul.mubr.f32.gmra.mrb[0].mxu0 %v372
      %v553 = vpop.f32.mrb[0].mxu0
      %v554 = vadd.f32 0.0, %v553
      %v555 = vpop.f32.mrb[0].mxu0
      %556 = vmatprep.mubr.f32.mxu0 0.0
      %557 = vmatmul.mubr.f32.gmra.mrb[0].mxu0 %v375
      %v558 = vpop.f32.mrb[0].mxu0
      %v559 = vadd.f32 0.0, %v558
      %v560 = vpop.f32.mrb[0].mxu0
      %561 = vmatprep.mubr.f32.mxu0 0.0
      %562 = vmatmul.mubr.f32.gmra.mrb[0].mxu0 %v378
      %v563 = vpop.f32.mrb[0].mxu0
      %v564 = vadd.f32 0.0, %v563
      %v565 = vpop.f32.mrb[0].mxu0
      %566 = vmatprep.mubr.f32.mxu0 0.0
      %567 = vmatmul.mubr.f32.gmra.mrb[0].mxu0 %v381
      %v568 = vpop.f32.mrb[0].mxu0
      %v569 = vadd.f32 0.0, %v568
      %v570 = vpop.f32.mrb[0].mxu0
      %571 = vmatprep.mubr.f32.mxu0 0.0
      %572 = vmatmul.mubr.f32.gmra.mrb[0].mxu0 %v384
      %v573 = vpop.f32.mrb[0].mxu0
      %v574 = vadd.f32 0.0, %v573
      %v575 = vpop.f32.mrb[0].mxu0
      %576 = vmatprep.mubr.f32.mxu0 0.0
      %577 = vmatmul.mubr.f32.gmra.mrb[0].mxu0 %v387
      %v578 = vpop.f32.mrb[0].mxu0
      %v579 = vadd.f32 0.0, %v578
      %v580 = vpop.f32.mrb[0].mxu0
      %581 = vmatprep.mubr.f32.mxu0 0.0
      %582 = vmatmul.mubr.f32.gmra.mrb[0].mxu0 %v390
      %v583 = vpop.f32.mrb[0].mxu0
      %v584 = vadd.f32 0.0, %v583
      %v585 = vpop.f32.mrb[0].mxu0
      %586 = vmatprep.mubr.f32.mxu0 0.0
      %587 = vmatmul.mubr.f32.gmra.mrb[0].mxu0 %v393
      %v588 = vpop.f32.mrb[0].mxu0
      %v589 = vadd.f32 0.0, %v588
      %v590 = vpop.f32.mrb[0].mxu0
      %591 = vmatprep.mubr.f32.mxu0 0.0
      %592 = vmatmul.mubr.f32.gmra.mrb[0].mxu0 %v396
      %v593 = vpop.f32.mrb[0].mxu0
      %v594 = vadd.f32 0.0, %v593
      %v595 = vpop.f32.mrb[0].mxu0
      %596 = vmatprep.mubr.f32.mxu0 0.0
      %597 = vmatmul.mubr.f32.gmra.mrb[0].mxu0 %v399
      %v598 = vpop.f32.mrb[0].mxu0
      %v599 = vadd.f32 0.0, %v598
      %v600 = vpop.f32.mrb[0].mxu0
      %601 = vmatprep.mubr.f32.mxu0 0.0
      %602 = vmatmul.mubr.f32.gmra.mrb[0].mxu0 %v402
      %v603 = vpop.f32.mrb[0].mxu0
      %v604 = vadd.f32 0.0, %v603
      %v605 = vpop.f32.mrb[0].mxu0
      %606 = vmatprep.mubr.f32.mxu0 0.0
      %607 = vmatmul.mubr.f32.gmra.mrb[0].mxu0 %v405
      %v608 = vpop.f32.mrb[0].mxu0
      %v609 = vadd.f32 0.0, %v608
      %v610 = vpop.f32.mrb[0].mxu0
      %611 = vmatprep.mubr.f32.mxu0 0.0
      %612 = vmatmul.mubr.f32.gmra.mrb[0].mxu0 %v408
      %v613 = vpop.f32.mrb[0].mxu0
      %v614 = vadd.f32 0.0, %v613
      %v615 = vpop.f32.mrb[0].mxu0
      %616 = vmatprep.mubr.f32.mxu0 0.0
      %617 = vmatmul.mubr.f32.gmra.mrb[0].mxu0 %v411
      %v618 = vpop.f32.mrb[0].mxu0
      %v619 = vadd.f32 0.0, %v618
      %v620 = vpop.f32.mrb[0].mxu0
      %621 = vmatprep.mubr.f32.mxu0 0.0
      %622 = vmatmul.mubr.f32.gmra.mrb[0].mxu0 %v414
      %v623 = vpop.f32.mrb[0].mxu0
      %v624 = vadd.f32 0.0, %v623
      %v625 = vpop.f32.mrb[0].mxu0
      %626 = vmatprep.mubr.f32.mxu0 0.0
      %627 = vmatmul.mubr.f32.gmra.mrb[0].mxu0 %v417
      %v628 = vpop.f32.mrb[0].mxu0
      %v629 = vadd.f32 0.0, %v628
      %v630 = vpop.f32.mrb[0].mxu0
      %631 = vmatprep.mubr.f32.mxu0 0.0
      %632 = vmatmul.mubr.f32.gmra.mrb[0].mxu0 %v420
      %v633 = vpop.f32.mrb[0].mxu0
      %v634 = vadd.f32 0.0, %v633
      %v635 = vpop.f32.mrb[0].mxu0
      %636 = vmatprep.mubr.f32.mxu0 0.0
      %637 = vmatmul.mubr.f32.gmra.mrb[0].mxu0 %v423
      %v638 = vpop.f32.mrb[0].mxu0
      %v639 = vadd.f32 0.0, %v638
      %v640 = vpop.f32.mrb[0].mxu0
      %641 = vmatprep.mubr.f32.mxu0 0.0
      %642 = vmatmul.mubr.f32.gmra.mrb[0].mxu0 %v426
      %v643 = vpop.f32.mrb[0].mxu0
      %v644 = vadd.f32 0.0, %v643
      %v645 = vpop.f32.mrb[0].mxu0
      %646 = vmatprep.mubr.f32.mxu0 0.0
      %647 = vmatmul.mubr.f32.gmra.mrb[0].mxu0 %v429
      %v648 = vpop.f32.mrb[0].mxu0
      %v649 = vadd.f32 0.0, %v648
      %v650 = vpop.f32.mrb[0].mxu0
      %651 = vmatprep.mubr.f32.mxu0 0.0
      %652 = vmatmul.mubr.f32.gmra.mrb[0].mxu0 %v432
      %v653 = vpop.f32.mrb[0].mxu0
      %v654 = vadd.f32 0.0, %v653
      %v655 = vpop.f32.mrb[0].mxu0
      %656 = vmatprep.mubr.f32.mxu0 0.0
      %657 = vmatmul.mubr.f32.gmra.mrb[0].mxu0 %v435
      %v658 = vpop.f32.mrb[0].mxu0
      %v659 = vadd.f32 0.0, %v658
      %v660 = vpop.f32.mrb[0].mxu0
      %661 = vmatprep.mubr.f32.mxu0 0.0
      %662 = vmatmul.mubr.f32.gmra.mrb[0].mxu0 %v438
      %v663 = vpop.f32.mrb[0].mxu0
      %v664 = vadd.f32 0.0, %v663
      %v665 = vpop.f32.mrb[0].mxu0
      %666 = vmatprep.mubr.f32.mxu0 0.0
      %667 = vmatmul.mubr.f32.gmra.mrb[0].mxu0 %v441
      %v668 = vpop.f32.mrb[0].mxu0
      %v669 = vadd.f32 0.0, %v668
      %v670 = vpop.f32.mrb[0].mxu0
      %671 = vdwg.mxu0
      %v673 = vsel %vm346, %v279, 0
      %v676 = vsel %vm346, %v280, 0
      %v679 = vsel %vm346, %v281, 0
      %v682 = vsel %vm346, %v282, 0
      %v685 = vsel %vm346, %v283, 0
      %v688 = vsel %vm346, %v284, 0
      %v691 = vsel %vm346, %v285, 0
      %v694 = vsel %vm346, %v286, 0
      %v697 = vsel %vm346, %v287, 0
      %v700 = vsel %vm346, %v288, 0
      %v703 = vsel %vm346, %v289, 0
      %v706 = vsel %vm346, %v290, 0
      %v709 = vsel %vm346, %v291, 0
      %v712 = vsel %vm346, %v292, 0
      %v715 = vsel %vm346, %v293, 0
      %v718 = vsel %vm346, %v294, 0
      %v721 = vsel %vm346, %v295, 0
      %v724 = vsel %vm346, %v296, 0
      %v727 = vsel %vm346, %v297, 0
      %v730 = vsel %vm346, %v298, 0
      %v733 = vsel %vm346, %v299, 0
      %v736 = vsel %vm346, %v300, 0
      %v739 = vsel %vm346, %v301, 0
      %v742 = vsel %vm346, %v302, 0
      %v745 = vsel %vm346, %v303, 0
      %v748 = vsel %vm346, %v304, 0
      %v751 = vsel %vm346, %v305, 0
      %v754 = vsel %vm346, %v306, 0
      %v757 = vsel %vm346, %v307, 0
      %v760 = vsel %vm346, %v308, 0
      %v763 = vsel %vm346, %v309, 0
      %v766 = vsel %vm346, %v310, 0
      %v769 = vsel %vm443, %v311, 0
      %771 = vmatprep.subr.mxu0 0.0
      %772 = vmatpush1.msra.mxu0 %v769
      %773 = vmatprep.subr.mxu0 0.0
      %774 = vmatpush1.msra.mxu0 0.0
      %775 = vmatprep.subr.mxu0 0.0
      %776 = vmatpush1.msra.mxu0 0.0
      %777 = vmatprep.subr.mxu0 0.0
      %778 = vmatpush1.msra.mxu0 0.0
      %779 = vmatprep.subr.mxu0 0.0
      %780 = vmatpush1.msra.mxu0 0.0
      %781 = vmatprep.subr.mxu0 0.0
      %782 = vmatpush1.msra.mxu0 0.0
      %783 = vmatprep.subr.mxu0 0.0
      %784 = vmatpush1.msra.mxu0 0.0
      %785 = vmatprep.subr.mxu0 0.0
      %786 = vmatpush1.msra.mxu0 0.0
      %787 = vmatprep.subr.mxu0 0.0
      %788 = vmatpush1.msra.mxu0 0.0
      %789 = vmatprep.subr.mxu0 0.0
      %790 = vmatpush1.msra.mxu0 0.0
      %791 = vmatprep.subr.mxu0 0.0
      %792 = vmatpush1.msra.mxu0 0.0
      %793 = vmatprep.subr.mxu0 0.0
      %794 = vmatpush1.msra.mxu0 0.0
      %795 = vmatprep.subr.mxu0 0.0
      %796 = vmatpush1.msra.mxu0 0.0
      %797 = vmatprep.subr.mxu0 0.0
      %798 = vmatpush1.msra.mxu0 0.0
      %799 = vmatprep.subr.mxu0 0.0
      %800 = vmatpush1.msra.mxu0 0.0
      %801 = vmatprep.subr.mxu0 0.0
      %802 = vmatpush1.msra.mxu0 0.0
      %803 = vmatprep.subr.mxu0 0.0
      %804 = vmatpush1.msra.mxu0 0.0
      %805 = vmatprep.subr.mxu0 0.0
      %806 = vmatpush1.msra.mxu0 0.0
      %807 = vmatprep.subr.mxu0 0.0
      %808 = vmatpush1.msra.mxu0 0.0
      %809 = vmatprep.subr.mxu0 0.0
      %810 = vmatpush1.msra.mxu0 0.0
      %811 = vmatprep.subr.mxu0 0.0
      %812 = vmatpush1.msra.mxu0 0.0
      %813 = vmatprep.subr.mxu0 0.0
      %814 = vmatpush1.msra.mxu0 0.0
      %815 = vmatprep.subr.mxu0 0.0
      %816 = vmatpush1.msra.mxu0 0.0
      %817 = vmatprep.subr.mxu0 0.0
      %818 = vmatpush1.msra.mxu0 0.0
      %819 = vmatprep.subr.mxu0 0.0
      %820 = vmatpush1.msra.mxu0 0.0
      %821 = vmatprep.subr.mxu0 0.0
      %822 = vmatpush1.msra.mxu0 0.0
      %823 = vmatprep.subr.mxu0 0.0
      %824 = vmatpush1.msra.mxu0 0.0
      %825 = vmatprep.subr.mxu0 0.0
      %826 = vmatpush1.msra.mxu0 0.0
      %827 = vmatprep.subr.mxu0 0.0
      %828 = vmatpush1.msra.mxu0 0.0
      %829 = vmatprep.subr.mxu0 0.0
      %830 = vmatpush1.msra.mxu0 0.0
      %831 = vmatprep.subr.mxu0 0.0
      %832 = vmatpush1.msra.mxu0 0.0
      %833 = vmatprep.subr.mxu0 0.0
      %834 = vmatpush1.msra.mxu0 0.0
      %835 = vmatprep.mubr.f32.mxu0 0.0
      %836 = vmatmul.mubr.f32.gmra.mrb[0].mxu0 %v673
      %v837 = vpop.f32.mrb[0].mxu0
      %v838 = vadd.f32 %v514, %v837
      %v839 = vpop.f32.mrb[0].mxu0
      %840 = vmatprep.mubr.f32.mxu0 0.0
      %841 = vmatmul.mubr.f32.gmra.mrb[0].mxu0 %v676
      %v842 = vpop.f32.mrb[0].mxu0
      %v843 = vadd.f32 %v519, %v842
      %v844 = vpop.f32.mrb[0].mxu0
      %845 = vmatprep.mubr.f32.mxu0 0.0
      %846 = vmatmul.mubr.f32.gmra.mrb[0].mxu0 %v679
      %v847 = vpop.f32.mrb[0].mxu0
      %v848 = vadd.f32 %v524, %v847
      %v849 = vpop.f32.mrb[0].mxu0
      %850 = vmatprep.mubr.f32.mxu0 0.0
      %851 = vmatmul.mubr.f32.gmra.mrb[0].mxu0 %v682
      %v852 = vpop.f32.mrb[0].mxu0
      %v853 = vadd.f32 %v529, %v852
      %v854 = vpop.f32.mrb[0].mxu0
      %855 = vmatprep.mubr.f32.mxu0 0.0
      %856 = vmatmul.mubr.f32.gmra.mrb[0].mxu0 %v685
      %v857 = vpop.f32.mrb[0].mxu0
      %v858 = vadd.f32 %v534, %v857
      %v859 = vpop.f32.mrb[0].mxu0
      %860 = vmatprep.mubr.f32.mxu0 0.0
      %861 = vmatmul.mubr.f32.gmra.mrb[0].mxu0 %v688
      %v862 = vpop.f32.mrb[0].mxu0
      %v863 = vadd.f32 %v539, %v862
      %v864 = vpop.f32.mrb[0].mxu0
      %865 = vmatprep.mubr.f32.mxu0 0.0
      %866 = vmatmul.mubr.f32.gmra.mrb[0].mxu0 %v691
      %v867 = vpop.f32.mrb[0].mxu0
      %v868 = vadd.f32 %v544, %v867
      %v869 = vpop.f32.mrb[0].mxu0
      %870 = vmatprep.mubr.f32.mxu0 0.0
      %871 = vmatmul.mubr.f32.gmra.mrb[0].mxu0 %v694
      %v872 = vpop.f32.mrb[0].mxu0
      %v873 = vadd.f32 %v549, %v872
      %v874 = vpop.f32.mrb[0].mxu0
      %875 = vmatprep.mubr.f32.mxu0 0.0
      %876 = vmatmul.mubr.f32.gmra.mrb[0].mxu0 %v697
      %v877 = vpop.f32.mrb[0].mxu0
      %v878 = vadd.f32 %v554, %v877
      %v879 = vpop.f32.mrb[0].mxu0
      %880 = vmatprep.mubr.f32.mxu0 0.0
      %881 = vmatmul.mubr.f32.gmra.mrb[0].mxu0 %v700
      %v882 = vpop.f32.mrb[0].mxu0
      %v883 = vadd.f32 %v559, %v882
      %v884 = vpop.f32.mrb[0].mxu0
      %885 = vmatprep.mubr.f32.mxu0 0.0
      %886 = vmatmul.mubr.f32.gmra.mrb[0].mxu0 %v703
      %v887 = vpop.f32.mrb[0].mxu0
      %v888 = vadd.f32 %v564, %v887
      %v889 = vpop.f32.mrb[0].mxu0
      %890 = vmatprep.mubr.f32.mxu0 0.0
      %891 = vmatmul.mubr.f32.gmra.mrb[0].mxu0 %v706
      %v892 = vpop.f32.mrb[0].mxu0
      %v893 = vadd.f32 %v569, %v892
      %v894 = vpop.f32.mrb[0].mxu0
      %895 = vmatprep.mubr.f32.mxu0 0.0
      %896 = vmatmul.mubr.f32.gmra.mrb[0].mxu0 %v709
      %v897 = vpop.f32.mrb[0].mxu0
      %v898 = vadd.f32 %v574, %v897
      %v899 = vpop.f32.mrb[0].mxu0
      %900 = vmatprep.mubr.f32.mxu0 0.0
      %901 = vmatmul.mubr.f32.gmra.mrb[0].mxu0 %v712
      %v902 = vpop.f32.mrb[0].mxu0
      %v903 = vadd.f32 %v579, %v902
      %v904 = vpop.f32.mrb[0].mxu0
      %905 = vmatprep.mubr.f32.mxu0 0.0
      %906 = vmatmul.mubr.f32.gmra.mrb[0].mxu0 %v715
      %v907 = vpop.f32.mrb[0].mxu0
      %v908 = vadd.f32 %v584, %v907
      %v909 = vpop.f32.mrb[0].mxu0
      %910 = vmatprep.mubr.f32.mxu0 0.0
      %911 = vmatmul.mubr.f32.gmra.mrb[0].mxu0 %v718
      %v912 = vpop.f32.mrb[0].mxu0
      %v913 = vadd.f32 %v589, %v912
      %v914 = vpop.f32.mrb[0].mxu0
      %915 = vmatprep.mubr.f32.mxu0 0.0
      %916 = vmatmul.mubr.f32.gmra.mrb[0].mxu0 %v721
      %v917 = vpop.f32.mrb[0].mxu0
      %v918 = vadd.f32 %v594, %v917
      %v919 = vpop.f32.mrb[0].mxu0
      %920 = vmatprep.mubr.f32.mxu0 0.0
      %921 = vmatmul.mubr.f32.gmra.mrb[0].mxu0 %v724
      %v922 = vpop.f32.mrb[0].mxu0
      %v923 = vadd.f32 %v599, %v922
      %v924 = vpop.f32.mrb[0].mxu0
      %925 = vmatprep.mubr.f32.mxu0 0.0
      %926 = vmatmul.mubr.f32.gmra.mrb[0].mxu0 %v727
      %v927 = vpop.f32.mrb[0].mxu0
      %v928 = vadd.f32 %v604, %v927
      %v929 = vpop.f32.mrb[0].mxu0
      %930 = vmatprep.mubr.f32.mxu0 0.0
      %931 = vmatmul.mubr.f32.gmra.mrb[0].mxu0 %v730
      %v932 = vpop.f32.mrb[0].mxu0
      %v933 = vadd.f32 %v609, %v932
      %v934 = vpop.f32.mrb[0].mxu0
      %935 = vmatprep.mubr.f32.mxu0 0.0
      %936 = vmatmul.mubr.f32.gmra.mrb[0].mxu0 %v733
      %v937 = vpop.f32.mrb[0].mxu0
      %v938 = vadd.f32 %v614, %v937
      %v939 = vpop.f32.mrb[0].mxu0
      %940 = vmatprep.mubr.f32.mxu0 0.0
      %941 = vmatmul.mubr.f32.gmra.mrb[0].mxu0 %v736
      %v942 = vpop.f32.mrb[0].mxu0
      %v943 = vadd.f32 %v619, %v942
      %v944 = vpop.f32.mrb[0].mxu0
      %945 = vmatprep.mubr.f32.mxu0 0.0
      %946 = vmatmul.mubr.f32.gmra.mrb[0].mxu0 %v739
      %v947 = vpop.f32.mrb[0].mxu0
      %v948 = vadd.f32 %v624, %v947
      %v949 = vpop.f32.mrb[0].mxu0
      %950 = vmatprep.mubr.f32.mxu0 0.0
      %951 = vmatmul.mubr.f32.gmra.mrb[0].mxu0 %v742
      %v952 = vpop.f32.mrb[0].mxu0
      %v953 = vadd.f32 %v629, %v952
      %v954 = vpop.f32.mrb[0].mxu0
      %955 = vmatprep.mubr.f32.mxu0 0.0
      %956 = vmatmul.mubr.f32.gmra.mrb[0].mxu0 %v745
      %v957 = vpop.f32.mrb[0].mxu0
      %v958 = vadd.f32 %v634, %v957
      %v959 = vpop.f32.mrb[0].mxu0
      %960 = vmatprep.mubr.f32.mxu0 0.0
      %961 = vmatmul.mubr.f32.gmra.mrb[0].mxu0 %v748
      %v962 = vpop.f32.mrb[0].mxu0
      %v963 = vadd.f32 %v639, %v962
      %v964 = vpop.f32.mrb[0].mxu0
      %965 = vmatprep.mubr.f32.mxu0 0.0
      %966 = vmatmul.mubr.f32.gmra.mrb[0].mxu0 %v751
      %v967 = vpop.f32.mrb[0].mxu0
      %v968 = vadd.f32 %v644, %v967
      %v969 = vpop.f32.mrb[0].mxu0
      %970 = vmatprep.mubr.f32.mxu0 0.0
      %971 = vmatmul.mubr.f32.gmra.mrb[0].mxu0 %v754
      %v972 = vpop.f32.mrb[0].mxu0
      %v973 = vadd.f32 %v649, %v972
      %v974 = vpop.f32.mrb[0].mxu0
      %975 = vmatprep.mubr.f32.mxu0 0.0
      %976 = vmatmul.mubr.f32.gmra.mrb[0].mxu0 %v757
      %v977 = vpop.f32.mrb[0].mxu0
      %v978 = vadd.f32 %v654, %v977
      %v979 = vpop.f32.mrb[0].mxu0
      %980 = vmatprep.mubr.f32.mxu0 0.0
      %981 = vmatmul.mubr.f32.gmra.mrb[0].mxu0 %v760
      %v982 = vpop.f32.mrb[0].mxu0
      %v983 = vadd.f32 %v659, %v982
      %v984 = vpop.f32.mrb[0].mxu0
      %985 = vmatprep.mubr.f32.mxu0 0.0
      %986 = vmatmul.mubr.f32.gmra.mrb[0].mxu0 %v763
      %v987 = vpop.f32.mrb[0].mxu0
      %v988 = vadd.f32 %v664, %v987
      %v989 = vpop.f32.mrb[0].mxu0
      %990 = vmatprep.mubr.f32.mxu0 0.0
      %991 = vmatmul.mubr.f32.gmra.mrb[0].mxu0 %v766
      %v992 = vpop.f32.mrb[0].mxu0
      %v993 = vadd.f32 %v669, %v992
      %v994 = vpop.f32.mrb[0].mxu0
      %995 = vdwg.mxu0
      %v996 = vld [vmem:[%s273 + $0x2] sm:$0xff]
      %v997 = vld [vmem:[%s273 + $0xa] sm:$0xff]
      %v998 = vld [vmem:[%s273 + $0x1a] sm:$0xff]
      %v999 = vld [vmem:[%s273 + $0x22] sm:$0xff]
      %v1000 = vld [vmem:[%s273 + $0x32] sm:$0xff]
      %v1001 = vld [vmem:[%s273 + $0x3a] sm:$0xff]
      %v1002 = vld [vmem:[%s273 + $0x4a] sm:$0xff]
      %v1003 = vld [vmem:[%s273 + $0x52] sm:$0xff]
      %v1004 = vld [vmem:[%s273 + $0x62] sm:$0xff]
      %v1005 = vld [vmem:[%s273 + $0x6a] sm:$0xff]
      %v1006 = vld [vmem:[%s273 + $0x7a] sm:$0xff]
      %v1007 = vld [vmem:[%s273 + $0x82] sm:$0xff]
      %v1008 = vld [vmem:[%s273 + $0x92] sm:$0xff]
      %v1009 = vld [vmem:[%s273 + $0x9a] sm:$0xff]
      %v1010 = vld [vmem:[%s273 + $0xaa] sm:$0xff]
      %v1011 = vld [vmem:[%s273 + $0xb2] sm:$0xff]
      %v1012 = vld [vmem:[%s273 + $0xc2] sm:$0xff]
      %v1013 = vld [vmem:[%s273 + $0xca] sm:$0xff]
      %v1014 = vld [vmem:[%s273 + $0xda] sm:$0xff]
      %v1015 = vld [vmem:[%s273 + $0xe2] sm:$0xff]
      %v1016 = vld [vmem:[%s273 + $0xf2] sm:$0xff]
      %v1017 = vld [vmem:[%s273 + $0xfa] sm:$0xff]
      %v1018 = vld [vmem:[%s273 + $0x10a] sm:$0xff]
      %v1019 = vld [vmem:[%s273 + $0x112] sm:$0xff]
      %v1020 = vld [vmem:[%s273 + $0x122] sm:$0xff]
      %v1021 = vld [vmem:[%s273 + $0x12a] sm:$0xff]
      %v1022 = vld [vmem:[%s273 + $0x13a] sm:$0xff]
      %v1023 = vld [vmem:[%s273 + $0x142] sm:$0xff]
      %v1024 = vld [vmem:[%s273 + $0x152] sm:$0xff]
      %v1025 = vld [vmem:[%s273 + $0x15a] sm:$0xff]
      %v1026 = vld [vmem:[%s273 + $0x16a] sm:$0xff]
      %v1027 = vld [vmem:[%s273 + $0x172] sm:$0xff]
      %s1028 = scalar_lea.vmem %s1, 8
      %v1029 = vld [vmem:[%s1028] sm:$0xf]
      %v1031 = vsel %vm346, %v996, 0
      %v1034 = vsel %vm346, %v997, 0
      %v1037 = vsel %vm346, %v998, 0
      %v1040 = vsel %vm346, %v999, 0
      %v1043 = vsel %vm346, %v1000, 0
      %v1046 = vsel %vm346, %v1001, 0
      %v1049 = vsel %vm346, %v1002, 0
      %v1052 = vsel %vm346, %v1003, 0
      %v1055 = vsel %vm346, %v1004, 0
      %v1058 = vsel %vm346, %v1005, 0
      %v1061 = vsel %vm346, %v1006, 0
      %v1064 = vsel %vm346, %v1007, 0
      %v1067 = vsel %vm346, %v1008, 0
      %v1070 = vsel %vm346, %v1009, 0
      %v1073 = vsel %vm346, %v1010, 0
      %v1076 = vsel %vm346, %v1011, 0
      %v1079 = vsel %vm346, %v1012, 0
      %v1082 = vsel %vm346, %v1013, 0
      %v1085 = vsel %vm346, %v1014, 0
      %v1088 = vsel %vm346, %v1015, 0
      %v1091 = vsel %vm346, %v1016, 0
      %v1094 = vsel %vm346, %v1017, 0
      %v1097 = vsel %vm346, %v1018, 0
      %v1100 = vsel %vm346, %v1019, 0
      %v1103 = vsel %vm346, %v1020, 0
      %v1106 = vsel %vm346, %v1021, 0
      %v1109 = vsel %vm346, %v1022, 0
      %v1112 = vsel %vm346, %v1023, 0
      %v1115 = vsel %vm346, %v1024, 0
      %v1118 = vsel %vm346, %v1025, 0
      %v1121 = vsel %vm346, %v1026, 0
      %v1124 = vsel %vm346, %v1027, 0
      %v1127 = vsel %vm443, %v1029, 0
      %1129 = vmatprep.subr.mxu0 0.0
      %1130 = vmatpush1.msra.mxu0 %v1127
      %1131 = vmatprep.subr.mxu0 0.0
      %1132 = vmatpush1.msra.mxu0 0.0
      %1133 = vmatprep.subr.mxu0 0.0
      %1134 = vmatpush1.msra.mxu0 0.0
      %1135 = vmatprep.subr.mxu0 0.0
      %1136 = vmatpush1.msra.mxu0 0.0
      %1137 = vmatprep.subr.mxu0 0.0
      %1138 = vmatpush1.msra.mxu0 0.0
      %1139 = vmatprep.subr.mxu0 0.0
      %1140 = vmatpush1.msra.mxu0 0.0
      %1141 = vmatprep.subr.mxu0 0.0
      %1142 = vmatpush1.msra.mxu0 0.0
      %1143 = vmatprep.subr.mxu0 0.0
      %1144 = vmatpush1.msra.mxu0 0.0
      %1145 = vmatprep.subr.mxu0 0.0
      %1146 = vmatpush1.msra.mxu0 0.0
      %1147 = vmatprep.subr.mxu0 0.0
      %1148 = vmatpush1.msra.mxu0 0.0
      %1149 = vmatprep.subr.mxu0 0.0
      %1150 = vmatpush1.msra.mxu0 0.0
      %1151 = vmatprep.subr.mxu0 0.0
      %1152 = vmatpush1.msra.mxu0 0.0
      %1153 = vmatprep.subr.mxu0 0.0
      %1154 = vmatpush1.msra.mxu0 0.0
      %1155 = vmatprep.subr.mxu0 0.0
      %1156 = vmatpush1.msra.mxu0 0.0
      %1157 = vmatprep.subr.mxu0 0.0
      %1158 = vmatpush1.msra.mxu0 0.0
      %1159 = vmatprep.subr.mxu0 0.0
      %1160 = vmatpush1.msra.mxu0 0.0
      %1161 = vmatprep.subr.mxu0 0.0
      %1162 = vmatpush1.msra.mxu0 0.0
      %1163 = vmatprep.subr.mxu0 0.0
      %1164 = vmatpush1.msra.mxu0 0.0
      %1165 = vmatprep.subr.mxu0 0.0
      %1166 = vmatpush1.msra.mxu0 0.0
      %1167 = vmatprep.subr.mxu0 0.0
      %1168 = vmatpush1.msra.mxu0 0.0
      %1169 = vmatprep.subr.mxu0 0.0
      %1170 = vmatpush1.msra.mxu0 0.0
      %1171 = vmatprep.subr.mxu0 0.0
      %1172 = vmatpush1.msra.mxu0 0.0
      %1173 = vmatprep.subr.mxu0 0.0
      %1174 = vmatpush1.msra.mxu0 0.0
      %1175 = vmatprep.subr.mxu0 0.0
      %1176 = vmatpush1.msra.mxu0 0.0
      %1177 = vmatprep.subr.mxu0 0.0
      %1178 = vmatpush1.msra.mxu0 0.0
      %1179 = vmatprep.subr.mxu0 0.0
      %1180 = vmatpush1.msra.mxu0 0.0
      %1181 = vmatprep.subr.mxu0 0.0
      %1182 = vmatpush1.msra.mxu0 0.0
      %1183 = vmatprep.subr.mxu0 0.0
      %1184 = vmatpush1.msra.mxu0 0.0
      %1185 = vmatprep.subr.mxu0 0.0
      %1186 = vmatpush1.msra.mxu0 0.0
      %1187 = vmatprep.subr.mxu0 0.0
      %1188 = vmatpush1.msra.mxu0 0.0
      %1189 = vmatprep.subr.mxu0 0.0
      %1190 = vmatpush1.msra.mxu0 0.0
      %1191 = vmatprep.subr.mxu0 0.0
      %1192 = vmatpush1.msra.mxu0 0.0
      %1193 = vmatprep.mubr.f32.mxu0 0.0
      %1194 = vmatmul.mubr.f32.gmra.mrb[0].mxu0 %v1031
      %v1195 = vpop.f32.mrb[0].mxu0
      %v1196 = vadd.f32 0.0, %v1195
      %v1197 = vpop.f32.mrb[0].mxu0
      %1198 = vmatprep.mubr.f32.mxu0 0.0
      %1199 = vmatmul.mubr.f32.gmra.mrb[0].mxu0 %v1034
      %v1200 = vpop.f32.mrb[0].mxu0
      %v1201 = vadd.f32 0.0, %v1200
      %v1202 = vpop.f32.mrb[0].mxu0
      %1203 = vmatprep.mubr.f32.mxu0 0.0
      %1204 = vmatmul.mubr.f32.gmra.mrb[0].mxu0 %v1037
      %v1205 = vpop.f32.mrb[0].mxu0
      %v1206 = vadd.f32 0.0, %v1205
      %v1207 = vpop.f32.mrb[0].mxu0
      %1208 = vmatprep.mubr.f32.mxu0 0.0
      %1209 = vmatmul.mubr.f32.gmra.mrb[0].mxu0 %v1040
      %v1210 = vpop.f32.mrb[0].mxu0
      %v1211 = vadd.f32 0.0, %v1210
      %v1212 = vpop.f32.mrb[0].mxu0
      %1213 = vmatprep.mubr.f32.mxu0 0.0
      %1214 = vmatmul.mubr.f32.gmra.mrb[0].mxu0 %v1043
      %v1215 = vpop.f32.mrb[0].mxu0
      %v1216 = vadd.f32 0.0, %v1215
      %v1217 = vpop.f32.mrb[0].mxu0
      %1218 = vmatprep.mubr.f32.mxu0 0.0
      %1219 = vmatmul.mubr.f32.gmra.mrb[0].mxu0 %v1046
      %v1220 = vpop.f32.mrb[0].mxu0
      %v1221 = vadd.f32 0.0, %v1220
      %v1222 = vpop.f32.mrb[0].mxu0
      %1223 = vmatprep.mubr.f32.mxu0 0.0
      %1224 = vmatmul.mubr.f32.gmra.mrb[0].mxu0 %v1049
      %v1225 = vpop.f32.mrb[0].mxu0
      %v1226 = vadd.f32 0.0, %v1225
      %v1227 = vpop.f32.mrb[0].mxu0
      %1228 = vmatprep.mubr.f32.mxu0 0.0
      %1229 = vmatmul.mubr.f32.gmra.mrb[0].mxu0 %v1052
      %v1230 = vpop.f32.mrb[0].mxu0
      %v1231 = vadd.f32 0.0, %v1230
      %v1232 = vpop.f32.mrb[0].mxu0
      %1233 = vmatprep.mubr.f32.mxu0 0.0
      %1234 = vmatmul.mubr.f32.gmra.mrb[0].mxu0 %v1055
      %v1235 = vpop.f32.mrb[0].mxu0
      %v1236 = vadd.f32 0.0, %v1235
      %v1237 = vpop.f32.mrb[0].mxu0
      %1238 = vmatprep.mubr.f32.mxu0 0.0
      %1239 = vmatmul.mubr.f32.gmra.mrb[0].mxu0 %v1058
      %v1240 = vpop.f32.mrb[0].mxu0
      %v1241 = vadd.f32 0.0, %v1240
      %v1242 = vpop.f32.mrb[0].mxu0
      %1243 = vmatprep.mubr.f32.mxu0 0.0
      %1244 = vmatmul.mubr.f32.gmra.mrb[0].mxu0 %v1061
      %v1245 = vpop.f32.mrb[0].mxu0
      %v1246 = vadd.f32 0.0, %v1245
      %v1247 = vpop.f32.mrb[0].mxu0
      %1248 = vmatprep.mubr.f32.mxu0 0.0
      %1249 = vmatmul.mubr.f32.gmra.mrb[0].mxu0 %v1064
      %v1250 = vpop.f32.mrb[0].mxu0
      %v1251 = vadd.f32 0.0, %v1250
      %v1252 = vpop.f32.mrb[0].mxu0
      %1253 = vmatprep.mubr.f32.mxu0 0.0
      %1254 = vmatmul.mubr.f32.gmra.mrb[0].mxu0 %v1067
      %v1255 = vpop.f32.mrb[0].mxu0
      %v1256 = vadd.f32 0.0, %v1255
      %v1257 = vpop.f32.mrb[0].mxu0
      %1258 = vmatprep.mubr.f32.mxu0 0.0
      %1259 = vmatmul.mubr.f32.gmra.mrb[0].mxu0 %v1070
      %v1260 = vpop.f32.mrb[0].mxu0
      %v1261 = vadd.f32 0.0, %v1260
      %v1262 = vpop.f32.mrb[0].mxu0
      %1263 = vmatprep.mubr.f32.mxu0 0.0
      %1264 = vmatmul.mubr.f32.gmra.mrb[0].mxu0 %v1073
      %v1265 = vpop.f32.mrb[0].mxu0
      %v1266 = vadd.f32 0.0, %v1265
      %v1267 = vpop.f32.mrb[0].mxu0
      %1268 = vmatprep.mubr.f32.mxu0 0.0
      %1269 = vmatmul.mubr.f32.gmra.mrb[0].mxu0 %v1076
      %v1270 = vpop.f32.mrb[0].mxu0
      %v1271 = vadd.f32 0.0, %v1270
      %v1272 = vpop.f32.mrb[0].mxu0
      %1273 = vmatprep.mubr.f32.mxu0 0.0
      %1274 = vmatmul.mubr.f32.gmra.mrb[0].mxu0 %v1079
      %v1275 = vpop.f32.mrb[0].mxu0
      %v1276 = vadd.f32 0.0, %v1275
      %v1277 = vpop.f32.mrb[0].mxu0
      %1278 = vmatprep.mubr.f32.mxu0 0.0
      %1279 = vmatmul.mubr.f32.gmra.mrb[0].mxu0 %v1082
      %v1280 = vpop.f32.mrb[0].mxu0
      %v1281 = vadd.f32 0.0, %v1280
      %v1282 = vpop.f32.mrb[0].mxu0
      %1283 = vmatprep.mubr.f32.mxu0 0.0
      %1284 = vmatmul.mubr.f32.gmra.mrb[0].mxu0 %v1085
      %v1285 = vpop.f32.mrb[0].mxu0
      %v1286 = vadd.f32 0.0, %v1285
      %v1287 = vpop.f32.mrb[0].mxu0
      %1288 = vmatprep.mubr.f32.mxu0 0.0
      %1289 = vmatmul.mubr.f32.gmra.mrb[0].mxu0 %v1088
      %v1290 = vpop.f32.mrb[0].mxu0
      %v1291 = vadd.f32 0.0, %v1290
      %v1292 = vpop.f32.mrb[0].mxu0
      %1293 = vmatprep.mubr.f32.mxu0 0.0
      %1294 = vmatmul.mubr.f32.gmra.mrb[0].mxu0 %v1091
      %v1295 = vpop.f32.mrb[0].mxu0
      %v1296 = vadd.f32 0.0, %v1295
      %v1297 = vpop.f32.mrb[0].mxu0
      %1298 = vmatprep.mubr.f32.mxu0 0.0
      %1299 = vmatmul.mubr.f32.gmra.mrb[0].mxu0 %v1094
      %v1300 = vpop.f32.mrb[0].mxu0
      %v1301 = vadd.f32 0.0, %v1300
      %v1302 = vpop.f32.mrb[0].mxu0
      %1303 = vmatprep.mubr.f32.mxu0 0.0
      %1304 = vmatmul.mubr.f32.gmra.mrb[0].mxu0 %v1097
      %v1305 = vpop.f32.mrb[0].mxu0
      %v1306 = vadd.f32 0.0, %v1305
      %v1307 = vpop.f32.mrb[0].mxu0
      %1308 = vmatprep.mubr.f32.mxu0 0.0
      %1309 = vmatmul.mubr.f32.gmra.mrb[0].mxu0 %v1100
      %v1310 = vpop.f32.mrb[0].mxu0
      %v1311 = vadd.f32 0.0, %v1310
      %v1312 = vpop.f32.mrb[0].mxu0
      %1313 = vmatprep.mubr.f32.mxu0 0.0
      %1314 = vmatmul.mubr.f32.gmra.mrb[0].mxu0 %v1103
      %v1315 = vpop.f32.mrb[0].mxu0
      %v1316 = vadd.f32 0.0, %v1315
      %v1317 = vpop.f32.mrb[0].mxu0
      %1318 = vmatprep.mubr.f32.mxu0 0.0
      %1319 = vmatmul.mubr.f32.gmra.mrb[0].mxu0 %v1106
      %v1320 = vpop.f32.mrb[0].mxu0
      %v1321 = vadd.f32 0.0, %v1320
      %v1322 = vpop.f32.mrb[0].mxu0
      %1323 = vmatprep.mubr.f32.mxu0 0.0
      %1324 = vmatmul.mubr.f32.gmra.mrb[0].mxu0 %v1109
      %v1325 = vpop.f32.mrb[0].mxu0
      %v1326 = vadd.f32 0.0, %v1325
      %v1327 = vpop.f32.mrb[0].mxu0
      %1328 = vmatprep.mubr.f32.mxu0 0.0
      %1329 = vmatmul.mubr.f32.gmra.mrb[0].mxu0 %v1112
      %v1330 = vpop.f32.mrb[0].mxu0
      %v1331 = vadd.f32 0.0, %v1330
      %v1332 = vpop.f32.mrb[0].mxu0
      %1333 = vmatprep.mubr.f32.mxu0 0.0
      %1334 = vmatmul.mubr.f32.gmra.mrb[0].mxu0 %v1115
      %v1335 = vpop.f32.mrb[0].mxu0
      %v1336 = vadd.f32 0.0, %v1335
      %v1337 = vpop.f32.mrb[0].mxu0
      %1338 = vmatprep.mubr.f32.mxu0 0.0
      %1339 = vmatmul.mubr.f32.gmra.mrb[0].mxu0 %v1118
      %v1340 = vpop.f32.mrb[0].mxu0
      %v1341 = vadd.f32 0.0, %v1340
      %v1342 = vpop.f32.mrb[0].mxu0
      %1343 = vmatprep.mubr.f32.mxu0 0.0
      %1344 = vmatmul.mubr.f32.gmra.mrb[0].mxu0 %v1121
      %v1345 = vpop.f32.mrb[0].mxu0
      %v1346 = vadd.f32 0.0, %v1345
      %v1347 = vpop.f32.mrb[0].mxu0
      %1348 = vmatprep.mubr.f32.mxu0 0.0
      %1349 = vmatmul.mubr.f32.gmra.mrb[0].mxu0 %v1124
      %v1350 = vpop.f32.mrb[0].mxu0
      %v1351 = vadd.f32 0.0, %v1350
      %v1352 = vpop.f32.mrb[0].mxu0
      %1353 = vdwg.mxu0
      %v1354 = vadd.f32 %v838, %v1196
      %v1355 = vadd.f32 %v843, %v1201
      %v1356 = vadd.f32 %v848, %v1206
      %v1357 = vadd.f32 %v853, %v1211
      %v1358 = vadd.f32 %v858, %v1216
      %v1359 = vadd.f32 %v863, %v1221
      %v1360 = vadd.f32 %v868, %v1226
      %v1361 = vadd.f32 %v873, %v1231
      %v1362 = vadd.f32 %v878, %v1236
      %v1363 = vadd.f32 %v883, %v1241
      %v1364 = vadd.f32 %v888, %v1246
      %v1365 = vadd.f32 %v893, %v1251
      %v1366 = vadd.f32 %v898, %v1256
      %v1367 = vadd.f32 %v903, %v1261
      %v1368 = vadd.f32 %v908, %v1266
      %v1369 = vadd.f32 %v913, %v1271
      %v1370 = vadd.f32 %v918, %v1276
      %v1371 = vadd.f32 %v923, %v1281
      %v1372 = vadd.f32 %v928, %v1286
      %v1373 = vadd.f32 %v933, %v1291
      %v1374 = vadd.f32 %v938, %v1296
      %v1375 = vadd.f32 %v943, %v1301
      %v1376 = vadd.f32 %v948, %v1306
      %v1377 = vadd.f32 %v953, %v1311
      %v1378 = vadd.f32 %v958, %v1316
      %v1379 = vadd.f32 %v963, %v1321
      %v1380 = vadd.f32 %v968, %v1326
      %v1381 = vadd.f32 %v973, %v1331
      %v1382 = vadd.f32 %v978, %v1336
      %v1383 = vadd.f32 %v983, %v1341
      %v1384 = vadd.f32 %v988, %v1346
      %v1385 = vadd.f32 %v993, %v1351
      %s1386 = scalar_lea.vmem %s273, 24
      %v1387 = vld [vmem:[%s1386] sm:$0xff]
      %v1388 = vld [vmem:[%s1386 + $0x8] sm:$0xff]
      %v1389 = vld [vmem:[%s1386 + $0x18] sm:$0xff]
      %v1390 = vld [vmem:[%s1386 + $0x20] sm:$0xff]
      %v1391 = vld [vmem:[%s1386 + $0x30] sm:$0xff]
      %v1392 = vld [vmem:[%s1386 + $0x38] sm:$0xff]
      %v1393 = vld [vmem:[%s1386 + $0x48] sm:$0xff]
      %v1394 = vld [vmem:[%s1386 + $0x50] sm:$0xff]
      %v1395 = vld [vmem:[%s1386 + $0x60] sm:$0xff]
      %v1396 = vld [vmem:[%s1386 + $0x68] sm:$0xff]
      %v1397 = vld [vmem:[%s1386 + $0x78] sm:$0xff]
      %v1398 = vld [vmem:[%s1386 + $0x80] sm:$0xff]
      %v1399 = vld [vmem:[%s1386 + $0x90] sm:$0xff]
      %v1400 = vld [vmem:[%s1386 + $0x98] sm:$0xff]
      %v1401 = vld [vmem:[%s1386 + $0xa8] sm:$0xff]
      %v1402 = vld [vmem:[%s1386 + $0xb0] sm:$0xff]
      %v1403 = vld [vmem:[%s1386 + $0xc0] sm:$0xff]
      %v1404 = vld [vmem:[%s1386 + $0xc8] sm:$0xff]
      %v1405 = vld [vmem:[%s1386 + $0xd8] sm:$0xff]
      %v1406 = vld [vmem:[%s1386 + $0xe0] sm:$0xff]
      %v1407 = vld [vmem:[%s1386 + $0xf0] sm:$0xff]
      %v1408 = vld [vmem:[%s1386 + $0xf8] sm:$0xff]
      %v1409 = vld [vmem:[%s1386 + $0x108] sm:$0xff]
      %v1410 = vld [vmem:[%s1386 + $0x110] sm:$0xff]
      %v1411 = vld [vmem:[%s1386 + $0x120] sm:$0xff]
      %v1412 = vld [vmem:[%s1386 + $0x128] sm:$0xff]
      %v1413 = vld [vmem:[%s1386 + $0x138] sm:$0xff]
      %v1414 = vld [vmem:[%s1386 + $0x140] sm:$0xff]
      %v1415 = vld [vmem:[%s1386 + $0x150] sm:$0xff]
      %v1416 = vld [vmem:[%s1386 + $0x158] sm:$0xff]
      %v1417 = vld [vmem:[%s1386 + $0x168] sm:$0xff]
      %v1418 = vld [vmem:[%s1386 + $0x170] sm:$0xff]
      %s1419 = scalar_lea.vmem %s1, 12
      %v1420 = vld [vmem:[%s1419] sm:$0xf]
      %v1422 = vsel %vm346, %v1387, 0
      %v1425 = vsel %vm346, %v1388, 0
      %v1428 = vsel %vm346, %v1389, 0
      %v1431 = vsel %vm346, %v1390, 0
      %v1434 = vsel %vm346, %v1391, 0
      %v1437 = vsel %vm346, %v1392, 0
      %v1440 = vsel %vm346, %v1393, 0
      %v1443 = vsel %vm346, %v1394, 0
      %v1446 = vsel %vm346, %v1395, 0
      %v1449 = vsel %vm346, %v1396, 0
      %v1452 = vsel %vm346, %v1397, 0
      %v1455 = vsel %vm346, %v1398, 0
      %v1458 = vsel %vm346, %v1399, 0
      %v1461 = vsel %vm346, %v1400, 0
      %v1464 = vsel %vm346, %v1401, 0
      %v1467 = vsel %vm346, %v1402, 0
      %v1470 = vsel %vm346, %v1403, 0
      %v1473 = vsel %vm346, %v1404, 0
      %v1476 = vsel %vm346, %v1405, 0
      %v1479 = vsel %vm346, %v1406, 0
      %v1482 = vsel %vm346, %v1407, 0
      %v1485 = vsel %vm346, %v1408, 0
      %v1488 = vsel %vm346, %v1409, 0
      %v1491 = vsel %vm346, %v1410, 0
      %v1494 = vsel %vm346, %v1411, 0
      %v1497 = vsel %vm346, %v1412, 0
      %v1500 = vsel %vm346, %v1413, 0
      %v1503 = vsel %vm346, %v1414, 0
      %v1506 = vsel %vm346, %v1415, 0
      %v1509 = vsel %vm346, %v1416, 0
      %v1512 = vsel %vm346, %v1417, 0
      %v1515 = vsel %vm346, %v1418, 0
      %v1518 = vsel %vm443, %v1420, 0
      %1520 = vmatprep.subr.mxu0 0.0
      %1521 = vmatpush1.msra.mxu0 %v1518
      %1522 = vmatprep.subr.mxu0 0.0
      %1523 = vmatpush1.msra.mxu0 0.0
      %1524 = vmatprep.subr.mxu0 0.0
      %1525 = vmatpush1.msra.mxu0 0.0
      %1526 = vmatprep.subr.mxu0 0.0
      %1527 = vmatpush1.msra.mxu0 0.0
      %1528 = vmatprep.subr.mxu0 0.0
      %1529 = vmatpush1.msra.mxu0 0.0
      %1530 = vmatprep.subr.mxu0 0.0
      %1531 = vmatpush1.msra.mxu0 0.0
      %1532 = vmatprep.subr.mxu0 0.0
      %1533 = vmatpush1.msra.mxu0 0.0
      %1534 = vmatprep.subr.mxu0 0.0
      %1535 = vmatpush1.msra.mxu0 0.0
      %1536 = vmatprep.subr.mxu0 0.0
      %1537 = vmatpush1.msra.mxu0 0.0
      %1538 = vmatprep.subr.mxu0 0.0
      %1539 = vmatpush1.msra.mxu0 0.0
      %1540 = vmatprep.subr.mxu0 0.0
      %1541 = vmatpush1.msra.mxu0 0.0
      %1542 = vmatprep.subr.mxu0 0.0
      %1543 = vmatpush1.msra.mxu0 0.0
      %1544 = vmatprep.subr.mxu0 0.0
      %1545 = vmatpush1.msra.mxu0 0.0
      %1546 = vmatprep.subr.mxu0 0.0
      %1547 = vmatpush1.msra.mxu0 0.0
      %1548 = vmatprep.subr.mxu0 0.0
      %1549 = vmatpush1.msra.mxu0 0.0
      %1550 = vmatprep.subr.mxu0 0.0
      %1551 = vmatpush1.msra.mxu0 0.0
      %1552 = vmatprep.subr.mxu0 0.0
      %1553 = vmatpush1.msra.mxu0 0.0
      %1554 = vmatprep.subr.mxu0 0.0
      %1555 = vmatpush1.msra.mxu0 0.0
      %1556 = vmatprep.subr.mxu0 0.0
      %1557 = vmatpush1.msra.mxu0 0.0
      %1558 = vmatprep.subr.mxu0 0.0
      %1559 = vmatpush1.msra.mxu0 0.0
      %1560 = vmatprep.subr.mxu0 0.0
      %1561 = vmatpush1.msra.mxu0 0.0
      %1562 = vmatprep.subr.mxu0 0.0
      %1563 = vmatpush1.msra.mxu0 0.0
      %1564 = vmatprep.subr.mxu0 0.0
      %1565 = vmatpush1.msra.mxu0 0.0
      %1566 = vmatprep.subr.mxu0 0.0
      %1567 = vmatpush1.msra.mxu0 0.0
      %1568 = vmatprep.subr.mxu0 0.0
      %1569 = vmatpush1.msra.mxu0 0.0
      %1570 = vmatprep.subr.mxu0 0.0
      %1571 = vmatpush1.msra.mxu0 0.0
      %1572 = vmatprep.subr.mxu0 0.0
      %1573 = vmatpush1.msra.mxu0 0.0
      %1574 = vmatprep.subr.mxu0 0.0
      %1575 = vmatpush1.msra.mxu0 0.0
      %1576 = vmatprep.subr.mxu0 0.0
      %1577 = vmatpush1.msra.mxu0 0.0
      %1578 = vmatprep.subr.mxu0 0.0
      %1579 = vmatpush1.msra.mxu0 0.0
      %1580 = vmatprep.subr.mxu0 0.0
      %1581 = vmatpush1.msra.mxu0 0.0
      %1582 = vmatprep.subr.mxu0 0.0
      %1583 = vmatpush1.msra.mxu0 0.0
      %1584 = vmatprep.mubr.f32.mxu0 0.0
      %1585 = vmatmul.mubr.f32.gmra.mrb[0].mxu0 %v1422
      %v1586 = vpop.f32.mrb[0].mxu0
      %v1587 = vadd.f32 0.0, %v1586
      %v1588 = vpop.f32.mrb[0].mxu0
      %1589 = vmatprep.mubr.f32.mxu0 0.0
      %1590 = vmatmul.mubr.f32.gmra.mrb[0].mxu0 %v1425
      %v1591 = vpop.f32.mrb[0].mxu0
      %v1592 = vadd.f32 0.0, %v1591
      %v1593 = vpop.f32.mrb[0].mxu0
      %1594 = vmatprep.mubr.f32.mxu0 0.0
      %1595 = vmatmul.mubr.f32.gmra.mrb[0].mxu0 %v1428
      %v1596 = vpop.f32.mrb[0].mxu0
      %v1597 = vadd.f32 0.0, %v1596
      %v1598 = vpop.f32.mrb[0].mxu0
      %1599 = vmatprep.mubr.f32.mxu0 0.0
      %1600 = vmatmul.mubr.f32.gmra.mrb[0].mxu0 %v1431
      %v1601 = vpop.f32.mrb[0].mxu0
      %v1602 = vadd.f32 0.0, %v1601
      %v1603 = vpop.f32.mrb[0].mxu0
      %1604 = vmatprep.mubr.f32.mxu0 0.0
      %1605 = vmatmul.mubr.f32.gmra.mrb[0].mxu0 %v1434
      %v1606 = vpop.f32.mrb[0].mxu0
      %v1607 = vadd.f32 0.0, %v1606
      %v1608 = vpop.f32.mrb[0].mxu0
      %1609 = vmatprep.mubr.f32.mxu0 0.0
      %1610 = vmatmul.mubr.f32.gmra.mrb[0].mxu0 %v1437
      %v1611 = vpop.f32.mrb[0].mxu0
      %v1612 = vadd.f32 0.0, %v1611
      %v1613 = vpop.f32.mrb[0].mxu0
      %1614 = vmatprep.mubr.f32.mxu0 0.0
      %1615 = vmatmul.mubr.f32.gmra.mrb[0].mxu0 %v1440
      %v1616 = vpop.f32.mrb[0].mxu0
      %v1617 = vadd.f32 0.0, %v1616
      %v1618 = vpop.f32.mrb[0].mxu0
      %1619 = vmatprep.mubr.f32.mxu0 0.0
      %1620 = vmatmul.mubr.f32.gmra.mrb[0].mxu0 %v1443
      %v1621 = vpop.f32.mrb[0].mxu0
      %v1622 = vadd.f32 0.0, %v1621
      %v1623 = vpop.f32.mrb[0].mxu0
      %1624 = vmatprep.mubr.f32.mxu0 0.0
      %1625 = vmatmul.mubr.f32.gmra.mrb[0].mxu0 %v1446
      %v1626 = vpop.f32.mrb[0].mxu0
      %v1627 = vadd.f32 0.0, %v1626
      %v1628 = vpop.f32.mrb[0].mxu0
      %1629 = vmatprep.mubr.f32.mxu0 0.0
      %1630 = vmatmul.mubr.f32.gmra.mrb[0].mxu0 %v1449
      %v1631 = vpop.f32.mrb[0].mxu0
      %v1632 = vadd.f32 0.0, %v1631
      %v1633 = vpop.f32.mrb[0].mxu0
      %1634 = vmatprep.mubr.f32.mxu0 0.0
      %1635 = vmatmul.mubr.f32.gmra.mrb[0].mxu0 %v1452
      %v1636 = vpop.f32.mrb[0].mxu0
      %v1637 = vadd.f32 0.0, %v1636
      %v1638 = vpop.f32.mrb[0].mxu0
      %1639 = vmatprep.mubr.f32.mxu0 0.0
      %1640 = vmatmul.mubr.f32.gmra.mrb[0].mxu0 %v1455
      %v1641 = vpop.f32.mrb[0].mxu0
      %v1642 = vadd.f32 0.0, %v1641
      %v1643 = vpop.f32.mrb[0].mxu0
      %1644 = vmatprep.mubr.f32.mxu0 0.0
      %1645 = vmatmul.mubr.f32.gmra.mrb[0].mxu0 %v1458
      %v1646 = vpop.f32.mrb[0].mxu0
      %v1647 = vadd.f32 0.0, %v1646
      %v1648 = vpop.f32.mrb[0].mxu0
      %1649 = vmatprep.mubr.f32.mxu0 0.0
      %1650 = vmatmul.mubr.f32.gmra.mrb[0].mxu0 %v1461
      %v1651 = vpop.f32.mrb[0].mxu0
      %v1652 = vadd.f32 0.0, %v1651
      %v1653 = vpop.f32.mrb[0].mxu0
      %1654 = vmatprep.mubr.f32.mxu0 0.0
      %1655 = vmatmul.mubr.f32.gmra.mrb[0].mxu0 %v1464
      %v1656 = vpop.f32.mrb[0].mxu0
      %v1657 = vadd.f32 0.0, %v1656
      %v1658 = vpop.f32.mrb[0].mxu0
      %1659 = vmatprep.mubr.f32.mxu0 0.0
      %1660 = vmatmul.mubr.f32.gmra.mrb[0].mxu0 %v1467
      %v1661 = vpop.f32.mrb[0].mxu0
      %v1662 = vadd.f32 0.0, %v1661
      %v1663 = vpop.f32.mrb[0].mxu0
      %1664 = vmatprep.mubr.f32.mxu0 0.0
      %1665 = vmatmul.mubr.f32.gmra.mrb[0].mxu0 %v1470
      %v1666 = vpop.f32.mrb[0].mxu0
      %v1667 = vadd.f32 0.0, %v1666
      %v1668 = vpop.f32.mrb[0].mxu0
      %1669 = vmatprep.mubr.f32.mxu0 0.0
      %1670 = vmatmul.mubr.f32.gmra.mrb[0].mxu0 %v1473
      %v1671 = vpop.f32.mrb[0].mxu0
      %v1672 = vadd.f32 0.0, %v1671
      %v1673 = vpop.f32.mrb[0].mxu0
      %1674 = vmatprep.mubr.f32.mxu0 0.0
      %1675 = vmatmul.mubr.f32.gmra.mrb[0].mxu0 %v1476
      %v1676 = vpop.f32.mrb[0].mxu0
      %v1677 = vadd.f32 0.0, %v1676
      %v1678 = vpop.f32.mrb[0].mxu0
      %1679 = vmatprep.mubr.f32.mxu0 0.0
      %1680 = vmatmul.mubr.f32.gmra.mrb[0].mxu0 %v1479
      %v1681 = vpop.f32.mrb[0].mxu0
      %v1682 = vadd.f32 0.0, %v1681
      %v1683 = vpop.f32.mrb[0].mxu0
      %1684 = vmatprep.mubr.f32.mxu0 0.0
      %1685 = vmatmul.mubr.f32.gmra.mrb[0].mxu0 %v1482
      %v1686 = vpop.f32.mrb[0].mxu0
      %v1687 = vadd.f32 0.0, %v1686
      %v1688 = vpop.f32.mrb[0].mxu0
      %1689 = vmatprep.mubr.f32.mxu0 0.0
      %1690 = vmatmul.mubr.f32.gmra.mrb[0].mxu0 %v1485
      %v1691 = vpop.f32.mrb[0].mxu0
      %v1692 = vadd.f32 0.0, %v1691
      %v1693 = vpop.f32.mrb[0].mxu0
      %1694 = vmatprep.mubr.f32.mxu0 0.0
      %1695 = vmatmul.mubr.f32.gmra.mrb[0].mxu0 %v1488
      %v1696 = vpop.f32.mrb[0].mxu0
      %v1697 = vadd.f32 0.0, %v1696
      %v1698 = vpop.f32.mrb[0].mxu0
      %1699 = vmatprep.mubr.f32.mxu0 0.0
      %1700 = vmatmul.mubr.f32.gmra.mrb[0].mxu0 %v1491
      %v1701 = vpop.f32.mrb[0].mxu0
      %v1702 = vadd.f32 0.0, %v1701
      %v1703 = vpop.f32.mrb[0].mxu0
      %1704 = vmatprep.mubr.f32.mxu0 0.0
      %1705 = vmatmul.mubr.f32.gmra.mrb[0].mxu0 %v1494
      %v1706 = vpop.f32.mrb[0].mxu0
      %v1707 = vadd.f32 0.0, %v1706
      %v1708 = vpop.f32.mrb[0].mxu0
      %1709 = vmatprep.mubr.f32.mxu0 0.0
      %1710 = vmatmul.mubr.f32.gmra.mrb[0].mxu0 %v1497
      %v1711 = vpop.f32.mrb[0].mxu0
      %v1712 = vadd.f32 0.0, %v1711
      %v1713 = vpop.f32.mrb[0].mxu0
      %1714 = vmatprep.mubr.f32.mxu0 0.0
      %1715 = vmatmul.mubr.f32.gmra.mrb[0].mxu0 %v1500
      %v1716 = vpop.f32.mrb[0].mxu0
      %v1717 = vadd.f32 0.0, %v1716
      %v1718 = vpop.f32.mrb[0].mxu0
      %1719 = vmatprep.mubr.f32.mxu0 0.0
      %1720 = vmatmul.mubr.f32.gmra.mrb[0].mxu0 %v1503
      %v1721 = vpop.f32.mrb[0].mxu0
      %v1722 = vadd.f32 0.0, %v1721
      %v1723 = vpop.f32.mrb[0].mxu0
      %1724 = vmatprep.mubr.f32.mxu0 0.0
      %1725 = vmatmul.mubr.f32.gmra.mrb[0].mxu0 %v1506
      %v1726 = vpop.f32.mrb[0].mxu0
      %v1727 = vadd.f32 0.0, %v1726
      %v1728 = vpop.f32.mrb[0].mxu0
      %1729 = vmatprep.mubr.f32.mxu0 0.0
      %1730 = vmatmul.mubr.f32.gmra.mrb[0].mxu0 %v1509
      %v1731 = vpop.f32.mrb[0].mxu0
      %v1732 = vadd.f32 0.0, %v1731
      %v1733 = vpop.f32.mrb[0].mxu0
      %1734 = vmatprep.mubr.f32.mxu0 0.0
      %1735 = vmatmul.mubr.f32.gmra.mrb[0].mxu0 %v1512
      %v1736 = vpop.f32.mrb[0].mxu0
      %v1737 = vadd.f32 0.0, %v1736
      %v1738 = vpop.f32.mrb[0].mxu0
      %1739 = vmatprep.mubr.f32.mxu0 0.0
      %1740 = vmatmul.mubr.f32.gmra.mrb[0].mxu0 %v1515
      %v1741 = vpop.f32.mrb[0].mxu0
      %v1742 = vadd.f32 0.0, %v1741
      %v1743 = vpop.f32.mrb[0].mxu0
      %1744 = vdwg.mxu0
      %v1745 = vadd.f32 %v1354, %v1587
      %v1746 = vadd.f32 %v1355, %v1592
      %v1747 = vadd.f32 %v1356, %v1597
      %v1748 = vadd.f32 %v1357, %v1602
      %v1749 = vadd.f32 %v1358, %v1607
      %v1750 = vadd.f32 %v1359, %v1612
      %v1751 = vadd.f32 %v1360, %v1617
      %v1752 = vadd.f32 %v1361, %v1622
      %v1753 = vadd.f32 %v1362, %v1627
      %v1754 = vadd.f32 %v1363, %v1632
      %v1755 = vadd.f32 %v1364, %v1637
      %v1756 = vadd.f32 %v1365, %v1642
      %v1757 = vadd.f32 %v1366, %v1647
      %v1758 = vadd.f32 %v1367, %v1652
      %v1759 = vadd.f32 %v1368, %v1657
      %v1760 = vadd.f32 %v1369, %v1662
      %v1761 = vadd.f32 %v1370, %v1667
      %v1762 = vadd.f32 %v1371, %v1672
      %v1763 = vadd.f32 %v1372, %v1677
      %v1764 = vadd.f32 %v1373, %v1682
      %v1765 = vadd.f32 %v1374, %v1687
      %v1766 = vadd.f32 %v1375, %v1692
      %v1767 = vadd.f32 %v1376, %v1697
      %v1768 = vadd.f32 %v1377, %v1702
      %v1769 = vadd.f32 %v1378, %v1707
      %v1770 = vadd.f32 %v1379, %v1712
      %v1771 = vadd.f32 %v1380, %v1717
      %v1772 = vadd.f32 %v1381, %v1722
      %v1773 = vadd.f32 %v1382, %v1727
      %v1774 = vadd.f32 %v1383, %v1732
      %v1775 = vadd.f32 %v1384, %v1737
      %v1776 = vadd.f32 %v1385, %v1742
      %v1777 = vld [vmem:[%s1386 + $0x1] sm:$0xff]
      %v1778 = vld [vmem:[%s1386 + $0x9] sm:$0xff]
      %v1779 = vld [vmem:[%s1386 + $0x19] sm:$0xff]
      %v1780 = vld [vmem:[%s1386 + $0x21] sm:$0xff]
      %v1781 = vld [vmem:[%s1386 + $0x31] sm:$0xff]
      %v1782 = vld [vmem:[%s1386 + $0x39] sm:$0xff]
      %v1783 = vld [vmem:[%s1386 + $0x49] sm:$0xff]
      %v1784 = vld [vmem:[%s1386 + $0x51] sm:$0xff]
      %v1785 = vld [vmem:[%s1386 + $0x61] sm:$0xff]
      %v1786 = vld [vmem:[%s1386 + $0x69] sm:$0xff]
      %v1787 = vld [vmem:[%s1386 + $0x79] sm:$0xff]
      %v1788 = vld [vmem:[%s1386 + $0x81] sm:$0xff]
      %v1789 = vld [vmem:[%s1386 + $0x91] sm:$0xff]
      %v1790 = vld [vmem:[%s1386 + $0x99] sm:$0xff]
      %v1791 = vld [vmem:[%s1386 + $0xa9] sm:$0xff]
      %v1792 = vld [vmem:[%s1386 + $0xb1] sm:$0xff]
      %v1793 = vld [vmem:[%s1386 + $0xc1] sm:$0xff]
      %v1794 = vld [vmem:[%s1386 + $0xc9] sm:$0xff]
      %v1795 = vld [vmem:[%s1386 + $0xd9] sm:$0xff]
      %v1796 = vld [vmem:[%s1386 + $0xe1] sm:$0xff]
      %v1797 = vld [vmem:[%s1386 + $0xf1] sm:$0xff]
      %v1798 = vld [vmem:[%s1386 + $0xf9] sm:$0xff]
      %v1799 = vld [vmem:[%s1386 + $0x109] sm:$0xff]
      %v1800 = vld [vmem:[%s1386 + $0x111] sm:$0xff]
      %v1801 = vld [vmem:[%s1386 + $0x121] sm:$0xff]
      %v1802 = vld [vmem:[%s1386 + $0x129] sm:$0xff]
      %v1803 = vld [vmem:[%s1386 + $0x139] sm:$0xff]
      %v1804 = vld [vmem:[%s1386 + $0x141] sm:$0xff]
      %v1805 = vld [vmem:[%s1386 + $0x151] sm:$0xff]
      %v1806 = vld [vmem:[%s1386 + $0x159] sm:$0xff]
      %v1807 = vld [vmem:[%s1386 + $0x169] sm:$0xff]
      %v1808 = vld [vmem:[%s1386 + $0x171] sm:$0xff]
      %s1809 = scalar_lea.vmem %s1, 16
      %v1810 = vld [vmem:[%s1809] sm:$0xf]
      %v1812 = vsel %vm346, %v1777, 0
      %v1815 = vsel %vm346, %v1778, 0
      %v1818 = vsel %vm346, %v1779, 0
      %v1821 = vsel %vm346, %v1780, 0
      %v1824 = vsel %vm346, %v1781, 0
      %v1827 = vsel %vm346, %v1782, 0
      %v1830 = vsel %vm346, %v1783, 0
      %v1833 = vsel %vm346, %v1784, 0
      %v1836 = vsel %vm346, %v1785, 0
      %v1839 = vsel %vm346, %v1786, 0
      %v1842 = vsel %vm346, %v1787, 0
      %v1845 = vsel %vm346, %v1788, 0
      %v1848 = vsel %vm346, %v1789, 0
      %v1851 = vsel %vm346, %v1790, 0
      %v1854 = vsel %vm346, %v1791, 0
      %v1857 = vsel %vm346, %v1792, 0
      %v1860 = vsel %vm346, %v1793, 0
      %v1863 = vsel %vm346, %v1794, 0
      %v1866 = vsel %vm346, %v1795, 0
      %v1869 = vsel %vm346, %v1796, 0
      %v1872 = vsel %vm346, %v1797, 0
      %v1875 = vsel %vm346, %v1798, 0
      %v1878 = vsel %vm346, %v1799, 0
      %v1881 = vsel %vm346, %v1800, 0
      %v1884 = vsel %vm346, %v1801, 0
      %v1887 = vsel %vm346, %v1802, 0
      %v1890 = vsel %vm346, %v1803, 0
      %v1893 = vsel %vm346, %v1804, 0
      %v1896 = vsel %vm346, %v1805, 0
      %v1899 = vsel %vm346, %v1806, 0
      %v1902 = vsel %vm346, %v1807, 0
      %v1905 = vsel %vm346, %v1808, 0
      %v1908 = vsel %vm443, %v1810, 0
      %1910 = vmatprep.subr.mxu0 0.0
      %1911 = vmatpush1.msra.mxu0 %v1908
      %1912 = vmatprep.subr.mxu0 0.0
      %1913 = vmatpush1.msra.mxu0 0.0
      %1914 = vmatprep.subr.mxu0 0.0
      %1915 = vmatpush1.msra.mxu0 0.0
      %1916 = vmatprep.subr.mxu0 0.0
      %1917 = vmatpush1.msra.mxu0 0.0
      %1918 = vmatprep.subr.mxu0 0.0
      %1919 = vmatpush1.msra.mxu0 0.0
      %1920 = vmatprep.subr.mxu0 0.0
      %1921 = vmatpush1.msra.mxu0 0.0
      %1922 = vmatprep.subr.mxu0 0.0
      %1923 = vmatpush1.msra.mxu0 0.0
      %1924 = vmatprep.subr.mxu0 0.0
      %1925 = vmatpush1.msra.mxu0 0.0
      %1926 = vmatprep.subr.mxu0 0.0
      %1927 = vmatpush1.msra.mxu0 0.0
      %1928 = vmatprep.subr.mxu0 0.0
      %1929 = vmatpush1.msra.mxu0 0.0
      %1930 = vmatprep.subr.mxu0 0.0
      %1931 = vmatpush1.msra.mxu0 0.0
      %1932 = vmatprep.subr.mxu0 0.0
      %1933 = vmatpush1.msra.mxu0 0.0
      %1934 = vmatprep.subr.mxu0 0.0
      %1935 = vmatpush1.msra.mxu0 0.0
      %1936 = vmatprep.subr.mxu0 0.0
      %1937 = vmatpush1.msra.mxu0 0.0
      %1938 = vmatprep.subr.mxu0 0.0
      %1939 = vmatpush1.msra.mxu0 0.0
      %1940 = vmatprep.subr.mxu0 0.0
      %1941 = vmatpush1.msra.mxu0 0.0
      %1942 = vmatprep.subr.mxu0 0.0
      %1943 = vmatpush1.msra.mxu0 0.0
      %1944 = vmatprep.subr.mxu0 0.0
      %1945 = vmatpush1.msra.mxu0 0.0
      %1946 = vmatprep.subr.mxu0 0.0
      %1947 = vmatpush1.msra.mxu0 0.0
      %1948 = vmatprep.subr.mxu0 0.0
      %1949 = vmatpush1.msra.mxu0 0.0
      %1950 = vmatprep.subr.mxu0 0.0
      %1951 = vmatpush1.msra.mxu0 0.0
      %1952 = vmatprep.subr.mxu0 0.0
      %1953 = vmatpush1.msra.mxu0 0.0
      %1954 = vmatprep.subr.mxu0 0.0
      %1955 = vmatpush1.msra.mxu0 0.0
      %1956 = vmatprep.subr.mxu0 0.0
      %1957 = vmatpush1.msra.mxu0 0.0
      %1958 = vmatprep.subr.mxu0 0.0
      %1959 = vmatpush1.msra.mxu0 0.0
      %1960 = vmatprep.subr.mxu0 0.0
      %1961 = vmatpush1.msra.mxu0 0.0
      %1962 = vmatprep.subr.mxu0 0.0
      %1963 = vmatpush1.msra.mxu0 0.0
      %1964 = vmatprep.subr.mxu0 0.0
      %1965 = vmatpush1.msra.mxu0 0.0
      %1966 = vmatprep.subr.mxu0 0.0
      %1967 = vmatpush1.msra.mxu0 0.0
      %1968 = vmatprep.subr.mxu0 0.0
      %1969 = vmatpush1.msra.mxu0 0.0
      %1970 = vmatprep.subr.mxu0 0.0
      %1971 = vmatpush1.msra.mxu0 0.0
      %1972 = vmatprep.subr.mxu0 0.0
      %1973 = vmatpush1.msra.mxu0 0.0
      %1974 = vmatprep.mubr.f32.mxu0 0.0
      %1975 = vmatmul.mubr.f32.gmra.mrb[0].mxu0 %v1812
      %v1976 = vpop.f32.mrb[0].mxu0
      %v1977 = vadd.f32 0.0, %v1976
      %v1978 = vpop.f32.mrb[0].mxu0
      %1979 = vmatprep.mubr.f32.mxu0 0.0
      %1980 = vmatmul.mubr.f32.gmra.mrb[0].mxu0 %v1815
      %v1981 = vpop.f32.mrb[0].mxu0
      %v1982 = vadd.f32 0.0, %v1981
      %v1983 = vpop.f32.mrb[0].mxu0
      %1984 = vmatprep.mubr.f32.mxu0 0.0
      %1985 = vmatmul.mubr.f32.gmra.mrb[0].mxu0 %v1818
      %v1986 = vpop.f32.mrb[0].mxu0
      %v1987 = vadd.f32 0.0, %v1986
      %v1988 = vpop.f32.mrb[0].mxu0
      %1989 = vmatprep.mubr.f32.mxu0 0.0
      %1990 = vmatmul.mubr.f32.gmra.mrb[0].mxu0 %v1821
      %v1991 = vpop.f32.mrb[0].mxu0
      %v1992 = vadd.f32 0.0, %v1991
      %v1993 = vpop.f32.mrb[0].mxu0
      %1994 = vmatprep.mubr.f32.mxu0 0.0
      %1995 = vmatmul.mubr.f32.gmra.mrb[0].mxu0 %v1824
      %v1996 = vpop.f32.mrb[0].mxu0
      %v1997 = vadd.f32 0.0, %v1996
      %v1998 = vpop.f32.mrb[0].mxu0
      %1999 = vmatprep.mubr.f32.mxu0 0.0
      %2000 = vmatmul.mubr.f32.gmra.mrb[0].mxu0 %v1827
      %v2001 = vpop.f32.mrb[0].mxu0
      %v2002 = vadd.f32 0.0, %v2001
      %v2003 = vpop.f32.mrb[0].mxu0
      %2004 = vmatprep.mubr.f32.mxu0 0.0
      %2005 = vmatmul.mubr.f32.gmra.mrb[0].mxu0 %v1830
      %v2006 = vpop.f32.mrb[0].mxu0
      %v2007 = vadd.f32 0.0, %v2006
      %v2008 = vpop.f32.mrb[0].mxu0
      %2009 = vmatprep.mubr.f32.mxu0 0.0
      %2010 = vmatmul.mubr.f32.gmra.mrb[0].mxu0 %v1833
      %v2011 = vpop.f32.mrb[0].mxu0
      %v2012 = vadd.f32 0.0, %v2011
      %v2013 = vpop.f32.mrb[0].mxu0
      %2014 = vmatprep.mubr.f32.mxu0 0.0
      %2015 = vmatmul.mubr.f32.gmra.mrb[0].mxu0 %v1836
      %v2016 = vpop.f32.mrb[0].mxu0
      %v2017 = vadd.f32 0.0, %v2016
      %v2018 = vpop.f32.mrb[0].mxu0
      %2019 = vmatprep.mubr.f32.mxu0 0.0
      %2020 = vmatmul.mubr.f32.gmra.mrb[0].mxu0 %v1839
      %v2021 = vpop.f32.mrb[0].mxu0
      %v2022 = vadd.f32 0.0, %v2021
      %v2023 = vpop.f32.mrb[0].mxu0
      %2024 = vmatprep.mubr.f32.mxu0 0.0
      %2025 = vmatmul.mubr.f32.gmra.mrb[0].mxu0 %v1842
      %v2026 = vpop.f32.mrb[0].mxu0
      %v2027 = vadd.f32 0.0, %v2026
      %v2028 = vpop.f32.mrb[0].mxu0
      %2029 = vmatprep.mubr.f32.mxu0 0.0
      %2030 = vmatmul.mubr.f32.gmra.mrb[0].mxu0 %v1845
      %v2031 = vpop.f32.mrb[0].mxu0
      %v2032 = vadd.f32 0.0, %v2031
      %v2033 = vpop.f32.mrb[0].mxu0
      %2034 = vmatprep.mubr.f32.mxu0 0.0
      %2035 = vmatmul.mubr.f32.gmra.mrb[0].mxu0 %v1848
      %v2036 = vpop.f32.mrb[0].mxu0
      %v2037 = vadd.f32 0.0, %v2036
      %v2038 = vpop.f32.mrb[0].mxu0
      %2039 = vmatprep.mubr.f32.mxu0 0.0
      %2040 = vmatmul.mubr.f32.gmra.mrb[0].mxu0 %v1851
      %v2041 = vpop.f32.mrb[0].mxu0
      %v2042 = vadd.f32 0.0, %v2041
      %v2043 = vpop.f32.mrb[0].mxu0
      %2044 = vmatprep.mubr.f32.mxu0 0.0
      %2045 = vmatmul.mubr.f32.gmra.mrb[0].mxu0 %v1854
      %v2046 = vpop.f32.mrb[0].mxu0
      %v2047 = vadd.f32 0.0, %v2046
      %v2048 = vpop.f32.mrb[0].mxu0
      %2049 = vmatprep.mubr.f32.mxu0 0.0
      %2050 = vmatmul.mubr.f32.gmra.mrb[0].mxu0 %v1857
      %v2051 = vpop.f32.mrb[0].mxu0
      %v2052 = vadd.f32 0.0, %v2051
      %v2053 = vpop.f32.mrb[0].mxu0
      %2054 = vmatprep.mubr.f32.mxu0 0.0
      %2055 = vmatmul.mubr.f32.gmra.mrb[0].mxu0 %v1860
      %v2056 = vpop.f32.mrb[0].mxu0
      %v2057 = vadd.f32 0.0, %v2056
      %v2058 = vpop.f32.mrb[0].mxu0
      %2059 = vmatprep.mubr.f32.mxu0 0.0
      %2060 = vmatmul.mubr.f32.gmra.mrb[0].mxu0 %v1863
      %v2061 = vpop.f32.mrb[0].mxu0
      %v2062 = vadd.f32 0.0, %v2061
      %v2063 = vpop.f32.mrb[0].mxu0
      %2064 = vmatprep.mubr.f32.mxu0 0.0
      %2065 = vmatmul.mubr.f32.gmra.mrb[0].mxu0 %v1866
      %v2066 = vpop.f32.mrb[0].mxu0
      %v2067 = vadd.f32 0.0, %v2066
      %v2068 = vpop.f32.mrb[0].mxu0
      %2069 = vmatprep.mubr.f32.mxu0 0.0
      %2070 = vmatmul.mubr.f32.gmra.mrb[0].mxu0 %v1869
      %v2071 = vpop.f32.mrb[0].mxu0
      %v2072 = vadd.f32 0.0, %v2071
      %v2073 = vpop.f32.mrb[0].mxu0
      %2074 = vmatprep.mubr.f32.mxu0 0.0
      %2075 = vmatmul.mubr.f32.gmra.mrb[0].mxu0 %v1872
      %v2076 = vpop.f32.mrb[0].mxu0
      %v2077 = vadd.f32 0.0, %v2076
      %v2078 = vpop.f32.mrb[0].mxu0
      %2079 = vmatprep.mubr.f32.mxu0 0.0
      %2080 = vmatmul.mubr.f32.gmra.mrb[0].mxu0 %v1875
      %v2081 = vpop.f32.mrb[0].mxu0
      %v2082 = vadd.f32 0.0, %v2081
      %v2083 = vpop.f32.mrb[0].mxu0
      %2084 = vmatprep.mubr.f32.mxu0 0.0
      %2085 = vmatmul.mubr.f32.gmra.mrb[0].mxu0 %v1878
      %v2086 = vpop.f32.mrb[0].mxu0
      %v2087 = vadd.f32 0.0, %v2086
      %v2088 = vpop.f32.mrb[0].mxu0
      %2089 = vmatprep.mubr.f32.mxu0 0.0
      %2090 = vmatmul.mubr.f32.gmra.mrb[0].mxu0 %v1881
      %v2091 = vpop.f32.mrb[0].mxu0
      %v2092 = vadd.f32 0.0, %v2091
      %v2093 = vpop.f32.mrb[0].mxu0
      %2094 = vmatprep.mubr.f32.mxu0 0.0
      %2095 = vmatmul.mubr.f32.gmra.mrb[0].mxu0 %v1884
      %v2096 = vpop.f32.mrb[0].mxu0
      %v2097 = vadd.f32 0.0, %v2096
      %v2098 = vpop.f32.mrb[0].mxu0
      %2099 = vmatprep.mubr.f32.mxu0 0.0
      %2100 = vmatmul.mubr.f32.gmra.mrb[0].mxu0 %v1887
      %v2101 = vpop.f32.mrb[0].mxu0
      %v2102 = vadd.f32 0.0, %v2101
      %v2103 = vpop.f32.mrb[0].mxu0
      %2104 = vmatprep.mubr.f32.mxu0 0.0
      %2105 = vmatmul.mubr.f32.gmra.mrb[0].mxu0 %v1890
      %v2106 = vpop.f32.mrb[0].mxu0
      %v2107 = vadd.f32 0.0, %v2106
      %v2108 = vpop.f32.mrb[0].mxu0
      %2109 = vmatprep.mubr.f32.mxu0 0.0
      %2110 = vmatmul.mubr.f32.gmra.mrb[0].mxu0 %v1893
      %v2111 = vpop.f32.mrb[0].mxu0
      %v2112 = vadd.f32 0.0, %v2111
      %v2113 = vpop.f32.mrb[0].mxu0
      %2114 = vmatprep.mubr.f32.mxu0 0.0
      %2115 = vmatmul.mubr.f32.gmra.mrb[0].mxu0 %v1896
      %v2116 = vpop.f32.mrb[0].mxu0
      %v2117 = vadd.f32 0.0, %v2116
      %v2118 = vpop.f32.mrb[0].mxu0
      %2119 = vmatprep.mubr.f32.mxu0 0.0
      %2120 = vmatmul.mubr.f32.gmra.mrb[0].mxu0 %v1899
      %v2121 = vpop.f32.mrb[0].mxu0
      %v2122 = vadd.f32 0.0, %v2121
      %v2123 = vpop.f32.mrb[0].mxu0
      %2124 = vmatprep.mubr.f32.mxu0 0.0
      %2125 = vmatmul.mubr.f32.gmra.mrb[0].mxu0 %v1902
      %v2126 = vpop.f32.mrb[0].mxu0
      %v2127 = vadd.f32 0.0, %v2126
      %v2128 = vpop.f32.mrb[0].mxu0
      %2129 = vmatprep.mubr.f32.mxu0 0.0
      %2130 = vmatmul.mubr.f32.gmra.mrb[0].mxu0 %v1905
      %v2131 = vpop.f32.mrb[0].mxu0
      %v2132 = vadd.f32 0.0, %v2131
      %v2133 = vpop.f32.mrb[0].mxu0
      %2134 = vdwg.mxu0
      %v2135 = vadd.f32 %v1745, %v1977
      %v2136 = vadd.f32 %v1746, %v1982
      %v2137 = vadd.f32 %v1747, %v1987
      %v2138 = vadd.f32 %v1748, %v1992
      %v2139 = vadd.f32 %v1749, %v1997
      %v2140 = vadd.f32 %v1750, %v2002
      %v2141 = vadd.f32 %v1751, %v2007
      %v2142 = vadd.f32 %v1752, %v2012
      %v2143 = vadd.f32 %v1753, %v2017
      %v2144 = vadd.f32 %v1754, %v2022
      %v2145 = vadd.f32 %v1755, %v2027
      %v2146 = vadd.f32 %v1756, %v2032
      %v2147 = vadd.f32 %v1757, %v2037
      %v2148 = vadd.f32 %v1758, %v2042
      %v2149 = vadd.f32 %v1759, %v2047
      %v2150 = vadd.f32 %v1760, %v2052
      %v2151 = vadd.f32 %v1761, %v2057
      %v2152 = vadd.f32 %v1762, %v2062
      %v2153 = vadd.f32 %v1763, %v2067
      %v2154 = vadd.f32 %v1764, %v2072
      %v2155 = vadd.f32 %v1765, %v2077
      %v2156 = vadd.f32 %v1766, %v2082
      %v2157 = vadd.f32 %v1767, %v2087
      %v2158 = vadd.f32 %v1768, %v2092
      %v2159 = vadd.f32 %v1769, %v2097
      %v2160 = vadd.f32 %v1770, %v2102
      %v2161 = vadd.f32 %v1771, %v2107
      %v2162 = vadd.f32 %v1772, %v2112
      %v2163 = vadd.f32 %v1773, %v2117
      %v2164 = vadd.f32 %v1774, %v2122
      %v2165 = vadd.f32 %v1775, %v2127
      %v2166 = vadd.f32 %v1776, %v2132
      %v2167 = vld [vmem:[%s1386 + $0x2] sm:$0xff]
      %v2168 = vld [vmem:[%s1386 + $0xa] sm:$0xff]
      %v2169 = vld [vmem:[%s1386 + $0x1a] sm:$0xff]
      %v2170 = vld [vmem:[%s1386 + $0x22] sm:$0xff]
      %v2171 = vld [vmem:[%s1386 + $0x32] sm:$0xff]
      %v2172 = vld [vmem:[%s1386 + $0x3a] sm:$0xff]
      %v2173 = vld [vmem:[%s1386 + $0x4a] sm:$0xff]
      %v2174 = vld [vmem:[%s1386 + $0x52] sm:$0xff]
      %v2175 = vld [vmem:[%s1386 + $0x62] sm:$0xff]
      %v2176 = vld [vmem:[%s1386 + $0x6a] sm:$0xff]
      %v2177 = vld [vmem:[%s1386 + $0x7a] sm:$0xff]
      %v2178 = vld [vmem:[%s1386 + $0x82] sm:$0xff]
      %v2179 = vld [vmem:[%s1386 + $0x92] sm:$0xff]
      %v2180 = vld [vmem:[%s1386 + $0x9a] sm:$0xff]
      %v2181 = vld [vmem:[%s1386 + $0xaa] sm:$0xff]
      %v2182 = vld [vmem:[%s1386 + $0xb2] sm:$0xff]
      %v2183 = vld [vmem:[%s1386 + $0xc2] sm:$0xff]
      %v2184 = vld [vmem:[%s1386 + $0xca] sm:$0xff]
      %v2185 = vld [vmem:[%s1386 + $0xda] sm:$0xff]
      %v2186 = vld [vmem:[%s1386 + $0xe2] sm:$0xff]
      %v2187 = vld [vmem:[%s1386 + $0xf2] sm:$0xff]
      %v2188 = vld [vmem:[%s1386 + $0xfa] sm:$0xff]
      %v2189 = vld [vmem:[%s1386 + $0x10a] sm:$0xff]
      %v2190 = vld [vmem:[%s1386 + $0x112] sm:$0xff]
      %v2191 = vld [vmem:[%s1386 + $0x122] sm:$0xff]
      %v2192 = vld [vmem:[%s1386 + $0x12a] sm:$0xff]
      %v2193 = vld [vmem:[%s1386 + $0x13a] sm:$0xff]
      %v2194 = vld [vmem:[%s1386 + $0x142] sm:$0xff]
      %v2195 = vld [vmem:[%s1386 + $0x152] sm:$0xff]
      %v2196 = vld [vmem:[%s1386 + $0x15a] sm:$0xff]
      %v2197 = vld [vmem:[%s1386 + $0x16a] sm:$0xff]
      %v2198 = vld [vmem:[%s1386 + $0x172] sm:$0xff]
      %s2199 = scalar_lea.vmem %s1, 20
      %v2200 = vld [vmem:[%s2199] sm:$0xf]
      %v2202 = vsel %vm346, %v2167, 0
      %v2205 = vsel %vm346, %v2168, 0
      %v2208 = vsel %vm346, %v2169, 0
      %v2211 = vsel %vm346, %v2170, 0
      %v2214 = vsel %vm346, %v2171, 0
      %v2217 = vsel %vm346, %v2172, 0
      %v2220 = vsel %vm346, %v2173, 0
      %v2223 = vsel %vm346, %v2174, 0
      %v2226 = vsel %vm346, %v2175, 0
      %v2229 = vsel %vm346, %v2176, 0
      %v2232 = vsel %vm346, %v2177, 0
      %v2235 = vsel %vm346, %v2178, 0
      %v2238 = vsel %vm346, %v2179, 0
      %v2241 = vsel %vm346, %v2180, 0
      %v2244 = vsel %vm346, %v2181, 0
      %v2247 = vsel %vm346, %v2182, 0
      %v2250 = vsel %vm346, %v2183, 0
      %v2253 = vsel %vm346, %v2184, 0
      %v2256 = vsel %vm346, %v2185, 0
      %v2259 = vsel %vm346, %v2186, 0
      %v2262 = vsel %vm346, %v2187, 0
      %v2265 = vsel %vm346, %v2188, 0
      %v2268 = vsel %vm346, %v2189, 0
      %v2271 = vsel %vm346, %v2190, 0
      %v2274 = vsel %vm346, %v2191, 0
      %v2277 = vsel %vm346, %v2192, 0
      %v2280 = vsel %vm346, %v2193, 0
      %v2283 = vsel %vm346, %v2194, 0
      %v2286 = vsel %vm346, %v2195, 0
      %v2289 = vsel %vm346, %v2196, 0
      %v2292 = vsel %vm346, %v2197, 0
      %v2295 = vsel %vm346, %v2198, 0
      %v2298 = vsel %vm443, %v2200, 0
      %2300 = vmatprep.subr.mxu0 0.0
      %2301 = vmatpush1.msra.mxu0 %v2298
      %2302 = vmatprep.subr.mxu0 0.0
      %2303 = vmatpush1.msra.mxu0 0.0
      %2304 = vmatprep.subr.mxu0 0.0
      %2305 = vmatpush1.msra.mxu0 0.0
      %2306 = vmatprep.subr.mxu0 0.0
      %2307 = vmatpush1.msra.mxu0 0.0
      %2308 = vmatprep.subr.mxu0 0.0
      %2309 = vmatpush1.msra.mxu0 0.0
      %2310 = vmatprep.subr.mxu0 0.0
      %2311 = vmatpush1.msra.mxu0 0.0
      %2312 = vmatprep.subr.mxu0 0.0
      %2313 = vmatpush1.msra.mxu0 0.0
      %2314 = vmatprep.subr.mxu0 0.0
      %2315 = vmatpush1.msra.mxu0 0.0
      %2316 = vmatprep.subr.mxu0 0.0
      %2317 = vmatpush1.msra.mxu0 0.0
      %2318 = vmatprep.subr.mxu0 0.0
      %2319 = vmatpush1.msra.mxu0 0.0
      %2320 = vmatprep.subr.mxu0 0.0
      %2321 = vmatpush1.msra.mxu0 0.0
      %2322 = vmatprep.subr.mxu0 0.0
      %2323 = vmatpush1.msra.mxu0 0.0
      %2324 = vmatprep.subr.mxu0 0.0
      %2325 = vmatpush1.msra.mxu0 0.0
      %2326 = vmatprep.subr.mxu0 0.0
      %2327 = vmatpush1.msra.mxu0 0.0
      %2328 = vmatprep.subr.mxu0 0.0
      %2329 = vmatpush1.msra.mxu0 0.0
      %2330 = vmatprep.subr.mxu0 0.0
      %2331 = vmatpush1.msra.mxu0 0.0
      %2332 = vmatprep.subr.mxu0 0.0
      %2333 = vmatpush1.msra.mxu0 0.0
      %2334 = vmatprep.subr.mxu0 0.0
      %2335 = vmatpush1.msra.mxu0 0.0
      %2336 = vmatprep.subr.mxu0 0.0
      %2337 = vmatpush1.msra.mxu0 0.0
      %2338 = vmatprep.subr.mxu0 0.0
      %2339 = vmatpush1.msra.mxu0 0.0
      %2340 = vmatprep.subr.mxu0 0.0
      %2341 = vmatpush1.msra.mxu0 0.0
      %2342 = vmatprep.subr.mxu0 0.0
      %2343 = vmatpush1.msra.mxu0 0.0
      %2344 = vmatprep.subr.mxu0 0.0
      %2345 = vmatpush1.msra.mxu0 0.0
      %2346 = vmatprep.subr.mxu0 0.0
      %2347 = vmatpush1.msra.mxu0 0.0
      %2348 = vmatprep.subr.mxu0 0.0
      %2349 = vmatpush1.msra.mxu0 0.0
      %2350 = vmatprep.subr.mxu0 0.0
      %2351 = vmatpush1.msra.mxu0 0.0
      %2352 = vmatprep.subr.mxu0 0.0
      %2353 = vmatpush1.msra.mxu0 0.0
      %2354 = vmatprep.subr.mxu0 0.0
      %2355 = vmatpush1.msra.mxu0 0.0
      %2356 = vmatprep.subr.mxu0 0.0
      %2357 = vmatpush1.msra.mxu0 0.0
      %2358 = vmatprep.subr.mxu0 0.0
      %2359 = vmatpush1.msra.mxu0 0.0
      %2360 = vmatprep.subr.mxu0 0.0
      %2361 = vmatpush1.msra.mxu0 0.0
      %2362 = vmatprep.subr.mxu0 0.0
      %2363 = vmatpush1.msra.mxu0 0.0
      %2364 = vmatprep.mubr.f32.mxu0 0.0
      %2365 = vmatmul.mubr.f32.gmra.mrb[0].mxu0 %v2202
      %v2366 = vpop.f32.mrb[0].mxu0
      %v2367 = vadd.f32 0.0, %v2366
      %v2368 = vpop.f32.mrb[0].mxu0
      %2369 = vmatprep.mubr.f32.mxu0 0.0
      %2370 = vmatmul.mubr.f32.gmra.mrb[0].mxu0 %v2205
      %v2371 = vpop.f32.mrb[0].mxu0
      %v2372 = vadd.f32 0.0, %v2371
      %v2373 = vpop.f32.mrb[0].mxu0
      %2374 = vmatprep.mubr.f32.mxu0 0.0
      %2375 = vmatmul.mubr.f32.gmra.mrb[0].mxu0 %v2208
      %v2376 = vpop.f32.mrb[0].mxu0
      %v2377 = vadd.f32 0.0, %v2376
      %v2378 = vpop.f32.mrb[0].mxu0
      %2379 = vmatprep.mubr.f32.mxu0 0.0
      %2380 = vmatmul.mubr.f32.gmra.mrb[0].mxu0 %v2211
      %v2381 = vpop.f32.mrb[0].mxu0
      %v2382 = vadd.f32 0.0, %v2381
      %v2383 = vpop.f32.mrb[0].mxu0
      %2384 = vmatprep.mubr.f32.mxu0 0.0
      %2385 = vmatmul.mubr.f32.gmra.mrb[0].mxu0 %v2214
      %v2386 = vpop.f32.mrb[0].mxu0
      %v2387 = vadd.f32 0.0, %v2386
      %v2388 = vpop.f32.mrb[0].mxu0
      %2389 = vmatprep.mubr.f32.mxu0 0.0
      %2390 = vmatmul.mubr.f32.gmra.mrb[0].mxu0 %v2217
      %v2391 = vpop.f32.mrb[0].mxu0
      %v2392 = vadd.f32 0.0, %v2391
      %v2393 = vpop.f32.mrb[0].mxu0
      %2394 = vmatprep.mubr.f32.mxu0 0.0
      %2395 = vmatmul.mubr.f32.gmra.mrb[0].mxu0 %v2220
      %v2396 = vpop.f32.mrb[0].mxu0
      %v2397 = vadd.f32 0.0, %v2396
      %v2398 = vpop.f32.mrb[0].mxu0
      %2399 = vmatprep.mubr.f32.mxu0 0.0
      %2400 = vmatmul.mubr.f32.gmra.mrb[0].mxu0 %v2223
      %v2401 = vpop.f32.mrb[0].mxu0
      %v2402 = vadd.f32 0.0, %v2401
      %v2403 = vpop.f32.mrb[0].mxu0
      %2404 = vmatprep.mubr.f32.mxu0 0.0
      %2405 = vmatmul.mubr.f32.gmra.mrb[0].mxu0 %v2226
      %v2406 = vpop.f32.mrb[0].mxu0
      %v2407 = vadd.f32 0.0, %v2406
      %v2408 = vpop.f32.mrb[0].mxu0
      %2409 = vmatprep.mubr.f32.mxu0 0.0
      %2410 = vmatmul.mubr.f32.gmra.mrb[0].mxu0 %v2229
      %v2411 = vpop.f32.mrb[0].mxu0
      %v2412 = vadd.f32 0.0, %v2411
      %v2413 = vpop.f32.mrb[0].mxu0
      %2414 = vmatprep.mubr.f32.mxu0 0.0
      %2415 = vmatmul.mubr.f32.gmra.mrb[0].mxu0 %v2232
      %v2416 = vpop.f32.mrb[0].mxu0
      %v2417 = vadd.f32 0.0, %v2416
      %v2418 = vpop.f32.mrb[0].mxu0
      %2419 = vmatprep.mubr.f32.mxu0 0.0
      %2420 = vmatmul.mubr.f32.gmra.mrb[0].mxu0 %v2235
      %v2421 = vpop.f32.mrb[0].mxu0
      %v2422 = vadd.f32 0.0, %v2421
      %v2423 = vpop.f32.mrb[0].mxu0
      %2424 = vmatprep.mubr.f32.mxu0 0.0
      %2425 = vmatmul.mubr.f32.gmra.mrb[0].mxu0 %v2238
      %v2426 = vpop.f32.mrb[0].mxu0
      %v2427 = vadd.f32 0.0, %v2426
      %v2428 = vpop.f32.mrb[0].mxu0
      %2429 = vmatprep.mubr.f32.mxu0 0.0
      %2430 = vmatmul.mubr.f32.gmra.mrb[0].mxu0 %v2241
      %v2431 = vpop.f32.mrb[0].mxu0
      %v2432 = vadd.f32 0.0, %v2431
      %v2433 = vpop.f32.mrb[0].mxu0
      %2434 = vmatprep.mubr.f32.mxu0 0.0
      %2435 = vmatmul.mubr.f32.gmra.mrb[0].mxu0 %v2244
      %v2436 = vpop.f32.mrb[0].mxu0
      %v2437 = vadd.f32 0.0, %v2436
      %v2438 = vpop.f32.mrb[0].mxu0
      %2439 = vmatprep.mubr.f32.mxu0 0.0
      %2440 = vmatmul.mubr.f32.gmra.mrb[0].mxu0 %v2247
      %v2441 = vpop.f32.mrb[0].mxu0
      %v2442 = vadd.f32 0.0, %v2441
      %v2443 = vpop.f32.mrb[0].mxu0
      %2444 = vmatprep.mubr.f32.mxu0 0.0
      %2445 = vmatmul.mubr.f32.gmra.mrb[0].mxu0 %v2250
      %v2446 = vpop.f32.mrb[0].mxu0
      %v2447 = vadd.f32 0.0, %v2446
      %v2448 = vpop.f32.mrb[0].mxu0
      %2449 = vmatprep.mubr.f32.mxu0 0.0
      %2450 = vmatmul.mubr.f32.gmra.mrb[0].mxu0 %v2253
      %v2451 = vpop.f32.mrb[0].mxu0
      %v2452 = vadd.f32 0.0, %v2451
      %v2453 = vpop.f32.mrb[0].mxu0
      %2454 = vmatprep.mubr.f32.mxu0 0.0
      %2455 = vmatmul.mubr.f32.gmra.mrb[0].mxu0 %v2256
      %v2456 = vpop.f32.mrb[0].mxu0
      %v2457 = vadd.f32 0.0, %v2456
      %v2458 = vpop.f32.mrb[0].mxu0
      %2459 = vmatprep.mubr.f32.mxu0 0.0
      %2460 = vmatmul.mubr.f32.gmra.mrb[0].mxu0 %v2259
      %v2461 = vpop.f32.mrb[0].mxu0
      %v2462 = vadd.f32 0.0, %v2461
      %v2463 = vpop.f32.mrb[0].mxu0
      %2464 = vmatprep.mubr.f32.mxu0 0.0
      %2465 = vmatmul.mubr.f32.gmra.mrb[0].mxu0 %v2262
      %v2466 = vpop.f32.mrb[0].mxu0
      %v2467 = vadd.f32 0.0, %v2466
      %v2468 = vpop.f32.mrb[0].mxu0
      %2469 = vmatprep.mubr.f32.mxu0 0.0
      %2470 = vmatmul.mubr.f32.gmra.mrb[0].mxu0 %v2265
      %v2471 = vpop.f32.mrb[0].mxu0
      %v2472 = vadd.f32 0.0, %v2471
      %v2473 = vpop.f32.mrb[0].mxu0
      %2474 = vmatprep.mubr.f32.mxu0 0.0
      %2475 = vmatmul.mubr.f32.gmra.mrb[0].mxu0 %v2268
      %v2476 = vpop.f32.mrb[0].mxu0
      %v2477 = vadd.f32 0.0, %v2476
      %v2478 = vpop.f32.mrb[0].mxu0
      %2479 = vmatprep.mubr.f32.mxu0 0.0
      %2480 = vmatmul.mubr.f32.gmra.mrb[0].mxu0 %v2271
      %v2481 = vpop.f32.mrb[0].mxu0
      %v2482 = vadd.f32 0.0, %v2481
      %v2483 = vpop.f32.mrb[0].mxu0
      %2484 = vmatprep.mubr.f32.mxu0 0.0
      %2485 = vmatmul.mubr.f32.gmra.mrb[0].mxu0 %v2274
      %v2486 = vpop.f32.mrb[0].mxu0
      %v2487 = vadd.f32 0.0, %v2486
      %v2488 = vpop.f32.mrb[0].mxu0
      %2489 = vmatprep.mubr.f32.mxu0 0.0
      %2490 = vmatmul.mubr.f32.gmra.mrb[0].mxu0 %v2277
      %v2491 = vpop.f32.mrb[0].mxu0
      %v2492 = vadd.f32 0.0, %v2491
      %v2493 = vpop.f32.mrb[0].mxu0
      %2494 = vmatprep.mubr.f32.mxu0 0.0
      %2495 = vmatmul.mubr.f32.gmra.mrb[0].mxu0 %v2280
      %v2496 = vpop.f32.mrb[0].mxu0
      %v2497 = vadd.f32 0.0, %v2496
      %v2498 = vpop.f32.mrb[0].mxu0
      %2499 = vmatprep.mubr.f32.mxu0 0.0
      %2500 = vmatmul.mubr.f32.gmra.mrb[0].mxu0 %v2283
      %v2501 = vpop.f32.mrb[0].mxu0
      %v2502 = vadd.f32 0.0, %v2501
      %v2503 = vpop.f32.mrb[0].mxu0
      %2504 = vmatprep.mubr.f32.mxu0 0.0
      %2505 = vmatmul.mubr.f32.gmra.mrb[0].mxu0 %v2286
      %v2506 = vpop.f32.mrb[0].mxu0
      %v2507 = vadd.f32 0.0, %v2506
      %v2508 = vpop.f32.mrb[0].mxu0
      %2509 = vmatprep.mubr.f32.mxu0 0.0
      %2510 = vmatmul.mubr.f32.gmra.mrb[0].mxu0 %v2289
      %v2511 = vpop.f32.mrb[0].mxu0
      %v2512 = vadd.f32 0.0, %v2511
      %v2513 = vpop.f32.mrb[0].mxu0
      %2514 = vmatprep.mubr.f32.mxu0 0.0
      %2515 = vmatmul.mubr.f32.gmra.mrb[0].mxu0 %v2292
      %v2516 = vpop.f32.mrb[0].mxu0
      %v2517 = vadd.f32 0.0, %v2516
      %v2518 = vpop.f32.mrb[0].mxu0
      %2519 = vmatprep.mubr.f32.mxu0 0.0
      %2520 = vmatmul.mubr.f32.gmra.mrb[0].mxu0 %v2295
      %v2521 = vpop.f32.mrb[0].mxu0
      %v2522 = vadd.f32 0.0, %v2521
      %v2523 = vpop.f32.mrb[0].mxu0
      %2524 = vdwg.mxu0
      %v2525 = vadd.f32 %v2135, %v2367
      %v2526 = vadd.f32 %v2136, %v2372
      %v2527 = vadd.f32 %v2137, %v2377
      %v2528 = vadd.f32 %v2138, %v2382
      %v2529 = vadd.f32 %v2139, %v2387
      %v2530 = vadd.f32 %v2140, %v2392
      %v2531 = vadd.f32 %v2141, %v2397
      %v2532 = vadd.f32 %v2142, %v2402
      %v2533 = vadd.f32 %v2143, %v2407
      %v2534 = vadd.f32 %v2144, %v2412
      %v2535 = vadd.f32 %v2145, %v2417
      %v2536 = vadd.f32 %v2146, %v2422
      %v2537 = vadd.f32 %v2147, %v2427
      %v2538 = vadd.f32 %v2148, %v2432
      %v2539 = vadd.f32 %v2149, %v2437
      %v2540 = vadd.f32 %v2150, %v2442
      %v2541 = vadd.f32 %v2151, %v2447
      %v2542 = vadd.f32 %v2152, %v2452
      %v2543 = vadd.f32 %v2153, %v2457
      %v2544 = vadd.f32 %v2154, %v2462
      %v2545 = vadd.f32 %v2155, %v2467
      %v2546 = vadd.f32 %v2156, %v2472
      %v2547 = vadd.f32 %v2157, %v2477
      %v2548 = vadd.f32 %v2158, %v2482
      %v2549 = vadd.f32 %v2159, %v2487
      %v2550 = vadd.f32 %v2160, %v2492
      %v2551 = vadd.f32 %v2161, %v2497
      %v2552 = vadd.f32 %v2162, %v2502
      %v2553 = vadd.f32 %v2163, %v2507
      %v2554 = vadd.f32 %v2164, %v2512
      %v2555 = vadd.f32 %v2165, %v2517
      %v2556 = vadd.f32 %v2166, %v2522
      %s2557 = scalar_lea.vmem %s273, 48
      %v2558 = vld [vmem:[%s2557] sm:$0xff]
      %v2559 = vld [vmem:[%s2557 + $0x8] sm:$0xff]
      %v2560 = vld [vmem:[%s2557 + $0x18] sm:$0xff]
      %v2561 = vld [vmem:[%s2557 + $0x20] sm:$0xff]
      %v2562 = vld [vmem:[%s2557 + $0x30] sm:$0xff]
      %v2563 = vld [vmem:[%s2557 + $0x38] sm:$0xff]
      %v2564 = vld [vmem:[%s2557 + $0x48] sm:$0xff]
      %v2565 = vld [vmem:[%s2557 + $0x50] sm:$0xff]
      %v2566 = vld [vmem:[%s2557 + $0x60] sm:$0xff]
      %v2567 = vld [vmem:[%s2557 + $0x68] sm:$0xff]
      %v2568 = vld [vmem:[%s2557 + $0x78] sm:$0xff]
      %v2569 = vld [vmem:[%s2557 + $0x80] sm:$0xff]
      %v2570 = vld [vmem:[%s2557 + $0x90] sm:$0xff]
      %v2571 = vld [vmem:[%s2557 + $0x98] sm:$0xff]
      %v2572 = vld [vmem:[%s2557 + $0xa8] sm:$0xff]
      %v2573 = vld [vmem:[%s2557 + $0xb0] sm:$0xff]
      %v2574 = vld [vmem:[%s2557 + $0xc0] sm:$0xff]
      %v2575 = vld [vmem:[%s2557 + $0xc8] sm:$0xff]
      %v2576 = vld [vmem:[%s2557 + $0xd8] sm:$0xff]
      %v2577 = vld [vmem:[%s2557 + $0xe0] sm:$0xff]
      %v2578 = vld [vmem:[%s2557 + $0xf0] sm:$0xff]
      %v2579 = vld [vmem:[%s2557 + $0xf8] sm:$0xff]
      %v2580 = vld [vmem:[%s2557 + $0x108] sm:$0xff]
      %v2581 = vld [vmem:[%s2557 + $0x110] sm:$0xff]
      %v2582 = vld [vmem:[%s2557 + $0x120] sm:$0xff]
      %v2583 = vld [vmem:[%s2557 + $0x128] sm:$0xff]
      %v2584 = vld [vmem:[%s2557 + $0x138] sm:$0xff]
      %v2585 = vld [vmem:[%s2557 + $0x140] sm:$0xff]
      %v2586 = vld [vmem:[%s2557 + $0x150] sm:$0xff]
      %v2587 = vld [vmem:[%s2557 + $0x158] sm:$0xff]
      %v2588 = vld [vmem:[%s2557 + $0x168] sm:$0xff]
      %v2589 = vld [vmem:[%s2557 + $0x170] sm:$0xff]
      %s2590 = scalar_lea.vmem %s1, 24
      %v2591 = vld [vmem:[%s2590] sm:$0xf]
      %v2593 = vsel %vm346, %v2558, 0
      %v2596 = vsel %vm346, %v2559, 0
      %v2599 = vsel %vm346, %v2560, 0
      %v2602 = vsel %vm346, %v2561, 0
      %v2605 = vsel %vm346, %v2562, 0
      %v2608 = vsel %vm346, %v2563, 0
      %v2611 = vsel %vm346, %v2564, 0
      %v2614 = vsel %vm346, %v2565, 0
      %v2617 = vsel %vm346, %v2566, 0
      %v2620 = vsel %vm346, %v2567, 0
      %v2623 = vsel %vm346, %v2568, 0
      %v2626 = vsel %vm346, %v2569, 0
      %v2629 = vsel %vm346, %v2570, 0
      %v2632 = vsel %vm346, %v2571, 0
      %v2635 = vsel %vm346, %v2572, 0
      %v2638 = vsel %vm346, %v2573, 0
      %v2641 = vsel %vm346, %v2574, 0
      %v2644 = vsel %vm346, %v2575, 0
      %v2647 = vsel %vm346, %v2576, 0
      %v2650 = vsel %vm346, %v2577, 0
      %v2653 = vsel %vm346, %v2578, 0
      %v2656 = vsel %vm346, %v2579, 0
      %v2659 = vsel %vm346, %v2580, 0
      %v2662 = vsel %vm346, %v2581, 0
      %v2665 = vsel %vm346, %v2582, 0
      %v2668 = vsel %vm346, %v2583, 0
      %v2671 = vsel %vm346, %v2584, 0
      %v2674 = vsel %vm346, %v2585, 0
      %v2677 = vsel %vm346, %v2586, 0
      %v2680 = vsel %vm346, %v2587, 0
      %v2683 = vsel %vm346, %v2588, 0
      %v2686 = vsel %vm346, %v2589, 0
      %v2689 = vsel %vm443, %v2591, 0
      %2691 = vmatprep.subr.mxu0 0.0
      %2692 = vmatpush1.msra.mxu0 %v2689
      %2693 = vmatprep.subr.mxu0 0.0
      %2694 = vmatpush1.msra.mxu0 0.0
      %2695 = vmatprep.subr.mxu0 0.0
      %2696 = vmatpush1.msra.mxu0 0.0
      %2697 = vmatprep.subr.mxu0 0.0
      %2698 = vmatpush1.msra.mxu0 0.0
      %2699 = vmatprep.subr.mxu0 0.0
      %2700 = vmatpush1.msra.mxu0 0.0
      %2701 = vmatprep.subr.mxu0 0.0
      %2702 = vmatpush1.msra.mxu0 0.0
      %2703 = vmatprep.subr.mxu0 0.0
      %2704 = vmatpush1.msra.mxu0 0.0
      %2705 = vmatprep.subr.mxu0 0.0
      %2706 = vmatpush1.msra.mxu0 0.0
      %2707 = vmatprep.subr.mxu0 0.0
      %2708 = vmatpush1.msra.mxu0 0.0
      %2709 = vmatprep.subr.mxu0 0.0
      %2710 = vmatpush1.msra.mxu0 0.0
      %2711 = vmatprep.subr.mxu0 0.0
      %2712 = vmatpush1.msra.mxu0 0.0
      %2713 = vmatprep.subr.mxu0 0.0
      %2714 = vmatpush1.msra.mxu0 0.0
      %2715 = vmatprep.subr.mxu0 0.0
      %2716 = vmatpush1.msra.mxu0 0.0
      %2717 = vmatprep.subr.mxu0 0.0
      %2718 = vmatpush1.msra.mxu0 0.0
      %2719 = vmatprep.subr.mxu0 0.0
      %2720 = vmatpush1.msra.mxu0 0.0
      %2721 = vmatprep.subr.mxu0 0.0
      %2722 = vmatpush1.msra.mxu0 0.0
      %2723 = vmatprep.subr.mxu0 0.0
      %2724 = vmatpush1.msra.mxu0 0.0
      %2725 = vmatprep.subr.mxu0 0.0
      %2726 = vmatpush1.msra.mxu0 0.0
      %2727 = vmatprep.subr.mxu0 0.0
      %2728 = vmatpush1.msra.mxu0 0.0
      %2729 = vmatprep.subr.mxu0 0.0
      %2730 = vmatpush1.msra.mxu0 0.0
      %2731 = vmatprep.subr.mxu0 0.0
      %2732 = vmatpush1.msra.mxu0 0.0
      %2733 = vmatprep.subr.mxu0 0.0
      %2734 = vmatpush1.msra.mxu0 0.0
      %2735 = vmatprep.subr.mxu0 0.0
      %2736 = vmatpush1.msra.mxu0 0.0
      %2737 = vmatprep.subr.mxu0 0.0
      %2738 = vmatpush1.msra.mxu0 0.0
      %2739 = vmatprep.subr.mxu0 0.0
      %2740 = vmatpush1.msra.mxu0 0.0
      %2741 = vmatprep.subr.mxu0 0.0
      %2742 = vmatpush1.msra.mxu0 0.0
      %2743 = vmatprep.subr.mxu0 0.0
      %2744 = vmatpush1.msra.mxu0 0.0
      %2745 = vmatprep.subr.mxu0 0.0
      %2746 = vmatpush1.msra.mxu0 0.0
      %2747 = vmatprep.subr.mxu0 0.0
      %2748 = vmatpush1.msra.mxu0 0.0
      %2749 = vmatprep.subr.mxu0 0.0
      %2750 = vmatpush1.msra.mxu0 0.0
      %2751 = vmatprep.subr.mxu0 0.0
      %2752 = vmatpush1.msra.mxu0 0.0
      %2753 = vmatprep.subr.mxu0 0.0
      %2754 = vmatpush1.msra.mxu0 0.0
      %2755 = vmatprep.mubr.f32.mxu0 0.0
      %2756 = vmatmul.mubr.f32.gmra.mrb[0].mxu0 %v2593
      %v2757 = vpop.f32.mrb[0].mxu0
      %v2758 = vadd.f32 0.0, %v2757
      %v2759 = vpop.f32.mrb[0].mxu0
      %2760 = vmatprep.mubr.f32.mxu0 0.0
      %2761 = vmatmul.mubr.f32.gmra.mrb[0].mxu0 %v2596
      %v2762 = vpop.f32.mrb[0].mxu0
      %v2763 = vadd.f32 0.0, %v2762
      %v2764 = vpop.f32.mrb[0].mxu0
      %2765 = vmatprep.mubr.f32.mxu0 0.0
      %2766 = vmatmul.mubr.f32.gmra.mrb[0].mxu0 %v2599
      %v2767 = vpop.f32.mrb[0].mxu0
      %v2768 = vadd.f32 0.0, %v2767
      %v2769 = vpop.f32.mrb[0].mxu0
      %2770 = vmatprep.mubr.f32.mxu0 0.0
      %2771 = vmatmul.mubr.f32.gmra.mrb[0].mxu0 %v2602
      %v2772 = vpop.f32.mrb[0].mxu0
      %v2773 = vadd.f32 0.0, %v2772
      %v2774 = vpop.f32.mrb[0].mxu0
      %2775 = vmatprep.mubr.f32.mxu0 0.0
      %2776 = vmatmul.mubr.f32.gmra.mrb[0].mxu0 %v2605
      %v2777 = vpop.f32.mrb[0].mxu0
      %v2778 = vadd.f32 0.0, %v2777
      %v2779 = vpop.f32.mrb[0].mxu0
      %2780 = vmatprep.mubr.f32.mxu0 0.0
      %2781 = vmatmul.mubr.f32.gmra.mrb[0].mxu0 %v2608
      %v2782 = vpop.f32.mrb[0].mxu0
      %v2783 = vadd.f32 0.0, %v2782
      %v2784 = vpop.f32.mrb[0].mxu0
      %2785 = vmatprep.mubr.f32.mxu0 0.0
      %2786 = vmatmul.mubr.f32.gmra.mrb[0].mxu0 %v2611
      %v2787 = vpop.f32.mrb[0].mxu0
      %v2788 = vadd.f32 0.0, %v2787
      %v2789 = vpop.f32.mrb[0].mxu0
      %2790 = vmatprep.mubr.f32.mxu0 0.0
      %2791 = vmatmul.mubr.f32.gmra.mrb[0].mxu0 %v2614
      %v2792 = vpop.f32.mrb[0].mxu0
      %v2793 = vadd.f32 0.0, %v2792
      %v2794 = vpop.f32.mrb[0].mxu0
      %2795 = vmatprep.mubr.f32.mxu0 0.0
      %2796 = vmatmul.mubr.f32.gmra.mrb[0].mxu0 %v2617
      %v2797 = vpop.f32.mrb[0].mxu0
      %v2798 = vadd.f32 0.0, %v2797
      %v2799 = vpop.f32.mrb[0].mxu0
      %2800 = vmatprep.mubr.f32.mxu0 0.0
      %2801 = vmatmul.mubr.f32.gmra.mrb[0].mxu0 %v2620
      %v2802 = vpop.f32.mrb[0].mxu0
      %v2803 = vadd.f32 0.0, %v2802
      %v2804 = vpop.f32.mrb[0].mxu0
      %2805 = vmatprep.mubr.f32.mxu0 0.0
      %2806 = vmatmul.mubr.f32.gmra.mrb[0].mxu0 %v2623
      %v2807 = vpop.f32.mrb[0].mxu0
      %v2808 = vadd.f32 0.0, %v2807
      %v2809 = vpop.f32.mrb[0].mxu0
      %2810 = vmatprep.mubr.f32.mxu0 0.0
      %2811 = vmatmul.mubr.f32.gmra.mrb[0].mxu0 %v2626
      %v2812 = vpop.f32.mrb[0].mxu0
      %v2813 = vadd.f32 0.0, %v2812
      %v2814 = vpop.f32.mrb[0].mxu0
      %2815 = vmatprep.mubr.f32.mxu0 0.0
      %2816 = vmatmul.mubr.f32.gmra.mrb[0].mxu0 %v2629
      %v2817 = vpop.f32.mrb[0].mxu0
      %v2818 = vadd.f32 0.0, %v2817
      %v2819 = vpop.f32.mrb[0].mxu0
      %2820 = vmatprep.mubr.f32.mxu0 0.0
      %2821 = vmatmul.mubr.f32.gmra.mrb[0].mxu0 %v2632
      %v2822 = vpop.f32.mrb[0].mxu0
      %v2823 = vadd.f32 0.0, %v2822
      %v2824 = vpop.f32.mrb[0].mxu0
      %2825 = vmatprep.mubr.f32.mxu0 0.0
      %2826 = vmatmul.mubr.f32.gmra.mrb[0].mxu0 %v2635
      %v2827 = vpop.f32.mrb[0].mxu0
      %v2828 = vadd.f32 0.0, %v2827
      %v2829 = vpop.f32.mrb[0].mxu0
      %2830 = vmatprep.mubr.f32.mxu0 0.0
      %2831 = vmatmul.mubr.f32.gmra.mrb[0].mxu0 %v2638
      %v2832 = vpop.f32.mrb[0].mxu0
      %v2833 = vadd.f32 0.0, %v2832
      %v2834 = vpop.f32.mrb[0].mxu0
      %2835 = vmatprep.mubr.f32.mxu0 0.0
      %2836 = vmatmul.mubr.f32.gmra.mrb[0].mxu0 %v2641
      %v2837 = vpop.f32.mrb[0].mxu0
      %v2838 = vadd.f32 0.0, %v2837
      %v2839 = vpop.f32.mrb[0].mxu0
      %2840 = vmatprep.mubr.f32.mxu0 0.0
      %2841 = vmatmul.mubr.f32.gmra.mrb[0].mxu0 %v2644
      %v2842 = vpop.f32.mrb[0].mxu0
      %v2843 = vadd.f32 0.0, %v2842
      %v2844 = vpop.f32.mrb[0].mxu0
      %2845 = vmatprep.mubr.f32.mxu0 0.0
      %2846 = vmatmul.mubr.f32.gmra.mrb[0].mxu0 %v2647
      %v2847 = vpop.f32.mrb[0].mxu0
      %v2848 = vadd.f32 0.0, %v2847
      %v2849 = vpop.f32.mrb[0].mxu0
      %2850 = vmatprep.mubr.f32.mxu0 0.0
      %2851 = vmatmul.mubr.f32.gmra.mrb[0].mxu0 %v2650
      %v2852 = vpop.f32.mrb[0].mxu0
      %v2853 = vadd.f32 0.0, %v2852
      %v2854 = vpop.f32.mrb[0].mxu0
      %2855 = vmatprep.mubr.f32.mxu0 0.0
      %2856 = vmatmul.mubr.f32.gmra.mrb[0].mxu0 %v2653
      %v2857 = vpop.f32.mrb[0].mxu0
      %v2858 = vadd.f32 0.0, %v2857
      %v2859 = vpop.f32.mrb[0].mxu0
      %2860 = vmatprep.mubr.f32.mxu0 0.0
      %2861 = vmatmul.mubr.f32.gmra.mrb[0].mxu0 %v2656
      %v2862 = vpop.f32.mrb[0].mxu0
      %v2863 = vadd.f32 0.0, %v2862
      %v2864 = vpop.f32.mrb[0].mxu0
      %2865 = vmatprep.mubr.f32.mxu0 0.0
      %2866 = vmatmul.mubr.f32.gmra.mrb[0].mxu0 %v2659
      %v2867 = vpop.f32.mrb[0].mxu0
      %v2868 = vadd.f32 0.0, %v2867
      %v2869 = vpop.f32.mrb[0].mxu0
      %2870 = vmatprep.mubr.f32.mxu0 0.0
      %2871 = vmatmul.mubr.f32.gmra.mrb[0].mxu0 %v2662
      %v2872 = vpop.f32.mrb[0].mxu0
      %v2873 = vadd.f32 0.0, %v2872
      %v2874 = vpop.f32.mrb[0].mxu0
      %2875 = vmatprep.mubr.f32.mxu0 0.0
      %2876 = vmatmul.mubr.f32.gmra.mrb[0].mxu0 %v2665
      %v2877 = vpop.f32.mrb[0].mxu0
      %v2878 = vadd.f32 0.0, %v2877
      %v2879 = vpop.f32.mrb[0].mxu0
      %2880 = vmatprep.mubr.f32.mxu0 0.0
      %2881 = vmatmul.mubr.f32.gmra.mrb[0].mxu0 %v2668
      %v2882 = vpop.f32.mrb[0].mxu0
      %v2883 = vadd.f32 0.0, %v2882
      %v2884 = vpop.f32.mrb[0].mxu0
      %2885 = vmatprep.mubr.f32.mxu0 0.0
      %2886 = vmatmul.mubr.f32.gmra.mrb[0].mxu0 %v2671
      %v2887 = vpop.f32.mrb[0].mxu0
      %v2888 = vadd.f32 0.0, %v2887
      %v2889 = vpop.f32.mrb[0].mxu0
      %2890 = vmatprep.mubr.f32.mxu0 0.0
      %2891 = vmatmul.mubr.f32.gmra.mrb[0].mxu0 %v2674
      %v2892 = vpop.f32.mrb[0].mxu0
      %v2893 = vadd.f32 0.0, %v2892
      %v2894 = vpop.f32.mrb[0].mxu0
      %2895 = vmatprep.mubr.f32.mxu0 0.0
      %2896 = vmatmul.mubr.f32.gmra.mrb[0].mxu0 %v2677
      %v2897 = vpop.f32.mrb[0].mxu0
      %v2898 = vadd.f32 0.0, %v2897
      %v2899 = vpop.f32.mrb[0].mxu0
      %2900 = vmatprep.mubr.f32.mxu0 0.0
      %2901 = vmatmul.mubr.f32.gmra.mrb[0].mxu0 %v2680
      %v2902 = vpop.f32.mrb[0].mxu0
      %v2903 = vadd.f32 0.0, %v2902
      %v2904 = vpop.f32.mrb[0].mxu0
      %2905 = vmatprep.mubr.f32.mxu0 0.0
      %2906 = vmatmul.mubr.f32.gmra.mrb[0].mxu0 %v2683
      %v2907 = vpop.f32.mrb[0].mxu0
      %v2908 = vadd.f32 0.0, %v2907
      %v2909 = vpop.f32.mrb[0].mxu0
      %2910 = vmatprep.mubr.f32.mxu0 0.0
      %2911 = vmatmul.mubr.f32.gmra.mrb[0].mxu0 %v2686
      %v2912 = vpop.f32.mrb[0].mxu0
      %v2913 = vadd.f32 0.0, %v2912
      %v2914 = vpop.f32.mrb[0].mxu0
      %2915 = vdwg.mxu0
      %v2916 = vadd.f32 %v2525, %v2758
      %v2917 = vadd.f32 %v2526, %v2763
      %v2918 = vadd.f32 %v2527, %v2768
      %v2919 = vadd.f32 %v2528, %v2773
      %v2920 = vadd.f32 %v2529, %v2778
      %v2921 = vadd.f32 %v2530, %v2783
      %v2922 = vadd.f32 %v2531, %v2788
      %v2923 = vadd.f32 %v2532, %v2793
      %v2924 = vadd.f32 %v2533, %v2798
      %v2925 = vadd.f32 %v2534, %v2803
      %v2926 = vadd.f32 %v2535, %v2808
      %v2927 = vadd.f32 %v2536, %v2813
      %v2928 = vadd.f32 %v2537, %v2818
      %v2929 = vadd.f32 %v2538, %v2823
      %v2930 = vadd.f32 %v2539, %v2828
      %v2931 = vadd.f32 %v2540, %v2833
      %v2932 = vadd.f32 %v2541, %v2838
      %v2933 = vadd.f32 %v2542, %v2843
      %v2934 = vadd.f32 %v2543, %v2848
      %v2935 = vadd.f32 %v2544, %v2853
      %v2936 = vadd.f32 %v2545, %v2858
      %v2937 = vadd.f32 %v2546, %v2863
      %v2938 = vadd.f32 %v2547, %v2868
      %v2939 = vadd.f32 %v2548, %v2873
      %v2940 = vadd.f32 %v2549, %v2878
      %v2941 = vadd.f32 %v2550, %v2883
      %v2942 = vadd.f32 %v2551, %v2888
      %v2943 = vadd.f32 %v2552, %v2893
      %v2944 = vadd.f32 %v2553, %v2898
      %v2945 = vadd.f32 %v2554, %v2903
      %v2946 = vadd.f32 %v2555, %v2908
      %v2947 = vadd.f32 %v2556, %v2913
      %v2948 = vld [vmem:[%s2557 + $0x1] sm:$0xff]
      %v2949 = vld [vmem:[%s2557 + $0x9] sm:$0xff]
      %v2950 = vld [vmem:[%s2557 + $0x19] sm:$0xff]
      %v2951 = vld [vmem:[%s2557 + $0x21] sm:$0xff]
      %v2952 = vld [vmem:[%s2557 + $0x31] sm:$0xff]
      %v2953 = vld [vmem:[%s2557 + $0x39] sm:$0xff]
      %v2954 = vld [vmem:[%s2557 + $0x49] sm:$0xff]
      %v2955 = vld [vmem:[%s2557 + $0x51] sm:$0xff]
      %v2956 = vld [vmem:[%s2557 + $0x61] sm:$0xff]
      %v2957 = vld [vmem:[%s2557 + $0x69] sm:$0xff]
      %v2958 = vld [vmem:[%s2557 + $0x79] sm:$0xff]
      %v2959 = vld [vmem:[%s2557 + $0x81] sm:$0xff]
      %v2960 = vld [vmem:[%s2557 + $0x91] sm:$0xff]
      %v2961 = vld [vmem:[%s2557 + $0x99] sm:$0xff]
      %v2962 = vld [vmem:[%s2557 + $0xa9] sm:$0xff]
      %v2963 = vld [vmem:[%s2557 + $0xb1] sm:$0xff]
      %v2964 = vld [vmem:[%s2557 + $0xc1] sm:$0xff]
      %v2965 = vld [vmem:[%s2557 + $0xc9] sm:$0xff]
      %v2966 = vld [vmem:[%s2557 + $0xd9] sm:$0xff]
      %v2967 = vld [vmem:[%s2557 + $0xe1] sm:$0xff]
      %v2968 = vld [vmem:[%s2557 + $0xf1] sm:$0xff]
      %v2969 = vld [vmem:[%s2557 + $0xf9] sm:$0xff]
      %v2970 = vld [vmem:[%s2557 + $0x109] sm:$0xff]
      %v2971 = vld [vmem:[%s2557 + $0x111] sm:$0xff]
      %v2972 = vld [vmem:[%s2557 + $0x121] sm:$0xff]
      %v2973 = vld [vmem:[%s2557 + $0x129] sm:$0xff]
      %v2974 = vld [vmem:[%s2557 + $0x139] sm:$0xff]
      %v2975 = vld [vmem:[%s2557 + $0x141] sm:$0xff]
      %v2976 = vld [vmem:[%s2557 + $0x151] sm:$0xff]
      %v2977 = vld [vmem:[%s2557 + $0x159] sm:$0xff]
      %v2978 = vld [vmem:[%s2557 + $0x169] sm:$0xff]
      %v2979 = vld [vmem:[%s2557 + $0x171] sm:$0xff]
      %s2980 = scalar_lea.vmem %s1, 28
      %v2981 = vld [vmem:[%s2980] sm:$0xf]
      %v2983 = vsel %vm346, %v2948, 0
      %v2986 = vsel %vm346, %v2949, 0
      %v2989 = vsel %vm346, %v2950, 0
      %v2992 = vsel %vm346, %v2951, 0
      %v2995 = vsel %vm346, %v2952, 0
      %v2998 = vsel %vm346, %v2953, 0
      %v3001 = vsel %vm346, %v2954, 0
      %v3004 = vsel %vm346, %v2955, 0
      %v3007 = vsel %vm346, %v2956, 0
      %v3010 = vsel %vm346, %v2957, 0
      %v3013 = vsel %vm346, %v2958, 0
      %v3016 = vsel %vm346, %v2959, 0
      %v3019 = vsel %vm346, %v2960, 0
      %v3022 = vsel %vm346, %v2961, 0
      %v3025 = vsel %vm346, %v2962, 0
      %v3028 = vsel %vm346, %v2963, 0
      %v3031 = vsel %vm346, %v2964, 0
      %v3034 = vsel %vm346, %v2965, 0
      %v3037 = vsel %vm346, %v2966, 0
      %v3040 = vsel %vm346, %v2967, 0
      %v3043 = vsel %vm346, %v2968, 0
      %v3046 = vsel %vm346, %v2969, 0
      %v3049 = vsel %vm346, %v2970, 0
      %v3052 = vsel %vm346, %v2971, 0
      %v3055 = vsel %vm346, %v2972, 0
      %v3058 = vsel %vm346, %v2973, 0
      %v3061 = vsel %vm346, %v2974, 0
      %v3064 = vsel %vm346, %v2975, 0
      %v3067 = vsel %vm346, %v2976, 0
      %v3070 = vsel %vm346, %v2977, 0
      %v3073 = vsel %vm346, %v2978, 0
      %v3076 = vsel %vm346, %v2979, 0
      %v3079 = vsel %vm443, %v2981, 0
      %3081 = vmatprep.subr.mxu0 0.0
      %3082 = vmatpush1.msra.mxu0 %v3079
      %3083 = vmatprep.subr.mxu0 0.0
      %3084 = vmatpush1.msra.mxu0 0.0
      %3085 = vmatprep.subr.mxu0 0.0
      %3086 = vmatpush1.msra.mxu0 0.0
      %3087 = vmatprep.subr.mxu0 0.0
      %3088 = vmatpush1.msra.mxu0 0.0
      %3089 = vmatprep.subr.mxu0 0.0
      %3090 = vmatpush1.msra.mxu0 0.0
      %3091 = vmatprep.subr.mxu0 0.0
      %3092 = vmatpush1.msra.mxu0 0.0
      %3093 = vmatprep.subr.mxu0 0.0
      %3094 = vmatpush1.msra.mxu0 0.0
      %3095 = vmatprep.subr.mxu0 0.0
      %3096 = vmatpush1.msra.mxu0 0.0
      %3097 = vmatprep.subr.mxu0 0.0
      %3098 = vmatpush1.msra.mxu0 0.0
      %3099 = vmatprep.subr.mxu0 0.0
      %3100 = vmatpush1.msra.mxu0 0.0
      %3101 = vmatprep.subr.mxu0 0.0
      %3102 = vmatpush1.msra.mxu0 0.0
      %3103 = vmatprep.subr.mxu0 0.0
      %3104 = vmatpush1.msra.mxu0 0.0
      %3105 = vmatprep.subr.mxu0 0.0
      %3106 = vmatpush1.msra.mxu0 0.0
      %3107 = vmatprep.subr.mxu0 0.0
      %3108 = vmatpush1.msra.mxu0 0.0
      %3109 = vmatprep.subr.mxu0 0.0
      %3110 = vmatpush1.msra.mxu0 0.0
      %3111 = vmatprep.subr.mxu0 0.0
      %3112 = vmatpush1.msra.mxu0 0.0
      %3113 = vmatprep.subr.mxu0 0.0
      %3114 = vmatpush1.msra.mxu0 0.0
      %3115 = vmatprep.subr.mxu0 0.0
      %3116 = vmatpush1.msra.mxu0 0.0
      %3117 = vmatprep.subr.mxu0 0.0
      %3118 = vmatpush1.msra.mxu0 0.0
      %3119 = vmatprep.subr.mxu0 0.0
      %3120 = vmatpush1.msra.mxu0 0.0
      %3121 = vmatprep.subr.mxu0 0.0
      %3122 = vmatpush1.msra.mxu0 0.0
      %3123 = vmatprep.subr.mxu0 0.0
      %3124 = vmatpush1.msra.mxu0 0.0
      %3125 = vmatprep.subr.mxu0 0.0
      %3126 = vmatpush1.msra.mxu0 0.0
      %3127 = vmatprep.subr.mxu0 0.0
      %3128 = vmatpush1.msra.mxu0 0.0
      %3129 = vmatprep.subr.mxu0 0.0
      %3130 = vmatpush1.msra.mxu0 0.0
      %3131 = vmatprep.subr.mxu0 0.0
      %3132 = vmatpush1.msra.mxu0 0.0
      %3133 = vmatprep.subr.mxu0 0.0
      %3134 = vmatpush1.msra.mxu0 0.0
      %3135 = vmatprep.subr.mxu0 0.0
      %3136 = vmatpush1.msra.mxu0 0.0
      %3137 = vmatprep.subr.mxu0 0.0
      %3138 = vmatpush1.msra.mxu0 0.0
      %3139 = vmatprep.subr.mxu0 0.0
      %3140 = vmatpush1.msra.mxu0 0.0
      %3141 = vmatprep.subr.mxu0 0.0
      %3142 = vmatpush1.msra.mxu0 0.0
      %3143 = vmatprep.subr.mxu0 0.0
      %3144 = vmatpush1.msra.mxu0 0.0
      %3145 = vmatprep.mubr.f32.mxu0 0.0
      %3146 = vmatmul.mubr.f32.gmra.mrb[0].mxu0 %v2983
      %v3147 = vpop.f32.mrb[0].mxu0
      %v3148 = vadd.f32 0.0, %v3147
      %v3149 = vpop.f32.mrb[0].mxu0
      %3150 = vmatprep.mubr.f32.mxu0 0.0
      %3151 = vmatmul.mubr.f32.gmra.mrb[0].mxu0 %v2986
      %v3152 = vpop.f32.mrb[0].mxu0
      %v3153 = vadd.f32 0.0, %v3152
      %v3154 = vpop.f32.mrb[0].mxu0
      %3155 = vmatprep.mubr.f32.mxu0 0.0
      %3156 = vmatmul.mubr.f32.gmra.mrb[0].mxu0 %v2989
      %v3157 = vpop.f32.mrb[0].mxu0
      %v3158 = vadd.f32 0.0, %v3157
      %v3159 = vpop.f32.mrb[0].mxu0
      %3160 = vmatprep.mubr.f32.mxu0 0.0
      %3161 = vmatmul.mubr.f32.gmra.mrb[0].mxu0 %v2992
      %v3162 = vpop.f32.mrb[0].mxu0
      %v3163 = vadd.f32 0.0, %v3162
      %v3164 = vpop.f32.mrb[0].mxu0
      %3165 = vmatprep.mubr.f32.mxu0 0.0
      %3166 = vmatmul.mubr.f32.gmra.mrb[0].mxu0 %v2995
      %v3167 = vpop.f32.mrb[0].mxu0
      %v3168 = vadd.f32 0.0, %v3167
      %v3169 = vpop.f32.mrb[0].mxu0
      %3170 = vmatprep.mubr.f32.mxu0 0.0
      %3171 = vmatmul.mubr.f32.gmra.mrb[0].mxu0 %v2998
      %v3172 = vpop.f32.mrb[0].mxu0
      %v3173 = vadd.f32 0.0, %v3172
      %v3174 = vpop.f32.mrb[0].mxu0
      %3175 = vmatprep.mubr.f32.mxu0 0.0
      %3176 = vmatmul.mubr.f32.gmra.mrb[0].mxu0 %v3001
      %v3177 = vpop.f32.mrb[0].mxu0
      %v3178 = vadd.f32 0.0, %v3177
      %v3179 = vpop.f32.mrb[0].mxu0
      %3180 = vmatprep.mubr.f32.mxu0 0.0
      %3181 = vmatmul.mubr.f32.gmra.mrb[0].mxu0 %v3004
      %v3182 = vpop.f32.mrb[0].mxu0
      %v3183 = vadd.f32 0.0, %v3182
      %v3184 = vpop.f32.mrb[0].mxu0
      %3185 = vmatprep.mubr.f32.mxu0 0.0
      %3186 = vmatmul.mubr.f32.gmra.mrb[0].mxu0 %v3007
      %v3187 = vpop.f32.mrb[0].mxu0
      %v3188 = vadd.f32 0.0, %v3187
      %v3189 = vpop.f32.mrb[0].mxu0
      %3190 = vmatprep.mubr.f32.mxu0 0.0
      %3191 = vmatmul.mubr.f32.gmra.mrb[0].mxu0 %v3010
      %v3192 = vpop.f32.mrb[0].mxu0
      %v3193 = vadd.f32 0.0, %v3192
      %v3194 = vpop.f32.mrb[0].mxu0
      %3195 = vmatprep.mubr.f32.mxu0 0.0
      %3196 = vmatmul.mubr.f32.gmra.mrb[0].mxu0 %v3013
      %v3197 = vpop.f32.mrb[0].mxu0
      %v3198 = vadd.f32 0.0, %v3197
      %v3199 = vpop.f32.mrb[0].mxu0
      %3200 = vmatprep.mubr.f32.mxu0 0.0
      %3201 = vmatmul.mubr.f32.gmra.mrb[0].mxu0 %v3016
      %v3202 = vpop.f32.mrb[0].mxu0
      %v3203 = vadd.f32 0.0, %v3202
      %v3204 = vpop.f32.mrb[0].mxu0
      %3205 = vmatprep.mubr.f32.mxu0 0.0
      %3206 = vmatmul.mubr.f32.gmra.mrb[0].mxu0 %v3019
      %v3207 = vpop.f32.mrb[0].mxu0
      %v3208 = vadd.f32 0.0, %v3207
      %v3209 = vpop.f32.mrb[0].mxu0
      %3210 = vmatprep.mubr.f32.mxu0 0.0
      %3211 = vmatmul.mubr.f32.gmra.mrb[0].mxu0 %v3022
      %v3212 = vpop.f32.mrb[0].mxu0
      %v3213 = vadd.f32 0.0, %v3212
      %v3214 = vpop.f32.mrb[0].mxu0
      %3215 = vmatprep.mubr.f32.mxu0 0.0
      %3216 = vmatmul.mubr.f32.gmra.mrb[0].mxu0 %v3025
      %v3217 = vpop.f32.mrb[0].mxu0
      %v3218 = vadd.f32 0.0, %v3217
      %v3219 = vpop.f32.mrb[0].mxu0
      %3220 = vmatprep.mubr.f32.mxu0 0.0
      %3221 = vmatmul.mubr.f32.gmra.mrb[0].mxu0 %v3028
      %v3222 = vpop.f32.mrb[0].mxu0
      %v3223 = vadd.f32 0.0, %v3222
      %v3224 = vpop.f32.mrb[0].mxu0
      %3225 = vmatprep.mubr.f32.mxu0 0.0
      %3226 = vmatmul.mubr.f32.gmra.mrb[0].mxu0 %v3031
      %v3227 = vpop.f32.mrb[0].mxu0
      %v3228 = vadd.f32 0.0, %v3227
      %v3229 = vpop.f32.mrb[0].mxu0
      %3230 = vmatprep.mubr.f32.mxu0 0.0
      %3231 = vmatmul.mubr.f32.gmra.mrb[0].mxu0 %v3034
      %v3232 = vpop.f32.mrb[0].mxu0
      %v3233 = vadd.f32 0.0, %v3232
      %v3234 = vpop.f32.mrb[0].mxu0
      %3235 = vmatprep.mubr.f32.mxu0 0.0
      %3236 = vmatmul.mubr.f32.gmra.mrb[0].mxu0 %v3037
      %v3237 = vpop.f32.mrb[0].mxu0
      %v3238 = vadd.f32 0.0, %v3237
      %v3239 = vpop.f32.mrb[0].mxu0
      %3240 = vmatprep.mubr.f32.mxu0 0.0
      %3241 = vmatmul.mubr.f32.gmra.mrb[0].mxu0 %v3040
      %v3242 = vpop.f32.mrb[0].mxu0
      %v3243 = vadd.f32 0.0, %v3242
      %v3244 = vpop.f32.mrb[0].mxu0
      %3245 = vmatprep.mubr.f32.mxu0 0.0
      %3246 = vmatmul.mubr.f32.gmra.mrb[0].mxu0 %v3043
      %v3247 = vpop.f32.mrb[0].mxu0
      %v3248 = vadd.f32 0.0, %v3247
      %v3249 = vpop.f32.mrb[0].mxu0
      %3250 = vmatprep.mubr.f32.mxu0 0.0
      %3251 = vmatmul.mubr.f32.gmra.mrb[0].mxu0 %v3046
      %v3252 = vpop.f32.mrb[0].mxu0
      %v3253 = vadd.f32 0.0, %v3252
      %v3254 = vpop.f32.mrb[0].mxu0
      %3255 = vmatprep.mubr.f32.mxu0 0.0
      %3256 = vmatmul.mubr.f32.gmra.mrb[0].mxu0 %v3049
      %v3257 = vpop.f32.mrb[0].mxu0
      %v3258 = vadd.f32 0.0, %v3257
      %v3259 = vpop.f32.mrb[0].mxu0
      %3260 = vmatprep.mubr.f32.mxu0 0.0
      %3261 = vmatmul.mubr.f32.gmra.mrb[0].mxu0 %v3052
      %v3262 = vpop.f32.mrb[0].mxu0
      %v3263 = vadd.f32 0.0, %v3262
      %v3264 = vpop.f32.mrb[0].mxu0
      %3265 = vmatprep.mubr.f32.mxu0 0.0
      %3266 = vmatmul.mubr.f32.gmra.mrb[0].mxu0 %v3055
      %v3267 = vpop.f32.mrb[0].mxu0
      %v3268 = vadd.f32 0.0, %v3267
      %v3269 = vpop.f32.mrb[0].mxu0
      %3270 = vmatprep.mubr.f32.mxu0 0.0
      %3271 = vmatmul.mubr.f32.gmra.mrb[0].mxu0 %v3058
      %v3272 = vpop.f32.mrb[0].mxu0
      %v3273 = vadd.f32 0.0, %v3272
      %v3274 = vpop.f32.mrb[0].mxu0
      %3275 = vmatprep.mubr.f32.mxu0 0.0
      %3276 = vmatmul.mubr.f32.gmra.mrb[0].mxu0 %v3061
      %v3277 = vpop.f32.mrb[0].mxu0
      %v3278 = vadd.f32 0.0, %v3277
      %v3279 = vpop.f32.mrb[0].mxu0
      %3280 = vmatprep.mubr.f32.mxu0 0.0
      %3281 = vmatmul.mubr.f32.gmra.mrb[0].mxu0 %v3064
      %v3282 = vpop.f32.mrb[0].mxu0
      %v3283 = vadd.f32 0.0, %v3282
      %v3284 = vpop.f32.mrb[0].mxu0
      %3285 = vmatprep.mubr.f32.mxu0 0.0
      %3286 = vmatmul.mubr.f32.gmra.mrb[0].mxu0 %v3067
      %v3287 = vpop.f32.mrb[0].mxu0
      %v3288 = vadd.f32 0.0, %v3287
      %v3289 = vpop.f32.mrb[0].mxu0
      %3290 = vmatprep.mubr.f32.mxu0 0.0
      %3291 = vmatmul.mubr.f32.gmra.mrb[0].mxu0 %v3070
      %v3292 = vpop.f32.mrb[0].mxu0
      %v3293 = vadd.f32 0.0, %v3292
      %v3294 = vpop.f32.mrb[0].mxu0
      %3295 = vmatprep.mubr.f32.mxu0 0.0
      %3296 = vmatmul.mubr.f32.gmra.mrb[0].mxu0 %v3073
      %v3297 = vpop.f32.mrb[0].mxu0
      %v3298 = vadd.f32 0.0, %v3297
      %v3299 = vpop.f32.mrb[0].mxu0
      %3300 = vmatprep.mubr.f32.mxu0 0.0
      %3301 = vmatmul.mubr.f32.gmra.mrb[0].mxu0 %v3076
      %v3302 = vpop.f32.mrb[0].mxu0
      %v3303 = vadd.f32 0.0, %v3302
      %v3304 = vpop.f32.mrb[0].mxu0
      %3305 = vdwg.mxu0
      %v3306 = vadd.f32 %v2916, %v3148
      %v3307 = vadd.f32 %v2917, %v3153
      %v3308 = vadd.f32 %v2918, %v3158
      %v3309 = vadd.f32 %v2919, %v3163
      %v3310 = vadd.f32 %v2920, %v3168
      %v3311 = vadd.f32 %v2921, %v3173
      %v3312 = vadd.f32 %v2922, %v3178
      %v3313 = vadd.f32 %v2923, %v3183
      %v3314 = vadd.f32 %v2924, %v3188
      %v3315 = vadd.f32 %v2925, %v3193
      %v3316 = vadd.f32 %v2926, %v3198
      %v3317 = vadd.f32 %v2927, %v3203
      %v3318 = vadd.f32 %v2928, %v3208
      %v3319 = vadd.f32 %v2929, %v3213
      %v3320 = vadd.f32 %v2930, %v3218
      %v3321 = vadd.f32 %v2931, %v3223
      %v3322 = vadd.f32 %v2932, %v3228
      %v3323 = vadd.f32 %v2933, %v3233
      %v3324 = vadd.f32 %v2934, %v3238
      %v3325 = vadd.f32 %v2935, %v3243
      %v3326 = vadd.f32 %v2936, %v3248
      %v3327 = vadd.f32 %v2937, %v3253
      %v3328 = vadd.f32 %v2938, %v3258
      %v3329 = vadd.f32 %v2939, %v3263
      %v3330 = vadd.f32 %v2940, %v3268
      %v3331 = vadd.f32 %v2941, %v3273
      %v3332 = vadd.f32 %v2942, %v3278
      %v3333 = vadd.f32 %v2943, %v3283
      %v3334 = vadd.f32 %v2944, %v3288
      %v3335 = vadd.f32 %v2945, %v3293
      %v3336 = vadd.f32 %v2946, %v3298
      %v3337 = vadd.f32 %v2947, %v3303
      %v3338 = vld [vmem:[%s2557 + $0x2] sm:$0xff]
      %v3339 = vld [vmem:[%s2557 + $0xa] sm:$0xff]
      %v3340 = vld [vmem:[%s2557 + $0x1a] sm:$0xff]
      %v3341 = vld [vmem:[%s2557 + $0x22] sm:$0xff]
      %v3342 = vld [vmem:[%s2557 + $0x32] sm:$0xff]
      %v3343 = vld [vmem:[%s2557 + $0x3a] sm:$0xff]
      %v3344 = vld [vmem:[%s2557 + $0x4a] sm:$0xff]
      %v3345 = vld [vmem:[%s2557 + $0x52] sm:$0xff]
      %v3346 = vld [vmem:[%s2557 + $0x62] sm:$0xff]
      %v3347 = vld [vmem:[%s2557 + $0x6a] sm:$0xff]
      %v3348 = vld [vmem:[%s2557 + $0x7a] sm:$0xff]
      %v3349 = vld [vmem:[%s2557 + $0x82] sm:$0xff]
      %v3350 = vld [vmem:[%s2557 + $0x92] sm:$0xff]
      %v3351 = vld [vmem:[%s2557 + $0x9a] sm:$0xff]
      %v3352 = vld [vmem:[%s2557 + $0xaa] sm:$0xff]
      %v3353 = vld [vmem:[%s2557 + $0xb2] sm:$0xff]
      %v3354 = vld [vmem:[%s2557 + $0xc2] sm:$0xff]
      %v3355 = vld [vmem:[%s2557 + $0xca] sm:$0xff]
      %v3356 = vld [vmem:[%s2557 + $0xda] sm:$0xff]
      %v3357 = vld [vmem:[%s2557 + $0xe2] sm:$0xff]
      %v3358 = vld [vmem:[%s2557 + $0xf2] sm:$0xff]
      %v3359 = vld [vmem:[%s2557 + $0xfa] sm:$0xff]
      %v3360 = vld [vmem:[%s2557 + $0x10a] sm:$0xff]
      %v3361 = vld [vmem:[%s2557 + $0x112] sm:$0xff]
      %v3362 = vld [vmem:[%s2557 + $0x122] sm:$0xff]
      %v3363 = vld [vmem:[%s2557 + $0x12a] sm:$0xff]
      %v3364 = vld [vmem:[%s2557 + $0x13a] sm:$0xff]
      %v3365 = vld [vmem:[%s2557 + $0x142] sm:$0xff]
      %v3366 = vld [vmem:[%s2557 + $0x152] sm:$0xff]
      %v3367 = vld [vmem:[%s2557 + $0x15a] sm:$0xff]
      %v3368 = vld [vmem:[%s2557 + $0x16a] sm:$0xff]
      %v3369 = vld [vmem:[%s2557 + $0x172] sm:$0xff]
      %s3370 = scalar_lea.vmem %s1, 32
      %v3371 = vld [vmem:[%s3370] sm:$0xf]
      %v3373 = vsel %vm346, %v3338, 0
      %v3376 = vsel %vm346, %v3339, 0
      %v3379 = vsel %vm346, %v3340, 0
      %v3382 = vsel %vm346, %v3341, 0
      %v3385 = vsel %vm346, %v3342, 0
      %v3388 = vsel %vm346, %v3343, 0
      %v3391 = vsel %vm346, %v3344, 0
      %v3394 = vsel %vm346, %v3345, 0
      %v3397 = vsel %vm346, %v3346, 0
      %v3400 = vsel %vm346, %v3347, 0
      %v3403 = vsel %vm346, %v3348, 0
      %v3406 = vsel %vm346, %v3349, 0
      %v3409 = vsel %vm346, %v3350, 0
      %v3412 = vsel %vm346, %v3351, 0
      %v3415 = vsel %vm346, %v3352, 0
      %v3418 = vsel %vm346, %v3353, 0
      %v3421 = vsel %vm346, %v3354, 0
      %v3424 = vsel %vm346, %v3355, 0
      %v3427 = vsel %vm346, %v3356, 0
      %v3430 = vsel %vm346, %v3357, 0
      %v3433 = vsel %vm346, %v3358, 0
      %v3436 = vsel %vm346, %v3359, 0
      %v3439 = vsel %vm346, %v3360, 0
      %v3442 = vsel %vm346, %v3361, 0
      %v3445 = vsel %vm346, %v3362, 0
      %v3448 = vsel %vm346, %v3363, 0
      %v3451 = vsel %vm346, %v3364, 0
      %v3454 = vsel %vm346, %v3365, 0
      %v3457 = vsel %vm346, %v3366, 0
      %v3460 = vsel %vm346, %v3367, 0
      %v3463 = vsel %vm346, %v3368, 0
      %v3466 = vsel %vm346, %v3369, 0
      %v3469 = vsel %vm443, %v3371, 0
      %3471 = vmatprep.subr.mxu0 0.0
      %3472 = vmatpush1.msra.mxu0 %v3469
      %3473 = vmatprep.subr.mxu0 0.0
      %3474 = vmatpush1.msra.mxu0 0.0
      %3475 = vmatprep.subr.mxu0 0.0
      %3476 = vmatpush1.msra.mxu0 0.0
      %3477 = vmatprep.subr.mxu0 0.0
      %3478 = vmatpush1.msra.mxu0 0.0
      %3479 = vmatprep.subr.mxu0 0.0
      %3480 = vmatpush1.msra.mxu0 0.0
      %3481 = vmatprep.subr.mxu0 0.0
      %3482 = vmatpush1.msra.mxu0 0.0
      %3483 = vmatprep.subr.mxu0 0.0
      %3484 = vmatpush1.msra.mxu0 0.0
      %3485 = vmatprep.subr.mxu0 0.0
      %3486 = vmatpush1.msra.mxu0 0.0
      %3487 = vmatprep.subr.mxu0 0.0
      %3488 = vmatpush1.msra.mxu0 0.0
      %3489 = vmatprep.subr.mxu0 0.0
      %3490 = vmatpush1.msra.mxu0 0.0
      %3491 = vmatprep.subr.mxu0 0.0
      %3492 = vmatpush1.msra.mxu0 0.0
      %3493 = vmatprep.subr.mxu0 0.0
      %3494 = vmatpush1.msra.mxu0 0.0
      %3495 = vmatprep.subr.mxu0 0.0
      %3496 = vmatpush1.msra.mxu0 0.0
      %3497 = vmatprep.subr.mxu0 0.0
      %3498 = vmatpush1.msra.mxu0 0.0
      %3499 = vmatprep.subr.mxu0 0.0
      %3500 = vmatpush1.msra.mxu0 0.0
      %3501 = vmatprep.subr.mxu0 0.0
      %3502 = vmatpush1.msra.mxu0 0.0
      %3503 = vmatprep.subr.mxu0 0.0
      %3504 = vmatpush1.msra.mxu0 0.0
      %3505 = vmatprep.subr.mxu0 0.0
      %3506 = vmatpush1.msra.mxu0 0.0
      %3507 = vmatprep.subr.mxu0 0.0
      %3508 = vmatpush1.msra.mxu0 0.0
      %3509 = vmatprep.subr.mxu0 0.0
      %3510 = vmatpush1.msra.mxu0 0.0
      %3511 = vmatprep.subr.mxu0 0.0
      %3512 = vmatpush1.msra.mxu0 0.0
      %3513 = vmatprep.subr.mxu0 0.0
      %3514 = vmatpush1.msra.mxu0 0.0
      %3515 = vmatprep.subr.mxu0 0.0
      %3516 = vmatpush1.msra.mxu0 0.0
      %3517 = vmatprep.subr.mxu0 0.0
      %3518 = vmatpush1.msra.mxu0 0.0
      %3519 = vmatprep.subr.mxu0 0.0
      %3520 = vmatpush1.msra.mxu0 0.0
      %3521 = vmatprep.subr.mxu0 0.0
      %3522 = vmatpush1.msra.mxu0 0.0
      %3523 = vmatprep.subr.mxu0 0.0
      %3524 = vmatpush1.msra.mxu0 0.0
      %3525 = vmatprep.subr.mxu0 0.0
      %3526 = vmatpush1.msra.mxu0 0.0
      %3527 = vmatprep.subr.mxu0 0.0
      %3528 = vmatpush1.msra.mxu0 0.0
      %3529 = vmatprep.subr.mxu0 0.0
      %3530 = vmatpush1.msra.mxu0 0.0
      %3531 = vmatprep.subr.mxu0 0.0
      %3532 = vmatpush1.msra.mxu0 0.0
      %3533 = vmatprep.subr.mxu0 0.0
      %3534 = vmatpush1.msra.mxu0 0.0
      %3535 = vmatprep.mubr.f32.mxu0 0.0
      %3536 = vmatmul.mubr.f32.gmra.mrb[0].mxu0 %v3373
      %v3537 = vpop.f32.mrb[0].mxu0
      %v3538 = vadd.f32 0.0, %v3537
      %v3539 = vpop.f32.mrb[0].mxu0
      %3540 = vmatprep.mubr.f32.mxu0 0.0
      %3541 = vmatmul.mubr.f32.gmra.mrb[0].mxu0 %v3376
      %v3542 = vpop.f32.mrb[0].mxu0
      %v3543 = vadd.f32 0.0, %v3542
      %v3544 = vpop.f32.mrb[0].mxu0
      %3545 = vmatprep.mubr.f32.mxu0 0.0
      %3546 = vmatmul.mubr.f32.gmra.mrb[0].mxu0 %v3379
      %v3547 = vpop.f32.mrb[0].mxu0
      %v3548 = vadd.f32 0.0, %v3547
      %v3549 = vpop.f32.mrb[0].mxu0
      %3550 = vmatprep.mubr.f32.mxu0 0.0
      %3551 = vmatmul.mubr.f32.gmra.mrb[0].mxu0 %v3382
      %v3552 = vpop.f32.mrb[0].mxu0
      %v3553 = vadd.f32 0.0, %v3552
      %v3554 = vpop.f32.mrb[0].mxu0
      %3555 = vmatprep.mubr.f32.mxu0 0.0
      %3556 = vmatmul.mubr.f32.gmra.mrb[0].mxu0 %v3385
      %v3557 = vpop.f32.mrb[0].mxu0
      %v3558 = vadd.f32 0.0, %v3557
      %v3559 = vpop.f32.mrb[0].mxu0
      %3560 = vmatprep.mubr.f32.mxu0 0.0
      %3561 = vmatmul.mubr.f32.gmra.mrb[0].mxu0 %v3388
      %v3562 = vpop.f32.mrb[0].mxu0
      %v3563 = vadd.f32 0.0, %v3562
      %v3564 = vpop.f32.mrb[0].mxu0
      %3565 = vmatprep.mubr.f32.mxu0 0.0
      %3566 = vmatmul.mubr.f32.gmra.mrb[0].mxu0 %v3391
      %v3567 = vpop.f32.mrb[0].mxu0
      %v3568 = vadd.f32 0.0, %v3567
      %v3569 = vpop.f32.mrb[0].mxu0
      %3570 = vmatprep.mubr.f32.mxu0 0.0
      %3571 = vmatmul.mubr.f32.gmra.mrb[0].mxu0 %v3394
      %v3572 = vpop.f32.mrb[0].mxu0
      %v3573 = vadd.f32 0.0, %v3572
      %v3574 = vpop.f32.mrb[0].mxu0
      %3575 = vmatprep.mubr.f32.mxu0 0.0
      %3576 = vmatmul.mubr.f32.gmra.mrb[0].mxu0 %v3397
      %v3577 = vpop.f32.mrb[0].mxu0
      %v3578 = vadd.f32 0.0, %v3577
      %v3579 = vpop.f32.mrb[0].mxu0
      %3580 = vmatprep.mubr.f32.mxu0 0.0
      %3581 = vmatmul.mubr.f32.gmra.mrb[0].mxu0 %v3400
      %v3582 = vpop.f32.mrb[0].mxu0
      %v3583 = vadd.f32 0.0, %v3582
      %v3584 = vpop.f32.mrb[0].mxu0
      %3585 = vmatprep.mubr.f32.mxu0 0.0
      %3586 = vmatmul.mubr.f32.gmra.mrb[0].mxu0 %v3403
      %v3587 = vpop.f32.mrb[0].mxu0
      %v3588 = vadd.f32 0.0, %v3587
      %v3589 = vpop.f32.mrb[0].mxu0
      %3590 = vmatprep.mubr.f32.mxu0 0.0
      %3591 = vmatmul.mubr.f32.gmra.mrb[0].mxu0 %v3406
      %v3592 = vpop.f32.mrb[0].mxu0
      %v3593 = vadd.f32 0.0, %v3592
      %v3594 = vpop.f32.mrb[0].mxu0
      %3595 = vmatprep.mubr.f32.mxu0 0.0
      %3596 = vmatmul.mubr.f32.gmra.mrb[0].mxu0 %v3409
      %v3597 = vpop.f32.mrb[0].mxu0
      %v3598 = vadd.f32 0.0, %v3597
      %v3599 = vpop.f32.mrb[0].mxu0
      %3600 = vmatprep.mubr.f32.mxu0 0.0
      %3601 = vmatmul.mubr.f32.gmra.mrb[0].mxu0 %v3412
      %v3602 = vpop.f32.mrb[0].mxu0
      %v3603 = vadd.f32 0.0, %v3602
      %v3604 = vpop.f32.mrb[0].mxu0
      %3605 = vmatprep.mubr.f32.mxu0 0.0
      %3606 = vmatmul.mubr.f32.gmra.mrb[0].mxu0 %v3415
      %v3607 = vpop.f32.mrb[0].mxu0
      %v3608 = vadd.f32 0.0, %v3607
      %v3609 = vpop.f32.mrb[0].mxu0
      %3610 = vmatprep.mubr.f32.mxu0 0.0
      %3611 = vmatmul.mubr.f32.gmra.mrb[0].mxu0 %v3418
      %v3612 = vpop.f32.mrb[0].mxu0
      %v3613 = vadd.f32 0.0, %v3612
      %v3614 = vpop.f32.mrb[0].mxu0
      %3615 = vmatprep.mubr.f32.mxu0 0.0
      %3616 = vmatmul.mubr.f32.gmra.mrb[0].mxu0 %v3421
      %v3617 = vpop.f32.mrb[0].mxu0
      %v3618 = vadd.f32 0.0, %v3617
      %v3619 = vpop.f32.mrb[0].mxu0
      %3620 = vmatprep.mubr.f32.mxu0 0.0
      %3621 = vmatmul.mubr.f32.gmra.mrb[0].mxu0 %v3424
      %v3622 = vpop.f32.mrb[0].mxu0
      %v3623 = vadd.f32 0.0, %v3622
      %v3624 = vpop.f32.mrb[0].mxu0
      %3625 = vmatprep.mubr.f32.mxu0 0.0
      %3626 = vmatmul.mubr.f32.gmra.mrb[0].mxu0 %v3427
      %v3627 = vpop.f32.mrb[0].mxu0
      %v3628 = vadd.f32 0.0, %v3627
      %v3629 = vpop.f32.mrb[0].mxu0
      %3630 = vmatprep.mubr.f32.mxu0 0.0
      %3631 = vmatmul.mubr.f32.gmra.mrb[0].mxu0 %v3430
      %v3632 = vpop.f32.mrb[0].mxu0
      %v3633 = vadd.f32 0.0, %v3632
      %v3634 = vpop.f32.mrb[0].mxu0
      %3635 = vmatprep.mubr.f32.mxu0 0.0
      %3636 = vmatmul.mubr.f32.gmra.mrb[0].mxu0 %v3433
      %v3637 = vpop.f32.mrb[0].mxu0
      %v3638 = vadd.f32 0.0, %v3637
      %v3639 = vpop.f32.mrb[0].mxu0
      %3640 = vmatprep.mubr.f32.mxu0 0.0
      %3641 = vmatmul.mubr.f32.gmra.mrb[0].mxu0 %v3436
      %v3642 = vpop.f32.mrb[0].mxu0
      %v3643 = vadd.f32 0.0, %v3642
      %v3644 = vpop.f32.mrb[0].mxu0
      %3645 = vmatprep.mubr.f32.mxu0 0.0
      %3646 = vmatmul.mubr.f32.gmra.mrb[0].mxu0 %v3439
      %v3647 = vpop.f32.mrb[0].mxu0
      %v3648 = vadd.f32 0.0, %v3647
      %v3649 = vpop.f32.mrb[0].mxu0
      %3650 = vmatprep.mubr.f32.mxu0 0.0
      %3651 = vmatmul.mubr.f32.gmra.mrb[0].mxu0 %v3442
      %v3652 = vpop.f32.mrb[0].mxu0
      %v3653 = vadd.f32 0.0, %v3652
      %v3654 = vpop.f32.mrb[0].mxu0
      %3655 = vmatprep.mubr.f32.mxu0 0.0
      %3656 = vmatmul.mubr.f32.gmra.mrb[0].mxu0 %v3445
      %v3657 = vpop.f32.mrb[0].mxu0
      %v3658 = vadd.f32 0.0, %v3657
      %v3659 = vpop.f32.mrb[0].mxu0
      %3660 = vmatprep.mubr.f32.mxu0 0.0
      %3661 = vmatmul.mubr.f32.gmra.mrb[0].mxu0 %v3448
      %v3662 = vpop.f32.mrb[0].mxu0
      %v3663 = vadd.f32 0.0, %v3662
      %v3664 = vpop.f32.mrb[0].mxu0
      %3665 = vmatprep.mubr.f32.mxu0 0.0
      %3666 = vmatmul.mubr.f32.gmra.mrb[0].mxu0 %v3451
      %v3667 = vpop.f32.mrb[0].mxu0
      %v3668 = vadd.f32 0.0, %v3667
      %v3669 = vpop.f32.mrb[0].mxu0
      %3670 = vmatprep.mubr.f32.mxu0 0.0
      %3671 = vmatmul.mubr.f32.gmra.mrb[0].mxu0 %v3454
      %v3672 = vpop.f32.mrb[0].mxu0
      %v3673 = vadd.f32 0.0, %v3672
      %v3674 = vpop.f32.mrb[0].mxu0
      %3675 = vmatprep.mubr.f32.mxu0 0.0
      %3676 = vmatmul.mubr.f32.gmra.mrb[0].mxu0 %v3457
      %v3677 = vpop.f32.mrb[0].mxu0
      %v3678 = vadd.f32 0.0, %v3677
      %v3679 = vpop.f32.mrb[0].mxu0
      %3680 = vmatprep.mubr.f32.mxu0 0.0
      %3681 = vmatmul.mubr.f32.gmra.mrb[0].mxu0 %v3460
      %v3682 = vpop.f32.mrb[0].mxu0
      %v3683 = vadd.f32 0.0, %v3682
      %v3684 = vpop.f32.mrb[0].mxu0
      %3685 = vmatprep.mubr.f32.mxu0 0.0
      %3686 = vmatmul.mubr.f32.gmra.mrb[0].mxu0 %v3463
      %v3687 = vpop.f32.mrb[0].mxu0
      %v3688 = vadd.f32 0.0, %v3687
      %v3689 = vpop.f32.mrb[0].mxu0
      %3690 = vmatprep.mubr.f32.mxu0 0.0
      %3691 = vmatmul.mubr.f32.gmra.mrb[0].mxu0 %v3466
      %v3692 = vpop.f32.mrb[0].mxu0
      %v3693 = vadd.f32 0.0, %v3692
      %v3694 = vpop.f32.mrb[0].mxu0
      %3695 = vdwg.mxu0
      %v3696 = vadd.f32 %v3306, %v3538
      %v3697 = vadd.f32 %v3307, %v3543
      %v3698 = vadd.f32 %v3308, %v3548
      %v3699 = vadd.f32 %v3309, %v3553
      %v3700 = vadd.f32 %v3310, %v3558
      %v3701 = vadd.f32 %v3311, %v3563
      %v3702 = vadd.f32 %v3312, %v3568
      %v3703 = vadd.f32 %v3313, %v3573
      %v3704 = vadd.f32 %v3314, %v3578
      %v3705 = vadd.f32 %v3315, %v3583
      %v3706 = vadd.f32 %v3316, %v3588
      %v3707 = vadd.f32 %v3317, %v3593
      %v3708 = vadd.f32 %v3318, %v3598
      %v3709 = vadd.f32 %v3319, %v3603
      %v3710 = vadd.f32 %v3320, %v3608
      %v3711 = vadd.f32 %v3321, %v3613
      %v3712 = vadd.f32 %v3322, %v3618
      %v3713 = vadd.f32 %v3323, %v3623
      %v3714 = vadd.f32 %v3324, %v3628
      %v3715 = vadd.f32 %v3325, %v3633
      %v3716 = vadd.f32 %v3326, %v3638
      %v3717 = vadd.f32 %v3327, %v3643
      %v3718 = vadd.f32 %v3328, %v3648
      %v3719 = vadd.f32 %v3329, %v3653
      %v3720 = vadd.f32 %v3330, %v3658
      %v3721 = vadd.f32 %v3331, %v3663
      %v3722 = vadd.f32 %v3332, %v3668
      %v3723 = vadd.f32 %v3333, %v3673
      %v3724 = vadd.f32 %v3334, %v3678
      %v3725 = vadd.f32 %v3335, %v3683
      %v3726 = vadd.f32 %v3336, %v3688
      %v3727 = vadd.f32 %v3337, %v3693
      %v3728 = vld [vmem:[%s2] sm:$0x1]
      %v3730 = vlaneseq
      %v3731 = vshrl.u32 %v3730, 7
      %v3732 = vsub.s32 0, %v3731
      %v3733 = vrot.slane %v3728, %v3732
      %v3735 = vmul.f32 %v3696, %v3733
      %v3736 = vmul.f32 %v3697, %v3733
      %v3737 = vmul.f32 %v3698, %v3733
      %v3738 = vmul.f32 %v3699, %v3733
      %v3739 = vmul.f32 %v3700, %v3733
      %v3740 = vmul.f32 %v3701, %v3733
      %v3741 = vmul.f32 %v3702, %v3733
      %v3742 = vmul.f32 %v3703, %v3733
      %v3743 = vmul.f32 %v3704, %v3733
      %v3744 = vmul.f32 %v3705, %v3733
      %v3745 = vmul.f32 %v3706, %v3733
      %v3746 = vmul.f32 %v3707, %v3733
      %v3747 = vmul.f32 %v3708, %v3733
      %v3748 = vmul.f32 %v3709, %v3733
      %v3749 = vmul.f32 %v3710, %v3733
      %v3750 = vmul.f32 %v3711, %v3733
      %v3751 = vmul.f32 %v3712, %v3733
      %v3752 = vmul.f32 %v3713, %v3733
      %v3753 = vmul.f32 %v3714, %v3733
      %v3754 = vmul.f32 %v3715, %v3733
      %v3755 = vmul.f32 %v3716, %v3733
      %v3756 = vmul.f32 %v3717, %v3733
      %v3757 = vmul.f32 %v3718, %v3733
      %v3758 = vmul.f32 %v3719, %v3733
      %v3759 = vmul.f32 %v3720, %v3733
      %v3760 = vmul.f32 %v3721, %v3733
      %v3761 = vmul.f32 %v3722, %v3733
      %v3762 = vmul.f32 %v3723, %v3733
      %v3763 = vmul.f32 %v3724, %v3733
      %v3764 = vmul.f32 %v3725, %v3733
      %v3765 = vmul.f32 %v3726, %v3733
      %v3766 = vmul.f32 %v3727, %v3733
      %v3767 = vld [vmem:[%s3] sm:$0x1]
      %v3769 = vlaneseq
      %v3770 = vshrl.u32 %v3769, 7
      %v3771 = vsub.s32 0, %v3770
      %v3772 = vrot.slane %v3767, %v3771
      %v3774 = vadd.f32 %v3735, %v3772
      %v3775 = vadd.f32 %v3736, %v3772
      %v3776 = vadd.f32 %v3737, %v3772
      %v3777 = vadd.f32 %v3738, %v3772
      %v3778 = vadd.f32 %v3739, %v3772
      %v3779 = vadd.f32 %v3740, %v3772
      %v3780 = vadd.f32 %v3741, %v3772
      %v3781 = vadd.f32 %v3742, %v3772
      %v3782 = vadd.f32 %v3743, %v3772
      %v3783 = vadd.f32 %v3744, %v3772
      %v3784 = vadd.f32 %v3745, %v3772
      %v3785 = vadd.f32 %v3746, %v3772
      %v3786 = vadd.f32 %v3747, %v3772
      %v3787 = vadd.f32 %v3748, %v3772
      %v3788 = vadd.f32 %v3749, %v3772
      %v3789 = vadd.f32 %v3750, %v3772
      %v3790 = vadd.f32 %v3751, %v3772
      %v3791 = vadd.f32 %v3752, %v3772
      %v3792 = vadd.f32 %v3753, %v3772
      %v3793 = vadd.f32 %v3754, %v3772
      %v3794 = vadd.f32 %v3755, %v3772
      %v3795 = vadd.f32 %v3756, %v3772
      %v3796 = vadd.f32 %v3757, %v3772
      %v3797 = vadd.f32 %v3758, %v3772
      %v3798 = vadd.f32 %v3759, %v3772
      %v3799 = vadd.f32 %v3760, %v3772
      %v3800 = vadd.f32 %v3761, %v3772
      %v3801 = vadd.f32 %v3762, %v3772
      %v3802 = vadd.f32 %v3763, %v3772
      %v3803 = vadd.f32 %v3764, %v3772
      %v3804 = vadd.f32 %v3765, %v3772
      %v3805 = vadd.f32 %v3766, %v3772
      %v3806 = vmax.f32 %v3774, 0.0
      %v3807 = vmax.f32 %v3775, 0.0
      %v3808 = vmax.f32 %v3776, 0.0
      %v3809 = vmax.f32 %v3777, 0.0
      %v3810 = vmax.f32 %v3778, 0.0
      %v3811 = vmax.f32 %v3779, 0.0
      %v3812 = vmax.f32 %v3780, 0.0
      %v3813 = vmax.f32 %v3781, 0.0
      %v3814 = vmax.f32 %v3782, 0.0
      %v3815 = vmax.f32 %v3783, 0.0
      %v3816 = vmax.f32 %v3784, 0.0
      %v3817 = vmax.f32 %v3785, 0.0
      %v3818 = vmax.f32 %v3786, 0.0
      %v3819 = vmax.f32 %v3787, 0.0
      %v3820 = vmax.f32 %v3788, 0.0
      %v3821 = vmax.f32 %v3789, 0.0
      %v3822 = vmax.f32 %v3790, 0.0
      %v3823 = vmax.f32 %v3791, 0.0
      %v3824 = vmax.f32 %v3792, 0.0
      %v3825 = vmax.f32 %v3793, 0.0
      %v3826 = vmax.f32 %v3794, 0.0
      %v3827 = vmax.f32 %v3795, 0.0
      %v3828 = vmax.f32 %v3796, 0.0
      %v3829 = vmax.f32 %v3797, 0.0
      %v3830 = vmax.f32 %v3798, 0.0
      %v3831 = vmax.f32 %v3799, 0.0
      %v3832 = vmax.f32 %v3800, 0.0
      %v3833 = vmax.f32 %v3801, 0.0
      %v3834 = vmax.f32 %v3802, 0.0
      %v3835 = vmax.f32 %v3803, 0.0
      %v3836 = vmax.f32 %v3804, 0.0
      %v3837 = vmax.f32 %v3805, 0.0
      %vm3838 = vcmask 64512
      %3839 = vst.msk [vmem:[#allocation2] sm:$0xff] %vm3838, 0.0
      %3840 = vst.msk [vmem:[#allocation2 + $0x8] sm:$0xff] %vm3838, 0.0
      %vm3841 = vcmask 58368
      %3842 = vst.msk [vmem:[#allocation2 + $0x10] sm:$0x3] %vm3841, 0.0
      %3843 = vst.msk [vmem:[#allocation2 + $0x18] sm:$0xff] %vm3838, 0.0
      %3844 = vst.msk [vmem:[#allocation2 + $0x20] sm:$0xff] %vm3838, 0.0
      %3845 = vst.msk [vmem:[#allocation2 + $0x28] sm:$0x3] %vm3841, 0.0
      %3846 = vst.msk [vmem:[#allocation2 + $0x30] sm:$0xff] %vm3838, 0.0
      %3847 = vst.msk [vmem:[#allocation2 + $0x38] sm:$0xff] %vm3838, 0.0
      %3848 = vst.msk [vmem:[#allocation2 + $0x40] sm:$0x3] %vm3841, 0.0
      %3849 = vst.msk [vmem:[#allocation2 + $0x48] sm:$0xff] %vm3838, 0.0
      %3850 = vst.msk [vmem:[#allocation2 + $0x50] sm:$0xff] %vm3838, 0.0
      %3851 = vst.msk [vmem:[#allocation2 + $0x58] sm:$0x3] %vm3841, 0.0
      %3852 = vst.msk [vmem:[#allocation2 + $0x60] sm:$0xff] %vm3838, 0.0
      %3853 = vst.msk [vmem:[#allocation2 + $0x68] sm:$0xff] %vm3838, 0.0
      %3854 = vst.msk [vmem:[#allocation2 + $0x70] sm:$0x3] %vm3841, 0.0
      %3855 = vst.msk [vmem:[#allocation2 + $0x78] sm:$0xff] %vm3838, 0.0
      %3856 = vst.msk [vmem:[#allocation2 + $0x80] sm:$0xff] %vm3838, 0.0
      %3857 = vst.msk [vmem:[#allocation2 + $0x88] sm:$0x3] %vm3841, 0.0
      %3858 = vst.msk [vmem:[#allocation2 + $0x90] sm:$0xff] %vm3838, 0.0
      %3859 = vst.msk [vmem:[#allocation2 + $0x98] sm:$0xff] %vm3838, 0.0
      %3860 = vst.msk [vmem:[#allocation2 + $0xa0] sm:$0x3] %vm3841, 0.0
      %3861 = vst.msk [vmem:[#allocation2 + $0xa8] sm:$0xff] %vm3838, 0.0
      %3862 = vst.msk [vmem:[#allocation2 + $0xb0] sm:$0xff] %vm3838, 0.0
      %3863 = vst.msk [vmem:[#allocation2 + $0xb8] sm:$0x3] %vm3841, 0.0
      %3864 = vst.msk [vmem:[#allocation2 + $0xc0] sm:$0xff] %vm3838, 0.0
      %3865 = vst.msk [vmem:[#allocation2 + $0xc8] sm:$0xff] %vm3838, 0.0
      %3866 = vst.msk [vmem:[#allocation2 + $0xd0] sm:$0x3] %vm3841, 0.0
      %3867 = vst.msk [vmem:[#allocation2 + $0xd8] sm:$0xff] %vm3838, 0.0
      %3868 = vst.msk [vmem:[#allocation2 + $0xe0] sm:$0xff] %vm3838, 0.0
      %3869 = vst.msk [vmem:[#allocation2 + $0xe8] sm:$0x3] %vm3841, 0.0
      %3870 = vst.msk [vmem:[#allocation2 + $0xf0] sm:$0xff] %vm3838, 0.0
      %3871 = vst.msk [vmem:[#allocation2 + $0xf8] sm:$0xff] %vm3838, 0.0
      %3872 = vst.msk [vmem:[#allocation2 + $0x100] sm:$0x3] %vm3841, 0.0
      %3873 = vst.msk [vmem:[#allocation2 + $0x108] sm:$0xff] %vm3838, 0.0
      %3874 = vst.msk [vmem:[#allocation2 + $0x110] sm:$0xff] %vm3838, 0.0
      %3875 = vst.msk [vmem:[#allocation2 + $0x118] sm:$0x3] %vm3841, 0.0
      %3876 = vst.msk [vmem:[#allocation2 + $0x120] sm:$0xff] %vm3838, 0.0
      %3877 = vst.msk [vmem:[#allocation2 + $0x128] sm:$0xff] %vm3838, 0.0
      %3878 = vst.msk [vmem:[#allocation2 + $0x130] sm:$0x3] %vm3841, 0.0
      %3879 = vst.msk [vmem:[#allocation2 + $0x138] sm:$0xff] %vm3838, 0.0
      %3880 = vst.msk [vmem:[#allocation2 + $0x140] sm:$0xff] %vm3838, 0.0
      %3881 = vst.msk [vmem:[#allocation2 + $0x148] sm:$0x3] %vm3841, 0.0
      %3882 = vst.msk [vmem:[#allocation2 + $0x150] sm:$0xff] %vm3838, 0.0
      %3883 = vst.msk [vmem:[#allocation2 + $0x158] sm:$0xff] %vm3838, 0.0
      %3884 = vst.msk [vmem:[#allocation2 + $0x160] sm:$0x3] %vm3841, 0.0
      %3885 = vst.msk [vmem:[#allocation2 + $0x168] sm:$0xff] %vm3838, 0.0
      %3886 = vst.msk [vmem:[#allocation2 + $0x170] sm:$0xff] %vm3838, 0.0
      %3887 = vst.msk [vmem:[#allocation2 + $0x178] sm:$0x3] %vm3841, 0.0
      %3888 = vst.msk [vmem:[#allocation2 + $0x180] sm:$0xff] %vm3838, 0.0
      %3889 = vst.msk [vmem:[#allocation2 + $0x188] sm:$0xff] %vm3838, 0.0
      %3890 = vst.msk [vmem:[#allocation2 + $0x190] sm:$0x3] %vm3841, 0.0
      %3891 = vst.msk [vmem:[#allocation2 + $0x198] sm:$0xff] %vm3838, 0.0
      %3892 = vst.msk [vmem:[#allocation2 + $0x1a0] sm:$0xff] %vm3838, 0.0
      %3893 = vst.msk [vmem:[#allocation2 + $0x1a8] sm:$0x3] %vm3841, 0.0
      %s3894 = scalar_lea.vmem [#allocation2], 24
      %3895 = vst.msk [vmem:[%s3894 + $0x1] sm:$0xff] %vm3838, %v3806
      %3896 = vst.msk [vmem:[%s3894 + $0x9] sm:$0xff] %vm3838, %v3807
      %3897 = vst.msk [vmem:[%s3894 + $0x19] sm:$0xff] %vm3838, %v3808
      %3898 = vst.msk [vmem:[%s3894 + $0x21] sm:$0xff] %vm3838, %v3809
      %3899 = vst.msk [vmem:[%s3894 + $0x31] sm:$0xff] %vm3838, %v3810
      %3900 = vst.msk [vmem:[%s3894 + $0x39] sm:$0xff] %vm3838, %v3811
      %3901 = vst.msk [vmem:[%s3894 + $0x49] sm:$0xff] %vm3838, %v3812
      %3902 = vst.msk [vmem:[%s3894 + $0x51] sm:$0xff] %vm3838, %v3813
      %3903 = vst.msk [vmem:[%s3894 + $0x61] sm:$0xff] %vm3838, %v3814
      %3904 = vst.msk [vmem:[%s3894 + $0x69] sm:$0xff] %vm3838, %v3815
      %3905 = vst.msk [vmem:[%s3894 + $0x79] sm:$0xff] %vm3838, %v3816
      %3906 = vst.msk [vmem:[%s3894 + $0x81] sm:$0xff] %vm3838, %v3817
      %3907 = vst.msk [vmem:[%s3894 + $0x91] sm:$0xff] %vm3838, %v3818
      %3908 = vst.msk [vmem:[%s3894 + $0x99] sm:$0xff] %vm3838, %v3819
      %3909 = vst.msk [vmem:[%s3894 + $0xa9] sm:$0xff] %vm3838, %v3820
      %3910 = vst.msk [vmem:[%s3894 + $0xb1] sm:$0xff] %vm3838, %v3821
      %3911 = vst.msk [vmem:[%s3894 + $0xc1] sm:$0xff] %vm3838, %v3822
      %3912 = vst.msk [vmem:[%s3894 + $0xc9] sm:$0xff] %vm3838, %v3823
      %3913 = vst.msk [vmem:[%s3894 + $0xd9] sm:$0xff] %vm3838, %v3824
      %3914 = vst.msk [vmem:[%s3894 + $0xe1] sm:$0xff] %vm3838, %v3825
      %3915 = vst.msk [vmem:[%s3894 + $0xf1] sm:$0xff] %vm3838, %v3826
      %3916 = vst.msk [vmem:[%s3894 + $0xf9] sm:$0xff] %vm3838, %v3827
      %3917 = vst.msk [vmem:[%s3894 + $0x109] sm:$0xff] %vm3838, %v3828
      %3918 = vst.msk [vmem:[%s3894 + $0x111] sm:$0xff] %vm3838, %v3829
      %3919 = vst.msk [vmem:[%s3894 + $0x121] sm:$0xff] %vm3838, %v3830
      %3920 = vst.msk [vmem:[%s3894 + $0x129] sm:$0xff] %vm3838, %v3831
      %3921 = vst.msk [vmem:[%s3894 + $0x139] sm:$0xff] %vm3838, %v3832
      %3922 = vst.msk [vmem:[%s3894 + $0x141] sm:$0xff] %vm3838, %v3833
      %3923 = vst.msk [vmem:[%s3894 + $0x151] sm:$0xff] %vm3838, %v3834
      %3924 = vst.msk [vmem:[%s3894 + $0x159] sm:$0xff] %vm3838, %v3835
      %3925 = vst.msk [vmem:[%s3894 + $0x169] sm:$0xff] %vm3838, %v3836
      %3926 = vst.msk [vmem:[%s3894 + $0x171] sm:$0xff] %vm3838, %v3837
      %v3927 = vld [vmem:[#allocation2] sm:$0xff]
      %v3928 = vld [vmem:[#allocation2 + $0x8] sm:$0xff]
      %v3929 = vld [vmem:[#allocation2 + $0x18] sm:$0xff]
      %v3930 = vld [vmem:[#allocation2 + $0x20] sm:$0xff]
      %v3931 = vld [vmem:[#allocation2 + $0x30] sm:$0xff]
      %v3932 = vld [vmem:[#allocation2 + $0x38] sm:$0xff]
      %v3933 = vld [vmem:[#allocation2 + $0x48] sm:$0xff]
      %v3934 = vld [vmem:[#allocation2 + $0x50] sm:$0xff]
      %v3935 = vld [vmem:[#allocation2 + $0x60] sm:$0xff]
      %v3936 = vld [vmem:[#allocation2 + $0x68] sm:$0xff]
      %v3937 = vld [vmem:[#allocation2 + $0x78] sm:$0xff]
      %v3938 = vld [vmem:[#allocation2 + $0x80] sm:$0xff]
      %v3939 = vld [vmem:[#allocation2 + $0x90] sm:$0xff]
      %v3940 = vld [vmem:[#allocation2 + $0x98] sm:$0xff]
      %v3941 = vld [vmem:[#allocation2 + $0xa8] sm:$0xff]
      %v3942 = vld [vmem:[#allocation2 + $0xb0] sm:$0xff]
      %v3943 = vld [vmem:[#allocation2 + $0xc0] sm:$0xff]
      %v3944 = vld [vmem:[#allocation2 + $0xc8] sm:$0xff]
      %v3945 = vld [vmem:[#allocation2 + $0xd8] sm:$0xff]
      %v3946 = vld [vmem:[#allocation2 + $0xe0] sm:$0xff]
      %v3947 = vld [vmem:[#allocation2 + $0xf0] sm:$0xff]
      %v3948 = vld [vmem:[#allocation2 + $0xf8] sm:$0xff]
      %v3949 = vld [vmem:[#allocation2 + $0x108] sm:$0xff]
      %v3950 = vld [vmem:[#allocation2 + $0x110] sm:$0xff]
      %v3951 = vld [vmem:[#allocation2 + $0x120] sm:$0xff]
      %v3952 = vld [vmem:[#allocation2 + $0x128] sm:$0xff]
      %v3953 = vld [vmem:[#allocation2 + $0x138] sm:$0xff]
      %v3954 = vld [vmem:[#allocation2 + $0x140] sm:$0xff]
      %v3955 = vld [vmem:[#allocation2 + $0x150] sm:$0xff]
      %v3956 = vld [vmem:[#allocation2 + $0x158] sm:$0xff]
      %v3957 = vld [vmem:[#allocation2 + $0x168] sm:$0xff]
      %v3958 = vld [vmem:[#allocation2 + $0x170] sm:$0xff]
      %v3959 = vld [vmem:[%s4] sm:$0xff]
      %v3960 = vld [vmem:[#allocation2 + $0x1] sm:$0xff]
      %v3961 = vld [vmem:[#allocation2 + $0x9] sm:$0xff]
      %v3962 = vld [vmem:[#allocation2 + $0x19] sm:$0xff]
      %v3963 = vld [vmem:[#allocation2 + $0x21] sm:$0xff]
      %v3964 = vld [vmem:[#allocation2 + $0x31] sm:$0xff]
      %v3965 = vld [vmem:[#allocation2 + $0x39] sm:$0xff]
      %v3966 = vld [vmem:[#allocation2 + $0x49] sm:$0xff]
      %v3967 = vld [vmem:[#allocation2 + $0x51] sm:$0xff]
      %v3968 = vld [vmem:[#allocation2 + $0x61] sm:$0xff]
      %v3969 = vld [vmem:[#allocation2 + $0x69] sm:$0xff]
      %v3970 = vld [vmem:[#allocation2 + $0x79] sm:$0xff]
      %v3971 = vld [vmem:[#allocation2 + $0x81] sm:$0xff]
      %v3972 = vld [vmem:[#allocation2 + $0x91] sm:$0xff]
      %v3973 = vld [vmem:[#allocation2 + $0x99] sm:$0xff]
      %v3974 = vld [vmem:[#allocation2 + $0xa9] sm:$0xff]
      %v3975 = vld [vmem:[#allocation2 + $0xb1] sm:$0xff]
      %v3976 = vld [vmem:[#allocation2 + $0xc1] sm:$0xff]
      %v3977 = vld [vmem:[#allocation2 + $0xc9] sm:$0xff]
      %v3978 = vld [vmem:[#allocation2 + $0xd9] sm:$0xff]
      %v3979 = vld [vmem:[#allocation2 + $0xe1] sm:$0xff]
      %v3980 = vld [vmem:[#allocation2 + $0xf1] sm:$0xff]
      %v3981 = vld [vmem:[#allocation2 + $0xf9] sm:$0xff]
      %v3982 = vld [vmem:[#allocation2 + $0x109] sm:$0xff]
      %v3983 = vld [vmem:[#allocation2 + $0x111] sm:$0xff]
      %v3984 = vld [vmem:[#allocation2 + $0x121] sm:$0xff]
      %v3985 = vld [vmem:[#allocation2 + $0x129] sm:$0xff]
      %v3986 = vld [vmem:[#allocation2 + $0x139] sm:$0xff]
      %v3987 = vld [vmem:[#allocation2 + $0x141] sm:$0xff]
      %v3988 = vld [vmem:[#allocation2 + $0x151] sm:$0xff]
      %v3989 = vld [vmem:[#allocation2 + $0x159] sm:$0xff]
      %v3990 = vld [vmem:[#allocation2 + $0x169] sm:$0xff]
      %v3991 = vld [vmem:[#allocation2 + $0x171] sm:$0xff]
      %s3992 = scalar_lea.vmem %s4, 8
      %v3993 = vld [vmem:[%s3992] sm:$0xff]
      %v3995 = vsel %vm3838, %v3960, 0
      %v3998 = vsel %vm3838, %v3961, 0
      %v4001 = vsel %vm3838, %v3962, 0
      %v4004 = vsel %vm3838, %v3963, 0
      %v4007 = vsel %vm3838, %v3964, 0
      %v4010 = vsel %vm3838, %v3965, 0
      %v4013 = vsel %vm3838, %v3966, 0
      %v4016 = vsel %vm3838, %v3967, 0
      %v4019 = vsel %vm3838, %v3968, 0
      %v4022 = vsel %vm3838, %v3969, 0
      %v4025 = vsel %vm3838, %v3970, 0
      %v4028 = vsel %vm3838, %v3971, 0
      %v4031 = vsel %vm3838, %v3972, 0
      %v4034 = vsel %vm3838, %v3973, 0
      %v4037 = vsel %vm3838, %v3974, 0
      %v4040 = vsel %vm3838, %v3975, 0
      %v4043 = vsel %vm3838, %v3976, 0
      %v4046 = vsel %vm3838, %v3977, 0
      %v4049 = vsel %vm3838, %v3978, 0
      %v4052 = vsel %vm3838, %v3979, 0
      %v4055 = vsel %vm3838, %v3980, 0
      %v4058 = vsel %vm3838, %v3981, 0
      %v4061 = vsel %vm3838, %v3982, 0
      %v4064 = vsel %vm3838, %v3983, 0
      %v4067 = vsel %vm3838, %v3984, 0
      %v4070 = vsel %vm3838, %v3985, 0
      %v4073 = vsel %vm3838, %v3986, 0
      %v4076 = vsel %vm3838, %v3987, 0
      %v4079 = vsel %vm3838, %v3988, 0
      %v4082 = vsel %vm3838, %v3989, 0
      %v4085 = vsel %vm3838, %v3990, 0
      %v4088 = vsel %vm3838, %v3991, 0
      %4090 = vmatprep.subr.mxu0 0.0
      %4091 = vmatpush1.msra.mxu0 %v3993
      %4092 = vmatprep.subr.mxu0 0.0
      %4093 = vmatpush1.msra.mxu0 0.0
      %4094 = vmatprep.subr.mxu0 0.0
      %4095 = vmatpush1.msra.mxu0 0.0
      %4096 = vmatprep.subr.mxu0 0.0
      %4097 = vmatpush1.msra.mxu0 0.0
      %4098 = vmatprep.subr.mxu0 0.0
      %4099 = vmatpush1.msra.mxu0 0.0
      %4100 = vmatprep.subr.mxu0 0.0
      %4101 = vmatpush1.msra.mxu0 0.0
      %4102 = vmatprep.subr.mxu0 0.0
      %4103 = vmatpush1.msra.mxu0 0.0
      %4104 = vmatprep.subr.mxu0 0.0
      %4105 = vmatpush1.msra.mxu0 0.0
      %4106 = vmatprep.subr.mxu0 0.0
      %4107 = vmatpush1.msra.mxu0 0.0
      %4108 = vmatprep.subr.mxu0 0.0
      %4109 = vmatpush1.msra.mxu0 0.0
      %4110 = vmatprep.subr.mxu0 0.0
      %4111 = vmatpush1.msra.mxu0 0.0
      %4112 = vmatprep.subr.mxu0 0.0
      %4113 = vmatpush1.msra.mxu0 0.0
      %4114 = vmatprep.subr.mxu0 0.0
      %4115 = vmatpush1.msra.mxu0 0.0
      %4116 = vmatprep.subr.mxu0 0.0
      %4117 = vmatpush1.msra.mxu0 0.0
      %4118 = vmatprep.subr.mxu0 0.0
      %4119 = vmatpush1.msra.mxu0 0.0
      %4120 = vmatprep.subr.mxu0 0.0
      %4121 = vmatpush1.msra.mxu0 0.0
      %4122 = vmatprep.subr.mxu0 0.0
      %4123 = vmatpush1.msra.mxu0 0.0
      %4124 = vmatprep.subr.mxu0 0.0
      %4125 = vmatpush1.msra.mxu0 0.0
      %4126 = vmatprep.subr.mxu0 0.0
      %4127 = vmatpush1.msra.mxu0 0.0
      %4128 = vmatprep.subr.mxu0 0.0
      %4129 = vmatpush1.msra.mxu0 0.0
      %4130 = vmatprep.subr.mxu0 0.0
      %4131 = vmatpush1.msra.mxu0 0.0
      %4132 = vmatprep.subr.mxu0 0.0
      %4133 = vmatpush1.msra.mxu0 0.0
      %4134 = vmatprep.subr.mxu0 0.0
      %4135 = vmatpush1.msra.mxu0 0.0
      %4136 = vmatprep.subr.mxu0 0.0
      %4137 = vmatpush1.msra.mxu0 0.0
      %4138 = vmatprep.subr.mxu0 0.0
      %4139 = vmatpush1.msra.mxu0 0.0
      %4140 = vmatprep.subr.mxu0 0.0
      %4141 = vmatpush1.msra.mxu0 0.0
      %4142 = vmatprep.subr.mxu0 0.0
      %4143 = vmatpush1.msra.mxu0 0.0
      %4144 = vmatprep.subr.mxu0 0.0
      %4145 = vmatpush1.msra.mxu0 0.0
      %4146 = vmatprep.subr.mxu0 0.0
      %4147 = vmatpush1.msra.mxu0 0.0
      %4148 = vmatprep.subr.mxu0 0.0
      %4149 = vmatpush1.msra.mxu0 0.0
      %4150 = vmatprep.subr.mxu0 0.0
      %4151 = vmatpush1.msra.mxu0 0.0
      %4152 = vmatprep.subr.mxu0 0.0
      %4153 = vmatpush1.msra.mxu0 0.0
      %4154 = vmatprep.mubr.f32.mxu0 0.0
      %4155 = vmatmul.mubr.f32.gmra.mrb[0].mxu0 %v3995
      %v4156 = vpop.f32.mrb[0].mxu0
      %v4157 = vadd.f32 0.0, %v4156
      %v4158 = vpop.f32.mrb[0].mxu0
      %4159 = vmatprep.mubr.f32.mxu0 0.0
      %4160 = vmatmul.mubr.f32.gmra.mrb[0].mxu0 %v3998
      %v4161 = vpop.f32.mrb[0].mxu0
      %v4162 = vadd.f32 0.0, %v4161
      %v4163 = vpop.f32.mrb[0].mxu0
      %4164 = vmatprep.mubr.f32.mxu0 0.0
      %4165 = vmatmul.mubr.f32.gmra.mrb[0].mxu0 %v4001
      %v4166 = vpop.f32.mrb[0].mxu0
      %v4167 = vadd.f32 0.0, %v4166
      %v4168 = vpop.f32.mrb[0].mxu0
      %4169 = vmatprep.mubr.f32.mxu0 0.0
      %4170 = vmatmul.mubr.f32.gmra.mrb[0].mxu0 %v4004
      %v4171 = vpop.f32.mrb[0].mxu0
      %v4172 = vadd.f32 0.0, %v4171
      %v4173 = vpop.f32.mrb[0].mxu0
      %4174 = vmatprep.mubr.f32.mxu0 0.0
      %4175 = vmatmul.mubr.f32.gmra.mrb[0].mxu0 %v4007
      %v4176 = vpop.f32.mrb[0].mxu0
      %v4177 = vadd.f32 0.0, %v4176
      %v4178 = vpop.f32.mrb[0].mxu0
      %4179 = vmatprep.mubr.f32.mxu0 0.0
      %4180 = vmatmul.mubr.f32.gmra.mrb[0].mxu0 %v4010
      %v4181 = vpop.f32.mrb[0].mxu0
      %v4182 = vadd.f32 0.0, %v4181
      %v4183 = vpop.f32.mrb[0].mxu0
      %4184 = vmatprep.mubr.f32.mxu0 0.0
      %4185 = vmatmul.mubr.f32.gmra.mrb[0].mxu0 %v4013
      %v4186 = vpop.f32.mrb[0].mxu0
      %v4187 = vadd.f32 0.0, %v4186
      %v4188 = vpop.f32.mrb[0].mxu0
      %4189 = vmatprep.mubr.f32.mxu0 0.0
      %4190 = vmatmul.mubr.f32.gmra.mrb[0].mxu0 %v4016
      %v4191 = vpop.f32.mrb[0].mxu0
      %v4192 = vadd.f32 0.0, %v4191
      %v4193 = vpop.f32.mrb[0].mxu0
      %4194 = vmatprep.mubr.f32.mxu0 0.0
      %4195 = vmatmul.mubr.f32.gmra.mrb[0].mxu0 %v4019
      %v4196 = vpop.f32.mrb[0].mxu0
      %v4197 = vadd.f32 0.0, %v4196
      %v4198 = vpop.f32.mrb[0].mxu0
      %4199 = vmatprep.mubr.f32.mxu0 0.0
      %4200 = vmatmul.mubr.f32.gmra.mrb[0].mxu0 %v4022
      %v4201 = vpop.f32.mrb[0].mxu0
      %v4202 = vadd.f32 0.0, %v4201
      %v4203 = vpop.f32.mrb[0].mxu0
      %4204 = vmatprep.mubr.f32.mxu0 0.0
      %4205 = vmatmul.mubr.f32.gmra.mrb[0].mxu0 %v4025
      %v4206 = vpop.f32.mrb[0].mxu0
      %v4207 = vadd.f32 0.0, %v4206
      %v4208 = vpop.f32.mrb[0].mxu0
      %4209 = vmatprep.mubr.f32.mxu0 0.0
      %4210 = vmatmul.mubr.f32.gmra.mrb[0].mxu0 %v4028
      %v4211 = vpop.f32.mrb[0].mxu0
      %v4212 = vadd.f32 0.0, %v4211
      %v4213 = vpop.f32.mrb[0].mxu0
      %4214 = vmatprep.mubr.f32.mxu0 0.0
      %4215 = vmatmul.mubr.f32.gmra.mrb[0].mxu0 %v4031
      %v4216 = vpop.f32.mrb[0].mxu0
      %v4217 = vadd.f32 0.0, %v4216
      %v4218 = vpop.f32.mrb[0].mxu0
      %4219 = vmatprep.mubr.f32.mxu0 0.0
      %4220 = vmatmul.mubr.f32.gmra.mrb[0].mxu0 %v4034
      %v4221 = vpop.f32.mrb[0].mxu0
      %v4222 = vadd.f32 0.0, %v4221
      %v4223 = vpop.f32.mrb[0].mxu0
      %4224 = vmatprep.mubr.f32.mxu0 0.0
      %4225 = vmatmul.mubr.f32.gmra.mrb[0].mxu0 %v4037
      %v4226 = vpop.f32.mrb[0].mxu0
      %v4227 = vadd.f32 0.0, %v4226
      %v4228 = vpop.f32.mrb[0].mxu0
      %4229 = vmatprep.mubr.f32.mxu0 0.0
      %4230 = vmatmul.mubr.f32.gmra.mrb[0].mxu0 %v4040
      %v4231 = vpop.f32.mrb[0].mxu0
      %v4232 = vadd.f32 0.0, %v4231
      %v4233 = vpop.f32.mrb[0].mxu0
      %4234 = vmatprep.mubr.f32.mxu0 0.0
      %4235 = vmatmul.mubr.f32.gmra.mrb[0].mxu0 %v4043
      %v4236 = vpop.f32.mrb[0].mxu0
      %v4237 = vadd.f32 0.0, %v4236
      %v4238 = vpop.f32.mrb[0].mxu0
      %4239 = vmatprep.mubr.f32.mxu0 0.0
      %4240 = vmatmul.mubr.f32.gmra.mrb[0].mxu0 %v4046
      %v4241 = vpop.f32.mrb[0].mxu0
      %v4242 = vadd.f32 0.0, %v4241
      %v4243 = vpop.f32.mrb[0].mxu0
      %4244 = vmatprep.mubr.f32.mxu0 0.0
      %4245 = vmatmul.mubr.f32.gmra.mrb[0].mxu0 %v4049
      %v4246 = vpop.f32.mrb[0].mxu0
      %v4247 = vadd.f32 0.0, %v4246
      %v4248 = vpop.f32.mrb[0].mxu0
      %4249 = vmatprep.mubr.f32.mxu0 0.0
      %4250 = vmatmul.mubr.f32.gmra.mrb[0].mxu0 %v4052
      %v4251 = vpop.f32.mrb[0].mxu0
      %v4252 = vadd.f32 0.0, %v4251
      %v4253 = vpop.f32.mrb[0].mxu0
      %4254 = vmatprep.mubr.f32.mxu0 0.0
      %4255 = vmatmul.mubr.f32.gmra.mrb[0].mxu0 %v4055
      %v4256 = vpop.f32.mrb[0].mxu0
      %v4257 = vadd.f32 0.0, %v4256
      %v4258 = vpop.f32.mrb[0].mxu0
      %4259 = vmatprep.mubr.f32.mxu0 0.0
      %4260 = vmatmul.mubr.f32.gmra.mrb[0].mxu0 %v4058
      %v4261 = vpop.f32.mrb[0].mxu0
      %v4262 = vadd.f32 0.0, %v4261
      %v4263 = vpop.f32.mrb[0].mxu0
      %4264 = vmatprep.mubr.f32.mxu0 0.0
      %4265 = vmatmul.mubr.f32.gmra.mrb[0].mxu0 %v4061
      %v4266 = vpop.f32.mrb[0].mxu0
      %v4267 = vadd.f32 0.0, %v4266
      %v4268 = vpop.f32.mrb[0].mxu0
      %4269 = vmatprep.mubr.f32.mxu0 0.0
      %4270 = vmatmul.mubr.f32.gmra.mrb[0].mxu0 %v4064
      %v4271 = vpop.f32.mrb[0].mxu0
      %v4272 = vadd.f32 0.0, %v4271
      %v4273 = vpop.f32.mrb[0].mxu0
      %4274 = vmatprep.mubr.f32.mxu0 0.0
      %4275 = vmatmul.mubr.f32.gmra.mrb[0].mxu0 %v4067
      %v4276 = vpop.f32.mrb[0].mxu0
      %v4277 = vadd.f32 0.0, %v4276
      %v4278 = vpop.f32.mrb[0].mxu0
      %4279 = vmatprep.mubr.f32.mxu0 0.0
      %4280 = vmatmul.mubr.f32.gmra.mrb[0].mxu0 %v4070
      %v4281 = vpop.f32.mrb[0].mxu0
      %v4282 = vadd.f32 0.0, %v4281
      %v4283 = vpop.f32.mrb[0].mxu0
      %4284 = vmatprep.mubr.f32.mxu0 0.0
      %4285 = vmatmul.mubr.f32.gmra.mrb[0].mxu0 %v4073
      %v4286 = vpop.f32.mrb[0].mxu0
      %v4287 = vadd.f32 0.0, %v4286
      %v4288 = vpop.f32.mrb[0].mxu0
      %4289 = vmatprep.mubr.f32.mxu0 0.0
      %4290 = vmatmul.mubr.f32.gmra.mrb[0].mxu0 %v4076
      %v4291 = vpop.f32.mrb[0].mxu0
      %v4292 = vadd.f32 0.0, %v4291
      %v4293 = vpop.f32.mrb[0].mxu0
      %4294 = vmatprep.mubr.f32.mxu0 0.0
      %4295 = vmatmul.mubr.f32.gmra.mrb[0].mxu0 %v4079
      %v4296 = vpop.f32.mrb[0].mxu0
      %v4297 = vadd.f32 0.0, %v4296
      %v4298 = vpop.f32.mrb[0].mxu0
      %4299 = vmatprep.mubr.f32.mxu0 0.0
      %4300 = vmatmul.mubr.f32.gmra.mrb[0].mxu0 %v4082
      %v4301 = vpop.f32.mrb[0].mxu0
      %v4302 = vadd.f32 0.0, %v4301
      %v4303 = vpop.f32.mrb[0].mxu0
      %4304 = vmatprep.mubr.f32.mxu0 0.0
      %4305 = vmatmul.mubr.f32.gmra.mrb[0].mxu0 %v4085
      %v4306 = vpop.f32.mrb[0].mxu0
      %v4307 = vadd.f32 0.0, %v4306
      %v4308 = vpop.f32.mrb[0].mxu0
      %4309 = vmatprep.mubr.f32.mxu0 0.0
      %4310 = vmatmul.mubr.f32.gmra.mrb[0].mxu0 %v4088
      %v4311 = vpop.f32.mrb[0].mxu0
      %v4312 = vadd.f32 0.0, %v4311
      %v4313 = vpop.f32.mrb[0].mxu0
      %4314 = vdwg.mxu0
      %v4316 = vsel %vm3838, %v3927, 0
      %v4319 = vsel %vm3838, %v3928, 0
      %v4322 = vsel %vm3838, %v3929, 0
      %v4325 = vsel %vm3838, %v3930, 0
      %v4328 = vsel %vm3838, %v3931, 0
      %v4331 = vsel %vm3838, %v3932, 0
      %v4334 = vsel %vm3838, %v3933, 0
      %v4337 = vsel %vm3838, %v3934, 0
      %v4340 = vsel %vm3838, %v3935, 0
      %v4343 = vsel %vm3838, %v3936, 0
      %v4346 = vsel %vm3838, %v3937, 0
      %v4349 = vsel %vm3838, %v3938, 0
      %v4352 = vsel %vm3838, %v3939, 0
      %v4355 = vsel %vm3838, %v3940, 0
      %v4358 = vsel %vm3838, %v3941, 0
      %v4361 = vsel %vm3838, %v3942, 0
      %v4364 = vsel %vm3838, %v3943, 0
      %v4367 = vsel %vm3838, %v3944, 0
      %v4370 = vsel %vm3838, %v3945, 0
      %v4373 = vsel %vm3838, %v3946, 0
      %v4376 = vsel %vm3838, %v3947, 0
      %v4379 = vsel %vm3838, %v3948, 0
      %v4382 = vsel %vm3838, %v3949, 0
      %v4385 = vsel %vm3838, %v3950, 0
      %v4388 = vsel %vm3838, %v3951, 0
      %v4391 = vsel %vm3838, %v3952, 0
      %v4394 = vsel %vm3838, %v3953, 0
      %v4397 = vsel %vm3838, %v3954, 0
      %v4400 = vsel %vm3838, %v3955, 0
      %v4403 = vsel %vm3838, %v3956, 0
      %v4406 = vsel %vm3838, %v3957, 0
      %v4409 = vsel %vm3838, %v3958, 0
      %4411 = vmatprep.subr.mxu0 0.0
      %4412 = vmatpush1.msra.mxu0 %v3959
      %4413 = vmatprep.subr.mxu0 0.0
      %4414 = vmatpush1.msra.mxu0 0.0
      %4415 = vmatprep.subr.mxu0 0.0
      %4416 = vmatpush1.msra.mxu0 0.0
      %4417 = vmatprep.subr.mxu0 0.0
      %4418 = vmatpush1.msra.mxu0 0.0
      %4419 = vmatprep.subr.mxu0 0.0
      %4420 = vmatpush1.msra.mxu0 0.0
      %4421 = vmatprep.subr.mxu0 0.0
      %4422 = vmatpush1.msra.mxu0 0.0
      %4423 = vmatprep.subr.mxu0 0.0
      %4424 = vmatpush1.msra.mxu0 0.0
      %4425 = vmatprep.subr.mxu0 0.0
      %4426 = vmatpush1.msra.mxu0 0.0
      %4427 = vmatprep.subr.mxu0 0.0
      %4428 = vmatpush1.msra.mxu0 0.0
      %4429 = vmatprep.subr.mxu0 0.0
      %4430 = vmatpush1.msra.mxu0 0.0
      %4431 = vmatprep.subr.mxu0 0.0
      %4432 = vmatpush1.msra.mxu0 0.0
      %4433 = vmatprep.subr.mxu0 0.0
      %4434 = vmatpush1.msra.mxu0 0.0
      %4435 = vmatprep.subr.mxu0 0.0
      %4436 = vmatpush1.msra.mxu0 0.0
      %4437 = vmatprep.subr.mxu0 0.0
      %4438 = vmatpush1.msra.mxu0 0.0
      %4439 = vmatprep.subr.mxu0 0.0
      %4440 = vmatpush1.msra.mxu0 0.0
      %4441 = vmatprep.subr.mxu0 0.0
      %4442 = vmatpush1.msra.mxu0 0.0
      %4443 = vmatprep.subr.mxu0 0.0
      %4444 = vmatpush1.msra.mxu0 0.0
      %4445 = vmatprep.subr.mxu0 0.0
      %4446 = vmatpush1.msra.mxu0 0.0
      %4447 = vmatprep.subr.mxu0 0.0
      %4448 = vmatpush1.msra.mxu0 0.0
      %4449 = vmatprep.subr.mxu0 0.0
      %4450 = vmatpush1.msra.mxu0 0.0
      %4451 = vmatprep.subr.mxu0 0.0
      %4452 = vmatpush1.msra.mxu0 0.0
      %4453 = vmatprep.subr.mxu0 0.0
      %4454 = vmatpush1.msra.mxu0 0.0
      %4455 = vmatprep.subr.mxu0 0.0
      %4456 = vmatpush1.msra.mxu0 0.0
      %4457 = vmatprep.subr.mxu0 0.0
      %4458 = vmatpush1.msra.mxu0 0.0
      %4459 = vmatprep.subr.mxu0 0.0
      %4460 = vmatpush1.msra.mxu0 0.0
      %4461 = vmatprep.subr.mxu0 0.0
      %4462 = vmatpush1.msra.mxu0 0.0
      %4463 = vmatprep.subr.mxu0 0.0
      %4464 = vmatpush1.msra.mxu0 0.0
      %4465 = vmatprep.subr.mxu0 0.0
      %4466 = vmatpush1.msra.mxu0 0.0
      %4467 = vmatprep.subr.mxu0 0.0
      %4468 = vmatpush1.msra.mxu0 0.0
      %4469 = vmatprep.subr.mxu0 0.0
      %4470 = vmatpush1.msra.mxu0 0.0
      %4471 = vmatprep.subr.mxu0 0.0
      %4472 = vmatpush1.msra.mxu0 0.0
      %4473 = vmatprep.subr.mxu0 0.0
      %4474 = vmatpush1.msra.mxu0 0.0
      %4475 = vmatprep.mubr.f32.mxu0 0.0
      %4476 = vmatmul.mubr.f32.gmra.mrb[0].mxu0 %v4316
      %v4477 = vpop.f32.mrb[0].mxu0
      %v4478 = vadd.f32 %v4157, %v4477
      %v4479 = vpop.f32.mrb[0].mxu0
      %4480 = vmatprep.mubr.f32.mxu0 0.0
      %4481 = vmatmul.mubr.f32.gmra.mrb[0].mxu0 %v4319
      %v4482 = vpop.f32.mrb[0].mxu0
      %v4483 = vadd.f32 %v4162, %v4482
      %v4484 = vpop.f32.mrb[0].mxu0
      %4485 = vmatprep.mubr.f32.mxu0 0.0
      %4486 = vmatmul.mubr.f32.gmra.mrb[0].mxu0 %v4322
      %v4487 = vpop.f32.mrb[0].mxu0
      %v4488 = vadd.f32 %v4167, %v4487
      %v4489 = vpop.f32.mrb[0].mxu0
      %4490 = vmatprep.mubr.f32.mxu0 0.0
      %4491 = vmatmul.mubr.f32.gmra.mrb[0].mxu0 %v4325
      %v4492 = vpop.f32.mrb[0].mxu0
      %v4493 = vadd.f32 %v4172, %v4492
      %v4494 = vpop.f32.mrb[0].mxu0
      %4495 = vmatprep.mubr.f32.mxu0 0.0
      %4496 = vmatmul.mubr.f32.gmra.mrb[0].mxu0 %v4328
      %v4497 = vpop.f32.mrb[0].mxu0
      %v4498 = vadd.f32 %v4177, %v4497
      %v4499 = vpop.f32.mrb[0].mxu0
      %4500 = vmatprep.mubr.f32.mxu0 0.0
      %4501 = vmatmul.mubr.f32.gmra.mrb[0].mxu0 %v4331
      %v4502 = vpop.f32.mrb[0].mxu0
      %v4503 = vadd.f32 %v4182, %v4502
      %v4504 = vpop.f32.mrb[0].mxu0
      %4505 = vmatprep.mubr.f32.mxu0 0.0
      %4506 = vmatmul.mubr.f32.gmra.mrb[0].mxu0 %v4334
      %v4507 = vpop.f32.mrb[0].mxu0
      %v4508 = vadd.f32 %v4187, %v4507
      %v4509 = vpop.f32.mrb[0].mxu0
      %4510 = vmatprep.mubr.f32.mxu0 0.0
      %4511 = vmatmul.mubr.f32.gmra.mrb[0].mxu0 %v4337
      %v4512 = vpop.f32.mrb[0].mxu0
      %v4513 = vadd.f32 %v4192, %v4512
      %v4514 = vpop.f32.mrb[0].mxu0
      %4515 = vmatprep.mubr.f32.mxu0 0.0
      %4516 = vmatmul.mubr.f32.gmra.mrb[0].mxu0 %v4340
      %v4517 = vpop.f32.mrb[0].mxu0
      %v4518 = vadd.f32 %v4197, %v4517
      %v4519 = vpop.f32.mrb[0].mxu0
      %4520 = vmatprep.mubr.f32.mxu0 0.0
      %4521 = vmatmul.mubr.f32.gmra.mrb[0].mxu0 %v4343
      %v4522 = vpop.f32.mrb[0].mxu0
      %v4523 = vadd.f32 %v4202, %v4522
      %v4524 = vpop.f32.mrb[0].mxu0
      %4525 = vmatprep.mubr.f32.mxu0 0.0
      %4526 = vmatmul.mubr.f32.gmra.mrb[0].mxu0 %v4346
      %v4527 = vpop.f32.mrb[0].mxu0
      %v4528 = vadd.f32 %v4207, %v4527
      %v4529 = vpop.f32.mrb[0].mxu0
      %4530 = vmatprep.mubr.f32.mxu0 0.0
      %4531 = vmatmul.mubr.f32.gmra.mrb[0].mxu0 %v4349
      %v4532 = vpop.f32.mrb[0].mxu0
      %v4533 = vadd.f32 %v4212, %v4532
      %v4534 = vpop.f32.mrb[0].mxu0
      %4535 = vmatprep.mubr.f32.mxu0 0.0
      %4536 = vmatmul.mubr.f32.gmra.mrb[0].mxu0 %v4352
      %v4537 = vpop.f32.mrb[0].mxu0
      %v4538 = vadd.f32 %v4217, %v4537
      %v4539 = vpop.f32.mrb[0].mxu0
      %4540 = vmatprep.mubr.f32.mxu0 0.0
      %4541 = vmatmul.mubr.f32.gmra.mrb[0].mxu0 %v4355
      %v4542 = vpop.f32.mrb[0].mxu0
      %v4543 = vadd.f32 %v4222, %v4542
      %v4544 = vpop.f32.mrb[0].mxu0
      %4545 = vmatprep.mubr.f32.mxu0 0.0
      %4546 = vmatmul.mubr.f32.gmra.mrb[0].mxu0 %v4358
      %v4547 = vpop.f32.mrb[0].mxu0
      %v4548 = vadd.f32 %v4227, %v4547
      %v4549 = vpop.f32.mrb[0].mxu0
      %4550 = vmatprep.mubr.f32.mxu0 0.0
      %4551 = vmatmul.mubr.f32.gmra.mrb[0].mxu0 %v4361
      %v4552 = vpop.f32.mrb[0].mxu0
      %v4553 = vadd.f32 %v4232, %v4552
      %v4554 = vpop.f32.mrb[0].mxu0
      %4555 = vmatprep.mubr.f32.mxu0 0.0
      %4556 = vmatmul.mubr.f32.gmra.mrb[0].mxu0 %v4364
      %v4557 = vpop.f32.mrb[0].mxu0
      %v4558 = vadd.f32 %v4237, %v4557
      %v4559 = vpop.f32.mrb[0].mxu0
      %4560 = vmatprep.mubr.f32.mxu0 0.0
      %4561 = vmatmul.mubr.f32.gmra.mrb[0].mxu0 %v4367
      %v4562 = vpop.f32.mrb[0].mxu0
      %v4563 = vadd.f32 %v4242, %v4562
      %v4564 = vpop.f32.mrb[0].mxu0
      %4565 = vmatprep.mubr.f32.mxu0 0.0
      %4566 = vmatmul.mubr.f32.gmra.mrb[0].mxu0 %v4370
      %v4567 = vpop.f32.mrb[0].mxu0
      %v4568 = vadd.f32 %v4247, %v4567
      %v4569 = vpop.f32.mrb[0].mxu0
      %4570 = vmatprep.mubr.f32.mxu0 0.0
      %4571 = vmatmul.mubr.f32.gmra.mrb[0].mxu0 %v4373
      %v4572 = vpop.f32.mrb[0].mxu0
      %v4573 = vadd.f32 %v4252, %v4572
      %v4574 = vpop.f32.mrb[0].mxu0
      %4575 = vmatprep.mubr.f32.mxu0 0.0
      %4576 = vmatmul.mubr.f32.gmra.mrb[0].mxu0 %v4376
      %v4577 = vpop.f32.mrb[0].mxu0
      %v4578 = vadd.f32 %v4257, %v4577
      %v4579 = vpop.f32.mrb[0].mxu0
      %4580 = vmatprep.mubr.f32.mxu0 0.0
      %4581 = vmatmul.mubr.f32.gmra.mrb[0].mxu0 %v4379
      %v4582 = vpop.f32.mrb[0].mxu0
      %v4583 = vadd.f32 %v4262, %v4582
      %v4584 = vpop.f32.mrb[0].mxu0
      %4585 = vmatprep.mubr.f32.mxu0 0.0
      %4586 = vmatmul.mubr.f32.gmra.mrb[0].mxu0 %v4382
      %v4587 = vpop.f32.mrb[0].mxu0
      %v4588 = vadd.f32 %v4267, %v4587
      %v4589 = vpop.f32.mrb[0].mxu0
      %4590 = vmatprep.mubr.f32.mxu0 0.0
      %4591 = vmatmul.mubr.f32.gmra.mrb[0].mxu0 %v4385
      %v4592 = vpop.f32.mrb[0].mxu0
      %v4593 = vadd.f32 %v4272, %v4592
      %v4594 = vpop.f32.mrb[0].mxu0
      %4595 = vmatprep.mubr.f32.mxu0 0.0
      %4596 = vmatmul.mubr.f32.gmra.mrb[0].mxu0 %v4388
      %v4597 = vpop.f32.mrb[0].mxu0
      %v4598 = vadd.f32 %v4277, %v4597
      %v4599 = vpop.f32.mrb[0].mxu0
      %4600 = vmatprep.mubr.f32.mxu0 0.0
      %4601 = vmatmul.mubr.f32.gmra.mrb[0].mxu0 %v4391
      %v4602 = vpop.f32.mrb[0].mxu0
      %v4603 = vadd.f32 %v4282, %v4602
      %v4604 = vpop.f32.mrb[0].mxu0
      %4605 = vmatprep.mubr.f32.mxu0 0.0
      %4606 = vmatmul.mubr.f32.gmra.mrb[0].mxu0 %v4394
      %v4607 = vpop.f32.mrb[0].mxu0
      %v4608 = vadd.f32 %v4287, %v4607
      %v4609 = vpop.f32.mrb[0].mxu0
      %4610 = vmatprep.mubr.f32.mxu0 0.0
      %4611 = vmatmul.mubr.f32.gmra.mrb[0].mxu0 %v4397
      %v4612 = vpop.f32.mrb[0].mxu0
      %v4613 = vadd.f32 %v4292, %v4612
      %v4614 = vpop.f32.mrb[0].mxu0
      %4615 = vmatprep.mubr.f32.mxu0 0.0
      %4616 = vmatmul.mubr.f32.gmra.mrb[0].mxu0 %v4400
      %v4617 = vpop.f32.mrb[0].mxu0
      %v4618 = vadd.f32 %v4297, %v4617
      %v4619 = vpop.f32.mrb[0].mxu0
      %4620 = vmatprep.mubr.f32.mxu0 0.0
      %4621 = vmatmul.mubr.f32.gmra.mrb[0].mxu0 %v4403
      %v4622 = vpop.f32.mrb[0].mxu0
      %v4623 = vadd.f32 %v4302, %v4622
      %v4624 = vpop.f32.mrb[0].mxu0
      %4625 = vmatprep.mubr.f32.mxu0 0.0
      %4626 = vmatmul.mubr.f32.gmra.mrb[0].mxu0 %v4406
      %v4627 = vpop.f32.mrb[0].mxu0
      %v4628 = vadd.f32 %v4307, %v4627
      %v4629 = vpop.f32.mrb[0].mxu0
      %4630 = vmatprep.mubr.f32.mxu0 0.0
      %4631 = vmatmul.mubr.f32.gmra.mrb[0].mxu0 %v4409
      %v4632 = vpop.f32.mrb[0].mxu0
      %v4633 = vadd.f32 %v4312, %v4632
      %v4634 = vpop.f32.mrb[0].mxu0
      %4635 = vdwg.mxu0
      %v4636 = vld [vmem:[#allocation2 + $0x2] sm:$0xff]
      %v4637 = vld [vmem:[#allocation2 + $0xa] sm:$0xff]
      %v4638 = vld [vmem:[#allocation2 + $0x1a] sm:$0xff]
      %v4639 = vld [vmem:[#allocation2 + $0x22] sm:$0xff]
      %v4640 = vld [vmem:[#allocation2 + $0x32] sm:$0xff]
      %v4641 = vld [vmem:[#allocation2 + $0x3a] sm:$0xff]
      %v4642 = vld [vmem:[#allocation2 + $0x4a] sm:$0xff]
      %v4643 = vld [vmem:[#allocation2 + $0x52] sm:$0xff]
      %v4644 = vld [vmem:[#allocation2 + $0x62] sm:$0xff]
      %v4645 = vld [vmem:[#allocation2 + $0x6a] sm:$0xff]
      %v4646 = vld [vmem:[#allocation2 + $0x7a] sm:$0xff]
      %v4647 = vld [vmem:[#allocation2 + $0x82] sm:$0xff]
      %v4648 = vld [vmem:[#allocation2 + $0x92] sm:$0xff]
      %v4649 = vld [vmem:[#allocation2 + $0x9a] sm:$0xff]
      %v4650 = vld [vmem:[#allocation2 + $0xaa] sm:$0xff]
      %v4651 = vld [vmem:[#allocation2 + $0xb2] sm:$0xff]
      %v4652 = vld [vmem:[#allocation2 + $0xc2] sm:$0xff]
      %v4653 = vld [vmem:[#allocation2 + $0xca] sm:$0xff]
      %v4654 = vld [vmem:[#allocation2 + $0xda] sm:$0xff]
      %v4655 = vld [vmem:[#allocation2 + $0xe2] sm:$0xff]
      %v4656 = vld [vmem:[#allocation2 + $0xf2] sm:$0xff]
      %v4657 = vld [vmem:[#allocation2 + $0xfa] sm:$0xff]
      %v4658 = vld [vmem:[#allocation2 + $0x10a] sm:$0xff]
      %v4659 = vld [vmem:[#allocation2 + $0x112] sm:$0xff]
      %v4660 = vld [vmem:[#allocation2 + $0x122] sm:$0xff]
      %v4661 = vld [vmem:[#allocation2 + $0x12a] sm:$0xff]
      %v4662 = vld [vmem:[#allocation2 + $0x13a] sm:$0xff]
      %v4663 = vld [vmem:[#allocation2 + $0x142] sm:$0xff]
      %v4664 = vld [vmem:[#allocation2 + $0x152] sm:$0xff]
      %v4665 = vld [vmem:[#allocation2 + $0x15a] sm:$0xff]
      %v4666 = vld [vmem:[#allocation2 + $0x16a] sm:$0xff]
      %v4667 = vld [vmem:[#allocation2 + $0x172] sm:$0xff]
      %s4668 = scalar_lea.vmem %s4, 16
      %v4669 = vld [vmem:[%s4668] sm:$0xff]
      %v4671 = vsel %vm3838, %v4636, 0
      %v4674 = vsel %vm3838, %v4637, 0
      %v4677 = vsel %vm3838, %v4638, 0
      %v4680 = vsel %vm3838, %v4639, 0
      %v4683 = vsel %vm3838, %v4640, 0
      %v4686 = vsel %vm3838, %v4641, 0
      %v4689 = vsel %vm3838, %v4642, 0
      %v4692 = vsel %vm3838, %v4643, 0
      %v4695 = vsel %vm3838, %v4644, 0
      %v4698 = vsel %vm3838, %v4645, 0
      %v4701 = vsel %vm3838, %v4646, 0
      %v4704 = vsel %vm3838, %v4647, 0
      %v4707 = vsel %vm3838, %v4648, 0
      %v4710 = vsel %vm3838, %v4649, 0
      %v4713 = vsel %vm3838, %v4650, 0
      %v4716 = vsel %vm3838, %v4651, 0
      %v4719 = vsel %vm3838, %v4652, 0
      %v4722 = vsel %vm3838, %v4653, 0
      %v4725 = vsel %vm3838, %v4654, 0
      %v4728 = vsel %vm3838, %v4655, 0
      %v4731 = vsel %vm3838, %v4656, 0
      %v4734 = vsel %vm3838, %v4657, 0
      %v4737 = vsel %vm3838, %v4658, 0
      %v4740 = vsel %vm3838, %v4659, 0
      %v4743 = vsel %vm3838, %v4660, 0
      %v4746 = vsel %vm3838, %v4661, 0
      %v4749 = vsel %vm3838, %v4662, 0
      %v4752 = vsel %vm3838, %v4663, 0
      %v4755 = vsel %vm3838, %v4664, 0
      %v4758 = vsel %vm3838, %v4665, 0
      %v4761 = vsel %vm3838, %v4666, 0
      %v4764 = vsel %vm3838, %v4667, 0
      %4766 = vmatprep.subr.mxu0 0.0
      %4767 = vmatpush1.msra.mxu0 %v4669
      %4768 = vmatprep.subr.mxu0 0.0
      %4769 = vmatpush1.msra.mxu0 0.0
      %4770 = vmatprep.subr.mxu0 0.0
      %4771 = vmatpush1.msra.mxu0 0.0
      %4772 = vmatprep.subr.mxu0 0.0
      %4773 = vmatpush1.msra.mxu0 0.0
      %4774 = vmatprep.subr.mxu0 0.0
      %4775 = vmatpush1.msra.mxu0 0.0
      %4776 = vmatprep.subr.mxu0 0.0
      %4777 = vmatpush1.msra.mxu0 0.0
      %4778 = vmatprep.subr.mxu0 0.0
      %4779 = vmatpush1.msra.mxu0 0.0
      %4780 = vmatprep.subr.mxu0 0.0
      %4781 = vmatpush1.msra.mxu0 0.0
      %4782 = vmatprep.subr.mxu0 0.0
      %4783 = vmatpush1.msra.mxu0 0.0
      %4784 = vmatprep.subr.mxu0 0.0
      %4785 = vmatpush1.msra.mxu0 0.0
      %4786 = vmatprep.subr.mxu0 0.0
      %4787 = vmatpush1.msra.mxu0 0.0
      %4788 = vmatprep.subr.mxu0 0.0
      %4789 = vmatpush1.msra.mxu0 0.0
      %4790 = vmatprep.subr.mxu0 0.0
      %4791 = vmatpush1.msra.mxu0 0.0
      %4792 = vmatprep.subr.mxu0 0.0
      %4793 = vmatpush1.msra.mxu0 0.0
      %4794 = vmatprep.subr.mxu0 0.0
      %4795 = vmatpush1.msra.mxu0 0.0
      %4796 = vmatprep.subr.mxu0 0.0
      %4797 = vmatpush1.msra.mxu0 0.0
      %4798 = vmatprep.subr.mxu0 0.0
      %4799 = vmatpush1.msra.mxu0 0.0
      %4800 = vmatprep.subr.mxu0 0.0
      %4801 = vmatpush1.msra.mxu0 0.0
      %4802 = vmatprep.subr.mxu0 0.0
      %4803 = vmatpush1.msra.mxu0 0.0
      %4804 = vmatprep.subr.mxu0 0.0
      %4805 = vmatpush1.msra.mxu0 0.0
      %4806 = vmatprep.subr.mxu0 0.0
      %4807 = vmatpush1.msra.mxu0 0.0
      %4808 = vmatprep.subr.mxu0 0.0
      %4809 = vmatpush1.msra.mxu0 0.0
      %4810 = vmatprep.subr.mxu0 0.0
      %4811 = vmatpush1.msra.mxu0 0.0
      %4812 = vmatprep.subr.mxu0 0.0
      %4813 = vmatpush1.msra.mxu0 0.0
      %4814 = vmatprep.subr.mxu0 0.0
      %4815 = vmatpush1.msra.mxu0 0.0
      %4816 = vmatprep.subr.mxu0 0.0
      %4817 = vmatpush1.msra.mxu0 0.0
      %4818 = vmatprep.subr.mxu0 0.0
      %4819 = vmatpush1.msra.mxu0 0.0
      %4820 = vmatprep.subr.mxu0 0.0
      %4821 = vmatpush1.msra.mxu0 0.0
      %4822 = vmatprep.subr.mxu0 0.0
      %4823 = vmatpush1.msra.mxu0 0.0
      %4824 = vmatprep.subr.mxu0 0.0
      %4825 = vmatpush1.msra.mxu0 0.0
      %4826 = vmatprep.subr.mxu0 0.0
      %4827 = vmatpush1.msra.mxu0 0.0
      %4828 = vmatprep.subr.mxu0 0.0
      %4829 = vmatpush1.msra.mxu0 0.0
      %4830 = vmatprep.mubr.f32.mxu0 0.0
      %4831 = vmatmul.mubr.f32.gmra.mrb[0].mxu0 %v4671
      %v4832 = vpop.f32.mrb[0].mxu0
      %v4833 = vadd.f32 0.0, %v4832
      %v4834 = vpop.f32.mrb[0].mxu0
      %4835 = vmatprep.mubr.f32.mxu0 0.0
      %4836 = vmatmul.mubr.f32.gmra.mrb[0].mxu0 %v4674
      %v4837 = vpop.f32.mrb[0].mxu0
      %v4838 = vadd.f32 0.0, %v4837
      %v4839 = vpop.f32.mrb[0].mxu0
      %4840 = vmatprep.mubr.f32.mxu0 0.0
      %4841 = vmatmul.mubr.f32.gmra.mrb[0].mxu0 %v4677
      %v4842 = vpop.f32.mrb[0].mxu0
      %v4843 = vadd.f32 0.0, %v4842
      %v4844 = vpop.f32.mrb[0].mxu0
      %4845 = vmatprep.mubr.f32.mxu0 0.0
      %4846 = vmatmul.mubr.f32.gmra.mrb[0].mxu0 %v4680
      %v4847 = vpop.f32.mrb[0].mxu0
      %v4848 = vadd.f32 0.0, %v4847
      %v4849 = vpop.f32.mrb[0].mxu0
      %4850 = vmatprep.mubr.f32.mxu0 0.0
      %4851 = vmatmul.mubr.f32.gmra.mrb[0].mxu0 %v4683
      %v4852 = vpop.f32.mrb[0].mxu0
      %v4853 = vadd.f32 0.0, %v4852
      %v4854 = vpop.f32.mrb[0].mxu0
      %4855 = vmatprep.mubr.f32.mxu0 0.0
      %4856 = vmatmul.mubr.f32.gmra.mrb[0].mxu0 %v4686
      %v4857 = vpop.f32.mrb[0].mxu0
      %v4858 = vadd.f32 0.0, %v4857
      %v4859 = vpop.f32.mrb[0].mxu0
      %4860 = vmatprep.mubr.f32.mxu0 0.0
      %4861 = vmatmul.mubr.f32.gmra.mrb[0].mxu0 %v4689
      %v4862 = vpop.f32.mrb[0].mxu0
      %v4863 = vadd.f32 0.0, %v4862
      %v4864 = vpop.f32.mrb[0].mxu0
      %4865 = vmatprep.mubr.f32.mxu0 0.0
      %4866 = vmatmul.mubr.f32.gmra.mrb[0].mxu0 %v4692
      %v4867 = vpop.f32.mrb[0].mxu0
      %v4868 = vadd.f32 0.0, %v4867
      %v4869 = vpop.f32.mrb[0].mxu0
      %4870 = vmatprep.mubr.f32.mxu0 0.0
      %4871 = vmatmul.mubr.f32.gmra.mrb[0].mxu0 %v4695
      %v4872 = vpop.f32.mrb[0].mxu0
      %v4873 = vadd.f32 0.0, %v4872
      %v4874 = vpop.f32.mrb[0].mxu0
      %4875 = vmatprep.mubr.f32.mxu0 0.0
      %4876 = vmatmul.mubr.f32.gmra.mrb[0].mxu0 %v4698
      %v4877 = vpop.f32.mrb[0].mxu0
      %v4878 = vadd.f32 0.0, %v4877
      %v4879 = vpop.f32.mrb[0].mxu0
      %4880 = vmatprep.mubr.f32.mxu0 0.0
      %4881 = vmatmul.mubr.f32.gmra.mrb[0].mxu0 %v4701
      %v4882 = vpop.f32.mrb[0].mxu0
      %v4883 = vadd.f32 0.0, %v4882
      %v4884 = vpop.f32.mrb[0].mxu0
      %4885 = vmatprep.mubr.f32.mxu0 0.0
      %4886 = vmatmul.mubr.f32.gmra.mrb[0].mxu0 %v4704
      %v4887 = vpop.f32.mrb[0].mxu0
      %v4888 = vadd.f32 0.0, %v4887
      %v4889 = vpop.f32.mrb[0].mxu0
      %4890 = vmatprep.mubr.f32.mxu0 0.0
      %4891 = vmatmul.mubr.f32.gmra.mrb[0].mxu0 %v4707
      %v4892 = vpop.f32.mrb[0].mxu0
      %v4893 = vadd.f32 0.0, %v4892
      %v4894 = vpop.f32.mrb[0].mxu0
      %4895 = vmatprep.mubr.f32.mxu0 0.0
      %4896 = vmatmul.mubr.f32.gmra.mrb[0].mxu0 %v4710
      %v4897 = vpop.f32.mrb[0].mxu0
      %v4898 = vadd.f32 0.0, %v4897
      %v4899 = vpop.f32.mrb[0].mxu0
      %4900 = vmatprep.mubr.f32.mxu0 0.0
      %4901 = vmatmul.mubr.f32.gmra.mrb[0].mxu0 %v4713
      %v4902 = vpop.f32.mrb[0].mxu0
      %v4903 = vadd.f32 0.0, %v4902
      %v4904 = vpop.f32.mrb[0].mxu0
      %4905 = vmatprep.mubr.f32.mxu0 0.0
      %4906 = vmatmul.mubr.f32.gmra.mrb[0].mxu0 %v4716
      %v4907 = vpop.f32.mrb[0].mxu0
      %v4908 = vadd.f32 0.0, %v4907
      %v4909 = vpop.f32.mrb[0].mxu0
      %4910 = vmatprep.mubr.f32.mxu0 0.0
      %4911 = vmatmul.mubr.f32.gmra.mrb[0].mxu0 %v4719
      %v4912 = vpop.f32.mrb[0].mxu0
      %v4913 = vadd.f32 0.0, %v4912
      %v4914 = vpop.f32.mrb[0].mxu0
      %4915 = vmatprep.mubr.f32.mxu0 0.0
      %4916 = vmatmul.mubr.f32.gmra.mrb[0].mxu0 %v4722
      %v4917 = vpop.f32.mrb[0].mxu0
      %v4918 = vadd.f32 0.0, %v4917
      %v4919 = vpop.f32.mrb[0].mxu0
      %4920 = vmatprep.mubr.f32.mxu0 0.0
      %4921 = vmatmul.mubr.f32.gmra.mrb[0].mxu0 %v4725
      %v4922 = vpop.f32.mrb[0].mxu0
      %v4923 = vadd.f32 0.0, %v4922
      %v4924 = vpop.f32.mrb[0].mxu0
      %4925 = vmatprep.mubr.f32.mxu0 0.0
      %4926 = vmatmul.mubr.f32.gmra.mrb[0].mxu0 %v4728
      %v4927 = vpop.f32.mrb[0].mxu0
      %v4928 = vadd.f32 0.0, %v4927
      %v4929 = vpop.f32.mrb[0].mxu0
      %4930 = vmatprep.mubr.f32.mxu0 0.0
      %4931 = vmatmul.mubr.f32.gmra.mrb[0].mxu0 %v4731
      %v4932 = vpop.f32.mrb[0].mxu0
      %v4933 = vadd.f32 0.0, %v4932
      %v4934 = vpop.f32.mrb[0].mxu0
      %4935 = vmatprep.mubr.f32.mxu0 0.0
      %4936 = vmatmul.mubr.f32.gmra.mrb[0].mxu0 %v4734
      %v4937 = vpop.f32.mrb[0].mxu0
      %v4938 = vadd.f32 0.0, %v4937
      %v4939 = vpop.f32.mrb[0].mxu0
      %4940 = vmatprep.mubr.f32.mxu0 0.0
      %4941 = vmatmul.mubr.f32.gmra.mrb[0].mxu0 %v4737
      %v4942 = vpop.f32.mrb[0].mxu0
      %v4943 = vadd.f32 0.0, %v4942
      %v4944 = vpop.f32.mrb[0].mxu0
      %4945 = vmatprep.mubr.f32.mxu0 0.0
      %4946 = vmatmul.mubr.f32.gmra.mrb[0].mxu0 %v4740
      %v4947 = vpop.f32.mrb[0].mxu0
      %v4948 = vadd.f32 0.0, %v4947
      %v4949 = vpop.f32.mrb[0].mxu0
      %4950 = vmatprep.mubr.f32.mxu0 0.0
      %4951 = vmatmul.mubr.f32.gmra.mrb[0].mxu0 %v4743
      %v4952 = vpop.f32.mrb[0].mxu0
      %v4953 = vadd.f32 0.0, %v4952
      %v4954 = vpop.f32.mrb[0].mxu0
      %4955 = vmatprep.mubr.f32.mxu0 0.0
      %4956 = vmatmul.mubr.f32.gmra.mrb[0].mxu0 %v4746
      %v4957 = vpop.f32.mrb[0].mxu0
      %v4958 = vadd.f32 0.0, %v4957
      %v4959 = vpop.f32.mrb[0].mxu0
      %4960 = vmatprep.mubr.f32.mxu0 0.0
      %4961 = vmatmul.mubr.f32.gmra.mrb[0].mxu0 %v4749
      %v4962 = vpop.f32.mrb[0].mxu0
      %v4963 = vadd.f32 0.0, %v4962
      %v4964 = vpop.f32.mrb[0].mxu0
      %4965 = vmatprep.mubr.f32.mxu0 0.0
      %4966 = vmatmul.mubr.f32.gmra.mrb[0].mxu0 %v4752
      %v4967 = vpop.f32.mrb[0].mxu0
      %v4968 = vadd.f32 0.0, %v4967
      %v4969 = vpop.f32.mrb[0].mxu0
      %4970 = vmatprep.mubr.f32.mxu0 0.0
      %4971 = vmatmul.mubr.f32.gmra.mrb[0].mxu0 %v4755
      %v4972 = vpop.f32.mrb[0].mxu0
      %v4973 = vadd.f32 0.0, %v4972
      %v4974 = vpop.f32.mrb[0].mxu0
      %4975 = vmatprep.mubr.f32.mxu0 0.0
      %4976 = vmatmul.mubr.f32.gmra.mrb[0].mxu0 %v4758
      %v4977 = vpop.f32.mrb[0].mxu0
      %v4978 = vadd.f32 0.0, %v4977
      %v4979 = vpop.f32.mrb[0].mxu0
      %4980 = vmatprep.mubr.f32.mxu0 0.0
      %4981 = vmatmul.mubr.f32.gmra.mrb[0].mxu0 %v4761
      %v4982 = vpop.f32.mrb[0].mxu0
      %v4983 = vadd.f32 0.0, %v4982
      %v4984 = vpop.f32.mrb[0].mxu0
      %4985 = vmatprep.mubr.f32.mxu0 0.0
      %4986 = vmatmul.mubr.f32.gmra.mrb[0].mxu0 %v4764
      %v4987 = vpop.f32.mrb[0].mxu0
      %v4988 = vadd.f32 0.0, %v4987
      %v4989 = vpop.f32.mrb[0].mxu0
      %4990 = vdwg.mxu0
      %v4991 = vadd.f32 %v4478, %v4833
      %v4992 = vadd.f32 %v4483, %v4838
      %v4993 = vadd.f32 %v4488, %v4843
      %v4994 = vadd.f32 %v4493, %v4848
      %v4995 = vadd.f32 %v4498, %v4853
      %v4996 = vadd.f32 %v4503, %v4858
      %v4997 = vadd.f32 %v4508, %v4863
      %v4998 = vadd.f32 %v4513, %v4868
      %v4999 = vadd.f32 %v4518, %v4873
      %v5000 = vadd.f32 %v4523, %v4878
      %v5001 = vadd.f32 %v4528, %v4883
      %v5002 = vadd.f32 %v4533, %v4888
      %v5003 = vadd.f32 %v4538, %v4893
      %v5004 = vadd.f32 %v4543, %v4898
      %v5005 = vadd.f32 %v4548, %v4903
      %v5006 = vadd.f32 %v4553, %v4908
      %v5007 = vadd.f32 %v4558, %v4913
      %v5008 = vadd.f32 %v4563, %v4918
      %v5009 = vadd.f32 %v4568, %v4923
      %v5010 = vadd.f32 %v4573, %v4928
      %v5011 = vadd.f32 %v4578, %v4933
      %v5012 = vadd.f32 %v4583, %v4938
      %v5013 = vadd.f32 %v4588, %v4943
      %v5014 = vadd.f32 %v4593, %v4948
      %v5015 = vadd.f32 %v4598, %v4953
      %v5016 = vadd.f32 %v4603, %v4958
      %v5017 = vadd.f32 %v4608, %v4963
      %v5018 = vadd.f32 %v4613, %v4968
      %v5019 = vadd.f32 %v4618, %v4973
      %v5020 = vadd.f32 %v4623, %v4978
      %v5021 = vadd.f32 %v4628, %v4983
      %v5022 = vadd.f32 %v4633, %v4988
      %v5023 = vld [vmem:[%s3894] sm:$0xff]
      %v5024 = vld [vmem:[%s3894 + $0x8] sm:$0xff]
      %v5025 = vld [vmem:[%s3894 + $0x18] sm:$0xff]
      %v5026 = vld [vmem:[%s3894 + $0x20] sm:$0xff]
      %v5027 = vld [vmem:[%s3894 + $0x30] sm:$0xff]
      %v5028 = vld [vmem:[%s3894 + $0x38] sm:$0xff]
      %v5029 = vld [vmem:[%s3894 + $0x48] sm:$0xff]
      %v5030 = vld [vmem:[%s3894 + $0x50] sm:$0xff]
      %v5031 = vld [vmem:[%s3894 + $0x60] sm:$0xff]
      %v5032 = vld [vmem:[%s3894 + $0x68] sm:$0xff]
      %v5033 = vld [vmem:[%s3894 + $0x78] sm:$0xff]
      %v5034 = vld [vmem:[%s3894 + $0x80] sm:$0xff]
      %v5035 = vld [vmem:[%s3894 + $0x90] sm:$0xff]
      %v5036 = vld [vmem:[%s3894 + $0x98] sm:$0xff]
      %v5037 = vld [vmem:[%s3894 + $0xa8] sm:$0xff]
      %v5038 = vld [vmem:[%s3894 + $0xb0] sm:$0xff]
      %v5039 = vld [vmem:[%s3894 + $0xc0] sm:$0xff]
      %v5040 = vld [vmem:[%s3894 + $0xc8] sm:$0xff]
      %v5041 = vld [vmem:[%s3894 + $0xd8] sm:$0xff]
      %v5042 = vld [vmem:[%s3894 + $0xe0] sm:$0xff]
      %v5043 = vld [vmem:[%s3894 + $0xf0] sm:$0xff]
      %v5044 = vld [vmem:[%s3894 + $0xf8] sm:$0xff]
      %v5045 = vld [vmem:[%s3894 + $0x108] sm:$0xff]
      %v5046 = vld [vmem:[%s3894 + $0x110] sm:$0xff]
      %v5047 = vld [vmem:[%s3894 + $0x120] sm:$0xff]
      %v5048 = vld [vmem:[%s3894 + $0x128] sm:$0xff]
      %v5049 = vld [vmem:[%s3894 + $0x138] sm:$0xff]
      %v5050 = vld [vmem:[%s3894 + $0x140] sm:$0xff]
      %v5051 = vld [vmem:[%s3894 + $0x150] sm:$0xff]
      %v5052 = vld [vmem:[%s3894 + $0x158] sm:$0xff]
      %v5053 = vld [vmem:[%s3894 + $0x168] sm:$0xff]
      %v5054 = vld [vmem:[%s3894 + $0x170] sm:$0xff]
      %s5055 = scalar_lea.vmem %s4, 24
      %v5056 = vld [vmem:[%s5055] sm:$0xff]
      %v5058 = vsel %vm3838, %v5023, 0
      %v5061 = vsel %vm3838, %v5024, 0
      %v5064 = vsel %vm3838, %v5025, 0
      %v5067 = vsel %vm3838, %v5026, 0
      %v5070 = vsel %vm3838, %v5027, 0
      %v5073 = vsel %vm3838, %v5028, 0
      %v5076 = vsel %vm3838, %v5029, 0
      %v5079 = vsel %vm3838, %v5030, 0
      %v5082 = vsel %vm3838, %v5031, 0
      %v5085 = vsel %vm3838, %v5032, 0
      %v5088 = vsel %vm3838, %v5033, 0
      %v5091 = vsel %vm3838, %v5034, 0
      %v5094 = vsel %vm3838, %v5035, 0
      %v5097 = vsel %vm3838, %v5036, 0
      %v5100 = vsel %vm3838, %v5037, 0
      %v5103 = vsel %vm3838, %v5038, 0
      %v5106 = vsel %vm3838, %v5039, 0
      %v5109 = vsel %vm3838, %v5040, 0
      %v5112 = vsel %vm3838, %v5041, 0
      %v5115 = vsel %vm3838, %v5042, 0
      %v5118 = vsel %vm3838, %v5043, 0
      %v5121 = vsel %vm3838, %v5044, 0
      %v5124 = vsel %vm3838, %v5045, 0
      %v5127 = vsel %vm3838, %v5046, 0
      %v5130 = vsel %vm3838, %v5047, 0
      %v5133 = vsel %vm3838, %v5048, 0
      %v5136 = vsel %vm3838, %v5049, 0
      %v5139 = vsel %vm3838, %v5050, 0
      %v5142 = vsel %vm3838, %v5051, 0
      %v5145 = vsel %vm3838, %v5052, 0
      %v5148 = vsel %vm3838, %v5053, 0
      %v5151 = vsel %vm3838, %v5054, 0
      %5153 = vmatprep.subr.mxu0 0.0
      %5154 = vmatpush1.msra.mxu0 %v5056
      %5155 = vmatprep.subr.mxu0 0.0
      %5156 = vmatpush1.msra.mxu0 0.0
      %5157 = vmatprep.subr.mxu0 0.0
      %5158 = vmatpush1.msra.mxu0 0.0
      %5159 = vmatprep.subr.mxu0 0.0
      %5160 = vmatpush1.msra.mxu0 0.0
      %5161 = vmatprep.subr.mxu0 0.0
      %5162 = vmatpush1.msra.mxu0 0.0
      %5163 = vmatprep.subr.mxu0 0.0
      %5164 = vmatpush1.msra.mxu0 0.0
      %5165 = vmatprep.subr.mxu0 0.0
      %5166 = vmatpush1.msra.mxu0 0.0
      %5167 = vmatprep.subr.mxu0 0.0
      %5168 = vmatpush1.msra.mxu0 0.0
      %5169 = vmatprep.subr.mxu0 0.0
      %5170 = vmatpush1.msra.mxu0 0.0
      %5171 = vmatprep.subr.mxu0 0.0
      %5172 = vmatpush1.msra.mxu0 0.0
      %5173 = vmatprep.subr.mxu0 0.0
      %5174 = vmatpush1.msra.mxu0 0.0
      %5175 = vmatprep.subr.mxu0 0.0
      %5176 = vmatpush1.msra.mxu0 0.0
      %5177 = vmatprep.subr.mxu0 0.0
      %5178 = vmatpush1.msra.mxu0 0.0
      %5179 = vmatprep.subr.mxu0 0.0
      %5180 = vmatpush1.msra.mxu0 0.0
      %5181 = vmatprep.subr.mxu0 0.0
      %5182 = vmatpush1.msra.mxu0 0.0
      %5183 = vmatprep.subr.mxu0 0.0
      %5184 = vmatpush1.msra.mxu0 0.0
      %5185 = vmatprep.subr.mxu0 0.0
      %5186 = vmatpush1.msra.mxu0 0.0
      %5187 = vmatprep.subr.mxu0 0.0
      %5188 = vmatpush1.msra.mxu0 0.0
      %5189 = vmatprep.subr.mxu0 0.0
      %5190 = vmatpush1.msra.mxu0 0.0
      %5191 = vmatprep.subr.mxu0 0.0
      %5192 = vmatpush1.msra.mxu0 0.0
      %5193 = vmatprep.subr.mxu0 0.0
      %5194 = vmatpush1.msra.mxu0 0.0
      %5195 = vmatprep.subr.mxu0 0.0
      %5196 = vmatpush1.msra.mxu0 0.0
      %5197 = vmatprep.subr.mxu0 0.0
      %5198 = vmatpush1.msra.mxu0 0.0
      %5199 = vmatprep.subr.mxu0 0.0
      %5200 = vmatpush1.msra.mxu0 0.0
      %5201 = vmatprep.subr.mxu0 0.0
      %5202 = vmatpush1.msra.mxu0 0.0
      %5203 = vmatprep.subr.mxu0 0.0
      %5204 = vmatpush1.msra.mxu0 0.0
      %5205 = vmatprep.subr.mxu0 0.0
      %5206 = vmatpush1.msra.mxu0 0.0
      %5207 = vmatprep.subr.mxu0 0.0
      %5208 = vmatpush1.msra.mxu0 0.0
      %5209 = vmatprep.subr.mxu0 0.0
      %5210 = vmatpush1.msra.mxu0 0.0
      %5211 = vmatprep.subr.mxu0 0.0
      %5212 = vmatpush1.msra.mxu0 0.0
      %5213 = vmatprep.subr.mxu0 0.0
      %5214 = vmatpush1.msra.mxu0 0.0
      %5215 = vmatprep.subr.mxu0 0.0
      %5216 = vmatpush1.msra.mxu0 0.0
      %5217 = vmatprep.mubr.f32.mxu0 0.0
      %5218 = vmatmul.mubr.f32.gmra.mrb[0].mxu0 %v5058
      %v5219 = vpop.f32.mrb[0].mxu0
      %v5220 = vadd.f32 0.0, %v5219
      %v5221 = vpop.f32.mrb[0].mxu0
      %5222 = vmatprep.mubr.f32.mxu0 0.0
      %5223 = vmatmul.mubr.f32.gmra.mrb[0].mxu0 %v5061
      %v5224 = vpop.f32.mrb[0].mxu0
      %v5225 = vadd.f32 0.0, %v5224
      %v5226 = vpop.f32.mrb[0].mxu0
      %5227 = vmatprep.mubr.f32.mxu0 0.0
      %5228 = vmatmul.mubr.f32.gmra.mrb[0].mxu0 %v5064
      %v5229 = vpop.f32.mrb[0].mxu0
      %v5230 = vadd.f32 0.0, %v5229
      %v5231 = vpop.f32.mrb[0].mxu0
      %5232 = vmatprep.mubr.f32.mxu0 0.0
      %5233 = vmatmul.mubr.f32.gmra.mrb[0].mxu0 %v5067
      %v5234 = vpop.f32.mrb[0].mxu0
      %v5235 = vadd.f32 0.0, %v5234
      %v5236 = vpop.f32.mrb[0].mxu0
      %5237 = vmatprep.mubr.f32.mxu0 0.0
      %5238 = vmatmul.mubr.f32.gmra.mrb[0].mxu0 %v5070
      %v5239 = vpop.f32.mrb[0].mxu0
      %v5240 = vadd.f32 0.0, %v5239
      %v5241 = vpop.f32.mrb[0].mxu0
      %5242 = vmatprep.mubr.f32.mxu0 0.0
      %5243 = vmatmul.mubr.f32.gmra.mrb[0].mxu0 %v5073
      %v5244 = vpop.f32.mrb[0].mxu0
      %v5245 = vadd.f32 0.0, %v5244
      %v5246 = vpop.f32.mrb[0].mxu0
      %5247 = vmatprep.mubr.f32.mxu0 0.0
      %5248 = vmatmul.mubr.f32.gmra.mrb[0].mxu0 %v5076
      %v5249 = vpop.f32.mrb[0].mxu0
      %v5250 = vadd.f32 0.0, %v5249
      %v5251 = vpop.f32.mrb[0].mxu0
      %5252 = vmatprep.mubr.f32.mxu0 0.0
      %5253 = vmatmul.mubr.f32.gmra.mrb[0].mxu0 %v5079
      %v5254 = vpop.f32.mrb[0].mxu0
      %v5255 = vadd.f32 0.0, %v5254
      %v5256 = vpop.f32.mrb[0].mxu0
      %5257 = vmatprep.mubr.f32.mxu0 0.0
      %5258 = vmatmul.mubr.f32.gmra.mrb[0].mxu0 %v5082
      %v5259 = vpop.f32.mrb[0].mxu0
      %v5260 = vadd.f32 0.0, %v5259
      %v5261 = vpop.f32.mrb[0].mxu0
      %5262 = vmatprep.mubr.f32.mxu0 0.0
      %5263 = vmatmul.mubr.f32.gmra.mrb[0].mxu0 %v5085
      %v5264 = vpop.f32.mrb[0].mxu0
      %v5265 = vadd.f32 0.0, %v5264
      %v5266 = vpop.f32.mrb[0].mxu0
      %5267 = vmatprep.mubr.f32.mxu0 0.0
      %5268 = vmatmul.mubr.f32.gmra.mrb[0].mxu0 %v5088
      %v5269 = vpop.f32.mrb[0].mxu0
      %v5270 = vadd.f32 0.0, %v5269
      %v5271 = vpop.f32.mrb[0].mxu0
      %5272 = vmatprep.mubr.f32.mxu0 0.0
      %5273 = vmatmul.mubr.f32.gmra.mrb[0].mxu0 %v5091
      %v5274 = vpop.f32.mrb[0].mxu0
      %v5275 = vadd.f32 0.0, %v5274
      %v5276 = vpop.f32.mrb[0].mxu0
      %5277 = vmatprep.mubr.f32.mxu0 0.0
      %5278 = vmatmul.mubr.f32.gmra.mrb[0].mxu0 %v5094
      %v5279 = vpop.f32.mrb[0].mxu0
      %v5280 = vadd.f32 0.0, %v5279
      %v5281 = vpop.f32.mrb[0].mxu0
      %5282 = vmatprep.mubr.f32.mxu0 0.0
      %5283 = vmatmul.mubr.f32.gmra.mrb[0].mxu0 %v5097
      %v5284 = vpop.f32.mrb[0].mxu0
      %v5285 = vadd.f32 0.0, %v5284
      %v5286 = vpop.f32.mrb[0].mxu0
      %5287 = vmatprep.mubr.f32.mxu0 0.0
      %5288 = vmatmul.mubr.f32.gmra.mrb[0].mxu0 %v5100
      %v5289 = vpop.f32.mrb[0].mxu0
      %v5290 = vadd.f32 0.0, %v5289
      %v5291 = vpop.f32.mrb[0].mxu0
      %5292 = vmatprep.mubr.f32.mxu0 0.0
      %5293 = vmatmul.mubr.f32.gmra.mrb[0].mxu0 %v5103
      %v5294 = vpop.f32.mrb[0].mxu0
      %v5295 = vadd.f32 0.0, %v5294
      %v5296 = vpop.f32.mrb[0].mxu0
      %5297 = vmatprep.mubr.f32.mxu0 0.0
      %5298 = vmatmul.mubr.f32.gmra.mrb[0].mxu0 %v5106
      %v5299 = vpop.f32.mrb[0].mxu0
      %v5300 = vadd.f32 0.0, %v5299
      %v5301 = vpop.f32.mrb[0].mxu0
      %5302 = vmatprep.mubr.f32.mxu0 0.0
      %5303 = vmatmul.mubr.f32.gmra.mrb[0].mxu0 %v5109
      %v5304 = vpop.f32.mrb[0].mxu0
      %v5305 = vadd.f32 0.0, %v5304
      %v5306 = vpop.f32.mrb[0].mxu0
      %5307 = vmatprep.mubr.f32.mxu0 0.0
      %5308 = vmatmul.mubr.f32.gmra.mrb[0].mxu0 %v5112
      %v5309 = vpop.f32.mrb[0].mxu0
      %v5310 = vadd.f32 0.0, %v5309
      %v5311 = vpop.f32.mrb[0].mxu0
      %5312 = vmatprep.mubr.f32.mxu0 0.0
      %5313 = vmatmul.mubr.f32.gmra.mrb[0].mxu0 %v5115
      %v5314 = vpop.f32.mrb[0].mxu0
      %v5315 = vadd.f32 0.0, %v5314
      %v5316 = vpop.f32.mrb[0].mxu0
      %5317 = vmatprep.mubr.f32.mxu0 0.0
      %5318 = vmatmul.mubr.f32.gmra.mrb[0].mxu0 %v5118
      %v5319 = vpop.f32.mrb[0].mxu0
      %v5320 = vadd.f32 0.0, %v5319
      %v5321 = vpop.f32.mrb[0].mxu0
      %5322 = vmatprep.mubr.f32.mxu0 0.0
      %5323 = vmatmul.mubr.f32.gmra.mrb[0].mxu0 %v5121
      %v5324 = vpop.f32.mrb[0].mxu0
      %v5325 = vadd.f32 0.0, %v5324
      %v5326 = vpop.f32.mrb[0].mxu0
      %5327 = vmatprep.mubr.f32.mxu0 0.0
      %5328 = vmatmul.mubr.f32.gmra.mrb[0].mxu0 %v5124
      %v5329 = vpop.f32.mrb[0].mxu0
      %v5330 = vadd.f32 0.0, %v5329
      %v5331 = vpop.f32.mrb[0].mxu0
      %5332 = vmatprep.mubr.f32.mxu0 0.0
      %5333 = vmatmul.mubr.f32.gmra.mrb[0].mxu0 %v5127
      %v5334 = vpop.f32.mrb[0].mxu0
      %v5335 = vadd.f32 0.0, %v5334
      %v5336 = vpop.f32.mrb[0].mxu0
      %5337 = vmatprep.mubr.f32.mxu0 0.0
      %5338 = vmatmul.mubr.f32.gmra.mrb[0].mxu0 %v5130
      %v5339 = vpop.f32.mrb[0].mxu0
      %v5340 = vadd.f32 0.0, %v5339
      %v5341 = vpop.f32.mrb[0].mxu0
      %5342 = vmatprep.mubr.f32.mxu0 0.0
      %5343 = vmatmul.mubr.f32.gmra.mrb[0].mxu0 %v5133
      %v5344 = vpop.f32.mrb[0].mxu0
      %v5345 = vadd.f32 0.0, %v5344
      %v5346 = vpop.f32.mrb[0].mxu0
      %5347 = vmatprep.mubr.f32.mxu0 0.0
      %5348 = vmatmul.mubr.f32.gmra.mrb[0].mxu0 %v5136
      %v5349 = vpop.f32.mrb[0].mxu0
      %v5350 = vadd.f32 0.0, %v5349
      %v5351 = vpop.f32.mrb[0].mxu0
      %5352 = vmatprep.mubr.f32.mxu0 0.0
      %5353 = vmatmul.mubr.f32.gmra.mrb[0].mxu0 %v5139
      %v5354 = vpop.f32.mrb[0].mxu0
      %v5355 = vadd.f32 0.0, %v5354
      %v5356 = vpop.f32.mrb[0].mxu0
      %5357 = vmatprep.mubr.f32.mxu0 0.0
      %5358 = vmatmul.mubr.f32.gmra.mrb[0].mxu0 %v5142
      %v5359 = vpop.f32.mrb[0].mxu0
      %v5360 = vadd.f32 0.0, %v5359
      %v5361 = vpop.f32.mrb[0].mxu0
      %5362 = vmatprep.mubr.f32.mxu0 0.0
      %5363 = vmatmul.mubr.f32.gmra.mrb[0].mxu0 %v5145
      %v5364 = vpop.f32.mrb[0].mxu0
      %v5365 = vadd.f32 0.0, %v5364
      %v5366 = vpop.f32.mrb[0].mxu0
      %5367 = vmatprep.mubr.f32.mxu0 0.0
      %5368 = vmatmul.mubr.f32.gmra.mrb[0].mxu0 %v5148
      %v5369 = vpop.f32.mrb[0].mxu0
      %v5370 = vadd.f32 0.0, %v5369
      %v5371 = vpop.f32.mrb[0].mxu0
      %5372 = vmatprep.mubr.f32.mxu0 0.0
      %5373 = vmatmul.mubr.f32.gmra.mrb[0].mxu0 %v5151
      %v5374 = vpop.f32.mrb[0].mxu0
      %v5375 = vadd.f32 0.0, %v5374
      %v5376 = vpop.f32.mrb[0].mxu0
      %5377 = vdwg.mxu0
      %v5378 = vadd.f32 %v4991, %v5220
      %v5379 = vadd.f32 %v4992, %v5225
      %v5380 = vadd.f32 %v4993, %v5230
      %v5381 = vadd.f32 %v4994, %v5235
      %v5382 = vadd.f32 %v4995, %v5240
      %v5383 = vadd.f32 %v4996, %v5245
      %v5384 = vadd.f32 %v4997, %v5250
      %v5385 = vadd.f32 %v4998, %v5255
      %v5386 = vadd.f32 %v4999, %v5260
      %v5387 = vadd.f32 %v5000, %v5265
      %v5388 = vadd.f32 %v5001, %v5270
      %v5389 = vadd.f32 %v5002, %v5275
      %v5390 = vadd.f32 %v5003, %v5280
      %v5391 = vadd.f32 %v5004, %v5285
      %v5392 = vadd.f32 %v5005, %v5290
      %v5393 = vadd.f32 %v5006, %v5295
      %v5394 = vadd.f32 %v5007, %v5300
      %v5395 = vadd.f32 %v5008, %v5305
      %v5396 = vadd.f32 %v5009, %v5310
      %v5397 = vadd.f32 %v5010, %v5315
      %v5398 = vadd.f32 %v5011, %v5320
      %v5399 = vadd.f32 %v5012, %v5325
      %v5400 = vadd.f32 %v5013, %v5330
      %v5401 = vadd.f32 %v5014, %v5335
      %v5402 = vadd.f32 %v5015, %v5340
      %v5403 = vadd.f32 %v5016, %v5345
      %v5404 = vadd.f32 %v5017, %v5350
      %v5405 = vadd.f32 %v5018, %v5355
      %v5406 = vadd.f32 %v5019, %v5360
      %v5407 = vadd.f32 %v5020, %v5365
      %v5408 = vadd.f32 %v5021, %v5370
      %v5409 = vadd.f32 %v5022, %v5375
      %v5410 = vld [vmem:[%s3894 + $0x1] sm:$0xff]
      %v5411 = vld [vmem:[%s3894 + $0x9] sm:$0xff]
      %v5412 = vld [vmem:[%s3894 + $0x19] sm:$0xff]
      %v5413 = vld [vmem:[%s3894 + $0x21] sm:$0xff]
      %v5414 = vld [vmem:[%s3894 + $0x31] sm:$0xff]
      %v5415 = vld [vmem:[%s3894 + $0x39] sm:$0xff]
      %v5416 = vld [vmem:[%s3894 + $0x49] sm:$0xff]
      %v5417 = vld [vmem:[%s3894 + $0x51] sm:$0xff]
      %v5418 = vld [vmem:[%s3894 + $0x61] sm:$0xff]
      %v5419 = vld [vmem:[%s3894 + $0x69] sm:$0xff]
      %v5420 = vld [vmem:[%s3894 + $0x79] sm:$0xff]
      %v5421 = vld [vmem:[%s3894 + $0x81] sm:$0xff]
      %v5422 = vld [vmem:[%s3894 + $0x91] sm:$0xff]
      %v5423 = vld [vmem:[%s3894 + $0x99] sm:$0xff]
      %v5424 = vld [vmem:[%s3894 + $0xa9] sm:$0xff]
      %v5425 = vld [vmem:[%s3894 + $0xb1] sm:$0xff]
      %v5426 = vld [vmem:[%s3894 + $0xc1] sm:$0xff]
      %v5427 = vld [vmem:[%s3894 + $0xc9] sm:$0xff]
      %v5428 = vld [vmem:[%s3894 + $0xd9] sm:$0xff]
      %v5429 = vld [vmem:[%s3894 + $0xe1] sm:$0xff]
      %v5430 = vld [vmem:[%s3894 + $0xf1] sm:$0xff]
      %v5431 = vld [vmem:[%s3894 + $0xf9] sm:$0xff]
      %v5432 = vld [vmem:[%s3894 + $0x109] sm:$0xff]
      %v5433 = vld [vmem:[%s3894 + $0x111] sm:$0xff]
      %v5434 = vld [vmem:[%s3894 + $0x121] sm:$0xff]
      %v5435 = vld [vmem:[%s3894 + $0x129] sm:$0xff]
      %v5436 = vld [vmem:[%s3894 + $0x139] sm:$0xff]
      %v5437 = vld [vmem:[%s3894 + $0x141] sm:$0xff]
      %v5438 = vld [vmem:[%s3894 + $0x151] sm:$0xff]
      %v5439 = vld [vmem:[%s3894 + $0x159] sm:$0xff]
      %v5440 = vld [vmem:[%s3894 + $0x169] sm:$0xff]
      %v5441 = vld [vmem:[%s3894 + $0x171] sm:$0xff]
      %s5442 = scalar_lea.vmem %s4, 32
      %v5443 = vld [vmem:[%s5442] sm:$0xff]
      %v5445 = vsel %vm3838, %v5410, 0
      %v5448 = vsel %vm3838, %v5411, 0
      %v5451 = vsel %vm3838, %v5412, 0
      %v5454 = vsel %vm3838, %v5413, 0
      %v5457 = vsel %vm3838, %v5414, 0
      %v5460 = vsel %vm3838, %v5415, 0
      %v5463 = vsel %vm3838, %v5416, 0
      %v5466 = vsel %vm3838, %v5417, 0
      %v5469 = vsel %vm3838, %v5418, 0
      %v5472 = vsel %vm3838, %v5419, 0
      %v5475 = vsel %vm3838, %v5420, 0
      %v5478 = vsel %vm3838, %v5421, 0
      %v5481 = vsel %vm3838, %v5422, 0
      %v5484 = vsel %vm3838, %v5423, 0
      %v5487 = vsel %vm3838, %v5424, 0
      %v5490 = vsel %vm3838, %v5425, 0
      %v5493 = vsel %vm3838, %v5426, 0
      %v5496 = vsel %vm3838, %v5427, 0
      %v5499 = vsel %vm3838, %v5428, 0
      %v5502 = vsel %vm3838, %v5429, 0
      %v5505 = vsel %vm3838, %v5430, 0
      %v5508 = vsel %vm3838, %v5431, 0
      %v5511 = vsel %vm3838, %v5432, 0
      %v5514 = vsel %vm3838, %v5433, 0
      %v5517 = vsel %vm3838, %v5434, 0
      %v5520 = vsel %vm3838, %v5435, 0
      %v5523 = vsel %vm3838, %v5436, 0
      %v5526 = vsel %vm3838, %v5437, 0
      %v5529 = vsel %vm3838, %v5438, 0
      %v5532 = vsel %vm3838, %v5439, 0
      %v5535 = vsel %vm3838, %v5440, 0
      %v5538 = vsel %vm3838, %v5441, 0
      %5540 = vmatprep.subr.mxu0 0.0
      %5541 = vmatpush1.msra.mxu0 %v5443
      %5542 = vmatprep.subr.mxu0 0.0
      %5543 = vmatpush1.msra.mxu0 0.0
      %5544 = vmatprep.subr.mxu0 0.0
      %5545 = vmatpush1.msra.mxu0 0.0
      %5546 = vmatprep.subr.mxu0 0.0
      %5547 = vmatpush1.msra.mxu0 0.0
      %5548 = vmatprep.subr.mxu0 0.0
      %5549 = vmatpush1.msra.mxu0 0.0
      %5550 = vmatprep.subr.mxu0 0.0
      %5551 = vmatpush1.msra.mxu0 0.0
      %5552 = vmatprep.subr.mxu0 0.0
      %5553 = vmatpush1.msra.mxu0 0.0
      %5554 = vmatprep.subr.mxu0 0.0
      %5555 = vmatpush1.msra.mxu0 0.0
      %5556 = vmatprep.subr.mxu0 0.0
      %5557 = vmatpush1.msra.mxu0 0.0
      %5558 = vmatprep.subr.mxu0 0.0
      %5559 = vmatpush1.msra.mxu0 0.0
      %5560 = vmatprep.subr.mxu0 0.0
      %5561 = vmatpush1.msra.mxu0 0.0
      %5562 = vmatprep.subr.mxu0 0.0
      %5563 = vmatpush1.msra.mxu0 0.0
      %5564 = vmatprep.subr.mxu0 0.0
      %5565 = vmatpush1.msra.mxu0 0.0
      %5566 = vmatprep.subr.mxu0 0.0
      %5567 = vmatpush1.msra.mxu0 0.0
      %5568 = vmatprep.subr.mxu0 0.0
      %5569 = vmatpush1.msra.mxu0 0.0
      %5570 = vmatprep.subr.mxu0 0.0
      %5571 = vmatpush1.msra.mxu0 0.0
      %5572 = vmatprep.subr.mxu0 0.0
      %5573 = vmatpush1.msra.mxu0 0.0
      %5574 = vmatprep.subr.mxu0 0.0
      %5575 = vmatpush1.msra.mxu0 0.0
      %5576 = vmatprep.subr.mxu0 0.0
      %5577 = vmatpush1.msra.mxu0 0.0
      %5578 = vmatprep.subr.mxu0 0.0
      %5579 = vmatpush1.msra.mxu0 0.0
      %5580 = vmatprep.subr.mxu0 0.0
      %5581 = vmatpush1.msra.mxu0 0.0
      %5582 = vmatprep.subr.mxu0 0.0
      %5583 = vmatpush1.msra.mxu0 0.0
      %5584 = vmatprep.subr.mxu0 0.0
      %5585 = vmatpush1.msra.mxu0 0.0
      %5586 = vmatprep.subr.mxu0 0.0
      %5587 = vmatpush1.msra.mxu0 0.0
      %5588 = vmatprep.subr.mxu0 0.0
      %5589 = vmatpush1.msra.mxu0 0.0
      %5590 = vmatprep.subr.mxu0 0.0
      %5591 = vmatpush1.msra.mxu0 0.0
      %5592 = vmatprep.subr.mxu0 0.0
      %5593 = vmatpush1.msra.mxu0 0.0
      %5594 = vmatprep.subr.mxu0 0.0
      %5595 = vmatpush1.msra.mxu0 0.0
      %5596 = vmatprep.subr.mxu0 0.0
      %5597 = vmatpush1.msra.mxu0 0.0
      %5598 = vmatprep.subr.mxu0 0.0
      %5599 = vmatpush1.msra.mxu0 0.0
      %5600 = vmatprep.subr.mxu0 0.0
      %5601 = vmatpush1.msra.mxu0 0.0
      %5602 = vmatprep.subr.mxu0 0.0
      %5603 = vmatpush1.msra.mxu0 0.0
      %5604 = vmatprep.mubr.f32.mxu0 0.0
      %5605 = vmatmul.mubr.f32.gmra.mrb[0].mxu0 %v5445
      %v5606 = vpop.f32.mrb[0].mxu0
      %v5607 = vadd.f32 0.0, %v5606
      %v5608 = vpop.f32.mrb[0].mxu0
      %5609 = vmatprep.mubr.f32.mxu0 0.0
      %5610 = vmatmul.mubr.f32.gmra.mrb[0].mxu0 %v5448
      %v5611 = vpop.f32.mrb[0].mxu0
      %v5612 = vadd.f32 0.0, %v5611
      %v5613 = vpop.f32.mrb[0].mxu0
      %5614 = vmatprep.mubr.f32.mxu0 0.0
      %5615 = vmatmul.mubr.f32.gmra.mrb[0].mxu0 %v5451
      %v5616 = vpop.f32.mrb[0].mxu0
      %v5617 = vadd.f32 0.0, %v5616
      %v5618 = vpop.f32.mrb[0].mxu0
      %5619 = vmatprep.mubr.f32.mxu0 0.0
      %5620 = vmatmul.mubr.f32.gmra.mrb[0].mxu0 %v5454
      %v5621 = vpop.f32.mrb[0].mxu0
      %v5622 = vadd.f32 0.0, %v5621
      %v5623 = vpop.f32.mrb[0].mxu0
      %5624 = vmatprep.mubr.f32.mxu0 0.0
      %5625 = vmatmul.mubr.f32.gmra.mrb[0].mxu0 %v5457
      %v5626 = vpop.f32.mrb[0].mxu0
      %v5627 = vadd.f32 0.0, %v5626
      %v5628 = vpop.f32.mrb[0].mxu0
      %5629 = vmatprep.mubr.f32.mxu0 0.0
      %5630 = vmatmul.mubr.f32.gmra.mrb[0].mxu0 %v5460
      %v5631 = vpop.f32.mrb[0].mxu0
      %v5632 = vadd.f32 0.0, %v5631
      %v5633 = vpop.f32.mrb[0].mxu0
      %5634 = vmatprep.mubr.f32.mxu0 0.0
      %5635 = vmatmul.mubr.f32.gmra.mrb[0].mxu0 %v5463
      %v5636 = vpop.f32.mrb[0].mxu0
      %v5637 = vadd.f32 0.0, %v5636
      %v5638 = vpop.f32.mrb[0].mxu0
      %5639 = vmatprep.mubr.f32.mxu0 0.0
      %5640 = vmatmul.mubr.f32.gmra.mrb[0].mxu0 %v5466
      %v5641 = vpop.f32.mrb[0].mxu0
      %v5642 = vadd.f32 0.0, %v5641
      %v5643 = vpop.f32.mrb[0].mxu0
      %5644 = vmatprep.mubr.f32.mxu0 0.0
      %5645 = vmatmul.mubr.f32.gmra.mrb[0].mxu0 %v5469
      %v5646 = vpop.f32.mrb[0].mxu0
      %v5647 = vadd.f32 0.0, %v5646
      %v5648 = vpop.f32.mrb[0].mxu0
      %5649 = vmatprep.mubr.f32.mxu0 0.0
      %5650 = vmatmul.mubr.f32.gmra.mrb[0].mxu0 %v5472
      %v5651 = vpop.f32.mrb[0].mxu0
      %v5652 = vadd.f32 0.0, %v5651
      %v5653 = vpop.f32.mrb[0].mxu0
      %5654 = vmatprep.mubr.f32.mxu0 0.0
      %5655 = vmatmul.mubr.f32.gmra.mrb[0].mxu0 %v5475
      %v5656 = vpop.f32.mrb[0].mxu0
      %v5657 = vadd.f32 0.0, %v5656
      %v5658 = vpop.f32.mrb[0].mxu0
      %5659 = vmatprep.mubr.f32.mxu0 0.0
      %5660 = vmatmul.mubr.f32.gmra.mrb[0].mxu0 %v5478
      %v5661 = vpop.f32.mrb[0].mxu0
      %v5662 = vadd.f32 0.0, %v5661
      %v5663 = vpop.f32.mrb[0].mxu0
      %5664 = vmatprep.mubr.f32.mxu0 0.0
      %5665 = vmatmul.mubr.f32.gmra.mrb[0].mxu0 %v5481
      %v5666 = vpop.f32.mrb[0].mxu0
      %v5667 = vadd.f32 0.0, %v5666
      %v5668 = vpop.f32.mrb[0].mxu0
      %5669 = vmatprep.mubr.f32.mxu0 0.0
      %5670 = vmatmul.mubr.f32.gmra.mrb[0].mxu0 %v5484
      %v5671 = vpop.f32.mrb[0].mxu0
      %v5672 = vadd.f32 0.0, %v5671
      %v5673 = vpop.f32.mrb[0].mxu0
      %5674 = vmatprep.mubr.f32.mxu0 0.0
      %5675 = vmatmul.mubr.f32.gmra.mrb[0].mxu0 %v5487
      %v5676 = vpop.f32.mrb[0].mxu0
      %v5677 = vadd.f32 0.0, %v5676
      %v5678 = vpop.f32.mrb[0].mxu0
      %5679 = vmatprep.mubr.f32.mxu0 0.0
      %5680 = vmatmul.mubr.f32.gmra.mrb[0].mxu0 %v5490
      %v5681 = vpop.f32.mrb[0].mxu0
      %v5682 = vadd.f32 0.0, %v5681
      %v5683 = vpop.f32.mrb[0].mxu0
      %5684 = vmatprep.mubr.f32.mxu0 0.0
      %5685 = vmatmul.mubr.f32.gmra.mrb[0].mxu0 %v5493
      %v5686 = vpop.f32.mrb[0].mxu0
      %v5687 = vadd.f32 0.0, %v5686
      %v5688 = vpop.f32.mrb[0].mxu0
      %5689 = vmatprep.mubr.f32.mxu0 0.0
      %5690 = vmatmul.mubr.f32.gmra.mrb[0].mxu0 %v5496
      %v5691 = vpop.f32.mrb[0].mxu0
      %v5692 = vadd.f32 0.0, %v5691
      %v5693 = vpop.f32.mrb[0].mxu0
      %5694 = vmatprep.mubr.f32.mxu0 0.0
      %5695 = vmatmul.mubr.f32.gmra.mrb[0].mxu0 %v5499
      %v5696 = vpop.f32.mrb[0].mxu0
      %v5697 = vadd.f32 0.0, %v5696
      %v5698 = vpop.f32.mrb[0].mxu0
      %5699 = vmatprep.mubr.f32.mxu0 0.0
      %5700 = vmatmul.mubr.f32.gmra.mrb[0].mxu0 %v5502
      %v5701 = vpop.f32.mrb[0].mxu0
      %v5702 = vadd.f32 0.0, %v5701
      %v5703 = vpop.f32.mrb[0].mxu0
      %5704 = vmatprep.mubr.f32.mxu0 0.0
      %5705 = vmatmul.mubr.f32.gmra.mrb[0].mxu0 %v5505
      %v5706 = vpop.f32.mrb[0].mxu0
      %v5707 = vadd.f32 0.0, %v5706
      %v5708 = vpop.f32.mrb[0].mxu0
      %5709 = vmatprep.mubr.f32.mxu0 0.0
      %5710 = vmatmul.mubr.f32.gmra.mrb[0].mxu0 %v5508
      %v5711 = vpop.f32.mrb[0].mxu0
      %v5712 = vadd.f32 0.0, %v5711
      %v5713 = vpop.f32.mrb[0].mxu0
      %5714 = vmatprep.mubr.f32.mxu0 0.0
      %5715 = vmatmul.mubr.f32.gmra.mrb[0].mxu0 %v5511
      %v5716 = vpop.f32.mrb[0].mxu0
      %v5717 = vadd.f32 0.0, %v5716
      %v5718 = vpop.f32.mrb[0].mxu0
      %5719 = vmatprep.mubr.f32.mxu0 0.0
      %5720 = vmatmul.mubr.f32.gmra.mrb[0].mxu0 %v5514
      %v5721 = vpop.f32.mrb[0].mxu0
      %v5722 = vadd.f32 0.0, %v5721
      %v5723 = vpop.f32.mrb[0].mxu0
      %5724 = vmatprep.mubr.f32.mxu0 0.0
      %5725 = vmatmul.mubr.f32.gmra.mrb[0].mxu0 %v5517
      %v5726 = vpop.f32.mrb[0].mxu0
      %v5727 = vadd.f32 0.0, %v5726
      %v5728 = vpop.f32.mrb[0].mxu0
      %5729 = vmatprep.mubr.f32.mxu0 0.0
      %5730 = vmatmul.mubr.f32.gmra.mrb[0].mxu0 %v5520
      %v5731 = vpop.f32.mrb[0].mxu0
      %v5732 = vadd.f32 0.0, %v5731
      %v5733 = vpop.f32.mrb[0].mxu0
      %5734 = vmatprep.mubr.f32.mxu0 0.0
      %5735 = vmatmul.mubr.f32.gmra.mrb[0].mxu0 %v5523
      %v5736 = vpop.f32.mrb[0].mxu0
      %v5737 = vadd.f32 0.0, %v5736
      %v5738 = vpop.f32.mrb[0].mxu0
      %5739 = vmatprep.mubr.f32.mxu0 0.0
      %5740 = vmatmul.mubr.f32.gmra.mrb[0].mxu0 %v5526
      %v5741 = vpop.f32.mrb[0].mxu0
      %v5742 = vadd.f32 0.0, %v5741
      %v5743 = vpop.f32.mrb[0].mxu0
      %5744 = vmatprep.mubr.f32.mxu0 0.0
      %5745 = vmatmul.mubr.f32.gmra.mrb[0].mxu0 %v5529
      %v5746 = vpop.f32.mrb[0].mxu0
      %v5747 = vadd.f32 0.0, %v5746
      %v5748 = vpop.f32.mrb[0].mxu0
      %5749 = vmatprep.mubr.f32.mxu0 0.0
      %5750 = vmatmul.mubr.f32.gmra.mrb[0].mxu0 %v5532
      %v5751 = vpop.f32.mrb[0].mxu0
      %v5752 = vadd.f32 0.0, %v5751
      %v5753 = vpop.f32.mrb[0].mxu0
      %5754 = vmatprep.mubr.f32.mxu0 0.0
      %5755 = vmatmul.mubr.f32.gmra.mrb[0].mxu0 %v5535
      %v5756 = vpop.f32.mrb[0].mxu0
      %v5757 = vadd.f32 0.0, %v5756
      %v5758 = vpop.f32.mrb[0].mxu0
      %5759 = vmatprep.mubr.f32.mxu0 0.0
      %5760 = vmatmul.mubr.f32.gmra.mrb[0].mxu0 %v5538
      %v5761 = vpop.f32.mrb[0].mxu0
      %v5762 = vadd.f32 0.0, %v5761
      %v5763 = vpop.f32.mrb[0].mxu0
      %5764 = vdwg.mxu0
      %v5765 = vadd.f32 %v5378, %v5607
      %v5766 = vadd.f32 %v5379, %v5612
      %v5767 = vadd.f32 %v5380, %v5617
      %v5768 = vadd.f32 %v5381, %v5622
      %v5769 = vadd.f32 %v5382, %v5627
      %v5770 = vadd.f32 %v5383, %v5632
      %v5771 = vadd.f32 %v5384, %v5637
      %v5772 = vadd.f32 %v5385, %v5642
      %v5773 = vadd.f32 %v5386, %v5647
      %v5774 = vadd.f32 %v5387, %v5652
      %v5775 = vadd.f32 %v5388, %v5657
      %v5776 = vadd.f32 %v5389, %v5662
      %v5777 = vadd.f32 %v5390, %v5667
      %v5778 = vadd.f32 %v5391, %v5672
      %v5779 = vadd.f32 %v5392, %v5677
      %v5780 = vadd.f32 %v5393, %v5682
      %v5781 = vadd.f32 %v5394, %v5687
      %v5782 = vadd.f32 %v5395, %v5692
      %v5783 = vadd.f32 %v5396, %v5697
      %v5784 = vadd.f32 %v5397, %v5702
      %v5785 = vadd.f32 %v5398, %v5707
      %v5786 = vadd.f32 %v5399, %v5712
      %v5787 = vadd.f32 %v5400, %v5717
      %v5788 = vadd.f32 %v5401, %v5722
      %v5789 = vadd.f32 %v5402, %v5727
      %v5790 = vadd.f32 %v5403, %v5732
      %v5791 = vadd.f32 %v5404, %v5737
      %v5792 = vadd.f32 %v5405, %v5742
      %v5793 = vadd.f32 %v5406, %v5747
      %v5794 = vadd.f32 %v5407, %v5752
      %v5795 = vadd.f32 %v5408, %v5757
      %v5796 = vadd.f32 %v5409, %v5762
      %v5797 = vld [vmem:[%s3894 + $0x2] sm:$0xff]
      %v5798 = vld [vmem:[%s3894 + $0xa] sm:$0xff]
      %v5799 = vld [vmem:[%s3894 + $0x1a] sm:$0xff]
      %v5800 = vld [vmem:[%s3894 + $0x22] sm:$0xff]
      %v5801 = vld [vmem:[%s3894 + $0x32] sm:$0xff]
      %v5802 = vld [vmem:[%s3894 + $0x3a] sm:$0xff]
      %v5803 = vld [vmem:[%s3894 + $0x4a] sm:$0xff]
      %v5804 = vld [vmem:[%s3894 + $0x52] sm:$0xff]
      %v5805 = vld [vmem:[%s3894 + $0x62] sm:$0xff]
      %v5806 = vld [vmem:[%s3894 + $0x6a] sm:$0xff]
      %v5807 = vld [vmem:[%s3894 + $0x7a] sm:$0xff]
      %v5808 = vld [vmem:[%s3894 + $0x82] sm:$0xff]
      %v5809 = vld [vmem:[%s3894 + $0x92] sm:$0xff]
      %v5810 = vld [vmem:[%s3894 + $0x9a] sm:$0xff]
      %v5811 = vld [vmem:[%s3894 + $0xaa] sm:$0xff]
      %v5812 = vld [vmem:[%s3894 + $0xb2] sm:$0xff]
      %v5813 = vld [vmem:[%s3894 + $0xc2] sm:$0xff]
      %v5814 = vld [vmem:[%s3894 + $0xca] sm:$0xff]
      %v5815 = vld [vmem:[%s3894 + $0xda] sm:$0xff]
      %v5816 = vld [vmem:[%s3894 + $0xe2] sm:$0xff]
      %v5817 = vld [vmem:[%s3894 + $0xf2] sm:$0xff]
      %v5818 = vld [vmem:[%s3894 + $0xfa] sm:$0xff]
      %v5819 = vld [vmem:[%s3894 + $0x10a] sm:$0xff]
      %v5820 = vld [vmem:[%s3894 + $0x112] sm:$0xff]
      %v5821 = vld [vmem:[%s3894 + $0x122] sm:$0xff]
      %v5822 = vld [vmem:[%s3894 + $0x12a] sm:$0xff]
      %v5823 = vld [vmem:[%s3894 + $0x13a] sm:$0xff]
      %v5824 = vld [vmem:[%s3894 + $0x142] sm:$0xff]
      %v5825 = vld [vmem:[%s3894 + $0x152] sm:$0xff]
      %v5826 = vld [vmem:[%s3894 + $0x15a] sm:$0xff]
      %v5827 = vld [vmem:[%s3894 + $0x16a] sm:$0xff]
      %v5828 = vld [vmem:[%s3894 + $0x172] sm:$0xff]
      %s5829 = scalar_lea.vmem %s4, 40
      %v5830 = vld [vmem:[%s5829] sm:$0xff]
      %v5832 = vsel %vm3838, %v5797, 0
      %v5835 = vsel %vm3838, %v5798, 0
      %v5838 = vsel %vm3838, %v5799, 0
      %v5841 = vsel %vm3838, %v5800, 0
      %v5844 = vsel %vm3838, %v5801, 0
      %v5847 = vsel %vm3838, %v5802, 0
      %v5850 = vsel %vm3838, %v5803, 0
      %v5853 = vsel %vm3838, %v5804, 0
      %v5856 = vsel %vm3838, %v5805, 0
      %v5859 = vsel %vm3838, %v5806, 0
      %v5862 = vsel %vm3838, %v5807, 0
      %v5865 = vsel %vm3838, %v5808, 0
      %v5868 = vsel %vm3838, %v5809, 0
      %v5871 = vsel %vm3838, %v5810, 0
      %v5874 = vsel %vm3838, %v5811, 0
      %v5877 = vsel %vm3838, %v5812, 0
      %v5880 = vsel %vm3838, %v5813, 0
      %v5883 = vsel %vm3838, %v5814, 0
      %v5886 = vsel %vm3838, %v5815, 0
      %v5889 = vsel %vm3838, %v5816, 0
      %v5892 = vsel %vm3838, %v5817, 0
      %v5895 = vsel %vm3838, %v5818, 0
      %v5898 = vsel %vm3838, %v5819, 0
      %v5901 = vsel %vm3838, %v5820, 0
      %v5904 = vsel %vm3838, %v5821, 0
      %v5907 = vsel %vm3838, %v5822, 0
      %v5910 = vsel %vm3838, %v5823, 0
      %v5913 = vsel %vm3838, %v5824, 0
      %v5916 = vsel %vm3838, %v5825, 0
      %v5919 = vsel %vm3838, %v5826, 0
      %v5922 = vsel %vm3838, %v5827, 0
      %v5925 = vsel %vm3838, %v5828, 0
      %5927 = vmatprep.subr.mxu0 0.0
      %5928 = vmatpush1.msra.mxu0 %v5830
      %5929 = vmatprep.subr.mxu0 0.0
      %5930 = vmatpush1.msra.mxu0 0.0
      %5931 = vmatprep.subr.mxu0 0.0
      %5932 = vmatpush1.msra.mxu0 0.0
      %5933 = vmatprep.subr.mxu0 0.0
      %5934 = vmatpush1.msra.mxu0 0.0
      %5935 = vmatprep.subr.mxu0 0.0
      %5936 = vmatpush1.msra.mxu0 0.0
      %5937 = vmatprep.subr.mxu0 0.0
      %5938 = vmatpush1.msra.mxu0 0.0
      %5939 = vmatprep.subr.mxu0 0.0
      %5940 = vmatpush1.msra.mxu0 0.0
      %5941 = vmatprep.subr.mxu0 0.0
      %5942 = vmatpush1.msra.mxu0 0.0
      %5943 = vmatprep.subr.mxu0 0.0
      %5944 = vmatpush1.msra.mxu0 0.0
      %5945 = vmatprep.subr.mxu0 0.0
      %5946 = vmatpush1.msra.mxu0 0.0
      %5947 = vmatprep.subr.mxu0 0.0
      %5948 = vmatpush1.msra.mxu0 0.0
      %5949 = vmatprep.subr.mxu0 0.0
      %5950 = vmatpush1.msra.mxu0 0.0
      %5951 = vmatprep.subr.mxu0 0.0
      %5952 = vmatpush1.msra.mxu0 0.0
      %5953 = vmatprep.subr.mxu0 0.0
      %5954 = vmatpush1.msra.mxu0 0.0
      %5955 = vmatprep.subr.mxu0 0.0
      %5956 = vmatpush1.msra.mxu0 0.0
      %5957 = vmatprep.subr.mxu0 0.0
      %5958 = vmatpush1.msra.mxu0 0.0
      %5959 = vmatprep.subr.mxu0 0.0
      %5960 = vmatpush1.msra.mxu0 0.0
      %5961 = vmatprep.subr.mxu0 0.0
      %5962 = vmatpush1.msra.mxu0 0.0
      %5963 = vmatprep.subr.mxu0 0.0
      %5964 = vmatpush1.msra.mxu0 0.0
      %5965 = vmatprep.subr.mxu0 0.0
      %5966 = vmatpush1.msra.mxu0 0.0
      %5967 = vmatprep.subr.mxu0 0.0
      %5968 = vmatpush1.msra.mxu0 0.0
      %5969 = vmatprep.subr.mxu0 0.0
      %5970 = vmatpush1.msra.mxu0 0.0
      %5971 = vmatprep.subr.mxu0 0.0
      %5972 = vmatpush1.msra.mxu0 0.0
      %5973 = vmatprep.subr.mxu0 0.0
      %5974 = vmatpush1.msra.mxu0 0.0
      %5975 = vmatprep.subr.mxu0 0.0
      %5976 = vmatpush1.msra.mxu0 0.0
      %5977 = vmatprep.subr.mxu0 0.0
      %5978 = vmatpush1.msra.mxu0 0.0
      %5979 = vmatprep.subr.mxu0 0.0
      %5980 = vmatpush1.msra.mxu0 0.0
      %5981 = vmatprep.subr.mxu0 0.0
      %5982 = vmatpush1.msra.mxu0 0.0
      %5983 = vmatprep.subr.mxu0 0.0
      %5984 = vmatpush1.msra.mxu0 0.0
      %5985 = vmatprep.subr.mxu0 0.0
      %5986 = vmatpush1.msra.mxu0 0.0
      %5987 = vmatprep.subr.mxu0 0.0
      %5988 = vmatpush1.msra.mxu0 0.0
      %5989 = vmatprep.subr.mxu0 0.0
      %5990 = vmatpush1.msra.mxu0 0.0
      %5991 = vmatprep.mubr.f32.mxu0 0.0
      %5992 = vmatmul.mubr.f32.gmra.mrb[0].mxu0 %v5832
      %v5993 = vpop.f32.mrb[0].mxu0
      %v5994 = vadd.f32 0.0, %v5993
      %v5995 = vpop.f32.mrb[0].mxu0
      %5996 = vmatprep.mubr.f32.mxu0 0.0
      %5997 = vmatmul.mubr.f32.gmra.mrb[0].mxu0 %v5835
      %v5998 = vpop.f32.mrb[0].mxu0
      %v5999 = vadd.f32 0.0, %v5998
      %v6000 = vpop.f32.mrb[0].mxu0
      %6001 = vmatprep.mubr.f32.mxu0 0.0
      %6002 = vmatmul.mubr.f32.gmra.mrb[0].mxu0 %v5838
      %v6003 = vpop.f32.mrb[0].mxu0
      %v6004 = vadd.f32 0.0, %v6003
      %v6005 = vpop.f32.mrb[0].mxu0
      %6006 = vmatprep.mubr.f32.mxu0 0.0
      %6007 = vmatmul.mubr.f32.gmra.mrb[0].mxu0 %v5841
      %v6008 = vpop.f32.mrb[0].mxu0
      %v6009 = vadd.f32 0.0, %v6008
      %v6010 = vpop.f32.mrb[0].mxu0
      %6011 = vmatprep.mubr.f32.mxu0 0.0
      %6012 = vmatmul.mubr.f32.gmra.mrb[0].mxu0 %v5844
      %v6013 = vpop.f32.mrb[0].mxu0
      %v6014 = vadd.f32 0.0, %v6013
      %v6015 = vpop.f32.mrb[0].mxu0
      %6016 = vmatprep.mubr.f32.mxu0 0.0
      %6017 = vmatmul.mubr.f32.gmra.mrb[0].mxu0 %v5847
      %v6018 = vpop.f32.mrb[0].mxu0
      %v6019 = vadd.f32 0.0, %v6018
      %v6020 = vpop.f32.mrb[0].mxu0
      %6021 = vmatprep.mubr.f32.mxu0 0.0
      %6022 = vmatmul.mubr.f32.gmra.mrb[0].mxu0 %v5850
      %v6023 = vpop.f32.mrb[0].mxu0
      %v6024 = vadd.f32 0.0, %v6023
      %v6025 = vpop.f32.mrb[0].mxu0
      %6026 = vmatprep.mubr.f32.mxu0 0.0
      %6027 = vmatmul.mubr.f32.gmra.mrb[0].mxu0 %v5853
      %v6028 = vpop.f32.mrb[0].mxu0
      %v6029 = vadd.f32 0.0, %v6028
      %v6030 = vpop.f32.mrb[0].mxu0
      %6031 = vmatprep.mubr.f32.mxu0 0.0
      %6032 = vmatmul.mubr.f32.gmra.mrb[0].mxu0 %v5856
      %v6033 = vpop.f32.mrb[0].mxu0
      %v6034 = vadd.f32 0.0, %v6033
      %v6035 = vpop.f32.mrb[0].mxu0
      %6036 = vmatprep.mubr.f32.mxu0 0.0
      %6037 = vmatmul.mubr.f32.gmra.mrb[0].mxu0 %v5859
      %v6038 = vpop.f32.mrb[0].mxu0
      %v6039 = vadd.f32 0.0, %v6038
      %v6040 = vpop.f32.mrb[0].mxu0
      %6041 = vmatprep.mubr.f32.mxu0 0.0
      %6042 = vmatmul.mubr.f32.gmra.mrb[0].mxu0 %v5862
      %v6043 = vpop.f32.mrb[0].mxu0
      %v6044 = vadd.f32 0.0, %v6043
      %v6045 = vpop.f32.mrb[0].mxu0
      %6046 = vmatprep.mubr.f32.mxu0 0.0
      %6047 = vmatmul.mubr.f32.gmra.mrb[0].mxu0 %v5865
      %v6048 = vpop.f32.mrb[0].mxu0
      %v6049 = vadd.f32 0.0, %v6048
      %v6050 = vpop.f32.mrb[0].mxu0
      %6051 = vmatprep.mubr.f32.mxu0 0.0
      %6052 = vmatmul.mubr.f32.gmra.mrb[0].mxu0 %v5868
      %v6053 = vpop.f32.mrb[0].mxu0
      %v6054 = vadd.f32 0.0, %v6053
      %v6055 = vpop.f32.mrb[0].mxu0
      %6056 = vmatprep.mubr.f32.mxu0 0.0
      %6057 = vmatmul.mubr.f32.gmra.mrb[0].mxu0 %v5871
      %v6058 = vpop.f32.mrb[0].mxu0
      %v6059 = vadd.f32 0.0, %v6058
      %v6060 = vpop.f32.mrb[0].mxu0
      %6061 = vmatprep.mubr.f32.mxu0 0.0
      %6062 = vmatmul.mubr.f32.gmra.mrb[0].mxu0 %v5874
      %v6063 = vpop.f32.mrb[0].mxu0
      %v6064 = vadd.f32 0.0, %v6063
      %v6065 = vpop.f32.mrb[0].mxu0
      %6066 = vmatprep.mubr.f32.mxu0 0.0
      %6067 = vmatmul.mubr.f32.gmra.mrb[0].mxu0 %v5877
      %v6068 = vpop.f32.mrb[0].mxu0
      %v6069 = vadd.f32 0.0, %v6068
      %v6070 = vpop.f32.mrb[0].mxu0
      %6071 = vmatprep.mubr.f32.mxu0 0.0
      %6072 = vmatmul.mubr.f32.gmra.mrb[0].mxu0 %v5880
      %v6073 = vpop.f32.mrb[0].mxu0
      %v6074 = vadd.f32 0.0, %v6073
      %v6075 = vpop.f32.mrb[0].mxu0
      %6076 = vmatprep.mubr.f32.mxu0 0.0
      %6077 = vmatmul.mubr.f32.gmra.mrb[0].mxu0 %v5883
      %v6078 = vpop.f32.mrb[0].mxu0
      %v6079 = vadd.f32 0.0, %v6078
      %v6080 = vpop.f32.mrb[0].mxu0
      %6081 = vmatprep.mubr.f32.mxu0 0.0
      %6082 = vmatmul.mubr.f32.gmra.mrb[0].mxu0 %v5886
      %v6083 = vpop.f32.mrb[0].mxu0
      %v6084 = vadd.f32 0.0, %v6083
      %v6085 = vpop.f32.mrb[0].mxu0
      %6086 = vmatprep.mubr.f32.mxu0 0.0
      %6087 = vmatmul.mubr.f32.gmra.mrb[0].mxu0 %v5889
      %v6088 = vpop.f32.mrb[0].mxu0
      %v6089 = vadd.f32 0.0, %v6088
      %v6090 = vpop.f32.mrb[0].mxu0
      %6091 = vmatprep.mubr.f32.mxu0 0.0
      %6092 = vmatmul.mubr.f32.gmra.mrb[0].mxu0 %v5892
      %v6093 = vpop.f32.mrb[0].mxu0
      %v6094 = vadd.f32 0.0, %v6093
      %v6095 = vpop.f32.mrb[0].mxu0
      %6096 = vmatprep.mubr.f32.mxu0 0.0
      %6097 = vmatmul.mubr.f32.gmra.mrb[0].mxu0 %v5895
      %v6098 = vpop.f32.mrb[0].mxu0
      %v6099 = vadd.f32 0.0, %v6098
      %v6100 = vpop.f32.mrb[0].mxu0
      %6101 = vmatprep.mubr.f32.mxu0 0.0
      %6102 = vmatmul.mubr.f32.gmra.mrb[0].mxu0 %v5898
      %v6103 = vpop.f32.mrb[0].mxu0
      %v6104 = vadd.f32 0.0, %v6103
      %v6105 = vpop.f32.mrb[0].mxu0
      %6106 = vmatprep.mubr.f32.mxu0 0.0
      %6107 = vmatmul.mubr.f32.gmra.mrb[0].mxu0 %v5901
      %v6108 = vpop.f32.mrb[0].mxu0
      %v6109 = vadd.f32 0.0, %v6108
      %v6110 = vpop.f32.mrb[0].mxu0
      %6111 = vmatprep.mubr.f32.mxu0 0.0
      %6112 = vmatmul.mubr.f32.gmra.mrb[0].mxu0 %v5904
      %v6113 = vpop.f32.mrb[0].mxu0
      %v6114 = vadd.f32 0.0, %v6113
      %v6115 = vpop.f32.mrb[0].mxu0
      %6116 = vmatprep.mubr.f32.mxu0 0.0
      %6117 = vmatmul.mubr.f32.gmra.mrb[0].mxu0 %v5907
      %v6118 = vpop.f32.mrb[0].mxu0
      %v6119 = vadd.f32 0.0, %v6118
      %v6120 = vpop.f32.mrb[0].mxu0
      %6121 = vmatprep.mubr.f32.mxu0 0.0
      %6122 = vmatmul.mubr.f32.gmra.mrb[0].mxu0 %v5910
      %v6123 = vpop.f32.mrb[0].mxu0
      %v6124 = vadd.f32 0.0, %v6123
      %v6125 = vpop.f32.mrb[0].mxu0
      %6126 = vmatprep.mubr.f32.mxu0 0.0
      %6127 = vmatmul.mubr.f32.gmra.mrb[0].mxu0 %v5913
      %v6128 = vpop.f32.mrb[0].mxu0
      %v6129 = vadd.f32 0.0, %v6128
      %v6130 = vpop.f32.mrb[0].mxu0
      %6131 = vmatprep.mubr.f32.mxu0 0.0
      %6132 = vmatmul.mubr.f32.gmra.mrb[0].mxu0 %v5916
      %v6133 = vpop.f32.mrb[0].mxu0
      %v6134 = vadd.f32 0.0, %v6133
      %v6135 = vpop.f32.mrb[0].mxu0
      %6136 = vmatprep.mubr.f32.mxu0 0.0
      %6137 = vmatmul.mubr.f32.gmra.mrb[0].mxu0 %v5919
      %v6138 = vpop.f32.mrb[0].mxu0
      %v6139 = vadd.f32 0.0, %v6138
      %v6140 = vpop.f32.mrb[0].mxu0
      %6141 = vmatprep.mubr.f32.mxu0 0.0
      %6142 = vmatmul.mubr.f32.gmra.mrb[0].mxu0 %v5922
      %v6143 = vpop.f32.mrb[0].mxu0
      %v6144 = vadd.f32 0.0, %v6143
      %v6145 = vpop.f32.mrb[0].mxu0
      %6146 = vmatprep.mubr.f32.mxu0 0.0
      %6147 = vmatmul.mubr.f32.gmra.mrb[0].mxu0 %v5925
      %v6148 = vpop.f32.mrb[0].mxu0
      %v6149 = vadd.f32 0.0, %v6148
      %v6150 = vpop.f32.mrb[0].mxu0
      %6151 = vdwg.mxu0
      %v6152 = vadd.f32 %v5765, %v5994
      %v6153 = vadd.f32 %v5766, %v5999
      %v6154 = vadd.f32 %v5767, %v6004
      %v6155 = vadd.f32 %v5768, %v6009
      %v6156 = vadd.f32 %v5769, %v6014
      %v6157 = vadd.f32 %v5770, %v6019
      %v6158 = vadd.f32 %v5771, %v6024
      %v6159 = vadd.f32 %v5772, %v6029
      %v6160 = vadd.f32 %v5773, %v6034
      %v6161 = vadd.f32 %v5774, %v6039
      %v6162 = vadd.f32 %v5775, %v6044
      %v6163 = vadd.f32 %v5776, %v6049
      %v6164 = vadd.f32 %v5777, %v6054
      %v6165 = vadd.f32 %v5778, %v6059
      %v6166 = vadd.f32 %v5779, %v6064
      %v6167 = vadd.f32 %v5780, %v6069
      %v6168 = vadd.f32 %v5781, %v6074
      %v6169 = vadd.f32 %v5782, %v6079
      %v6170 = vadd.f32 %v5783, %v6084
      %v6171 = vadd.f32 %v5784, %v6089
      %v6172 = vadd.f32 %v5785, %v6094
      %v6173 = vadd.f32 %v5786, %v6099
      %v6174 = vadd.f32 %v5787, %v6104
      %v6175 = vadd.f32 %v5788, %v6109
      %v6176 = vadd.f32 %v5789, %v6114
      %v6177 = vadd.f32 %v5790, %v6119
      %v6178 = vadd.f32 %v5791, %v6124
      %v6179 = vadd.f32 %v5792, %v6129
      %v6180 = vadd.f32 %v5793, %v6134
      %v6181 = vadd.f32 %v5794, %v6139
      %v6182 = vadd.f32 %v5795, %v6144
      %v6183 = vadd.f32 %v5796, %v6149
      %s6184 = scalar_lea.vmem [#allocation2], 48
      %v6185 = vld [vmem:[%s6184] sm:$0xff]
      %v6186 = vld [vmem:[%s6184 + $0x8] sm:$0xff]
      %v6187 = vld [vmem:[%s6184 + $0x18] sm:$0xff]
      %v6188 = vld [vmem:[%s6184 + $0x20] sm:$0xff]
      %v6189 = vld [vmem:[%s6184 + $0x30] sm:$0xff]
      %v6190 = vld [vmem:[%s6184 + $0x38] sm:$0xff]
      %v6191 = vld [vmem:[%s6184 + $0x48] sm:$0xff]
      %v6192 = vld [vmem:[%s6184 + $0x50] sm:$0xff]
      %v6193 = vld [vmem:[%s6184 + $0x60] sm:$0xff]
      %v6194 = vld [vmem:[%s6184 + $0x68] sm:$0xff]
      %v6195 = vld [vmem:[%s6184 + $0x78] sm:$0xff]
      %v6196 = vld [vmem:[%s6184 + $0x80] sm:$0xff]
      %v6197 = vld [vmem:[%s6184 + $0x90] sm:$0xff]
      %v6198 = vld [vmem:[%s6184 + $0x98] sm:$0xff]
      %v6199 = vld [vmem:[%s6184 + $0xa8] sm:$0xff]
      %v6200 = vld [vmem:[%s6184 + $0xb0] sm:$0xff]
      %v6201 = vld [vmem:[%s6184 + $0xc0] sm:$0xff]
      %v6202 = vld [vmem:[%s6184 + $0xc8] sm:$0xff]
      %v6203 = vld [vmem:[%s6184 + $0xd8] sm:$0xff]
      %v6204 = vld [vmem:[%s6184 + $0xe0] sm:$0xff]
      %v6205 = vld [vmem:[%s6184 + $0xf0] sm:$0xff]
      %v6206 = vld [vmem:[%s6184 + $0xf8] sm:$0xff]
      %v6207 = vld [vmem:[%s6184 + $0x108] sm:$0xff]
      %v6208 = vld [vmem:[%s6184 + $0x110] sm:$0xff]
      %v6209 = vld [vmem:[%s6184 + $0x120] sm:$0xff]
      %v6210 = vld [vmem:[%s6184 + $0x128] sm:$0xff]
      %v6211 = vld [vmem:[%s6184 + $0x138] sm:$0xff]
      %v6212 = vld [vmem:[%s6184 + $0x140] sm:$0xff]
      %v6213 = vld [vmem:[%s6184 + $0x150] sm:$0xff]
      %v6214 = vld [vmem:[%s6184 + $0x158] sm:$0xff]
      %v6215 = vld [vmem:[%s6184 + $0x168] sm:$0xff]
      %v6216 = vld [vmem:[%s6184 + $0x170] sm:$0xff]
      %s6217 = scalar_lea.vmem %s4, 48
      %v6218 = vld [vmem:[%s6217] sm:$0xff]
      %v6220 = vsel %vm3838, %v6185, 0
      %v6223 = vsel %vm3838, %v6186, 0
      %v6226 = vsel %vm3838, %v6187, 0
      %v6229 = vsel %vm3838, %v6188, 0
      %v6232 = vsel %vm3838, %v6189, 0
      %v6235 = vsel %vm3838, %v6190, 0
      %v6238 = vsel %vm3838, %v6191, 0
      %v6241 = vsel %vm3838, %v6192, 0
      %v6244 = vsel %vm3838, %v6193, 0
      %v6247 = vsel %vm3838, %v6194, 0
      %v6250 = vsel %vm3838, %v6195, 0
      %v6253 = vsel %vm3838, %v6196, 0
      %v6256 = vsel %vm3838, %v6197, 0
      %v6259 = vsel %vm3838, %v6198, 0
      %v6262 = vsel %vm3838, %v6199, 0
      %v6265 = vsel %vm3838, %v6200, 0
      %v6268 = vsel %vm3838, %v6201, 0
      %v6271 = vsel %vm3838, %v6202, 0
      %v6274 = vsel %vm3838, %v6203, 0
      %v6277 = vsel %vm3838, %v6204, 0
      %v6280 = vsel %vm3838, %v6205, 0
      %v6283 = vsel %vm3838, %v6206, 0
      %v6286 = vsel %vm3838, %v6207, 0
      %v6289 = vsel %vm3838, %v6208, 0
      %v6292 = vsel %vm3838, %v6209, 0
      %v6295 = vsel %vm3838, %v6210, 0
      %v6298 = vsel %vm3838, %v6211, 0
      %v6301 = vsel %vm3838, %v6212, 0
      %v6304 = vsel %vm3838, %v6213, 0
      %v6307 = vsel %vm3838, %v6214, 0
      %v6310 = vsel %vm3838, %v6215, 0
      %v6313 = vsel %vm3838, %v6216, 0
      %6315 = vmatprep.subr.mxu0 0.0
      %6316 = vmatpush1.msra.mxu0 %v6218
      %6317 = vmatprep.subr.mxu0 0.0
      %6318 = vmatpush1.msra.mxu0 0.0
      %6319 = vmatprep.subr.mxu0 0.0
      %6320 = vmatpush1.msra.mxu0 0.0
      %6321 = vmatprep.subr.mxu0 0.0
      %6322 = vmatpush1.msra.mxu0 0.0
      %6323 = vmatprep.subr.mxu0 0.0
      %6324 = vmatpush1.msra.mxu0 0.0
      %6325 = vmatprep.subr.mxu0 0.0
      %6326 = vmatpush1.msra.mxu0 0.0
      %6327 = vmatprep.subr.mxu0 0.0
      %6328 = vmatpush1.msra.mxu0 0.0
      %6329 = vmatprep.subr.mxu0 0.0
      %6330 = vmatpush1.msra.mxu0 0.0
      %6331 = vmatprep.subr.mxu0 0.0
      %6332 = vmatpush1.msra.mxu0 0.0
      %6333 = vmatprep.subr.mxu0 0.0
      %6334 = vmatpush1.msra.mxu0 0.0
      %6335 = vmatprep.subr.mxu0 0.0
      %6336 = vmatpush1.msra.mxu0 0.0
      %6337 = vmatprep.subr.mxu0 0.0
      %6338 = vmatpush1.msra.mxu0 0.0
      %6339 = vmatprep.subr.mxu0 0.0
      %6340 = vmatpush1.msra.mxu0 0.0
      %6341 = vmatprep.subr.mxu0 0.0
      %6342 = vmatpush1.msra.mxu0 0.0
      %6343 = vmatprep.subr.mxu0 0.0
      %6344 = vmatpush1.msra.mxu0 0.0
      %6345 = vmatprep.subr.mxu0 0.0
      %6346 = vmatpush1.msra.mxu0 0.0
      %6347 = vmatprep.subr.mxu0 0.0
      %6348 = vmatpush1.msra.mxu0 0.0
      %6349 = vmatprep.subr.mxu0 0.0
      %6350 = vmatpush1.msra.mxu0 0.0
      %6351 = vmatprep.subr.mxu0 0.0
      %6352 = vmatpush1.msra.mxu0 0.0
      %6353 = vmatprep.subr.mxu0 0.0
      %6354 = vmatpush1.msra.mxu0 0.0
      %6355 = vmatprep.subr.mxu0 0.0
      %6356 = vmatpush1.msra.mxu0 0.0
      %6357 = vmatprep.subr.mxu0 0.0
      %6358 = vmatpush1.msra.mxu0 0.0
      %6359 = vmatprep.subr.mxu0 0.0
      %6360 = vmatpush1.msra.mxu0 0.0
      %6361 = vmatprep.subr.mxu0 0.0
      %6362 = vmatpush1.msra.mxu0 0.0
      %6363 = vmatprep.subr.mxu0 0.0
      %6364 = vmatpush1.msra.mxu0 0.0
      %6365 = vmatprep.subr.mxu0 0.0
      %6366 = vmatpush1.msra.mxu0 0.0
      %6367 = vmatprep.subr.mxu0 0.0
      %6368 = vmatpush1.msra.mxu0 0.0
      %6369 = vmatprep.subr.mxu0 0.0
      %6370 = vmatpush1.msra.mxu0 0.0
      %6371 = vmatprep.subr.mxu0 0.0
      %6372 = vmatpush1.msra.mxu0 0.0
      %6373 = vmatprep.subr.mxu0 0.0
      %6374 = vmatpush1.msra.mxu0 0.0
      %6375 = vmatprep.subr.mxu0 0.0
      %6376 = vmatpush1.msra.mxu0 0.0
      %6377 = vmatprep.subr.mxu0 0.0
      %6378 = vmatpush1.msra.mxu0 0.0
      %6379 = vmatprep.mubr.f32.mxu0 0.0
      %6380 = vmatmul.mubr.f32.gmra.mrb[0].mxu0 %v6220
      %v6381 = vpop.f32.mrb[0].mxu0
      %v6382 = vadd.f32 0.0, %v6381
      %v6383 = vpop.f32.mrb[0].mxu0
      %6384 = vmatprep.mubr.f32.mxu0 0.0
      %6385 = vmatmul.mubr.f32.gmra.mrb[0].mxu0 %v6223
      %v6386 = vpop.f32.mrb[0].mxu0
      %v6387 = vadd.f32 0.0, %v6386
      %v6388 = vpop.f32.mrb[0].mxu0
      %6389 = vmatprep.mubr.f32.mxu0 0.0
      %6390 = vmatmul.mubr.f32.gmra.mrb[0].mxu0 %v6226
      %v6391 = vpop.f32.mrb[0].mxu0
      %v6392 = vadd.f32 0.0, %v6391
      %v6393 = vpop.f32.mrb[0].mxu0
      %6394 = vmatprep.mubr.f32.mxu0 0.0
      %6395 = vmatmul.mubr.f32.gmra.mrb[0].mxu0 %v6229
      %v6396 = vpop.f32.mrb[0].mxu0
      %v6397 = vadd.f32 0.0, %v6396
      %v6398 = vpop.f32.mrb[0].mxu0
      %6399 = vmatprep.mubr.f32.mxu0 0.0
      %6400 = vmatmul.mubr.f32.gmra.mrb[0].mxu0 %v6232
      %v6401 = vpop.f32.mrb[0].mxu0
      %v6402 = vadd.f32 0.0, %v6401
      %v6403 = vpop.f32.mrb[0].mxu0
      %6404 = vmatprep.mubr.f32.mxu0 0.0
      %6405 = vmatmul.mubr.f32.gmra.mrb[0].mxu0 %v6235
      %v6406 = vpop.f32.mrb[0].mxu0
      %v6407 = vadd.f32 0.0, %v6406
      %v6408 = vpop.f32.mrb[0].mxu0
      %6409 = vmatprep.mubr.f32.mxu0 0.0
      %6410 = vmatmul.mubr.f32.gmra.mrb[0].mxu0 %v6238
      %v6411 = vpop.f32.mrb[0].mxu0
      %v6412 = vadd.f32 0.0, %v6411
      %v6413 = vpop.f32.mrb[0].mxu0
      %6414 = vmatprep.mubr.f32.mxu0 0.0
      %6415 = vmatmul.mubr.f32.gmra.mrb[0].mxu0 %v6241
      %v6416 = vpop.f32.mrb[0].mxu0
      %v6417 = vadd.f32 0.0, %v6416
      %v6418 = vpop.f32.mrb[0].mxu0
      %6419 = vmatprep.mubr.f32.mxu0 0.0
      %6420 = vmatmul.mubr.f32.gmra.mrb[0].mxu0 %v6244
      %v6421 = vpop.f32.mrb[0].mxu0
      %v6422 = vadd.f32 0.0, %v6421
      %v6423 = vpop.f32.mrb[0].mxu0
      %6424 = vmatprep.mubr.f32.mxu0 0.0
      %6425 = vmatmul.mubr.f32.gmra.mrb[0].mxu0 %v6247
      %v6426 = vpop.f32.mrb[0].mxu0
      %v6427 = vadd.f32 0.0, %v6426
      %v6428 = vpop.f32.mrb[0].mxu0
      %6429 = vmatprep.mubr.f32.mxu0 0.0
      %6430 = vmatmul.mubr.f32.gmra.mrb[0].mxu0 %v6250
      %v6431 = vpop.f32.mrb[0].mxu0
      %v6432 = vadd.f32 0.0, %v6431
      %v6433 = vpop.f32.mrb[0].mxu0
      %6434 = vmatprep.mubr.f32.mxu0 0.0
      %6435 = vmatmul.mubr.f32.gmra.mrb[0].mxu0 %v6253
      %v6436 = vpop.f32.mrb[0].mxu0
      %v6437 = vadd.f32 0.0, %v6436
      %v6438 = vpop.f32.mrb[0].mxu0
      %6439 = vmatprep.mubr.f32.mxu0 0.0
      %6440 = vmatmul.mubr.f32.gmra.mrb[0].mxu0 %v6256
      %v6441 = vpop.f32.mrb[0].mxu0
      %v6442 = vadd.f32 0.0, %v6441
      %v6443 = vpop.f32.mrb[0].mxu0
      %6444 = vmatprep.mubr.f32.mxu0 0.0
      %6445 = vmatmul.mubr.f32.gmra.mrb[0].mxu0 %v6259
      %v6446 = vpop.f32.mrb[0].mxu0
      %v6447 = vadd.f32 0.0, %v6446
      %v6448 = vpop.f32.mrb[0].mxu0
      %6449 = vmatprep.mubr.f32.mxu0 0.0
      %6450 = vmatmul.mubr.f32.gmra.mrb[0].mxu0 %v6262
      %v6451 = vpop.f32.mrb[0].mxu0
      %v6452 = vadd.f32 0.0, %v6451
      %v6453 = vpop.f32.mrb[0].mxu0
      %6454 = vmatprep.mubr.f32.mxu0 0.0
      %6455 = vmatmul.mubr.f32.gmra.mrb[0].mxu0 %v6265
      %v6456 = vpop.f32.mrb[0].mxu0
      %v6457 = vadd.f32 0.0, %v6456
      %v6458 = vpop.f32.mrb[0].mxu0
      %6459 = vmatprep.mubr.f32.mxu0 0.0
      %6460 = vmatmul.mubr.f32.gmra.mrb[0].mxu0 %v6268
      %v6461 = vpop.f32.mrb[0].mxu0
      %v6462 = vadd.f32 0.0, %v6461
      %v6463 = vpop.f32.mrb[0].mxu0
      %6464 = vmatprep.mubr.f32.mxu0 0.0
      %6465 = vmatmul.mubr.f32.gmra.mrb[0].mxu0 %v6271
      %v6466 = vpop.f32.mrb[0].mxu0
      %v6467 = vadd.f32 0.0, %v6466
      %v6468 = vpop.f32.mrb[0].mxu0
      %6469 = vmatprep.mubr.f32.mxu0 0.0
      %6470 = vmatmul.mubr.f32.gmra.mrb[0].mxu0 %v6274
      %v6471 = vpop.f32.mrb[0].mxu0
      %v6472 = vadd.f32 0.0, %v6471
      %v6473 = vpop.f32.mrb[0].mxu0
      %6474 = vmatprep.mubr.f32.mxu0 0.0
      %6475 = vmatmul.mubr.f32.gmra.mrb[0].mxu0 %v6277
      %v6476 = vpop.f32.mrb[0].mxu0
      %v6477 = vadd.f32 0.0, %v6476
      %v6478 = vpop.f32.mrb[0].mxu0
      %6479 = vmatprep.mubr.f32.mxu0 0.0
      %6480 = vmatmul.mubr.f32.gmra.mrb[0].mxu0 %v6280
      %v6481 = vpop.f32.mrb[0].mxu0
      %v6482 = vadd.f32 0.0, %v6481
      %v6483 = vpop.f32.mrb[0].mxu0
      %6484 = vmatprep.mubr.f32.mxu0 0.0
      %6485 = vmatmul.mubr.f32.gmra.mrb[0].mxu0 %v6283
      %v6486 = vpop.f32.mrb[0].mxu0
      %v6487 = vadd.f32 0.0, %v6486
      %v6488 = vpop.f32.mrb[0].mxu0
      %6489 = vmatprep.mubr.f32.mxu0 0.0
      %6490 = vmatmul.mubr.f32.gmra.mrb[0].mxu0 %v6286
      %v6491 = vpop.f32.mrb[0].mxu0
      %v6492 = vadd.f32 0.0, %v6491
      %v6493 = vpop.f32.mrb[0].mxu0
      %6494 = vmatprep.mubr.f32.mxu0 0.0
      %6495 = vmatmul.mubr.f32.gmra.mrb[0].mxu0 %v6289
      %v6496 = vpop.f32.mrb[0].mxu0
      %v6497 = vadd.f32 0.0, %v6496
      %v6498 = vpop.f32.mrb[0].mxu0
      %6499 = vmatprep.mubr.f32.mxu0 0.0
      %6500 = vmatmul.mubr.f32.gmra.mrb[0].mxu0 %v6292
      %v6501 = vpop.f32.mrb[0].mxu0
      %v6502 = vadd.f32 0.0, %v6501
      %v6503 = vpop.f32.mrb[0].mxu0
      %6504 = vmatprep.mubr.f32.mxu0 0.0
      %6505 = vmatmul.mubr.f32.gmra.mrb[0].mxu0 %v6295
      %v6506 = vpop.f32.mrb[0].mxu0
      %v6507 = vadd.f32 0.0, %v6506
      %v6508 = vpop.f32.mrb[0].mxu0
      %6509 = vmatprep.mubr.f32.mxu0 0.0
      %6510 = vmatmul.mubr.f32.gmra.mrb[0].mxu0 %v6298
      %v6511 = vpop.f32.mrb[0].mxu0
      %v6512 = vadd.f32 0.0, %v6511
      %v6513 = vpop.f32.mrb[0].mxu0
      %6514 = vmatprep.mubr.f32.mxu0 0.0
      %6515 = vmatmul.mubr.f32.gmra.mrb[0].mxu0 %v6301
      %v6516 = vpop.f32.mrb[0].mxu0
      %v6517 = vadd.f32 0.0, %v6516
      %v6518 = vpop.f32.mrb[0].mxu0
      %6519 = vmatprep.mubr.f32.mxu0 0.0
      %6520 = vmatmul.mubr.f32.gmra.mrb[0].mxu0 %v6304
      %v6521 = vpop.f32.mrb[0].mxu0
      %v6522 = vadd.f32 0.0, %v6521
      %v6523 = vpop.f32.mrb[0].mxu0
      %6524 = vmatprep.mubr.f32.mxu0 0.0
      %6525 = vmatmul.mubr.f32.gmra.mrb[0].mxu0 %v6307
      %v6526 = vpop.f32.mrb[0].mxu0
      %v6527 = vadd.f32 0.0, %v6526
      %v6528 = vpop.f32.mrb[0].mxu0
      %6529 = vmatprep.mubr.f32.mxu0 0.0
      %6530 = vmatmul.mubr.f32.gmra.mrb[0].mxu0 %v6310
      %v6531 = vpop.f32.mrb[0].mxu0
      %v6532 = vadd.f32 0.0, %v6531
      %v6533 = vpop.f32.mrb[0].mxu0
      %6534 = vmatprep.mubr.f32.mxu0 0.0
      %6535 = vmatmul.mubr.f32.gmra.mrb[0].mxu0 %v6313
      %v6536 = vpop.f32.mrb[0].mxu0
      %v6537 = vadd.f32 0.0, %v6536
      %v6538 = vpop.f32.mrb[0].mxu0
      %6539 = vdwg.mxu0
      %v6540 = vadd.f32 %v6152, %v6382
      %v6541 = vadd.f32 %v6153, %v6387
      %v6542 = vadd.f32 %v6154, %v6392
      %v6543 = vadd.f32 %v6155, %v6397
      %v6544 = vadd.f32 %v6156, %v6402
      %v6545 = vadd.f32 %v6157, %v6407
      %v6546 = vadd.f32 %v6158, %v6412
      %v6547 = vadd.f32 %v6159, %v6417
      %v6548 = vadd.f32 %v6160, %v6422
      %v6549 = vadd.f32 %v6161, %v6427
      %v6550 = vadd.f32 %v6162, %v6432
      %v6551 = vadd.f32 %v6163, %v6437
      %v6552 = vadd.f32 %v6164, %v6442
      %v6553 = vadd.f32 %v6165, %v6447
      %v6554 = vadd.f32 %v6166, %v6452
      %v6555 = vadd.f32 %v6167, %v6457
      %v6556 = vadd.f32 %v6168, %v6462
      %v6557 = vadd.f32 %v6169, %v6467
      %v6558 = vadd.f32 %v6170, %v6472
      %v6559 = vadd.f32 %v6171, %v6477
      %v6560 = vadd.f32 %v6172, %v6482
      %v6561 = vadd.f32 %v6173, %v6487
      %v6562 = vadd.f32 %v6174, %v6492
      %v6563 = vadd.f32 %v6175, %v6497
      %v6564 = vadd.f32 %v6176, %v6502
      %v6565 = vadd.f32 %v6177, %v6507
      %v6566 = vadd.f32 %v6178, %v6512
      %v6567 = vadd.f32 %v6179, %v6517
      %v6568 = vadd.f32 %v6180, %v6522
      %v6569 = vadd.f32 %v6181, %v6527
      %v6570 = vadd.f32 %v6182, %v6532
      %v6571 = vadd.f32 %v6183, %v6537
      %v6572 = vld [vmem:[%s6184 + $0x1] sm:$0xff]
      %v6573 = vld [vmem:[%s6184 + $0x9] sm:$0xff]
      %v6574 = vld [vmem:[%s6184 + $0x19] sm:$0xff]
      %v6575 = vld [vmem:[%s6184 + $0x21] sm:$0xff]
      %v6576 = vld [vmem:[%s6184 + $0x31] sm:$0xff]
      %v6577 = vld [vmem:[%s6184 + $0x39] sm:$0xff]
      %v6578 = vld [vmem:[%s6184 + $0x49] sm:$0xff]
      %v6579 = vld [vmem:[%s6184 + $0x51] sm:$0xff]
      %v6580 = vld [vmem:[%s6184 + $0x61] sm:$0xff]
      %v6581 = vld [vmem:[%s6184 + $0x69] sm:$0xff]
      %v6582 = vld [vmem:[%s6184 + $0x79] sm:$0xff]
      %v6583 = vld [vmem:[%s6184 + $0x81] sm:$0xff]
      %v6584 = vld [vmem:[%s6184 + $0x91] sm:$0xff]
      %v6585 = vld [vmem:[%s6184 + $0x99] sm:$0xff]
      %v6586 = vld [vmem:[%s6184 + $0xa9] sm:$0xff]
      %v6587 = vld [vmem:[%s6184 + $0xb1] sm:$0xff]
      %v6588 = vld [vmem:[%s6184 + $0xc1] sm:$0xff]
      %v6589 = vld [vmem:[%s6184 + $0xc9] sm:$0xff]
      %v6590 = vld [vmem:[%s6184 + $0xd9] sm:$0xff]
      %v6591 = vld [vmem:[%s6184 + $0xe1] sm:$0xff]
      %v6592 = vld [vmem:[%s6184 + $0xf1] sm:$0xff]
      %v6593 = vld [vmem:[%s6184 + $0xf9] sm:$0xff]
      %v6594 = vld [vmem:[%s6184 + $0x109] sm:$0xff]
      %v6595 = vld [vmem:[%s6184 + $0x111] sm:$0xff]
      %v6596 = vld [vmem:[%s6184 + $0x121] sm:$0xff]
      %v6597 = vld [vmem:[%s6184 + $0x129] sm:$0xff]
      %v6598 = vld [vmem:[%s6184 + $0x139] sm:$0xff]
      %v6599 = vld [vmem:[%s6184 + $0x141] sm:$0xff]
      %v6600 = vld [vmem:[%s6184 + $0x151] sm:$0xff]
      %v6601 = vld [vmem:[%s6184 + $0x159] sm:$0xff]
      %v6602 = vld [vmem:[%s6184 + $0x169] sm:$0xff]
      %v6603 = vld [vmem:[%s6184 + $0x171] sm:$0xff]
      %s6604 = scalar_lea.vmem %s4, 56
      %v6605 = vld [vmem:[%s6604] sm:$0xff]
      %v6607 = vsel %vm3838, %v6572, 0
      %v6610 = vsel %vm3838, %v6573, 0
      %v6613 = vsel %vm3838, %v6574, 0
      %v6616 = vsel %vm3838, %v6575, 0
      %v6619 = vsel %vm3838, %v6576, 0
      %v6622 = vsel %vm3838, %v6577, 0
      %v6625 = vsel %vm3838, %v6578, 0
      %v6628 = vsel %vm3838, %v6579, 0
      %v6631 = vsel %vm3838, %v6580, 0
      %v6634 = vsel %vm3838, %v6581, 0
      %v6637 = vsel %vm3838, %v6582, 0
      %v6640 = vsel %vm3838, %v6583, 0
      %v6643 = vsel %vm3838, %v6584, 0
      %v6646 = vsel %vm3838, %v6585, 0
      %v6649 = vsel %vm3838, %v6586, 0
      %v6652 = vsel %vm3838, %v6587, 0
      %v6655 = vsel %vm3838, %v6588, 0
      %v6658 = vsel %vm3838, %v6589, 0
      %v6661 = vsel %vm3838, %v6590, 0
      %v6664 = vsel %vm3838, %v6591, 0
      %v6667 = vsel %vm3838, %v6592, 0
      %v6670 = vsel %vm3838, %v6593, 0
      %v6673 = vsel %vm3838, %v6594, 0
      %v6676 = vsel %vm3838, %v6595, 0
      %v6679 = vsel %vm3838, %v6596, 0
      %v6682 = vsel %vm3838, %v6597, 0
      %v6685 = vsel %vm3838, %v6598, 0
      %v6688 = vsel %vm3838, %v6599, 0
      %v6691 = vsel %vm3838, %v6600, 0
      %v6694 = vsel %vm3838, %v6601, 0
      %v6697 = vsel %vm3838, %v6602, 0
      %v6700 = vsel %vm3838, %v6603, 0
      %6702 = vmatprep.subr.mxu0 0.0
      %6703 = vmatpush1.msra.mxu0 %v6605
      %6704 = vmatprep.subr.mxu0 0.0
      %6705 = vmatpush1.msra.mxu0 0.0
      %6706 = vmatprep.subr.mxu0 0.0
      %6707 = vmatpush1.msra.mxu0 0.0
      %6708 = vmatprep.subr.mxu0 0.0
      %6709 = vmatpush1.msra.mxu0 0.0
      %6710 = vmatprep.subr.mxu0 0.0
      %6711 = vmatpush1.msra.mxu0 0.0
      %6712 = vmatprep.subr.mxu0 0.0
      %6713 = vmatpush1.msra.mxu0 0.0
      %6714 = vmatprep.subr.mxu0 0.0
      %6715 = vmatpush1.msra.mxu0 0.0
      %6716 = vmatprep.subr.mxu0 0.0
      %6717 = vmatpush1.msra.mxu0 0.0
      %6718 = vmatprep.subr.mxu0 0.0
      %6719 = vmatpush1.msra.mxu0 0.0
      %6720 = vmatprep.subr.mxu0 0.0
      %6721 = vmatpush1.msra.mxu0 0.0
      %6722 = vmatprep.subr.mxu0 0.0
      %6723 = vmatpush1.msra.mxu0 0.0
      %6724 = vmatprep.subr.mxu0 0.0
      %6725 = vmatpush1.msra.mxu0 0.0
      %6726 = vmatprep.subr.mxu0 0.0
      %6727 = vmatpush1.msra.mxu0 0.0
      %6728 = vmatprep.subr.mxu0 0.0
      %6729 = vmatpush1.msra.mxu0 0.0
      %6730 = vmatprep.subr.mxu0 0.0
      %6731 = vmatpush1.msra.mxu0 0.0
      %6732 = vmatprep.subr.mxu0 0.0
      %6733 = vmatpush1.msra.mxu0 0.0
      %6734 = vmatprep.subr.mxu0 0.0
      %6735 = vmatpush1.msra.mxu0 0.0
      %6736 = vmatprep.subr.mxu0 0.0
      %6737 = vmatpush1.msra.mxu0 0.0
      %6738 = vmatprep.subr.mxu0 0.0
      %6739 = vmatpush1.msra.mxu0 0.0
      %6740 = vmatprep.subr.mxu0 0.0
      %6741 = vmatpush1.msra.mxu0 0.0
      %6742 = vmatprep.subr.mxu0 0.0
      %6743 = vmatpush1.msra.mxu0 0.0
      %6744 = vmatprep.subr.mxu0 0.0
      %6745 = vmatpush1.msra.mxu0 0.0
      %6746 = vmatprep.subr.mxu0 0.0
      %6747 = vmatpush1.msra.mxu0 0.0
      %6748 = vmatprep.subr.mxu0 0.0
      %6749 = vmatpush1.msra.mxu0 0.0
      %6750 = vmatprep.subr.mxu0 0.0
      %6751 = vmatpush1.msra.mxu0 0.0
      %6752 = vmatprep.subr.mxu0 0.0
      %6753 = vmatpush1.msra.mxu0 0.0
      %6754 = vmatprep.subr.mxu0 0.0
      %6755 = vmatpush1.msra.mxu0 0.0
      %6756 = vmatprep.subr.mxu0 0.0
      %6757 = vmatpush1.msra.mxu0 0.0
      %6758 = vmatprep.subr.mxu0 0.0
      %6759 = vmatpush1.msra.mxu0 0.0
      %6760 = vmatprep.subr.mxu0 0.0
      %6761 = vmatpush1.msra.mxu0 0.0
      %6762 = vmatprep.subr.mxu0 0.0
      %6763 = vmatpush1.msra.mxu0 0.0
      %6764 = vmatprep.subr.mxu0 0.0
      %6765 = vmatpush1.msra.mxu0 0.0
      %6766 = vmatprep.mubr.f32.mxu0 0.0
      %6767 = vmatmul.mubr.f32.gmra.mrb[0].mxu0 %v6607
      %v6768 = vpop.f32.mrb[0].mxu0
      %v6769 = vadd.f32 0.0, %v6768
      %v6770 = vpop.f32.mrb[0].mxu0
      %6771 = vmatprep.mubr.f32.mxu0 0.0
      %6772 = vmatmul.mubr.f32.gmra.mrb[0].mxu0 %v6610
      %v6773 = vpop.f32.mrb[0].mxu0
      %v6774 = vadd.f32 0.0, %v6773
      %v6775 = vpop.f32.mrb[0].mxu0
      %6776 = vmatprep.mubr.f32.mxu0 0.0
      %6777 = vmatmul.mubr.f32.gmra.mrb[0].mxu0 %v6613
      %v6778 = vpop.f32.mrb[0].mxu0
      %v6779 = vadd.f32 0.0, %v6778
      %v6780 = vpop.f32.mrb[0].mxu0
      %6781 = vmatprep.mubr.f32.mxu0 0.0
      %6782 = vmatmul.mubr.f32.gmra.mrb[0].mxu0 %v6616
      %v6783 = vpop.f32.mrb[0].mxu0
      %v6784 = vadd.f32 0.0, %v6783
      %v6785 = vpop.f32.mrb[0].mxu0
      %6786 = vmatprep.mubr.f32.mxu0 0.0
      %6787 = vmatmul.mubr.f32.gmra.mrb[0].mxu0 %v6619
      %v6788 = vpop.f32.mrb[0].mxu0
      %v6789 = vadd.f32 0.0, %v6788
      %v6790 = vpop.f32.mrb[0].mxu0
      %6791 = vmatprep.mubr.f32.mxu0 0.0
      %6792 = vmatmul.mubr.f32.gmra.mrb[0].mxu0 %v6622
      %v6793 = vpop.f32.mrb[0].mxu0
      %v6794 = vadd.f32 0.0, %v6793
      %v6795 = vpop.f32.mrb[0].mxu0
      %6796 = vmatprep.mubr.f32.mxu0 0.0
      %6797 = vmatmul.mubr.f32.gmra.mrb[0].mxu0 %v6625
      %v6798 = vpop.f32.mrb[0].mxu0
      %v6799 = vadd.f32 0.0, %v6798
      %v6800 = vpop.f32.mrb[0].mxu0
      %6801 = vmatprep.mubr.f32.mxu0 0.0
      %6802 = vmatmul.mubr.f32.gmra.mrb[0].mxu0 %v6628
      %v6803 = vpop.f32.mrb[0].mxu0
      %v6804 = vadd.f32 0.0, %v6803
      %v6805 = vpop.f32.mrb[0].mxu0
      %6806 = vmatprep.mubr.f32.mxu0 0.0
      %6807 = vmatmul.mubr.f32.gmra.mrb[0].mxu0 %v6631
      %v6808 = vpop.f32.mrb[0].mxu0
      %v6809 = vadd.f32 0.0, %v6808
      %v6810 = vpop.f32.mrb[0].mxu0
      %6811 = vmatprep.mubr.f32.mxu0 0.0
      %6812 = vmatmul.mubr.f32.gmra.mrb[0].mxu0 %v6634
      %v6813 = vpop.f32.mrb[0].mxu0
      %v6814 = vadd.f32 0.0, %v6813
      %v6815 = vpop.f32.mrb[0].mxu0
      %6816 = vmatprep.mubr.f32.mxu0 0.0
      %6817 = vmatmul.mubr.f32.gmra.mrb[0].mxu0 %v6637
      %v6818 = vpop.f32.mrb[0].mxu0
      %v6819 = vadd.f32 0.0, %v6818
      %v6820 = vpop.f32.mrb[0].mxu0
      %6821 = vmatprep.mubr.f32.mxu0 0.0
      %6822 = vmatmul.mubr.f32.gmra.mrb[0].mxu0 %v6640
      %v6823 = vpop.f32.mrb[0].mxu0
      %v6824 = vadd.f32 0.0, %v6823
      %v6825 = vpop.f32.mrb[0].mxu0
      %6826 = vmatprep.mubr.f32.mxu0 0.0
      %6827 = vmatmul.mubr.f32.gmra.mrb[0].mxu0 %v6643
      %v6828 = vpop.f32.mrb[0].mxu0
      %v6829 = vadd.f32 0.0, %v6828
      %v6830 = vpop.f32.mrb[0].mxu0
      %6831 = vmatprep.mubr.f32.mxu0 0.0
      %6832 = vmatmul.mubr.f32.gmra.mrb[0].mxu0 %v6646
      %v6833 = vpop.f32.mrb[0].mxu0
      %v6834 = vadd.f32 0.0, %v6833
      %v6835 = vpop.f32.mrb[0].mxu0
      %6836 = vmatprep.mubr.f32.mxu0 0.0
      %6837 = vmatmul.mubr.f32.gmra.mrb[0].mxu0 %v6649
      %v6838 = vpop.f32.mrb[0].mxu0
      %v6839 = vadd.f32 0.0, %v6838
      %v6840 = vpop.f32.mrb[0].mxu0
      %6841 = vmatprep.mubr.f32.mxu0 0.0
      %6842 = vmatmul.mubr.f32.gmra.mrb[0].mxu0 %v6652
      %v6843 = vpop.f32.mrb[0].mxu0
      %v6844 = vadd.f32 0.0, %v6843
      %v6845 = vpop.f32.mrb[0].mxu0
      %6846 = vmatprep.mubr.f32.mxu0 0.0
      %6847 = vmatmul.mubr.f32.gmra.mrb[0].mxu0 %v6655
      %v6848 = vpop.f32.mrb[0].mxu0
      %v6849 = vadd.f32 0.0, %v6848
      %v6850 = vpop.f32.mrb[0].mxu0
      %6851 = vmatprep.mubr.f32.mxu0 0.0
      %6852 = vmatmul.mubr.f32.gmra.mrb[0].mxu0 %v6658
      %v6853 = vpop.f32.mrb[0].mxu0
      %v6854 = vadd.f32 0.0, %v6853
      %v6855 = vpop.f32.mrb[0].mxu0
      %6856 = vmatprep.mubr.f32.mxu0 0.0
      %6857 = vmatmul.mubr.f32.gmra.mrb[0].mxu0 %v6661
      %v6858 = vpop.f32.mrb[0].mxu0
      %v6859 = vadd.f32 0.0, %v6858
      %v6860 = vpop.f32.mrb[0].mxu0
      %6861 = vmatprep.mubr.f32.mxu0 0.0
      %6862 = vmatmul.mubr.f32.gmra.mrb[0].mxu0 %v6664
      %v6863 = vpop.f32.mrb[0].mxu0
      %v6864 = vadd.f32 0.0, %v6863
      %v6865 = vpop.f32.mrb[0].mxu0
      %6866 = vmatprep.mubr.f32.mxu0 0.0
      %6867 = vmatmul.mubr.f32.gmra.mrb[0].mxu0 %v6667
      %v6868 = vpop.f32.mrb[0].mxu0
      %v6869 = vadd.f32 0.0, %v6868
      %v6870 = vpop.f32.mrb[0].mxu0
      %6871 = vmatprep.mubr.f32.mxu0 0.0
      %6872 = vmatmul.mubr.f32.gmra.mrb[0].mxu0 %v6670
      %v6873 = vpop.f32.mrb[0].mxu0
      %v6874 = vadd.f32 0.0, %v6873
      %v6875 = vpop.f32.mrb[0].mxu0
      %6876 = vmatprep.mubr.f32.mxu0 0.0
      %6877 = vmatmul.mubr.f32.gmra.mrb[0].mxu0 %v6673
      %v6878 = vpop.f32.mrb[0].mxu0
      %v6879 = vadd.f32 0.0, %v6878
      %v6880 = vpop.f32.mrb[0].mxu0
      %6881 = vmatprep.mubr.f32.mxu0 0.0
      %6882 = vmatmul.mubr.f32.gmra.mrb[0].mxu0 %v6676
      %v6883 = vpop.f32.mrb[0].mxu0
      %v6884 = vadd.f32 0.0, %v6883
      %v6885 = vpop.f32.mrb[0].mxu0
      %6886 = vmatprep.mubr.f32.mxu0 0.0
      %6887 = vmatmul.mubr.f32.gmra.mrb[0].mxu0 %v6679
      %v6888 = vpop.f32.mrb[0].mxu0
      %v6889 = vadd.f32 0.0, %v6888
      %v6890 = vpop.f32.mrb[0].mxu0
      %6891 = vmatprep.mubr.f32.mxu0 0.0
      %6892 = vmatmul.mubr.f32.gmra.mrb[0].mxu0 %v6682
      %v6893 = vpop.f32.mrb[0].mxu0
      %v6894 = vadd.f32 0.0, %v6893
      %v6895 = vpop.f32.mrb[0].mxu0
      %6896 = vmatprep.mubr.f32.mxu0 0.0
      %6897 = vmatmul.mubr.f32.gmra.mrb[0].mxu0 %v6685
      %v6898 = vpop.f32.mrb[0].mxu0
      %v6899 = vadd.f32 0.0, %v6898
      %v6900 = vpop.f32.mrb[0].mxu0
      %6901 = vmatprep.mubr.f32.mxu0 0.0
      %6902 = vmatmul.mubr.f32.gmra.mrb[0].mxu0 %v6688
      %v6903 = vpop.f32.mrb[0].mxu0
      %v6904 = vadd.f32 0.0, %v6903
      %v6905 = vpop.f32.mrb[0].mxu0
      %6906 = vmatprep.mubr.f32.mxu0 0.0
      %6907 = vmatmul.mubr.f32.gmra.mrb[0].mxu0 %v6691
      %v6908 = vpop.f32.mrb[0].mxu0
      %v6909 = vadd.f32 0.0, %v6908
      %v6910 = vpop.f32.mrb[0].mxu0
      %6911 = vmatprep.mubr.f32.mxu0 0.0
      %6912 = vmatmul.mubr.f32.gmra.mrb[0].mxu0 %v6694
      %v6913 = vpop.f32.mrb[0].mxu0
      %v6914 = vadd.f32 0.0, %v6913
      %v6915 = vpop.f32.mrb[0].mxu0
      %6916 = vmatprep.mubr.f32.mxu0 0.0
      %6917 = vmatmul.mubr.f32.gmra.mrb[0].mxu0 %v6697
      %v6918 = vpop.f32.mrb[0].mxu0
      %v6919 = vadd.f32 0.0, %v6918
      %v6920 = vpop.f32.mrb[0].mxu0
      %6921 = vmatprep.mubr.f32.mxu0 0.0
      %6922 = vmatmul.mubr.f32.gmra.mrb[0].mxu0 %v6700
      %v6923 = vpop.f32.mrb[0].mxu0
      %v6924 = vadd.f32 0.0, %v6923
      %v6925 = vpop.f32.mrb[0].mxu0
      %6926 = vdwg.mxu0
      %v6927 = vadd.f32 %v6540, %v6769
      %v6928 = vadd.f32 %v6541, %v6774
      %v6929 = vadd.f32 %v6542, %v6779
      %v6930 = vadd.f32 %v6543, %v6784
      %v6931 = vadd.f32 %v6544, %v6789
      %v6932 = vadd.f32 %v6545, %v6794
      %v6933 = vadd.f32 %v6546, %v6799
      %v6934 = vadd.f32 %v6547, %v6804
      %v6935 = vadd.f32 %v6548, %v6809
      %v6936 = vadd.f32 %v6549, %v6814
      %v6937 = vadd.f32 %v6550, %v6819
      %v6938 = vadd.f32 %v6551, %v6824
      %v6939 = vadd.f32 %v6552, %v6829
      %v6940 = vadd.f32 %v6553, %v6834
      %v6941 = vadd.f32 %v6554, %v6839
      %v6942 = vadd.f32 %v6555, %v6844
      %v6943 = vadd.f32 %v6556, %v6849
      %v6944 = vadd.f32 %v6557, %v6854
      %v6945 = vadd.f32 %v6558, %v6859
      %v6946 = vadd.f32 %v6559, %v6864
      %v6947 = vadd.f32 %v6560, %v6869
      %v6948 = vadd.f32 %v6561, %v6874
      %v6949 = vadd.f32 %v6562, %v6879
      %v6950 = vadd.f32 %v6563, %v6884
      %v6951 = vadd.f32 %v6564, %v6889
      %v6952 = vadd.f32 %v6565, %v6894
      %v6953 = vadd.f32 %v6566, %v6899
      %v6954 = vadd.f32 %v6567, %v6904
      %v6955 = vadd.f32 %v6568, %v6909
      %v6956 = vadd.f32 %v6569, %v6914
      %v6957 = vadd.f32 %v6570, %v6919
      %v6958 = vadd.f32 %v6571, %v6924
      %v6959 = vld [vmem:[%s6184 + $0x2] sm:$0xff]
      %v6960 = vld [vmem:[%s6184 + $0xa] sm:$0xff]
      %v6961 = vld [vmem:[%s6184 + $0x1a] sm:$0xff]
      %v6962 = vld [vmem:[%s6184 + $0x22] sm:$0xff]
      %v6963 = vld [vmem:[%s6184 + $0x32] sm:$0xff]
      %v6964 = vld [vmem:[%s6184 + $0x3a] sm:$0xff]
      %v6965 = vld [vmem:[%s6184 + $0x4a] sm:$0xff]
      %v6966 = vld [vmem:[%s6184 + $0x52] sm:$0xff]
      %v6967 = vld [vmem:[%s6184 + $0x62] sm:$0xff]
      %v6968 = vld [vmem:[%s6184 + $0x6a] sm:$0xff]
      %v6969 = vld [vmem:[%s6184 + $0x7a] sm:$0xff]
      %v6970 = vld [vmem:[%s6184 + $0x82] sm:$0xff]
      %v6971 = vld [vmem:[%s6184 + $0x92] sm:$0xff]
      %v6972 = vld [vmem:[%s6184 + $0x9a] sm:$0xff]
      %v6973 = vld [vmem:[%s6184 + $0xaa] sm:$0xff]
      %v6974 = vld [vmem:[%s6184 + $0xb2] sm:$0xff]
      %v6975 = vld [vmem:[%s6184 + $0xc2] sm:$0xff]
      %v6976 = vld [vmem:[%s6184 + $0xca] sm:$0xff]
      %v6977 = vld [vmem:[%s6184 + $0xda] sm:$0xff]
      %v6978 = vld [vmem:[%s6184 + $0xe2] sm:$0xff]
      %v6979 = vld [vmem:[%s6184 + $0xf2] sm:$0xff]
      %v6980 = vld [vmem:[%s6184 + $0xfa] sm:$0xff]
      %v6981 = vld [vmem:[%s6184 + $0x10a] sm:$0xff]
      %v6982 = vld [vmem:[%s6184 + $0x112] sm:$0xff]
      %v6983 = vld [vmem:[%s6184 + $0x122] sm:$0xff]
      %v6984 = vld [vmem:[%s6184 + $0x12a] sm:$0xff]
      %v6985 = vld [vmem:[%s6184 + $0x13a] sm:$0xff]
      %v6986 = vld [vmem:[%s6184 + $0x142] sm:$0xff]
      %v6987 = vld [vmem:[%s6184 + $0x152] sm:$0xff]
      %v6988 = vld [vmem:[%s6184 + $0x15a] sm:$0xff]
      %v6989 = vld [vmem:[%s6184 + $0x16a] sm:$0xff]
      %v6990 = vld [vmem:[%s6184 + $0x172] sm:$0xff]
      %s6991 = scalar_lea.vmem %s4, 64
      %v6992 = vld [vmem:[%s6991] sm:$0xff]
      %v6994 = vsel %vm3838, %v6959, 0
      %v6997 = vsel %vm3838, %v6960, 0
      %v7000 = vsel %vm3838, %v6961, 0
      %v7003 = vsel %vm3838, %v6962, 0
      %v7006 = vsel %vm3838, %v6963, 0
      %v7009 = vsel %vm3838, %v6964, 0
      %v7012 = vsel %vm3838, %v6965, 0
      %v7015 = vsel %vm3838, %v6966, 0
      %v7018 = vsel %vm3838, %v6967, 0
      %v7021 = vsel %vm3838, %v6968, 0
      %v7024 = vsel %vm3838, %v6969, 0
      %v7027 = vsel %vm3838, %v6970, 0
      %v7030 = vsel %vm3838, %v6971, 0
      %v7033 = vsel %vm3838, %v6972, 0
      %v7036 = vsel %vm3838, %v6973, 0
      %v7039 = vsel %vm3838, %v6974, 0
      %v7042 = vsel %vm3838, %v6975, 0
      %v7045 = vsel %vm3838, %v6976, 0
      %v7048 = vsel %vm3838, %v6977, 0
      %v7051 = vsel %vm3838, %v6978, 0
      %v7054 = vsel %vm3838, %v6979, 0
      %v7057 = vsel %vm3838, %v6980, 0
      %v7060 = vsel %vm3838, %v6981, 0
      %v7063 = vsel %vm3838, %v6982, 0
      %v7066 = vsel %vm3838, %v6983, 0
      %v7069 = vsel %vm3838, %v6984, 0
      %v7072 = vsel %vm3838, %v6985, 0
      %v7075 = vsel %vm3838, %v6986, 0
      %v7078 = vsel %vm3838, %v6987, 0
      %v7081 = vsel %vm3838, %v6988, 0
      %v7084 = vsel %vm3838, %v6989, 0
      %v7087 = vsel %vm3838, %v6990, 0
      %7089 = vmatprep.subr.mxu0 0.0
      %7090 = vmatpush1.msra.mxu0 %v6992
      %7091 = vmatprep.subr.mxu0 0.0
      %7092 = vmatpush1.msra.mxu0 0.0
      %7093 = vmatprep.subr.mxu0 0.0
      %7094 = vmatpush1.msra.mxu0 0.0
      %7095 = vmatprep.subr.mxu0 0.0
      %7096 = vmatpush1.msra.mxu0 0.0
      %7097 = vmatprep.subr.mxu0 0.0
      %7098 = vmatpush1.msra.mxu0 0.0
      %7099 = vmatprep.subr.mxu0 0.0
      %7100 = vmatpush1.msra.mxu0 0.0
      %7101 = vmatprep.subr.mxu0 0.0
      %7102 = vmatpush1.msra.mxu0 0.0
      %7103 = vmatprep.subr.mxu0 0.0
      %7104 = vmatpush1.msra.mxu0 0.0
      %7105 = vmatprep.subr.mxu0 0.0
      %7106 = vmatpush1.msra.mxu0 0.0
      %7107 = vmatprep.subr.mxu0 0.0
      %7108 = vmatpush1.msra.mxu0 0.0
      %7109 = vmatprep.subr.mxu0 0.0
      %7110 = vmatpush1.msra.mxu0 0.0
      %7111 = vmatprep.subr.mxu0 0.0
      %7112 = vmatpush1.msra.mxu0 0.0
      %7113 = vmatprep.subr.mxu0 0.0
      %7114 = vmatpush1.msra.mxu0 0.0
      %7115 = vmatprep.subr.mxu0 0.0
      %7116 = vmatpush1.msra.mxu0 0.0
      %7117 = vmatprep.subr.mxu0 0.0
      %7118 = vmatpush1.msra.mxu0 0.0
      %7119 = vmatprep.subr.mxu0 0.0
      %7120 = vmatpush1.msra.mxu0 0.0
      %7121 = vmatprep.subr.mxu0 0.0
      %7122 = vmatpush1.msra.mxu0 0.0
      %7123 = vmatprep.subr.mxu0 0.0
      %7124 = vmatpush1.msra.mxu0 0.0
      %7125 = vmatprep.subr.mxu0 0.0
      %7126 = vmatpush1.msra.mxu0 0.0
      %7127 = vmatprep.subr.mxu0 0.0
      %7128 = vmatpush1.msra.mxu0 0.0
      %7129 = vmatprep.subr.mxu0 0.0
      %7130 = vmatpush1.msra.mxu0 0.0
      %7131 = vmatprep.subr.mxu0 0.0
      %7132 = vmatpush1.msra.mxu0 0.0
      %7133 = vmatprep.subr.mxu0 0.0
      %7134 = vmatpush1.msra.mxu0 0.0
      %7135 = vmatprep.subr.mxu0 0.0
      %7136 = vmatpush1.msra.mxu0 0.0
      %7137 = vmatprep.subr.mxu0 0.0
      %7138 = vmatpush1.msra.mxu0 0.0
      %7139 = vmatprep.subr.mxu0 0.0
      %7140 = vmatpush1.msra.mxu0 0.0
      %7141 = vmatprep.subr.mxu0 0.0
      %7142 = vmatpush1.msra.mxu0 0.0
      %7143 = vmatprep.subr.mxu0 0.0
      %7144 = vmatpush1.msra.mxu0 0.0
      %7145 = vmatprep.subr.mxu0 0.0
      %7146 = vmatpush1.msra.mxu0 0.0
      %7147 = vmatprep.subr.mxu0 0.0
      %7148 = vmatpush1.msra.mxu0 0.0
      %7149 = vmatprep.subr.mxu0 0.0
      %7150 = vmatpush1.msra.mxu0 0.0
      %7151 = vmatprep.subr.mxu0 0.0
      %7152 = vmatpush1.msra.mxu0 0.0
      %7153 = vmatprep.mubr.f32.mxu0 0.0
      %7154 = vmatmul.mubr.f32.gmra.mrb[0].mxu0 %v6994
      %v7155 = vpop.f32.mrb[0].mxu0
      %v7156 = vadd.f32 0.0, %v7155
      %v7157 = vpop.f32.mrb[0].mxu0
      %7158 = vmatprep.mubr.f32.mxu0 0.0
      %7159 = vmatmul.mubr.f32.gmra.mrb[0].mxu0 %v6997
      %v7160 = vpop.f32.mrb[0].mxu0
      %v7161 = vadd.f32 0.0, %v7160
      %v7162 = vpop.f32.mrb[0].mxu0
      %7163 = vmatprep.mubr.f32.mxu0 0.0
      %7164 = vmatmul.mubr.f32.gmra.mrb[0].mxu0 %v7000
      %v7165 = vpop.f32.mrb[0].mxu0
      %v7166 = vadd.f32 0.0, %v7165
      %v7167 = vpop.f32.mrb[0].mxu0
      %7168 = vmatprep.mubr.f32.mxu0 0.0
      %7169 = vmatmul.mubr.f32.gmra.mrb[0].mxu0 %v7003
      %v7170 = vpop.f32.mrb[0].mxu0
      %v7171 = vadd.f32 0.0, %v7170
      %v7172 = vpop.f32.mrb[0].mxu0
      %7173 = vmatprep.mubr.f32.mxu0 0.0
      %7174 = vmatmul.mubr.f32.gmra.mrb[0].mxu0 %v7006
      %v7175 = vpop.f32.mrb[0].mxu0
      %v7176 = vadd.f32 0.0, %v7175
      %v7177 = vpop.f32.mrb[0].mxu0
      %7178 = vmatprep.mubr.f32.mxu0 0.0
      %7179 = vmatmul.mubr.f32.gmra.mrb[0].mxu0 %v7009
      %v7180 = vpop.f32.mrb[0].mxu0
      %v7181 = vadd.f32 0.0, %v7180
      %v7182 = vpop.f32.mrb[0].mxu0
      %7183 = vmatprep.mubr.f32.mxu0 0.0
      %7184 = vmatmul.mubr.f32.gmra.mrb[0].mxu0 %v7012
      %v7185 = vpop.f32.mrb[0].mxu0
      %v7186 = vadd.f32 0.0, %v7185
      %v7187 = vpop.f32.mrb[0].mxu0
      %7188 = vmatprep.mubr.f32.mxu0 0.0
      %7189 = vmatmul.mubr.f32.gmra.mrb[0].mxu0 %v7015
      %v7190 = vpop.f32.mrb[0].mxu0
      %v7191 = vadd.f32 0.0, %v7190
      %v7192 = vpop.f32.mrb[0].mxu0
      %7193 = vmatprep.mubr.f32.mxu0 0.0
      %7194 = vmatmul.mubr.f32.gmra.mrb[0].mxu0 %v7018
      %v7195 = vpop.f32.mrb[0].mxu0
      %v7196 = vadd.f32 0.0, %v7195
      %v7197 = vpop.f32.mrb[0].mxu0
      %7198 = vmatprep.mubr.f32.mxu0 0.0
      %7199 = vmatmul.mubr.f32.gmra.mrb[0].mxu0 %v7021
      %v7200 = vpop.f32.mrb[0].mxu0
      %v7201 = vadd.f32 0.0, %v7200
      %v7202 = vpop.f32.mrb[0].mxu0
      %7203 = vmatprep.mubr.f32.mxu0 0.0
      %7204 = vmatmul.mubr.f32.gmra.mrb[0].mxu0 %v7024
      %v7205 = vpop.f32.mrb[0].mxu0
      %v7206 = vadd.f32 0.0, %v7205
      %v7207 = vpop.f32.mrb[0].mxu0
      %7208 = vmatprep.mubr.f32.mxu0 0.0
      %7209 = vmatmul.mubr.f32.gmra.mrb[0].mxu0 %v7027
      %v7210 = vpop.f32.mrb[0].mxu0
      %v7211 = vadd.f32 0.0, %v7210
      %v7212 = vpop.f32.mrb[0].mxu0
      %7213 = vmatprep.mubr.f32.mxu0 0.0
      %7214 = vmatmul.mubr.f32.gmra.mrb[0].mxu0 %v7030
      %v7215 = vpop.f32.mrb[0].mxu0
      %v7216 = vadd.f32 0.0, %v7215
      %v7217 = vpop.f32.mrb[0].mxu0
      %7218 = vmatprep.mubr.f32.mxu0 0.0
      %7219 = vmatmul.mubr.f32.gmra.mrb[0].mxu0 %v7033
      %v7220 = vpop.f32.mrb[0].mxu0
      %v7221 = vadd.f32 0.0, %v7220
      %v7222 = vpop.f32.mrb[0].mxu0
      %7223 = vmatprep.mubr.f32.mxu0 0.0
      %7224 = vmatmul.mubr.f32.gmra.mrb[0].mxu0 %v7036
      %v7225 = vpop.f32.mrb[0].mxu0
      %v7226 = vadd.f32 0.0, %v7225
      %v7227 = vpop.f32.mrb[0].mxu0
      %7228 = vmatprep.mubr.f32.mxu0 0.0
      %7229 = vmatmul.mubr.f32.gmra.mrb[0].mxu0 %v7039
      %v7230 = vpop.f32.mrb[0].mxu0
      %v7231 = vadd.f32 0.0, %v7230
      %v7232 = vpop.f32.mrb[0].mxu0
      %7233 = vmatprep.mubr.f32.mxu0 0.0
      %7234 = vmatmul.mubr.f32.gmra.mrb[0].mxu0 %v7042
      %v7235 = vpop.f32.mrb[0].mxu0
      %v7236 = vadd.f32 0.0, %v7235
      %v7237 = vpop.f32.mrb[0].mxu0
      %7238 = vmatprep.mubr.f32.mxu0 0.0
      %7239 = vmatmul.mubr.f32.gmra.mrb[0].mxu0 %v7045
      %v7240 = vpop.f32.mrb[0].mxu0
      %v7241 = vadd.f32 0.0, %v7240
      %v7242 = vpop.f32.mrb[0].mxu0
      %7243 = vmatprep.mubr.f32.mxu0 0.0
      %7244 = vmatmul.mubr.f32.gmra.mrb[0].mxu0 %v7048
      %v7245 = vpop.f32.mrb[0].mxu0
      %v7246 = vadd.f32 0.0, %v7245
      %v7247 = vpop.f32.mrb[0].mxu0
      %7248 = vmatprep.mubr.f32.mxu0 0.0
      %7249 = vmatmul.mubr.f32.gmra.mrb[0].mxu0 %v7051
      %v7250 = vpop.f32.mrb[0].mxu0
      %v7251 = vadd.f32 0.0, %v7250
      %v7252 = vpop.f32.mrb[0].mxu0
      %7253 = vmatprep.mubr.f32.mxu0 0.0
      %7254 = vmatmul.mubr.f32.gmra.mrb[0].mxu0 %v7054
      %v7255 = vpop.f32.mrb[0].mxu0
      %v7256 = vadd.f32 0.0, %v7255
      %v7257 = vpop.f32.mrb[0].mxu0
      %7258 = vmatprep.mubr.f32.mxu0 0.0
      %7259 = vmatmul.mubr.f32.gmra.mrb[0].mxu0 %v7057
      %v7260 = vpop.f32.mrb[0].mxu0
      %v7261 = vadd.f32 0.0, %v7260
      %v7262 = vpop.f32.mrb[0].mxu0
      %7263 = vmatprep.mubr.f32.mxu0 0.0
      %7264 = vmatmul.mubr.f32.gmra.mrb[0].mxu0 %v7060
      %v7265 = vpop.f32.mrb[0].mxu0
      %v7266 = vadd.f32 0.0, %v7265
      %v7267 = vpop.f32.mrb[0].mxu0
      %7268 = vmatprep.mubr.f32.mxu0 0.0
      %7269 = vmatmul.mubr.f32.gmra.mrb[0].mxu0 %v7063
      %v7270 = vpop.f32.mrb[0].mxu0
      %v7271 = vadd.f32 0.0, %v7270
      %v7272 = vpop.f32.mrb[0].mxu0
      %7273 = vmatprep.mubr.f32.mxu0 0.0
      %7274 = vmatmul.mubr.f32.gmra.mrb[0].mxu0 %v7066
      %v7275 = vpop.f32.mrb[0].mxu0
      %v7276 = vadd.f32 0.0, %v7275
      %v7277 = vpop.f32.mrb[0].mxu0
      %7278 = vmatprep.mubr.f32.mxu0 0.0
      %7279 = vmatmul.mubr.f32.gmra.mrb[0].mxu0 %v7069
      %v7280 = vpop.f32.mrb[0].mxu0
      %v7281 = vadd.f32 0.0, %v7280
      %v7282 = vpop.f32.mrb[0].mxu0
      %7283 = vmatprep.mubr.f32.mxu0 0.0
      %7284 = vmatmul.mubr.f32.gmra.mrb[0].mxu0 %v7072
      %v7285 = vpop.f32.mrb[0].mxu0
      %v7286 = vadd.f32 0.0, %v7285
      %v7287 = vpop.f32.mrb[0].mxu0
      %7288 = vmatprep.mubr.f32.mxu0 0.0
      %7289 = vmatmul.mubr.f32.gmra.mrb[0].mxu0 %v7075
      %v7290 = vpop.f32.mrb[0].mxu0
      %v7291 = vadd.f32 0.0, %v7290
      %v7292 = vpop.f32.mrb[0].mxu0
      %7293 = vmatprep.mubr.f32.mxu0 0.0
      %7294 = vmatmul.mubr.f32.gmra.mrb[0].mxu0 %v7078
      %v7295 = vpop.f32.mrb[0].mxu0
      %v7296 = vadd.f32 0.0, %v7295
      %v7297 = vpop.f32.mrb[0].mxu0
      %7298 = vmatprep.mubr.f32.mxu0 0.0
      %7299 = vmatmul.mubr.f32.gmra.mrb[0].mxu0 %v7081
      %v7300 = vpop.f32.mrb[0].mxu0
      %v7301 = vadd.f32 0.0, %v7300
      %v7302 = vpop.f32.mrb[0].mxu0
      %7303 = vmatprep.mubr.f32.mxu0 0.0
      %7304 = vmatmul.mubr.f32.gmra.mrb[0].mxu0 %v7084
      %v7305 = vpop.f32.mrb[0].mxu0
      %v7306 = vadd.f32 0.0, %v7305
      %v7307 = vpop.f32.mrb[0].mxu0
      %7308 = vmatprep.mubr.f32.mxu0 0.0
      %7309 = vmatmul.mubr.f32.gmra.mrb[0].mxu0 %v7087
      %v7310 = vpop.f32.mrb[0].mxu0
      %v7311 = vadd.f32 0.0, %v7310
      %v7312 = vpop.f32.mrb[0].mxu0
      %7313 = vdwg.mxu0
      %v7314 = vadd.f32 %v6927, %v7156
      %v7315 = vadd.f32 %v6928, %v7161
      %v7316 = vadd.f32 %v6929, %v7166
      %v7317 = vadd.f32 %v6930, %v7171
      %v7318 = vadd.f32 %v6931, %v7176
      %v7319 = vadd.f32 %v6932, %v7181
      %v7320 = vadd.f32 %v6933, %v7186
      %v7321 = vadd.f32 %v6934, %v7191
      %v7322 = vadd.f32 %v6935, %v7196
      %v7323 = vadd.f32 %v6936, %v7201
      %v7324 = vadd.f32 %v6937, %v7206
      %v7325 = vadd.f32 %v6938, %v7211
      %v7326 = vadd.f32 %v6939, %v7216
      %v7327 = vadd.f32 %v6940, %v7221
      %v7328 = vadd.f32 %v6941, %v7226
      %v7329 = vadd.f32 %v6942, %v7231
      %v7330 = vadd.f32 %v6943, %v7236
      %v7331 = vadd.f32 %v6944, %v7241
      %v7332 = vadd.f32 %v6945, %v7246
      %v7333 = vadd.f32 %v6946, %v7251
      %v7334 = vadd.f32 %v6947, %v7256
      %v7335 = vadd.f32 %v6948, %v7261
      %v7336 = vadd.f32 %v6949, %v7266
      %v7337 = vadd.f32 %v6950, %v7271
      %v7338 = vadd.f32 %v6951, %v7276
      %v7339 = vadd.f32 %v6952, %v7281
      %v7340 = vadd.f32 %v6953, %v7286
      %v7341 = vadd.f32 %v6954, %v7291
      %v7342 = vadd.f32 %v6955, %v7296
      %v7343 = vadd.f32 %v6956, %v7301
      %v7344 = vadd.f32 %v6957, %v7306
      %v7345 = vadd.f32 %v6958, %v7311
      %v7346 = vld [vmem:[%s5] sm:$0x1]
      %v7348 = vlaneseq
      %v7349 = vshrl.u32 %v7348, 7
      %v7350 = vsub.s32 0, %v7349
      %v7351 = vrot.slane %v7346, %v7350
      %v7353 = vmul.f32 %v7314, %v7351
      %v7354 = vmul.f32 %v7315, %v7351
      %v7355 = vmul.f32 %v7316, %v7351
      %v7356 = vmul.f32 %v7317, %v7351
      %v7357 = vmul.f32 %v7318, %v7351
      %v7358 = vmul.f32 %v7319, %v7351
      %v7359 = vmul.f32 %v7320, %v7351
      %v7360 = vmul.f32 %v7321, %v7351
      %v7361 = vmul.f32 %v7322, %v7351
      %v7362 = vmul.f32 %v7323, %v7351
      %v7363 = vmul.f32 %v7324, %v7351
      %v7364 = vmul.f32 %v7325, %v7351
      %v7365 = vmul.f32 %v7326, %v7351
      %v7366 = vmul.f32 %v7327, %v7351
      %v7367 = vmul.f32 %v7328, %v7351
      %v7368 = vmul.f32 %v7329, %v7351
      %v7369 = vmul.f32 %v7330, %v7351
      %v7370 = vmul.f32 %v7331, %v7351
      %v7371 = vmul.f32 %v7332, %v7351
      %v7372 = vmul.f32 %v7333, %v7351
      %v7373 = vmul.f32 %v7334, %v7351
      %v7374 = vmul.f32 %v7335, %v7351
      %v7375 = vmul.f32 %v7336, %v7351
      %v7376 = vmul.f32 %v7337, %v7351
      %v7377 = vmul.f32 %v7338, %v7351
      %v7378 = vmul.f32 %v7339, %v7351
      %v7379 = vmul.f32 %v7340, %v7351
      %v7380 = vmul.f32 %v7341, %v7351
      %v7381 = vmul.f32 %v7342, %v7351
      %v7382 = vmul.f32 %v7343, %v7351
      %v7383 = vmul.f32 %v7344, %v7351
      %v7384 = vmul.f32 %v7345, %v7351
      %v7385 = vld [vmem:[%s6] sm:$0x1]
      %v7387 = vlaneseq
      %v7388 = vshrl.u32 %v7387, 7
      %v7389 = vsub.s32 0, %v7388
      %v7390 = vrot.slane %v7385, %v7389
      %v7392 = vadd.f32 %v7353, %v7390
      %v7393 = vadd.f32 %v7354, %v7390
      %v7394 = vadd.f32 %v7355, %v7390
      %v7395 = vadd.f32 %v7356, %v7390
      %v7396 = vadd.f32 %v7357, %v7390
      %v7397 = vadd.f32 %v7358, %v7390
      %v7398 = vadd.f32 %v7359, %v7390
      %v7399 = vadd.f32 %v7360, %v7390
      %v7400 = vadd.f32 %v7361, %v7390
      %v7401 = vadd.f32 %v7362, %v7390
      %v7402 = vadd.f32 %v7363, %v7390
      %v7403 = vadd.f32 %v7364, %v7390
      %v7404 = vadd.f32 %v7365, %v7390
      %v7405 = vadd.f32 %v7366, %v7390
      %v7406 = vadd.f32 %v7367, %v7390
      %v7407 = vadd.f32 %v7368, %v7390
      %v7408 = vadd.f32 %v7369, %v7390
      %v7409 = vadd.f32 %v7370, %v7390
      %v7410 = vadd.f32 %v7371, %v7390
      %v7411 = vadd.f32 %v7372, %v7390
      %v7412 = vadd.f32 %v7373, %v7390
      %v7413 = vadd.f32 %v7374, %v7390
      %v7414 = vadd.f32 %v7375, %v7390
      %v7415 = vadd.f32 %v7376, %v7390
      %v7416 = vadd.f32 %v7377, %v7390
      %v7417 = vadd.f32 %v7378, %v7390
      %v7418 = vadd.f32 %v7379, %v7390
      %v7419 = vadd.f32 %v7380, %v7390
      %v7420 = vadd.f32 %v7381, %v7390
      %v7421 = vadd.f32 %v7382, %v7390
      %v7422 = vadd.f32 %v7383, %v7390
      %v7423 = vadd.f32 %v7384, %v7390
      %v7424 = vmax.f32 %v7392, 0.0
      %v7425 = vmax.f32 %v7393, 0.0
      %v7426 = vmax.f32 %v7394, 0.0
      %v7427 = vmax.f32 %v7395, 0.0
      %v7428 = vmax.f32 %v7396, 0.0
      %v7429 = vmax.f32 %v7397, 0.0
      %v7430 = vmax.f32 %v7398, 0.0
      %v7431 = vmax.f32 %v7399, 0.0
      %v7432 = vmax.f32 %v7400, 0.0
      %v7433 = vmax.f32 %v7401, 0.0
      %v7434 = vmax.f32 %v7402, 0.0
      %v7435 = vmax.f32 %v7403, 0.0
      %v7436 = vmax.f32 %v7404, 0.0
      %v7437 = vmax.f32 %v7405, 0.0
      %v7438 = vmax.f32 %v7406, 0.0
      %v7439 = vmax.f32 %v7407, 0.0
      %v7440 = vmax.f32 %v7408, 0.0
      %v7441 = vmax.f32 %v7409, 0.0
      %v7442 = vmax.f32 %v7410, 0.0
      %v7443 = vmax.f32 %v7411, 0.0
      %v7444 = vmax.f32 %v7412, 0.0
      %v7445 = vmax.f32 %v7413, 0.0
      %v7446 = vmax.f32 %v7414, 0.0
      %v7447 = vmax.f32 %v7415, 0.0
      %v7448 = vmax.f32 %v7416, 0.0
      %v7449 = vmax.f32 %v7417, 0.0
      %v7450 = vmax.f32 %v7418, 0.0
      %v7451 = vmax.f32 %v7419, 0.0
      %v7452 = vmax.f32 %v7420, 0.0
      %v7453 = vmax.f32 %v7421, 0.0
      %v7454 = vmax.f32 %v7422, 0.0
      %v7455 = vmax.f32 %v7423, 0.0
      %7456 = vst.msk [vmem:[%s278] sm:$0xff] %vm3838, %v7424
      %7457 = vst.msk [vmem:[%s278 + $0x8] sm:$0xff] %vm3838, %v7425
      %7458 = vst.msk [vmem:[%s278 + $0x10] sm:$0xff] %vm3838, %v7426
      %7459 = vst.msk [vmem:[%s278 + $0x18] sm:$0xff] %vm3838, %v7427
      %7460 = vst.msk [vmem:[%s278 + $0x20] sm:$0xff] %vm3838, %v7428
      %7461 = vst.msk [vmem:[%s278 + $0x28] sm:$0xff] %vm3838, %v7429
      %7462 = vst.msk [vmem:[%s278 + $0x30] sm:$0xff] %vm3838, %v7430
      %7463 = vst.msk [vmem:[%s278 + $0x38] sm:$0xff] %vm3838, %v7431
      %7464 = vst.msk [vmem:[%s278 + $0x40] sm:$0xff] %vm3838, %v7432
      %7465 = vst.msk [vmem:[%s278 + $0x48] sm:$0xff] %vm3838, %v7433
      %7466 = vst.msk [vmem:[%s278 + $0x50] sm:$0xff] %vm3838, %v7434
      %7467 = vst.msk [vmem:[%s278 + $0x58] sm:$0xff] %vm3838, %v7435
      %7468 = vst.msk [vmem:[%s278 + $0x60] sm:$0xff] %vm3838, %v7436
      %7469 = vst.msk [vmem:[%s278 + $0x68] sm:$0xff] %vm3838, %v7437
      %7470 = vst.msk [vmem:[%s278 + $0x70] sm:$0xff] %vm3838, %v7438
      %7471 = vst.msk [vmem:[%s278 + $0x78] sm:$0xff] %vm3838, %v7439
      %7472 = vst.msk [vmem:[%s278 + $0x80] sm:$0xff] %vm3838, %v7440
      %7473 = vst.msk [vmem:[%s278 + $0x88] sm:$0xff] %vm3838, %v7441
      %7474 = vst.msk [vmem:[%s278 + $0x90] sm:$0xff] %vm3838, %v7442
      %7475 = vst.msk [vmem:[%s278 + $0x98] sm:$0xff] %vm3838, %v7443
      %7476 = vst.msk [vmem:[%s278 + $0xa0] sm:$0xff] %vm3838, %v7444
      %7477 = vst.msk [vmem:[%s278 + $0xa8] sm:$0xff] %vm3838, %v7445
      %7478 = vst.msk [vmem:[%s278 + $0xb0] sm:$0xff] %vm3838, %v7446
      %7479 = vst.msk [vmem:[%s278 + $0xb8] sm:$0xff] %vm3838, %v7447
      %7480 = vst.msk [vmem:[%s278 + $0xc0] sm:$0xff] %vm3838, %v7448
      %7481 = vst.msk [vmem:[%s278 + $0xc8] sm:$0xff] %vm3838, %v7449
      %7482 = vst.msk [vmem:[%s278 + $0xd0] sm:$0xff] %vm3838, %v7450
      %7483 = vst.msk [vmem:[%s278 + $0xd8] sm:$0xff] %vm3838, %v7451
      %7484 = vst.msk [vmem:[%s278 + $0xe0] sm:$0xff] %vm3838, %v7452
      %7485 = vst.msk [vmem:[%s278 + $0xe8] sm:$0xff] %vm3838, %v7453
      %7486 = vst.msk [vmem:[%s278 + $0xf0] sm:$0xff] %vm3838, %v7454
      %7487 = vst.msk [vmem:[%s278 + $0xf8] sm:$0xff] %vm3838, %v7455
      %p7488 = scmp.lt.s32.totalorder %s18, 1
      %s7489 = scalar_select %p7488, %s18, 1
      %s7490 = smul.addr %s7489, 32
      %s7491 = smul.addr %s7490, 8
      %s7492 = scalar_lea.vmem %s7, %s7491
      // Predicated region
      $region49: #{conv_block_forward.1} parent=47 // pred_check
        %p7493 = pneg %p188
      $region50: #{conv_block_forward.1} parent=47 // pred_check_branch
        %7495 = sbr.rel (%p7493) target = $region52
      $region51: #{conv_block_forward.1} parent=47 // pred_region
        _
      $region52: #{conv_block_forward.1} parent=47 // pred_fallthru
        _
    $region48: #{conv_block_forward.1} parent=5 // pred_fallthru
      _
    %p7496 = scmp.le.s32.totalorder 2, %s13
    // Predicated region
    $region53: #{conv_block_forward.1} parent=5 // pred_check
      %p7497 = pneg %p7496
    $region54: #{conv_block_forward.1} parent=5 // pred_check_branch
      %7499 = sbr.rel (%p7497) target = $region56
    $region55: #{conv_block_forward.1} parent=5 // pred_region
      %s7500 = ssub.s32 %s13, 2
      // Predicated region
      $region57: #{conv_block_forward.1} parent=55 // pred_check
        %p7501 = pneg %p194
      $region58: #{conv_block_forward.1} parent=55 // pred_check_branch
        %7503 = sbr.rel (%p7501) target = $region60
      $region59: #{conv_block_forward.1} parent=55 // pred_region
        %p7504 = scmp.lt.s32.totalorder %s19, 1
        %s7505 = scalar_select %p7504, %s19, 1
        %s7506 = smul.addr %s7505, 32
        %s7507 = smul.addr %s7506, 8
        %s7508 = scalar_lea.vmem %s7, %s7507
      $region60: #{conv_block_forward.1} parent=55 // pred_fallthru
        _
    $region56: #{conv_block_forward.1} parent=5 // pred_fallthru
      _
  $region6: #{conv_block_forward.1} parent=0 // loop_footer
    %s17 = sadd.s32 1, %s13
  $region7: #{conv_block_forward.1} parent=0 // loop_footer_branch
    %12 = sbr.rel target = $region3
  $region8: #{conv_block_forward.1} parent=0 // loop_exit
    _

</llo_original>
